<compile_context>
chip_gen: v6e
topology: v6e:2x2x1
jax: 0.10.0
libtpu: 0.0.40
codegen_flags: <defaults>
</compile_context>

<pallas_src>
import jax
import jax.numpy as jnp
import numpy as np
from jax.experimental import pallas as pl
from jax.experimental.pallas import tpu as pltpu


CNN_CHANNELS = [16, 32]
GRU_HIDDEN = 64
NUM_CLASSES = 5
KSIZE = 16
CONV_PAD = 2
POOLS = (4, 4, 2)
LANE = 128


def _ceil_to(n, m):
    return ((n + m - 1) // m) * m


# ---------------------------------------------------------------------------
# In-kernel helpers
# ---------------------------------------------------------------------------
def _im2col(h, lout, lout_pad):
    """im2col for Conv1d(K=16, stride=1, pad=2) on one batch element.
    h: (Cin, Lin) valid columns -> (K*Cin, lout_pad) patches (zero lane padding)."""
    cin = h.shape[0]
    zpad = jnp.zeros((cin, CONV_PAD), jnp.float32)
    hp = jnp.concatenate([zpad, h, zpad], axis=1)                       # (Cin, Lin+4)
    patches = jnp.concatenate([hp[:, k:k + lout] for k in range(KSIZE)], axis=0)
    if lout_pad > lout:
        patches = jnp.concatenate(
            [patches, jnp.zeros((KSIZE * cin, lout_pad - lout), jnp.float32)], axis=1)
    return patches


def _gru_cell(xp, h, whh_t, bhh_n, hidden):
    """One GRU step, PyTorch gate order (r|z|n).
    xp already holds x@Wih^T + bih + [b_hr | b_hz | 0] (r/z hidden biases pre-folded);
    b_hn stays inside the recurrent term: n = tanh(xp_n + r*(W_hn h + b_hn))."""
    rec = jnp.dot(h, whh_t, preferred_element_type=jnp.float32)         # (B, 3H)
    r = jax.nn.sigmoid(xp[:, :hidden] + rec[:, :hidden])
    z = jax.nn.sigmoid(xp[:, hidden:2 * hidden] + rec[:, hidden:2 * hidden])
    n = jnp.tanh(xp[:, 2 * hidden:] + r * (rec[:, 2 * hidden:] + bhh_n))
    return (1.0 - z) * n + z * h


# ---------------------------------------------------------------------------
# Fused encoder + BiGRU + classifier-half kernel (grid over the 2 signals)
# ---------------------------------------------------------------------------
def _encoder_head_kernel(x_ref, w1_ref, b1_ref, w2_ref, b2_ref, w3_ref, b3_ref,
                         sel1_ref, sel2_ref, sel3_ref,
                         wih_ref, whh_ref, bih_ref, bhhn_ref, wcls_ref, o_ref):
    x = x_ref[0]                                       # (B, L) signal for this grid step
    bsz = x.shape[0]
    hidden = whh_ref.shape[2]

    stage_w = (w1_ref[0], w2_ref[0], w3_ref[0])
    stage_b = (b1_ref[0], b2_ref[0], b3_ref[0])
    stage_sel = (sel1_ref[...], sel2_ref[...], sel3_ref[...])

    # ---- CNN encoder: 3 x [batched im2col -> ONE MXU matmul -> maxpool -> sigmoid] ----
    hs = [x[b:b + 1, :] for b in range(bsz)]           # per-batch (Cin=1, L)
    lin = x.shape[1]
    a3 = None
    for stage, (w_mat, b_col, sel, pool) in enumerate(
            zip(stage_w, stage_b, stage_sel, POOLS)):
        lout = lin + 2 * CONV_PAD - KSIZE + 1
        lout_pad = _ceil_to(lout, LANE)
        lq = lout // pool
        # both batch elements side by side along lanes -> one matmul per stage
        patches = jnp.concatenate([_im2col(h, lout, lout_pad) for h in hs], axis=1)
        y = jnp.dot(w_mat, patches, preferred_element_type=jnp.float32) + b_col
        # maxpool BEFORE sigmoid (monotonic): windowed max (VPU) + 0/1 select (MXU)
        wlen = y.shape[1] - pool + 1
        m = y[:, :wlen]
        for i in range(1, pool):
            m = jnp.maximum(m, y[:, i:i + wlen])
        act = jax.nn.sigmoid(jnp.dot(m, sel, preferred_element_type=jnp.float32))
        if stage < 2:
            lq_pad = _ceil_to(lq, LANE)
            hs = [act[:, b * lq_pad: b * lq_pad + lq] for b in range(bsz)]
        else:
            a3 = act                                   # (D, T*B), columns time-major
        lin = lq

    n_steps = lin                                      # GRU sequence length T
    x_tm = a3.T                                        # (T*B, D) time-major rows

    # ---- forward GRU: one input-projection matmul for the whole sequence ----
    wih_f, whh_f = wih_ref[0, 0], whh_ref[0, 0]
    bih_f, bhhn_f = bih_ref[0, 0], bhhn_ref[0, 0]
    xp_all = jnp.dot(x_tm, wih_f, preferred_element_type=jnp.float32) + bih_f
    h = jnp.zeros((bsz, hidden), jnp.float32)
    for t in range(n_steps):                           # serial recurrence: 1 matmul/step
        h = _gru_cell(xp_all[t * bsz:(t + 1) * bsz, :], h, whh_f, bhhn_f, hidden)
    h_fwd = h

    # ---- backward GRU: out[:, -1, :] only needs ONE step on x_{T-1} ----
    wih_b, whh_b = wih_ref[0, 1], whh_ref[0, 1]
    bih_b, bhhn_b = bih_ref[0, 1], bhhn_ref[0, 1]
    x_last = x_tm[(n_steps - 1) * bsz:, :]             # (B, D)
    xp_last = jnp.dot(x_last, wih_b, preferred_element_type=jnp.float32) + bih_b
    h_bwd = _gru_cell(xp_last, jnp.zeros((bsz, hidden), jnp.float32),
                      whh_b, bhhn_b, hidden)

    # ---- this signal's half of the classifier Linear (lane-padded to 128) ----
    enc = jnp.concatenate([h_fwd, h_bwd], axis=1)      # (B, 2H)
    o_ref[0] = jnp.dot(enc, wcls_ref[0], preferred_element_type=jnp.float32)


def encoder_head(x_sig, p):
    """x_sig: (2, B, L).  Returns per-signal partial classifier logits (2, B, LANE)."""
    n_sig, bsz, _ = x_sig.shape

    def sig_spec(arr):
        nd = arr.ndim
        return pl.BlockSpec((1,) + arr.shape[1:], lambda s: (s,) + (0,) * (nd - 1))

    def const_spec(arr):
        nd = arr.ndim
        return pl.BlockSpec(arr.shape, lambda s: (0,) * nd)

    return pl.pallas_call(
        _encoder_head_kernel,
        out_shape=jax.ShapeDtypeStruct((n_sig, bsz, LANE), jnp.float32),
        grid=(n_sig,),
        in_specs=[
            sig_spec(x_sig),
            sig_spec(p["w1"]), sig_spec(p["b1"]),
            sig_spec(p["w2"]), sig_spec(p["b2"]),
            sig_spec(p["w3"]), sig_spec(p["b3"]),
            const_spec(p["sel1"]), const_spec(p["sel2"]), const_spec(p["sel3"]),
            sig_spec(p["wih"]), sig_spec(p["whh"]),
            sig_spec(p["bihf"]), sig_spec(p["bhhn"]),
            sig_spec(p["wcls"]),
        ],
        out_specs=pl.BlockSpec((1, bsz, LANE), lambda s: (s, 0, 0)),
        compiler_params=pltpu.CompilerParams(dimension_semantics=("parallel",)),
    )(x_sig, p["w1"], p["b1"], p["w2"], p["b2"], p["w3"], p["b3"],
      p["sel1"], p["sel2"], p["sel3"],
      p["wih"], p["whh"], p["bihf"], p["bhhn"], p["wcls"])


# ---------------------------------------------------------------------------
# One-time parameter repacking (hoisted out of the jitted forward)
# ---------------------------------------------------------------------------
def _pool_select_blockdiag(bsz, lout, lout_pad, pool, lq, lq_pad):
    """0/1 constant picking column b*lout_pad + q*pool into column b*lq_pad + q."""
    sel = np.zeros((bsz * lout_pad - pool + 1, bsz * lq_pad), np.float32)
    for b in range(bsz):
        for q in range(lq):
            sel[b * lout_pad + q * pool, b * lq_pad + q] = 1.0
    return jnp.asarray(sel)


def _pool_select_timemajor(bsz, lout_pad, pool, lq):
    """Last stage: emit columns in time-major (t*B + b) order so the GRU input
    projection is one contiguous (T*B, D) matmul with static per-step slices."""
    sel = np.zeros((bsz * lout_pad - pool + 1, lq * bsz), np.float32)
    for b in range(bsz):
        for t in range(lq):
            sel[b * lout_pad + t * pool, t * bsz + b] = 1.0
    return jnp.asarray(sel)


def pack_params(params, bsz, length):
    p = {}
    # Conv: (Cout, Cin, K) -> (Cout, K*Cin), row order (k, cin) matching the im2col.
    for i in range(3):
        ws, bs = [], []
        for name in ("wrist", "finger"):
            w, b = params[f"enc_{name}"][i]
            cout, cin, k = w.shape
            ws.append(jnp.transpose(w, (0, 2, 1)).reshape(cout, k * cin))
            bs.append(b.reshape(cout, 1))
        p[f"w{i + 1}"] = jnp.stack(ws, 0)
        p[f"b{i + 1}"] = jnp.stack(bs, 0)

    # MaxPool 0/1-select constants (block-diagonal over the lane-batched columns).
    lin = length
    sels = []
    for stage, pool in enumerate(POOLS):
        lout = lin + 2 * CONV_PAD - KSIZE + 1
        lout_pad = _ceil_to(lout, LANE)
        lq = lout // pool
        if stage < 2:
            sels.append(_pool_select_blockdiag(bsz, lout, lout_pad, pool, lq,
                                               _ceil_to(lq, LANE)))
        else:
            sels.append(_pool_select_timemajor(bsz, lout_pad, pool, lq))
        lin = lq
    p["sel1"], p["sel2"], p["sel3"] = sels

    # GRU: transpose weights; fold b_hr, b_hz into the input bias (NOT b_hn).
    hdn = GRU_HIDDEN
    wih, whh, bihf, bhhn = [], [], [], []
    for name in ("wrist", "finger"):
        wd, hd, bd, nd = [], [], [], []
        for d in ("fwd", "bwd"):
            g = params[f"gru_{name}"][d]
            wd.append(g["wih"].T)                                       # (D, 3H)
            hd.append(g["whh"].T)                                       # (H, 3H)
            bd.append((g["bih"] + jnp.concatenate(
                [g["bhh"][:2 * hdn], jnp.zeros((hdn,), jnp.float32)])).reshape(1, -1))
            nd.append(g["bhh"][2 * hdn:].reshape(1, -1))
        wih.append(jnp.stack(wd, 0)); whh.append(jnp.stack(hd, 0))
        bihf.append(jnp.stack(bd, 0)); bhhn.append(jnp.stack(nd, 0))
    p["wih"] = jnp.stack(wih, 0)        # (2, 2, D, 3H)
    p["whh"] = jnp.stack(whh, 0)        # (2, 2, H, 3H)
    p["bihf"] = jnp.stack(bihf, 0)      # (2, 2, 1, 3H)
    p["bhhn"] = jnp.stack(bhhn, 0)      # (2, 2, 1, H)

    # Classifier: rows [wrist | finger] of W^T, lane-padded class dim.
    wt = params["cls_w"].T              # (4H, C)
    twoh = 2 * hdn
    wcls = jnp.zeros((2, twoh, LANE), jnp.float32)
    wcls = wcls.at[0, :, :NUM_CLASSES].set(wt[:twoh])
    wcls = wcls.at[1, :, :NUM_CLASSES].set(wt[twoh:])
    p["wcls"] = wcls
    p["cls_b"] = params["cls_b"]
    return p


# ---------------------------------------------------------------------------
# Model assembly
# ---------------------------------------------------------------------------
def init_params(key):
    def uni(k, shape, bound):
        return jax.random.uniform(k, shape, jnp.float32, -bound, bound)

    keys = iter(jax.random.split(key, 64))
    params = {}
    for name in ("wrist", "finger"):
        chans = [(1, CNN_CHANNELS[0]),
                 (CNN_CHANNELS[0], CNN_CHANNELS[1]),
                 (CNN_CHANNELS[1], CNN_CHANNELS[1])]
        convs = []
        for cin, cout in chans:
            bound = 1.0 / (cin * KSIZE) ** 0.5
            convs.append((uni(next(keys), (cout, cin, KSIZE), bound),
                          uni(next(keys), (cout,), bound)))
        params[f"enc_{name}"] = convs

        gbound = 1.0 / GRU_HIDDEN ** 0.5
        gru = {}
        for d in ("fwd", "bwd"):
            gru[d] = {
                "wih": uni(next(keys), (3 * GRU_HIDDEN, CNN_CHANNELS[1]), gbound),
                "whh": uni(next(keys), (3 * GRU_HIDDEN, GRU_HIDDEN), gbound),
                "bih": uni(next(keys), (3 * GRU_HIDDEN,), gbound),
                "bhh": uni(next(keys), (3 * GRU_HIDDEN,), gbound),
            }
        params[f"gru_{name}"] = gru

    cbound = 1.0 / (GRU_HIDDEN * 2 * 2) ** 0.5
    params["cls_w"] = uni(next(keys), (NUM_CLASSES, GRU_HIDDEN * 4), cbound)
    params["cls_b"] = uni(next(keys), (NUM_CLASSES,), cbound)
    return params


def hepps_forward(packed, x):
    # x: (B, L, 2) float32  ->  (B, NUM_CLASSES) softmax probabilities
    x_sig = jnp.transpose(x, (2, 0, 1))                  # (2, B, L): [wrist, finger]
    part = encoder_head(x_sig, packed)                   # (2, B, LANE) partial logits
    logits = part[0, :, :NUM_CLASSES] + part[1, :, :NUM_CLASSES] + packed["cls_b"]
    return jax.nn.softmax(jnp.maximum(logits, 0.0), axis=1)


if __name__ == "__main__":
    key = jax.random.PRNGKey(0)
    pkey, xkey = jax.random.split(key)
    params = init_params(pkey)

    B, L = 2, 512                                        # L=512 -> GRU sequence length 8
    packed = pack_params(params, bsz=B, length=L)        # one-time repack, outside jit
    x = jax.random.normal(xkey, (B, L, 2), dtype=jnp.float32)

    out = jax.jit(hepps_forward)(packed, x)
    out = jax.block_until_ready(out)
    assert out.shape == (B, NUM_CLASSES)
    assert bool(jnp.all(jnp.isfinite(out)))
    print("KERNEL_OK")
</pallas_src>

<mosaic_0001>
module attributes {stable_mosaic.version = 11 : i64} {
  func.func @_encoder_head_kernel(%arg0: i32, %arg1: memref<1x2x512xf32, #tpu.memory_space<vmem>>, %arg2: memref<1x16x16xf32, #tpu.memory_space<vmem>>, %arg3: memref<1x16x1xf32, #tpu.memory_space<vmem>>, %arg4: memref<1x32x256xf32, #tpu.memory_space<vmem>>, %arg5: memref<1x32x1xf32, #tpu.memory_space<vmem>>, %arg6: memref<1x32x512xf32, #tpu.memory_space<vmem>>, %arg7: memref<1x32x1xf32, #tpu.memory_space<vmem>>, %arg8: memref<1021x256xf32, #tpu.memory_space<vmem>>, %arg9: memref<253x256xf32, #tpu.memory_space<vmem>>, %arg10: memref<255x16xf32, #tpu.memory_space<vmem>>, %arg11: memref<1x2x32x192xf32, #tpu.memory_space<vmem>>, %arg12: memref<1x2x64x192xf32, #tpu.memory_space<vmem>>, %arg13: memref<1x2x1x192xf32, #tpu.memory_space<vmem>>, %arg14: memref<1x2x1x64xf32, #tpu.memory_space<vmem>>, %arg15: memref<1x128x128xf32, #tpu.memory_space<vmem>>, %arg16: memref<1x2x128xf32, #tpu.memory_space<vmem>>) attributes {dimension_semantics = [#tpu.dimension_semantics<parallel>], iteration_bounds = array<i64: 2>, scalar_prefetch = 0 : i64, scratch_operands = 0 : i64, tpu.core_type = #tpu.core_type<tc>, window_params = [{transform_indices = @transform_0, window_bounds = array<i64: 1, 2, 512>}, {transform_indices = @transform_1, window_bounds = array<i64: 1, 16, 16>}, {transform_indices = @transform_2, window_bounds = array<i64: 1, 16, 1>}, {transform_indices = @transform_3, window_bounds = array<i64: 1, 32, 256>}, {transform_indices = @transform_4, window_bounds = array<i64: 1, 32, 1>}, {transform_indices = @transform_5, window_bounds = array<i64: 1, 32, 512>}, {transform_indices = @transform_6, window_bounds = array<i64: 1, 32, 1>}, {pipeline_mode = #tpu.pipeline_mode<synchronous>, transform_indices = @transform_7, window_bounds = array<i64: 1021, 256>}, {pipeline_mode = #tpu.pipeline_mode<synchronous>, transform_indices = @transform_8, window_bounds = array<i64: 253, 256>}, {pipeline_mode = #tpu.pipeline_mode<synchronous>, transform_indices = @transform_9, window_bounds = array<i64: 255, 16>}, {transform_indices = @transform_10, window_bounds = array<i64: 1, 2, 32, 192>}, {transform_indices = @transform_11, window_bounds = array<i64: 1, 2, 64, 192>}, {transform_indices = @transform_12, window_bounds = array<i64: 1, 2, 1, 192>}, {transform_indices = @transform_13, window_bounds = array<i64: 1, 2, 1, 64>}, {transform_indices = @transform_14, window_bounds = array<i64: 1, 128, 128>}, {transform_indices = @transform_15, window_bounds = array<i64: 1, 2, 128>}]} {
    %c0 = arith.constant 0 : index
    %c0_0 = arith.constant 0 : index
    %c0_1 = arith.constant 0 : index
    %0 = vector.load %arg1[%c0, %c0_0, %c0_1] : memref<1x2x512xf32, #tpu.memory_space<vmem>>, vector<1x2x512xf32>
    %1 = vector.shape_cast %0 : vector<1x2x512xf32> to vector<2x512xf32>
    %c0_2 = arith.constant 0 : index
    %c0_3 = arith.constant 0 : index
    %c0_4 = arith.constant 0 : index
    %2 = vector.load %arg2[%c0_2, %c0_3, %c0_4] : memref<1x16x16xf32, #tpu.memory_space<vmem>>, vector<1x16x16xf32>
    %3 = vector.shape_cast %2 : vector<1x16x16xf32> to vector<16x16xf32>
    %c0_5 = arith.constant 0 : index
    %c0_6 = arith.constant 0 : index
    %c0_7 = arith.constant 0 : index
    %4 = vector.load %arg4[%c0_5, %c0_6, %c0_7] : memref<1x32x256xf32, #tpu.memory_space<vmem>>, vector<1x32x256xf32>
    %5 = vector.shape_cast %4 : vector<1x32x256xf32> to vector<32x256xf32>
    %c0_8 = arith.constant 0 : index
    %c0_9 = arith.constant 0 : index
    %c0_10 = arith.constant 0 : index
    %6 = vector.load %arg6[%c0_8, %c0_9, %c0_10] : memref<1x32x512xf32, #tpu.memory_space<vmem>>, vector<1x32x512xf32>
    %7 = vector.shape_cast %6 : vector<1x32x512xf32> to vector<32x512xf32>
    %c0_11 = arith.constant 0 : index
    %c0_12 = arith.constant 0 : index
    %c0_13 = arith.constant 0 : index
    %8 = vector.load %arg3[%c0_11, %c0_12, %c0_13] : memref<1x16x1xf32, #tpu.memory_space<vmem>>, vector<1x16x1xf32>
    %9 = vector.shape_cast %8 : vector<1x16x1xf32> to vector<16x1xf32>
    %c0_14 = arith.constant 0 : index
    %c0_15 = arith.constant 0 : index
    %c0_16 = arith.constant 0 : index
    %10 = vector.load %arg5[%c0_14, %c0_15, %c0_16] : memref<1x32x1xf32, #tpu.memory_space<vmem>>, vector<1x32x1xf32>
    %11 = vector.shape_cast %10 : vector<1x32x1xf32> to vector<32x1xf32>
    %c0_17 = arith.constant 0 : index
    %c0_18 = arith.constant 0 : index
    %c0_19 = arith.constant 0 : index
    %12 = vector.load %arg7[%c0_17, %c0_18, %c0_19] : memref<1x32x1xf32, #tpu.memory_space<vmem>>, vector<1x32x1xf32>
    %13 = vector.shape_cast %12 : vector<1x32x1xf32> to vector<32x1xf32>
    %c0_20 = arith.constant 0 : index
    %c0_21 = arith.constant 0 : index
    %14 = vector.load %arg8[%c0_20, %c0_21] : memref<1021x256xf32, #tpu.memory_space<vmem>>, vector<1021x256xf32>
    %c0_22 = arith.constant 0 : index
    %c0_23 = arith.constant 0 : index
    %15 = vector.load %arg9[%c0_22, %c0_23] : memref<253x256xf32, #tpu.memory_space<vmem>>, vector<253x256xf32>
    %c0_24 = arith.constant 0 : index
    %c0_25 = arith.constant 0 : index
    %16 = vector.load %arg10[%c0_24, %c0_25] : memref<255x16xf32, #tpu.memory_space<vmem>>, vector<255x16xf32>
    %17 = vector.extract_strided_slice %1 {offsets = [0, 0], sizes = [1, 512], strides = [1, 1]} : vector<2x512xf32> to vector<1x512xf32>
    %18 = vector.extract_strided_slice %1 {offsets = [1, 0], sizes = [1, 512], strides = [1, 1]} : vector<2x512xf32> to vector<1x512xf32>
    %cst = arith.constant 0.000000e+00 : f32
    %19 = vector.broadcast %cst : f32 to vector<1x2xf32>
    %20 = tpu.concatenate %19, %17, %19 in 1 : vector<1x2xf32>, vector<1x512xf32>, vector<1x2xf32> -> vector<1x516xf32>
    %21 = vector.extract_strided_slice %20 {offsets = [0, 0], sizes = [1, 501], strides = [1, 1]} : vector<1x516xf32> to vector<1x501xf32>
    %22 = vector.extract_strided_slice %20 {offsets = [0, 1], sizes = [1, 501], strides = [1, 1]} : vector<1x516xf32> to vector<1x501xf32>
    %23 = vector.extract_strided_slice %20 {offsets = [0, 2], sizes = [1, 501], strides = [1, 1]} : vector<1x516xf32> to vector<1x501xf32>
    %24 = vector.extract_strided_slice %20 {offsets = [0, 3], sizes = [1, 501], strides = [1, 1]} : vector<1x516xf32> to vector<1x501xf32>
    %25 = vector.extract_strided_slice %20 {offsets = [0, 4], sizes = [1, 501], strides = [1, 1]} : vector<1x516xf32> to vector<1x501xf32>
    %26 = vector.extract_strided_slice %20 {offsets = [0, 5], sizes = [1, 501], strides = [1, 1]} : vector<1x516xf32> to vector<1x501xf32>
    %27 = vector.extract_strided_slice %20 {offsets = [0, 6], sizes = [1, 501], strides = [1, 1]} : vector<1x516xf32> to vector<1x501xf32>
    %28 = vector.extract_strided_slice %20 {offsets = [0, 7], sizes = [1, 501], strides = [1, 1]} : vector<1x516xf32> to vector<1x501xf32>
    %29 = vector.extract_strided_slice %20 {offsets = [0, 8], sizes = [1, 501], strides = [1, 1]} : vector<1x516xf32> to vector<1x501xf32>
    %30 = vector.extract_strided_slice %20 {offsets = [0, 9], sizes = [1, 501], strides = [1, 1]} : vector<1x516xf32> to vector<1x501xf32>
    %31 = vector.extract_strided_slice %20 {offsets = [0, 10], sizes = [1, 501], strides = [1, 1]} : vector<1x516xf32> to vector<1x501xf32>
    %32 = vector.extract_strided_slice %20 {offsets = [0, 11], sizes = [1, 501], strides = [1, 1]} : vector<1x516xf32> to vector<1x501xf32>
    %33 = vector.extract_strided_slice %20 {offsets = [0, 12], sizes = [1, 501], strides = [1, 1]} : vector<1x516xf32> to vector<1x501xf32>
    %34 = vector.extract_strided_slice %20 {offsets = [0, 13], sizes = [1, 501], strides = [1, 1]} : vector<1x516xf32> to vector<1x501xf32>
    %35 = vector.extract_strided_slice %20 {offsets = [0, 14], sizes = [1, 501], strides = [1, 1]} : vector<1x516xf32> to vector<1x501xf32>
    %36 = vector.extract_strided_slice %20 {offsets = [0, 15], sizes = [1, 501], strides = [1, 1]} : vector<1x516xf32> to vector<1x501xf32>
    %37 = tpu.concatenate %21, %22, %23, %24, %25, %26, %27, %28, %29, %30, %31, %32, %33, %34, %35, %36 in 0 : vector<1x501xf32>, vector<1x501xf32>, vector<1x501xf32>, vector<1x501xf32>, vector<1x501xf32>, vector<1x501xf32>, vector<1x501xf32>, vector<1x501xf32>, vector<1x501xf32>, vector<1x501xf32>, vector<1x501xf32>, vector<1x501xf32>, vector<1x501xf32>, vector<1x501xf32>, vector<1x501xf32>, vector<1x501xf32> -> vector<16x501xf32>
    %cst_26 = arith.constant 0.000000e+00 : f32
    %38 = vector.broadcast %cst_26 : f32 to vector<16x11xf32>
    %39 = tpu.concatenate %37, %38 in 1 : vector<16x501xf32>, vector<16x11xf32> -> vector<16x512xf32>
    %cst_27 = arith.constant 0.000000e+00 : f32
    %40 = vector.broadcast %cst_27 : f32 to vector<1x2xf32>
    %41 = tpu.concatenate %40, %18, %40 in 1 : vector<1x2xf32>, vector<1x512xf32>, vector<1x2xf32> -> vector<1x516xf32>
    %42 = vector.extract_strided_slice %41 {offsets = [0, 0], sizes = [1, 501], strides = [1, 1]} : vector<1x516xf32> to vector<1x501xf32>
    %43 = vector.extract_strided_slice %41 {offsets = [0, 1], sizes = [1, 501], strides = [1, 1]} : vector<1x516xf32> to vector<1x501xf32>
    %44 = vector.extract_strided_slice %41 {offsets = [0, 2], sizes = [1, 501], strides = [1, 1]} : vector<1x516xf32> to vector<1x501xf32>
    %45 = vector.extract_strided_slice %41 {offsets = [0, 3], sizes = [1, 501], strides = [1, 1]} : vector<1x516xf32> to vector<1x501xf32>
    %46 = vector.extract_strided_slice %41 {offsets = [0, 4], sizes = [1, 501], strides = [1, 1]} : vector<1x516xf32> to vector<1x501xf32>
    %47 = vector.extract_strided_slice %41 {offsets = [0, 5], sizes = [1, 501], strides = [1, 1]} : vector<1x516xf32> to vector<1x501xf32>
    %48 = vector.extract_strided_slice %41 {offsets = [0, 6], sizes = [1, 501], strides = [1, 1]} : vector<1x516xf32> to vector<1x501xf32>
    %49 = vector.extract_strided_slice %41 {offsets = [0, 7], sizes = [1, 501], strides = [1, 1]} : vector<1x516xf32> to vector<1x501xf32>
    %50 = vector.extract_strided_slice %41 {offsets = [0, 8], sizes = [1, 501], strides = [1, 1]} : vector<1x516xf32> to vector<1x501xf32>
    %51 = vector.extract_strided_slice %41 {offsets = [0, 9], sizes = [1, 501], strides = [1, 1]} : vector<1x516xf32> to vector<1x501xf32>
    %52 = vector.extract_strided_slice %41 {offsets = [0, 10], sizes = [1, 501], strides = [1, 1]} : vector<1x516xf32> to vector<1x501xf32>
    %53 = vector.extract_strided_slice %41 {offsets = [0, 11], sizes = [1, 501], strides = [1, 1]} : vector<1x516xf32> to vector<1x501xf32>
    %54 = vector.extract_strided_slice %41 {offsets = [0, 12], sizes = [1, 501], strides = [1, 1]} : vector<1x516xf32> to vector<1x501xf32>
    %55 = vector.extract_strided_slice %41 {offsets = [0, 13], sizes = [1, 501], strides = [1, 1]} : vector<1x516xf32> to vector<1x501xf32>
    %56 = vector.extract_strided_slice %41 {offsets = [0, 14], sizes = [1, 501], strides = [1, 1]} : vector<1x516xf32> to vector<1x501xf32>
    %57 = vector.extract_strided_slice %41 {offsets = [0, 15], sizes = [1, 501], strides = [1, 1]} : vector<1x516xf32> to vector<1x501xf32>
    %58 = tpu.concatenate %42, %43, %44, %45, %46, %47, %48, %49, %50, %51, %52, %53, %54, %55, %56, %57 in 0 : vector<1x501xf32>, vector<1x501xf32>, vector<1x501xf32>, vector<1x501xf32>, vector<1x501xf32>, vector<1x501xf32>, vector<1x501xf32>, vector<1x501xf32>, vector<1x501xf32>, vector<1x501xf32>, vector<1x501xf32>, vector<1x501xf32>, vector<1x501xf32>, vector<1x501xf32>, vector<1x501xf32>, vector<1x501xf32> -> vector<16x501xf32>
    %cst_28 = arith.constant 0.000000e+00 : f32
    %59 = vector.broadcast %cst_28 : f32 to vector<16x11xf32>
    %60 = tpu.concatenate %58, %59 in 1 : vector<16x501xf32>, vector<16x11xf32> -> vector<16x512xf32>
    %61 = tpu.concatenate %39, %60 in 1 : vector<16x512xf32>, vector<16x512xf32> -> vector<16x1024xf32>
    %cst_29 = arith.constant dense<0.000000e+00> : vector<16x1024xf32>
    %62 = tpu.matmul %3, %61, %cst_29 {dimension_numbers = #tpu.dot_dimension_numbers<[1], [0], [0], [1], [0, 0, 1, 1], [], []>} : vector<16x16xf32>, vector<16x1024xf32>, vector<16x1024xf32> -> vector<16x1024xf32>
    %63 = vector.broadcast %9 : vector<16x1xf32> to vector<16x1024xf32>
    %64 = arith.addf %62, %63 : vector<16x1024xf32>
    %65 = vector.extract_strided_slice %64 {offsets = [0, 0], sizes = [16, 1021], strides = [1, 1]} : vector<16x1024xf32> to vector<16x1021xf32>
    %66 = vector.extract_strided_slice %64 {offsets = [0, 1], sizes = [16, 1021], strides = [1, 1]} : vector<16x1024xf32> to vector<16x1021xf32>
    %67 = arith.maximumf %65, %66 : vector<16x1021xf32>
    %68 = vector.extract_strided_slice %64 {offsets = [0, 2], sizes = [16, 1021], strides = [1, 1]} : vector<16x1024xf32> to vector<16x1021xf32>
    %69 = arith.maximumf %67, %68 : vector<16x1021xf32>
    %70 = vector.extract_strided_slice %64 {offsets = [0, 3], sizes = [16, 1021], strides = [1, 1]} : vector<16x1024xf32> to vector<16x1021xf32>
    %71 = arith.maximumf %69, %70 : vector<16x1021xf32>
    %cst_30 = arith.constant dense<0.000000e+00> : vector<16x256xf32>
    %72 = tpu.matmul %71, %14, %cst_30 {dimension_numbers = #tpu.dot_dimension_numbers<[1], [0], [0], [1], [0, 0, 1, 1], [], []>} : vector<16x1021xf32>, vector<1021x256xf32>, vector<16x256xf32> -> vector<16x256xf32>
    %73 = arith.negf %72 : vector<16x256xf32>
    %74 = math.exp %73 : vector<16x256xf32>
    %cst_31 = arith.constant 1.000000e+00 : f32
    %75 = vector.broadcast %cst_31 : f32 to vector<16x256xf32>
    %76 = arith.addf %75, %74 : vector<16x256xf32>
    %77 = arith.divf %75, %76 : vector<16x256xf32>
    %78 = vector.extract_strided_slice %77 {offsets = [0, 0], sizes = [16, 125], strides = [1, 1]} : vector<16x256xf32> to vector<16x125xf32>
    %79 = vector.extract_strided_slice %77 {offsets = [0, 128], sizes = [16, 125], strides = [1, 1]} : vector<16x256xf32> to vector<16x125xf32>
    %cst_32 = arith.constant 0.000000e+00 : f32
    %80 = vector.broadcast %cst_32 : f32 to vector<16x2xf32>
    %81 = tpu.concatenate %80, %78, %80 in 1 : vector<16x2xf32>, vector<16x125xf32>, vector<16x2xf32> -> vector<16x129xf32>
    %82 = vector.extract_strided_slice %81 {offsets = [0, 0], sizes = [16, 114], strides = [1, 1]} : vector<16x129xf32> to vector<16x114xf32>
    %83 = vector.extract_strided_slice %81 {offsets = [0, 1], sizes = [16, 114], strides = [1, 1]} : vector<16x129xf32> to vector<16x114xf32>
    %84 = vector.extract_strided_slice %81 {offsets = [0, 2], sizes = [16, 114], strides = [1, 1]} : vector<16x129xf32> to vector<16x114xf32>
    %85 = vector.extract_strided_slice %81 {offsets = [0, 3], sizes = [16, 114], strides = [1, 1]} : vector<16x129xf32> to vector<16x114xf32>
    %86 = vector.extract_strided_slice %81 {offsets = [0, 4], sizes = [16, 114], strides = [1, 1]} : vector<16x129xf32> to vector<16x114xf32>
    %87 = vector.extract_strided_slice %81 {offsets = [0, 5], sizes = [16, 114], strides = [1, 1]} : vector<16x129xf32> to vector<16x114xf32>
    %88 = vector.extract_strided_slice %81 {offsets = [0, 6], sizes = [16, 114], strides = [1, 1]} : vector<16x129xf32> to vector<16x114xf32>
    %89 = vector.extract_strided_slice %81 {offsets = [0, 7], sizes = [16, 114], strides = [1, 1]} : vector<16x129xf32> to vector<16x114xf32>
    %90 = vector.extract_strided_slice %81 {offsets = [0, 8], sizes = [16, 114], strides = [1, 1]} : vector<16x129xf32> to vector<16x114xf32>
    %91 = vector.extract_strided_slice %81 {offsets = [0, 9], sizes = [16, 114], strides = [1, 1]} : vector<16x129xf32> to vector<16x114xf32>
    %92 = vector.extract_strided_slice %81 {offsets = [0, 10], sizes = [16, 114], strides = [1, 1]} : vector<16x129xf32> to vector<16x114xf32>
    %93 = vector.extract_strided_slice %81 {offsets = [0, 11], sizes = [16, 114], strides = [1, 1]} : vector<16x129xf32> to vector<16x114xf32>
    %94 = vector.extract_strided_slice %81 {offsets = [0, 12], sizes = [16, 114], strides = [1, 1]} : vector<16x129xf32> to vector<16x114xf32>
    %95 = vector.extract_strided_slice %81 {offsets = [0, 13], sizes = [16, 114], strides = [1, 1]} : vector<16x129xf32> to vector<16x114xf32>
    %96 = vector.extract_strided_slice %81 {offsets = [0, 14], sizes = [16, 114], strides = [1, 1]} : vector<16x129xf32> to vector<16x114xf32>
    %97 = vector.extract_strided_slice %81 {offsets = [0, 15], sizes = [16, 114], strides = [1, 1]} : vector<16x129xf32> to vector<16x114xf32>
    %98 = tpu.concatenate %82, %83, %84, %85, %86, %87, %88, %89, %90, %91, %92, %93, %94, %95, %96, %97 in 0 : vector<16x114xf32>, vector<16x114xf32>, vector<16x114xf32>, vector<16x114xf32>, vector<16x114xf32>, vector<16x114xf32>, vector<16x114xf32>, vector<16x114xf32>, vector<16x114xf32>, vector<16x114xf32>, vector<16x114xf32>, vector<16x114xf32>, vector<16x114xf32>, vector<16x114xf32>, vector<16x114xf32>, vector<16x114xf32> -> vector<256x114xf32>
    %cst_33 = arith.constant 0.000000e+00 : f32
    %99 = vector.broadcast %cst_33 : f32 to vector<256x14xf32>
    %100 = tpu.concatenate %98, %99 in 1 : vector<256x114xf32>, vector<256x14xf32> -> vector<256x128xf32>
    %cst_34 = arith.constant 0.000000e+00 : f32
    %101 = vector.broadcast %cst_34 : f32 to vector<16x2xf32>
    %102 = tpu.concatenate %101, %79, %101 in 1 : vector<16x2xf32>, vector<16x125xf32>, vector<16x2xf32> -> vector<16x129xf32>
    %103 = vector.extract_strided_slice %102 {offsets = [0, 0], sizes = [16, 114], strides = [1, 1]} : vector<16x129xf32> to vector<16x114xf32>
    %104 = vector.extract_strided_slice %102 {offsets = [0, 1], sizes = [16, 114], strides = [1, 1]} : vector<16x129xf32> to vector<16x114xf32>
    %105 = vector.extract_strided_slice %102 {offsets = [0, 2], sizes = [16, 114], strides = [1, 1]} : vector<16x129xf32> to vector<16x114xf32>
    %106 = vector.extract_strided_slice %102 {offsets = [0, 3], sizes = [16, 114], strides = [1, 1]} : vector<16x129xf32> to vector<16x114xf32>
    %107 = vector.extract_strided_slice %102 {offsets = [0, 4], sizes = [16, 114], strides = [1, 1]} : vector<16x129xf32> to vector<16x114xf32>
    %108 = vector.extract_strided_slice %102 {offsets = [0, 5], sizes = [16, 114], strides = [1, 1]} : vector<16x129xf32> to vector<16x114xf32>
    %109 = vector.extract_strided_slice %102 {offsets = [0, 6], sizes = [16, 114], strides = [1, 1]} : vector<16x129xf32> to vector<16x114xf32>
    %110 = vector.extract_strided_slice %102 {offsets = [0, 7], sizes = [16, 114], strides = [1, 1]} : vector<16x129xf32> to vector<16x114xf32>
    %111 = vector.extract_strided_slice %102 {offsets = [0, 8], sizes = [16, 114], strides = [1, 1]} : vector<16x129xf32> to vector<16x114xf32>
    %112 = vector.extract_strided_slice %102 {offsets = [0, 9], sizes = [16, 114], strides = [1, 1]} : vector<16x129xf32> to vector<16x114xf32>
    %113 = vector.extract_strided_slice %102 {offsets = [0, 10], sizes = [16, 114], strides = [1, 1]} : vector<16x129xf32> to vector<16x114xf32>
    %114 = vector.extract_strided_slice %102 {offsets = [0, 11], sizes = [16, 114], strides = [1, 1]} : vector<16x129xf32> to vector<16x114xf32>
    %115 = vector.extract_strided_slice %102 {offsets = [0, 12], sizes = [16, 114], strides = [1, 1]} : vector<16x129xf32> to vector<16x114xf32>
    %116 = vector.extract_strided_slice %102 {offsets = [0, 13], sizes = [16, 114], strides = [1, 1]} : vector<16x129xf32> to vector<16x114xf32>
    %117 = vector.extract_strided_slice %102 {offsets = [0, 14], sizes = [16, 114], strides = [1, 1]} : vector<16x129xf32> to vector<16x114xf32>
    %118 = vector.extract_strided_slice %102 {offsets = [0, 15], sizes = [16, 114], strides = [1, 1]} : vector<16x129xf32> to vector<16x114xf32>
    %119 = tpu.concatenate %103, %104, %105, %106, %107, %108, %109, %110, %111, %112, %113, %114, %115, %116, %117, %118 in 0 : vector<16x114xf32>, vector<16x114xf32>, vector<16x114xf32>, vector<16x114xf32>, vector<16x114xf32>, vector<16x114xf32>, vector<16x114xf32>, vector<16x114xf32>, vector<16x114xf32>, vector<16x114xf32>, vector<16x114xf32>, vector<16x114xf32>, vector<16x114xf32>, vector<16x114xf32>, vector<16x114xf32>, vector<16x114xf32> -> vector<256x114xf32>
    %cst_35 = arith.constant 0.000000e+00 : f32
    %120 = vector.broadcast %cst_35 : f32 to vector<256x14xf32>
    %121 = tpu.concatenate %119, %120 in 1 : vector<256x114xf32>, vector<256x14xf32> -> vector<256x128xf32>
    %122 = tpu.concatenate %100, %121 in 1 : vector<256x128xf32>, vector<256x128xf32> -> vector<256x256xf32>
    %cst_36 = arith.constant dense<0.000000e+00> : vector<32x256xf32>
    %123 = tpu.matmul %5, %122, %cst_36 {dimension_numbers = #tpu.dot_dimension_numbers<[1], [0], [0], [1], [0, 0, 1, 1], [], []>} : vector<32x256xf32>, vector<256x256xf32>, vector<32x256xf32> -> vector<32x256xf32>
    %124 = vector.broadcast %11 : vector<32x1xf32> to vector<32x256xf32>
    %125 = arith.addf %123, %124 : vector<32x256xf32>
    %126 = vector.extract_strided_slice %125 {offsets = [0, 0], sizes = [32, 253], strides = [1, 1]} : vector<32x256xf32> to vector<32x253xf32>
    %127 = vector.extract_strided_slice %125 {offsets = [0, 1], sizes = [32, 253], strides = [1, 1]} : vector<32x256xf32> to vector<32x253xf32>
    %128 = arith.maximumf %126, %127 : vector<32x253xf32>
    %129 = vector.extract_strided_slice %125 {offsets = [0, 2], sizes = [32, 253], strides = [1, 1]} : vector<32x256xf32> to vector<32x253xf32>
    %130 = arith.maximumf %128, %129 : vector<32x253xf32>
    %131 = vector.extract_strided_slice %125 {offsets = [0, 3], sizes = [32, 253], strides = [1, 1]} : vector<32x256xf32> to vector<32x253xf32>
    %132 = arith.maximumf %130, %131 : vector<32x253xf32>
    %cst_37 = arith.constant dense<0.000000e+00> : vector<32x256xf32>
    %133 = tpu.matmul %132, %15, %cst_37 {dimension_numbers = #tpu.dot_dimension_numbers<[1], [0], [0], [1], [0, 0, 1, 1], [], []>} : vector<32x253xf32>, vector<253x256xf32>, vector<32x256xf32> -> vector<32x256xf32>
    %134 = arith.negf %133 : vector<32x256xf32>
    %135 = math.exp %134 : vector<32x256xf32>
    %cst_38 = arith.constant 1.000000e+00 : f32
    %136 = vector.broadcast %cst_38 : f32 to vector<32x256xf32>
    %137 = arith.addf %136, %135 : vector<32x256xf32>
    %138 = arith.divf %136, %137 : vector<32x256xf32>
    %139 = vector.extract_strided_slice %138 {offsets = [0, 0], sizes = [32, 28], strides = [1, 1]} : vector<32x256xf32> to vector<32x28xf32>
    %140 = vector.extract_strided_slice %138 {offsets = [0, 128], sizes = [32, 28], strides = [1, 1]} : vector<32x256xf32> to vector<32x28xf32>
    %cst_39 = arith.constant 0.000000e+00 : f32
    %141 = vector.broadcast %cst_39 : f32 to vector<32x2xf32>
    %142 = tpu.concatenate %141, %139, %141 in 1 : vector<32x2xf32>, vector<32x28xf32>, vector<32x2xf32> -> vector<32x32xf32>
    %143 = vector.extract_strided_slice %142 {offsets = [0, 0], sizes = [32, 17], strides = [1, 1]} : vector<32x32xf32> to vector<32x17xf32>
    %144 = vector.extract_strided_slice %142 {offsets = [0, 1], sizes = [32, 17], strides = [1, 1]} : vector<32x32xf32> to vector<32x17xf32>
    %145 = vector.extract_strided_slice %142 {offsets = [0, 2], sizes = [32, 17], strides = [1, 1]} : vector<32x32xf32> to vector<32x17xf32>
    %146 = vector.extract_strided_slice %142 {offsets = [0, 3], sizes = [32, 17], strides = [1, 1]} : vector<32x32xf32> to vector<32x17xf32>
    %147 = vector.extract_strided_slice %142 {offsets = [0, 4], sizes = [32, 17], strides = [1, 1]} : vector<32x32xf32> to vector<32x17xf32>
    %148 = vector.extract_strided_slice %142 {offsets = [0, 5], sizes = [32, 17], strides = [1, 1]} : vector<32x32xf32> to vector<32x17xf32>
    %149 = vector.extract_strided_slice %142 {offsets = [0, 6], sizes = [32, 17], strides = [1, 1]} : vector<32x32xf32> to vector<32x17xf32>
    %150 = vector.extract_strided_slice %142 {offsets = [0, 7], sizes = [32, 17], strides = [1, 1]} : vector<32x32xf32> to vector<32x17xf32>
    %151 = vector.extract_strided_slice %142 {offsets = [0, 8], sizes = [32, 17], strides = [1, 1]} : vector<32x32xf32> to vector<32x17xf32>
    %152 = vector.extract_strided_slice %142 {offsets = [0, 9], sizes = [32, 17], strides = [1, 1]} : vector<32x32xf32> to vector<32x17xf32>
    %153 = vector.extract_strided_slice %142 {offsets = [0, 10], sizes = [32, 17], strides = [1, 1]} : vector<32x32xf32> to vector<32x17xf32>
    %154 = vector.extract_strided_slice %142 {offsets = [0, 11], sizes = [32, 17], strides = [1, 1]} : vector<32x32xf32> to vector<32x17xf32>
    %155 = vector.extract_strided_slice %142 {offsets = [0, 12], sizes = [32, 17], strides = [1, 1]} : vector<32x32xf32> to vector<32x17xf32>
    %156 = vector.extract_strided_slice %142 {offsets = [0, 13], sizes = [32, 17], strides = [1, 1]} : vector<32x32xf32> to vector<32x17xf32>
    %157 = vector.extract_strided_slice %142 {offsets = [0, 14], sizes = [32, 17], strides = [1, 1]} : vector<32x32xf32> to vector<32x17xf32>
    %158 = vector.extract_strided_slice %142 {offsets = [0, 15], sizes = [32, 17], strides = [1, 1]} : vector<32x32xf32> to vector<32x17xf32>
    %159 = tpu.concatenate %143, %144, %145, %146, %147, %148, %149, %150, %151, %152, %153, %154, %155, %156, %157, %158 in 0 : vector<32x17xf32>, vector<32x17xf32>, vector<32x17xf32>, vector<32x17xf32>, vector<32x17xf32>, vector<32x17xf32>, vector<32x17xf32>, vector<32x17xf32>, vector<32x17xf32>, vector<32x17xf32>, vector<32x17xf32>, vector<32x17xf32>, vector<32x17xf32>, vector<32x17xf32>, vector<32x17xf32>, vector<32x17xf32> -> vector<512x17xf32>
    %cst_40 = arith.constant 0.000000e+00 : f32
    %160 = vector.broadcast %cst_40 : f32 to vector<512x111xf32>
    %161 = tpu.concatenate %159, %160 in 1 : vector<512x17xf32>, vector<512x111xf32> -> vector<512x128xf32>
    %cst_41 = arith.constant 0.000000e+00 : f32
    %162 = vector.broadcast %cst_41 : f32 to vector<32x2xf32>
    %163 = tpu.concatenate %162, %140, %162 in 1 : vector<32x2xf32>, vector<32x28xf32>, vector<32x2xf32> -> vector<32x32xf32>
    %164 = vector.extract_strided_slice %163 {offsets = [0, 0], sizes = [32, 17], strides = [1, 1]} : vector<32x32xf32> to vector<32x17xf32>
    %165 = vector.extract_strided_slice %163 {offsets = [0, 1], sizes = [32, 17], strides = [1, 1]} : vector<32x32xf32> to vector<32x17xf32>
    %166 = vector.extract_strided_slice %163 {offsets = [0, 2], sizes = [32, 17], strides = [1, 1]} : vector<32x32xf32> to vector<32x17xf32>
    %167 = vector.extract_strided_slice %163 {offsets = [0, 3], sizes = [32, 17], strides = [1, 1]} : vector<32x32xf32> to vector<32x17xf32>
    %168 = vector.extract_strided_slice %163 {offsets = [0, 4], sizes = [32, 17], strides = [1, 1]} : vector<32x32xf32> to vector<32x17xf32>
    %169 = vector.extract_strided_slice %163 {offsets = [0, 5], sizes = [32, 17], strides = [1, 1]} : vector<32x32xf32> to vector<32x17xf32>
    %170 = vector.extract_strided_slice %163 {offsets = [0, 6], sizes = [32, 17], strides = [1, 1]} : vector<32x32xf32> to vector<32x17xf32>
    %171 = vector.extract_strided_slice %163 {offsets = [0, 7], sizes = [32, 17], strides = [1, 1]} : vector<32x32xf32> to vector<32x17xf32>
    %172 = vector.extract_strided_slice %163 {offsets = [0, 8], sizes = [32, 17], strides = [1, 1]} : vector<32x32xf32> to vector<32x17xf32>
    %173 = vector.extract_strided_slice %163 {offsets = [0, 9], sizes = [32, 17], strides = [1, 1]} : vector<32x32xf32> to vector<32x17xf32>
    %174 = vector.extract_strided_slice %163 {offsets = [0, 10], sizes = [32, 17], strides = [1, 1]} : vector<32x32xf32> to vector<32x17xf32>
    %175 = vector.extract_strided_slice %163 {offsets = [0, 11], sizes = [32, 17], strides = [1, 1]} : vector<32x32xf32> to vector<32x17xf32>
    %176 = vector.extract_strided_slice %163 {offsets = [0, 12], sizes = [32, 17], strides = [1, 1]} : vector<32x32xf32> to vector<32x17xf32>
    %177 = vector.extract_strided_slice %163 {offsets = [0, 13], sizes = [32, 17], strides = [1, 1]} : vector<32x32xf32> to vector<32x17xf32>
    %178 = vector.extract_strided_slice %163 {offsets = [0, 14], sizes = [32, 17], strides = [1, 1]} : vector<32x32xf32> to vector<32x17xf32>
    %179 = vector.extract_strided_slice %163 {offsets = [0, 15], sizes = [32, 17], strides = [1, 1]} : vector<32x32xf32> to vector<32x17xf32>
    %180 = tpu.concatenate %164, %165, %166, %167, %168, %169, %170, %171, %172, %173, %174, %175, %176, %177, %178, %179 in 0 : vector<32x17xf32>, vector<32x17xf32>, vector<32x17xf32>, vector<32x17xf32>, vector<32x17xf32>, vector<32x17xf32>, vector<32x17xf32>, vector<32x17xf32>, vector<32x17xf32>, vector<32x17xf32>, vector<32x17xf32>, vector<32x17xf32>, vector<32x17xf32>, vector<32x17xf32>, vector<32x17xf32>, vector<32x17xf32> -> vector<512x17xf32>
    %cst_42 = arith.constant 0.000000e+00 : f32
    %181 = vector.broadcast %cst_42 : f32 to vector<512x111xf32>
    %182 = tpu.concatenate %180, %181 in 1 : vector<512x17xf32>, vector<512x111xf32> -> vector<512x128xf32>
    %183 = tpu.concatenate %161, %182 in 1 : vector<512x128xf32>, vector<512x128xf32> -> vector<512x256xf32>
    %cst_43 = arith.constant dense<0.000000e+00> : vector<32x256xf32>
    %184 = tpu.matmul %7, %183, %cst_43 {dimension_numbers = #tpu.dot_dimension_numbers<[1], [0], [0], [1], [0, 0, 1, 1], [], []>} : vector<32x512xf32>, vector<512x256xf32>, vector<32x256xf32> -> vector<32x256xf32>
    %185 = vector.broadcast %13 : vector<32x1xf32> to vector<32x256xf32>
    %186 = arith.addf %184, %185 : vector<32x256xf32>
    %187 = vector.extract_strided_slice %186 {offsets = [0, 0], sizes = [32, 255], strides = [1, 1]} : vector<32x256xf32> to vector<32x255xf32>
    %188 = vector.extract_strided_slice %186 {offsets = [0, 1], sizes = [32, 255], strides = [1, 1]} : vector<32x256xf32> to vector<32x255xf32>
    %189 = arith.maximumf %187, %188 : vector<32x255xf32>
    %cst_44 = arith.constant dense<0.000000e+00> : vector<32x16xf32>
    %190 = tpu.matmul %189, %16, %cst_44 {dimension_numbers = #tpu.dot_dimension_numbers<[1], [0], [0], [1], [0, 0, 1, 1], [], []>} : vector<32x255xf32>, vector<255x16xf32>, vector<32x16xf32> -> vector<32x16xf32>
    %191 = arith.negf %190 : vector<32x16xf32>
    %192 = math.exp %191 : vector<32x16xf32>
    %cst_45 = arith.constant 1.000000e+00 : f32
    %193 = vector.broadcast %cst_45 : f32 to vector<32x16xf32>
    %194 = arith.addf %193, %192 : vector<32x16xf32>
    %195 = arith.divf %193, %194 : vector<32x16xf32>
    %196 = tpu.transpose %195, [1, 0] : vector<32x16xf32> -> vector<16x32xf32>
    %c0_46 = arith.constant 0 : index
    %c0_47 = arith.constant 0 : index
    %c0_48 = arith.constant 0 : index
    %c0_49 = arith.constant 0 : index
    %197 = vector.load %arg11[%c0_46, %c0_47, %c0_48, %c0_49] : memref<1x2x32x192xf32, #tpu.memory_space<vmem>>, vector<1x1x32x192xf32>
    %198 = vector.shape_cast %197 : vector<1x1x32x192xf32> to vector<32x192xf32>
    %c0_50 = arith.constant 0 : index
    %c0_51 = arith.constant 0 : index
    %c0_52 = arith.constant 0 : index
    %c0_53 = arith.constant 0 : index
    %199 = vector.load %arg12[%c0_50, %c0_51, %c0_52, %c0_53] : memref<1x2x64x192xf32, #tpu.memory_space<vmem>>, vector<1x1x64x192xf32>
    %200 = vector.shape_cast %199 : vector<1x1x64x192xf32> to vector<64x192xf32>
    %c0_54 = arith.constant 0 : index
    %c0_55 = arith.constant 0 : index
    %c0_56 = arith.constant 0 : index
    %c0_57 = arith.constant 0 : index
    %201 = vector.load %arg13[%c0_54, %c0_55, %c0_56, %c0_57] : memref<1x2x1x192xf32, #tpu.memory_space<vmem>>, vector<1x1x1x192xf32>
    %202 = vector.shape_cast %201 : vector<1x1x1x192xf32> to vector<1x192xf32>
    %c0_58 = arith.constant 0 : index
    %c0_59 = arith.constant 0 : index
    %c0_60 = arith.constant 0 : index
    %c0_61 = arith.constant 0 : index
    %203 = vector.load %arg14[%c0_58, %c0_59, %c0_60, %c0_61] : memref<1x2x1x64xf32, #tpu.memory_space<vmem>>, vector<1x1x1x64xf32>
    %204 = vector.shape_cast %203 : vector<1x1x1x64xf32> to vector<1x64xf32>
    %cst_62 = arith.constant dense<0.000000e+00> : vector<16x192xf32>
    %205 = tpu.matmul %196, %198, %cst_62 {dimension_numbers = #tpu.dot_dimension_numbers<[1], [0], [0], [1], [0, 0, 1, 1], [], []>} : vector<16x32xf32>, vector<32x192xf32>, vector<16x192xf32> -> vector<16x192xf32>
    %206 = vector.broadcast %202 : vector<1x192xf32> to vector<16x192xf32>
    %207 = arith.addf %205, %206 : vector<16x192xf32>
    %cst_63 = arith.constant 0.000000e+00 : f32
    %208 = vector.broadcast %cst_63 : f32 to vector<2x64xf32>
    %209 = vector.extract_strided_slice %207 {offsets = [0, 0], sizes = [2, 192], strides = [1, 1]} : vector<16x192xf32> to vector<2x192xf32>
    %cst_64 = arith.constant dense<0.000000e+00> : vector<2x192xf32>
    %210 = tpu.matmul %208, %200, %cst_64 {dimension_numbers = #tpu.dot_dimension_numbers<[1], [0], [0], [1], [0, 0, 1, 1], [], []>} : vector<2x64xf32>, vector<64x192xf32>, vector<2x192xf32> -> vector<2x192xf32>
    %211 = vector.extract_strided_slice %209 {offsets = [0, 0], sizes = [2, 64], strides = [1, 1]} : vector<2x192xf32> to vector<2x64xf32>
    %212 = vector.extract_strided_slice %210 {offsets = [0, 0], sizes = [2, 64], strides = [1, 1]} : vector<2x192xf32> to vector<2x64xf32>
    %213 = arith.addf %211, %212 : vector<2x64xf32>
    %214 = arith.negf %213 : vector<2x64xf32>
    %215 = math.exp %214 : vector<2x64xf32>
    %cst_65 = arith.constant 1.000000e+00 : f32
    %216 = vector.broadcast %cst_65 : f32 to vector<2x64xf32>
    %217 = arith.addf %216, %215 : vector<2x64xf32>
    %218 = arith.divf %216, %217 : vector<2x64xf32>
    %219 = vector.extract_strided_slice %209 {offsets = [0, 64], sizes = [2, 64], strides = [1, 1]} : vector<2x192xf32> to vector<2x64xf32>
    %220 = vector.extract_strided_slice %210 {offsets = [0, 64], sizes = [2, 64], strides = [1, 1]} : vector<2x192xf32> to vector<2x64xf32>
    %221 = arith.addf %219, %220 : vector<2x64xf32>
    %222 = arith.negf %221 : vector<2x64xf32>
    %223 = math.exp %222 : vector<2x64xf32>
    %cst_66 = arith.constant 1.000000e+00 : f32
    %224 = vector.broadcast %cst_66 : f32 to vector<2x64xf32>
    %225 = arith.addf %224, %223 : vector<2x64xf32>
    %226 = arith.divf %224, %225 : vector<2x64xf32>
    %227 = vector.extract_strided_slice %209 {offsets = [0, 128], sizes = [2, 64], strides = [1, 1]} : vector<2x192xf32> to vector<2x64xf32>
    %228 = vector.extract_strided_slice %210 {offsets = [0, 128], sizes = [2, 64], strides = [1, 1]} : vector<2x192xf32> to vector<2x64xf32>
    %229 = vector.broadcast %204 : vector<1x64xf32> to vector<2x64xf32>
    %230 = arith.addf %228, %229 : vector<2x64xf32>
    %231 = arith.mulf %218, %230 : vector<2x64xf32>
    %232 = arith.addf %227, %231 : vector<2x64xf32>
    %233 = math.tanh %232 : vector<2x64xf32>
    %cst_67 = arith.constant 1.000000e+00 : f32
    %234 = vector.broadcast %cst_67 : f32 to vector<2x64xf32>
    %235 = arith.subf %234, %226 : vector<2x64xf32>
    %236 = arith.mulf %235, %233 : vector<2x64xf32>
    %237 = arith.mulf %226, %208 : vector<2x64xf32>
    %238 = arith.addf %236, %237 : vector<2x64xf32>
    %239 = vector.extract_strided_slice %207 {offsets = [2, 0], sizes = [2, 192], strides = [1, 1]} : vector<16x192xf32> to vector<2x192xf32>
    %cst_68 = arith.constant dense<0.000000e+00> : vector<2x192xf32>
    %240 = tpu.matmul %238, %200, %cst_68 {dimension_numbers = #tpu.dot_dimension_numbers<[1], [0], [0], [1], [0, 0, 1, 1], [], []>} : vector<2x64xf32>, vector<64x192xf32>, vector<2x192xf32> -> vector<2x192xf32>
    %241 = vector.extract_strided_slice %239 {offsets = [0, 0], sizes = [2, 64], strides = [1, 1]} : vector<2x192xf32> to vector<2x64xf32>
    %242 = vector.extract_strided_slice %240 {offsets = [0, 0], sizes = [2, 64], strides = [1, 1]} : vector<2x192xf32> to vector<2x64xf32>
    %243 = arith.addf %241, %242 : vector<2x64xf32>
    %244 = arith.negf %243 : vector<2x64xf32>
    %245 = math.exp %244 : vector<2x64xf32>
    %cst_69 = arith.constant 1.000000e+00 : f32
    %246 = vector.broadcast %cst_69 : f32 to vector<2x64xf32>
    %247 = arith.addf %246, %245 : vector<2x64xf32>
    %248 = arith.divf %246, %247 : vector<2x64xf32>
    %249 = vector.extract_strided_slice %239 {offsets = [0, 64], sizes = [2, 64], strides = [1, 1]} : vector<2x192xf32> to vector<2x64xf32>
    %250 = vector.extract_strided_slice %240 {offsets = [0, 64], sizes = [2, 64], strides = [1, 1]} : vector<2x192xf32> to vector<2x64xf32>
    %251 = arith.addf %249, %250 : vector<2x64xf32>
    %252 = arith.negf %251 : vector<2x64xf32>
    %253 = math.exp %252 : vector<2x64xf32>
    %cst_70 = arith.constant 1.000000e+00 : f32
    %254 = vector.broadcast %cst_70 : f32 to vector<2x64xf32>
    %255 = arith.addf %254, %253 : vector<2x64xf32>
    %256 = arith.divf %254, %255 : vector<2x64xf32>
    %257 = vector.extract_strided_slice %239 {offsets = [0, 128], sizes = [2, 64], strides = [1, 1]} : vector<2x192xf32> to vector<2x64xf32>
    %258 = vector.extract_strided_slice %240 {offsets = [0, 128], sizes = [2, 64], strides = [1, 1]} : vector<2x192xf32> to vector<2x64xf32>
    %259 = vector.broadcast %204 : vector<1x64xf32> to vector<2x64xf32>
    %260 = arith.addf %258, %259 : vector<2x64xf32>
    %261 = arith.mulf %248, %260 : vector<2x64xf32>
    %262 = arith.addf %257, %261 : vector<2x64xf32>
    %263 = math.tanh %262 : vector<2x64xf32>
    %cst_71 = arith.constant 1.000000e+00 : f32
    %264 = vector.broadcast %cst_71 : f32 to vector<2x64xf32>
    %265 = arith.subf %264, %256 : vector<2x64xf32>
    %266 = arith.mulf %265, %263 : vector<2x64xf32>
    %267 = arith.mulf %256, %238 : vector<2x64xf32>
    %268 = arith.addf %266, %267 : vector<2x64xf32>
    %269 = vector.extract_strided_slice %207 {offsets = [4, 0], sizes = [2, 192], strides = [1, 1]} : vector<16x192xf32> to vector<2x192xf32>
    %cst_72 = arith.constant dense<0.000000e+00> : vector<2x192xf32>
    %270 = tpu.matmul %268, %200, %cst_72 {dimension_numbers = #tpu.dot_dimension_numbers<[1], [0], [0], [1], [0, 0, 1, 1], [], []>} : vector<2x64xf32>, vector<64x192xf32>, vector<2x192xf32> -> vector<2x192xf32>
    %271 = vector.extract_strided_slice %269 {offsets = [0, 0], sizes = [2, 64], strides = [1, 1]} : vector<2x192xf32> to vector<2x64xf32>
    %272 = vector.extract_strided_slice %270 {offsets = [0, 0], sizes = [2, 64], strides = [1, 1]} : vector<2x192xf32> to vector<2x64xf32>
    %273 = arith.addf %271, %272 : vector<2x64xf32>
    %274 = arith.negf %273 : vector<2x64xf32>
    %275 = math.exp %274 : vector<2x64xf32>
    %cst_73 = arith.constant 1.000000e+00 : f32
    %276 = vector.broadcast %cst_73 : f32 to vector<2x64xf32>
    %277 = arith.addf %276, %275 : vector<2x64xf32>
    %278 = arith.divf %276, %277 : vector<2x64xf32>
    %279 = vector.extract_strided_slice %269 {offsets = [0, 64], sizes = [2, 64], strides = [1, 1]} : vector<2x192xf32> to vector<2x64xf32>
    %280 = vector.extract_strided_slice %270 {offsets = [0, 64], sizes = [2, 64], strides = [1, 1]} : vector<2x192xf32> to vector<2x64xf32>
    %281 = arith.addf %279, %280 : vector<2x64xf32>
    %282 = arith.negf %281 : vector<2x64xf32>
    %283 = math.exp %282 : vector<2x64xf32>
    %cst_74 = arith.constant 1.000000e+00 : f32
    %284 = vector.broadcast %cst_74 : f32 to vector<2x64xf32>
    %285 = arith.addf %284, %283 : vector<2x64xf32>
    %286 = arith.divf %284, %285 : vector<2x64xf32>
    %287 = vector.extract_strided_slice %269 {offsets = [0, 128], sizes = [2, 64], strides = [1, 1]} : vector<2x192xf32> to vector<2x64xf32>
    %288 = vector.extract_strided_slice %270 {offsets = [0, 128], sizes = [2, 64], strides = [1, 1]} : vector<2x192xf32> to vector<2x64xf32>
    %289 = vector.broadcast %204 : vector<1x64xf32> to vector<2x64xf32>
    %290 = arith.addf %288, %289 : vector<2x64xf32>
    %291 = arith.mulf %278, %290 : vector<2x64xf32>
    %292 = arith.addf %287, %291 : vector<2x64xf32>
    %293 = math.tanh %292 : vector<2x64xf32>
    %cst_75 = arith.constant 1.000000e+00 : f32
    %294 = vector.broadcast %cst_75 : f32 to vector<2x64xf32>
    %295 = arith.subf %294, %286 : vector<2x64xf32>
    %296 = arith.mulf %295, %293 : vector<2x64xf32>
    %297 = arith.mulf %286, %268 : vector<2x64xf32>
    %298 = arith.addf %296, %297 : vector<2x64xf32>
    %299 = vector.extract_strided_slice %207 {offsets = [6, 0], sizes = [2, 192], strides = [1, 1]} : vector<16x192xf32> to vector<2x192xf32>
    %cst_76 = arith.constant dense<0.000000e+00> : vector<2x192xf32>
    %300 = tpu.matmul %298, %200, %cst_76 {dimension_numbers = #tpu.dot_dimension_numbers<[1], [0], [0], [1], [0, 0, 1, 1], [], []>} : vector<2x64xf32>, vector<64x192xf32>, vector<2x192xf32> -> vector<2x192xf32>
    %301 = vector.extract_strided_slice %299 {offsets = [0, 0], sizes = [2, 64], strides = [1, 1]} : vector<2x192xf32> to vector<2x64xf32>
    %302 = vector.extract_strided_slice %300 {offsets = [0, 0], sizes = [2, 64], strides = [1, 1]} : vector<2x192xf32> to vector<2x64xf32>
    %303 = arith.addf %301, %302 : vector<2x64xf32>
    %304 = arith.negf %303 : vector<2x64xf32>
    %305 = math.exp %304 : vector<2x64xf32>
    %cst_77 = arith.constant 1.000000e+00 : f32
    %306 = vector.broadcast %cst_77 : f32 to vector<2x64xf32>
    %307 = arith.addf %306, %305 : vector<2x64xf32>
    %308 = arith.divf %306, %307 : vector<2x64xf32>
    %309 = vector.extract_strided_slice %299 {offsets = [0, 64], sizes = [2, 64], strides = [1, 1]} : vector<2x192xf32> to vector<2x64xf32>
    %310 = vector.extract_strided_slice %300 {offsets = [0, 64], sizes = [2, 64], strides = [1, 1]} : vector<2x192xf32> to vector<2x64xf32>
    %311 = arith.addf %309, %310 : vector<2x64xf32>
    %312 = arith.negf %311 : vector<2x64xf32>
    %313 = math.exp %312 : vector<2x64xf32>
    %cst_78 = arith.constant 1.000000e+00 : f32
    %314 = vector.broadcast %cst_78 : f32 to vector<2x64xf32>
    %315 = arith.addf %314, %313 : vector<2x64xf32>
    %316 = arith.divf %314, %315 : vector<2x64xf32>
    %317 = vector.extract_strided_slice %299 {offsets = [0, 128], sizes = [2, 64], strides = [1, 1]} : vector<2x192xf32> to vector<2x64xf32>
    %318 = vector.extract_strided_slice %300 {offsets = [0, 128], sizes = [2, 64], strides = [1, 1]} : vector<2x192xf32> to vector<2x64xf32>
    %319 = vector.broadcast %204 : vector<1x64xf32> to vector<2x64xf32>
    %320 = arith.addf %318, %319 : vector<2x64xf32>
    %321 = arith.mulf %308, %320 : vector<2x64xf32>
    %322 = arith.addf %317, %321 : vector<2x64xf32>
    %323 = math.tanh %322 : vector<2x64xf32>
    %cst_79 = arith.constant 1.000000e+00 : f32
    %324 = vector.broadcast %cst_79 : f32 to vector<2x64xf32>
    %325 = arith.subf %324, %316 : vector<2x64xf32>
    %326 = arith.mulf %325, %323 : vector<2x64xf32>
    %327 = arith.mulf %316, %298 : vector<2x64xf32>
    %328 = arith.addf %326, %327 : vector<2x64xf32>
    %329 = vector.extract_strided_slice %207 {offsets = [8, 0], sizes = [2, 192], strides = [1, 1]} : vector<16x192xf32> to vector<2x192xf32>
    %cst_80 = arith.constant dense<0.000000e+00> : vector<2x192xf32>
    %330 = tpu.matmul %328, %200, %cst_80 {dimension_numbers = #tpu.dot_dimension_numbers<[1], [0], [0], [1], [0, 0, 1, 1], [], []>} : vector<2x64xf32>, vector<64x192xf32>, vector<2x192xf32> -> vector<2x192xf32>
    %331 = vector.extract_strided_slice %329 {offsets = [0, 0], sizes = [2, 64], strides = [1, 1]} : vector<2x192xf32> to vector<2x64xf32>
    %332 = vector.extract_strided_slice %330 {offsets = [0, 0], sizes = [2, 64], strides = [1, 1]} : vector<2x192xf32> to vector<2x64xf32>
    %333 = arith.addf %331, %332 : vector<2x64xf32>
    %334 = arith.negf %333 : vector<2x64xf32>
    %335 = math.exp %334 : vector<2x64xf32>
    %cst_81 = arith.constant 1.000000e+00 : f32
    %336 = vector.broadcast %cst_81 : f32 to vector<2x64xf32>
    %337 = arith.addf %336, %335 : vector<2x64xf32>
    %338 = arith.divf %336, %337 : vector<2x64xf32>
    %339 = vector.extract_strided_slice %329 {offsets = [0, 64], sizes = [2, 64], strides = [1, 1]} : vector<2x192xf32> to vector<2x64xf32>
    %340 = vector.extract_strided_slice %330 {offsets = [0, 64], sizes = [2, 64], strides = [1, 1]} : vector<2x192xf32> to vector<2x64xf32>
    %341 = arith.addf %339, %340 : vector<2x64xf32>
    %342 = arith.negf %341 : vector<2x64xf32>
    %343 = math.exp %342 : vector<2x64xf32>
    %cst_82 = arith.constant 1.000000e+00 : f32
    %344 = vector.broadcast %cst_82 : f32 to vector<2x64xf32>
    %345 = arith.addf %344, %343 : vector<2x64xf32>
    %346 = arith.divf %344, %345 : vector<2x64xf32>
    %347 = vector.extract_strided_slice %329 {offsets = [0, 128], sizes = [2, 64], strides = [1, 1]} : vector<2x192xf32> to vector<2x64xf32>
    %348 = vector.extract_strided_slice %330 {offsets = [0, 128], sizes = [2, 64], strides = [1, 1]} : vector<2x192xf32> to vector<2x64xf32>
    %349 = vector.broadcast %204 : vector<1x64xf32> to vector<2x64xf32>
    %350 = arith.addf %348, %349 : vector<2x64xf32>
    %351 = arith.mulf %338, %350 : vector<2x64xf32>
    %352 = arith.addf %347, %351 : vector<2x64xf32>
    %353 = math.tanh %352 : vector<2x64xf32>
    %cst_83 = arith.constant 1.000000e+00 : f32
    %354 = vector.broadcast %cst_83 : f32 to vector<2x64xf32>
    %355 = arith.subf %354, %346 : vector<2x64xf32>
    %356 = arith.mulf %355, %353 : vector<2x64xf32>
    %357 = arith.mulf %346, %328 : vector<2x64xf32>
    %358 = arith.addf %356, %357 : vector<2x64xf32>
    %359 = vector.extract_strided_slice %207 {offsets = [10, 0], sizes = [2, 192], strides = [1, 1]} : vector<16x192xf32> to vector<2x192xf32>
    %cst_84 = arith.constant dense<0.000000e+00> : vector<2x192xf32>
    %360 = tpu.matmul %358, %200, %cst_84 {dimension_numbers = #tpu.dot_dimension_numbers<[1], [0], [0], [1], [0, 0, 1, 1], [], []>} : vector<2x64xf32>, vector<64x192xf32>, vector<2x192xf32> -> vector<2x192xf32>
    %361 = vector.extract_strided_slice %359 {offsets = [0, 0], sizes = [2, 64], strides = [1, 1]} : vector<2x192xf32> to vector<2x64xf32>
    %362 = vector.extract_strided_slice %360 {offsets = [0, 0], sizes = [2, 64], strides = [1, 1]} : vector<2x192xf32> to vector<2x64xf32>
    %363 = arith.addf %361, %362 : vector<2x64xf32>
    %364 = arith.negf %363 : vector<2x64xf32>
    %365 = math.exp %364 : vector<2x64xf32>
    %cst_85 = arith.constant 1.000000e+00 : f32
    %366 = vector.broadcast %cst_85 : f32 to vector<2x64xf32>
    %367 = arith.addf %366, %365 : vector<2x64xf32>
    %368 = arith.divf %366, %367 : vector<2x64xf32>
    %369 = vector.extract_strided_slice %359 {offsets = [0, 64], sizes = [2, 64], strides = [1, 1]} : vector<2x192xf32> to vector<2x64xf32>
    %370 = vector.extract_strided_slice %360 {offsets = [0, 64], sizes = [2, 64], strides = [1, 1]} : vector<2x192xf32> to vector<2x64xf32>
    %371 = arith.addf %369, %370 : vector<2x64xf32>
    %372 = arith.negf %371 : vector<2x64xf32>
    %373 = math.exp %372 : vector<2x64xf32>
    %cst_86 = arith.constant 1.000000e+00 : f32
    %374 = vector.broadcast %cst_86 : f32 to vector<2x64xf32>
    %375 = arith.addf %374, %373 : vector<2x64xf32>
    %376 = arith.divf %374, %375 : vector<2x64xf32>
    %377 = vector.extract_strided_slice %359 {offsets = [0, 128], sizes = [2, 64], strides = [1, 1]} : vector<2x192xf32> to vector<2x64xf32>
    %378 = vector.extract_strided_slice %360 {offsets = [0, 128], sizes = [2, 64], strides = [1, 1]} : vector<2x192xf32> to vector<2x64xf32>
    %379 = vector.broadcast %204 : vector<1x64xf32> to vector<2x64xf32>
    %380 = arith.addf %378, %379 : vector<2x64xf32>
    %381 = arith.mulf %368, %380 : vector<2x64xf32>
    %382 = arith.addf %377, %381 : vector<2x64xf32>
    %383 = math.tanh %382 : vector<2x64xf32>
    %cst_87 = arith.constant 1.000000e+00 : f32
    %384 = vector.broadcast %cst_87 : f32 to vector<2x64xf32>
    %385 = arith.subf %384, %376 : vector<2x64xf32>
    %386 = arith.mulf %385, %383 : vector<2x64xf32>
    %387 = arith.mulf %376, %358 : vector<2x64xf32>
    %388 = arith.addf %386, %387 : vector<2x64xf32>
    %389 = vector.extract_strided_slice %207 {offsets = [12, 0], sizes = [2, 192], strides = [1, 1]} : vector<16x192xf32> to vector<2x192xf32>
    %cst_88 = arith.constant dense<0.000000e+00> : vector<2x192xf32>
    %390 = tpu.matmul %388, %200, %cst_88 {dimension_numbers = #tpu.dot_dimension_numbers<[1], [0], [0], [1], [0, 0, 1, 1], [], []>} : vector<2x64xf32>, vector<64x192xf32>, vector<2x192xf32> -> vector<2x192xf32>
    %391 = vector.extract_strided_slice %389 {offsets = [0, 0], sizes = [2, 64], strides = [1, 1]} : vector<2x192xf32> to vector<2x64xf32>
    %392 = vector.extract_strided_slice %390 {offsets = [0, 0], sizes = [2, 64], strides = [1, 1]} : vector<2x192xf32> to vector<2x64xf32>
    %393 = arith.addf %391, %392 : vector<2x64xf32>
    %394 = arith.negf %393 : vector<2x64xf32>
    %395 = math.exp %394 : vector<2x64xf32>
    %cst_89 = arith.constant 1.000000e+00 : f32
    %396 = vector.broadcast %cst_89 : f32 to vector<2x64xf32>
    %397 = arith.addf %396, %395 : vector<2x64xf32>
    %398 = arith.divf %396, %397 : vector<2x64xf32>
    %399 = vector.extract_strided_slice %389 {offsets = [0, 64], sizes = [2, 64], strides = [1, 1]} : vector<2x192xf32> to vector<2x64xf32>
    %400 = vector.extract_strided_slice %390 {offsets = [0, 64], sizes = [2, 64], strides = [1, 1]} : vector<2x192xf32> to vector<2x64xf32>
    %401 = arith.addf %399, %400 : vector<2x64xf32>
    %402 = arith.negf %401 : vector<2x64xf32>
    %403 = math.exp %402 : vector<2x64xf32>
    %cst_90 = arith.constant 1.000000e+00 : f32
    %404 = vector.broadcast %cst_90 : f32 to vector<2x64xf32>
    %405 = arith.addf %404, %403 : vector<2x64xf32>
    %406 = arith.divf %404, %405 : vector<2x64xf32>
    %407 = vector.extract_strided_slice %389 {offsets = [0, 128], sizes = [2, 64], strides = [1, 1]} : vector<2x192xf32> to vector<2x64xf32>
    %408 = vector.extract_strided_slice %390 {offsets = [0, 128], sizes = [2, 64], strides = [1, 1]} : vector<2x192xf32> to vector<2x64xf32>
    %409 = vector.broadcast %204 : vector<1x64xf32> to vector<2x64xf32>
    %410 = arith.addf %408, %409 : vector<2x64xf32>
    %411 = arith.mulf %398, %410 : vector<2x64xf32>
    %412 = arith.addf %407, %411 : vector<2x64xf32>
    %413 = math.tanh %412 : vector<2x64xf32>
    %cst_91 = arith.constant 1.000000e+00 : f32
    %414 = vector.broadcast %cst_91 : f32 to vector<2x64xf32>
    %415 = arith.subf %414, %406 : vector<2x64xf32>
    %416 = arith.mulf %415, %413 : vector<2x64xf32>
    %417 = arith.mulf %406, %388 : vector<2x64xf32>
    %418 = arith.addf %416, %417 : vector<2x64xf32>
    %419 = vector.extract_strided_slice %207 {offsets = [14, 0], sizes = [2, 192], strides = [1, 1]} : vector<16x192xf32> to vector<2x192xf32>
    %cst_92 = arith.constant dense<0.000000e+00> : vector<2x192xf32>
    %420 = tpu.matmul %418, %200, %cst_92 {dimension_numbers = #tpu.dot_dimension_numbers<[1], [0], [0], [1], [0, 0, 1, 1], [], []>} : vector<2x64xf32>, vector<64x192xf32>, vector<2x192xf32> -> vector<2x192xf32>
    %421 = vector.extract_strided_slice %419 {offsets = [0, 0], sizes = [2, 64], strides = [1, 1]} : vector<2x192xf32> to vector<2x64xf32>
    %422 = vector.extract_strided_slice %420 {offsets = [0, 0], sizes = [2, 64], strides = [1, 1]} : vector<2x192xf32> to vector<2x64xf32>
    %423 = arith.addf %421, %422 : vector<2x64xf32>
    %424 = arith.negf %423 : vector<2x64xf32>
    %425 = math.exp %424 : vector<2x64xf32>
    %cst_93 = arith.constant 1.000000e+00 : f32
    %426 = vector.broadcast %cst_93 : f32 to vector<2x64xf32>
    %427 = arith.addf %426, %425 : vector<2x64xf32>
    %428 = arith.divf %426, %427 : vector<2x64xf32>
    %429 = vector.extract_strided_slice %419 {offsets = [0, 64], sizes = [2, 64], strides = [1, 1]} : vector<2x192xf32> to vector<2x64xf32>
    %430 = vector.extract_strided_slice %420 {offsets = [0, 64], sizes = [2, 64], strides = [1, 1]} : vector<2x192xf32> to vector<2x64xf32>
    %431 = arith.addf %429, %430 : vector<2x64xf32>
    %432 = arith.negf %431 : vector<2x64xf32>
    %433 = math.exp %432 : vector<2x64xf32>
    %cst_94 = arith.constant 1.000000e+00 : f32
    %434 = vector.broadcast %cst_94 : f32 to vector<2x64xf32>
    %435 = arith.addf %434, %433 : vector<2x64xf32>
    %436 = arith.divf %434, %435 : vector<2x64xf32>
    %437 = vector.extract_strided_slice %419 {offsets = [0, 128], sizes = [2, 64], strides = [1, 1]} : vector<2x192xf32> to vector<2x64xf32>
    %438 = vector.extract_strided_slice %420 {offsets = [0, 128], sizes = [2, 64], strides = [1, 1]} : vector<2x192xf32> to vector<2x64xf32>
    %439 = vector.broadcast %204 : vector<1x64xf32> to vector<2x64xf32>
    %440 = arith.addf %438, %439 : vector<2x64xf32>
    %441 = arith.mulf %428, %440 : vector<2x64xf32>
    %442 = arith.addf %437, %441 : vector<2x64xf32>
    %443 = math.tanh %442 : vector<2x64xf32>
    %cst_95 = arith.constant 1.000000e+00 : f32
    %444 = vector.broadcast %cst_95 : f32 to vector<2x64xf32>
    %445 = arith.subf %444, %436 : vector<2x64xf32>
    %446 = arith.mulf %445, %443 : vector<2x64xf32>
    %447 = arith.mulf %436, %418 : vector<2x64xf32>
    %448 = arith.addf %446, %447 : vector<2x64xf32>
    %c0_96 = arith.constant 0 : index
    %c1 = arith.constant 1 : index
    %c0_97 = arith.constant 0 : index
    %c0_98 = arith.constant 0 : index
    %449 = vector.load %arg11[%c0_96, %c1, %c0_97, %c0_98] : memref<1x2x32x192xf32, #tpu.memory_space<vmem>>, vector<1x1x32x192xf32>
    %450 = vector.shape_cast %449 : vector<1x1x32x192xf32> to vector<32x192xf32>
    %c0_99 = arith.constant 0 : index
    %c1_100 = arith.constant 1 : index
    %c0_101 = arith.constant 0 : index
    %c0_102 = arith.constant 0 : index
    %451 = vector.load %arg12[%c0_99, %c1_100, %c0_101, %c0_102] : memref<1x2x64x192xf32, #tpu.memory_space<vmem>>, vector<1x1x64x192xf32>
    %452 = vector.shape_cast %451 : vector<1x1x64x192xf32> to vector<64x192xf32>
    %c0_103 = arith.constant 0 : index
    %c1_104 = arith.constant 1 : index
    %c0_105 = arith.constant 0 : index
    %c0_106 = arith.constant 0 : index
    %453 = vector.load %arg13[%c0_103, %c1_104, %c0_105, %c0_106] : memref<1x2x1x192xf32, #tpu.memory_space<vmem>>, vector<1x1x1x192xf32>
    %454 = vector.shape_cast %453 : vector<1x1x1x192xf32> to vector<1x192xf32>
    %c0_107 = arith.constant 0 : index
    %c1_108 = arith.constant 1 : index
    %c0_109 = arith.constant 0 : index
    %c0_110 = arith.constant 0 : index
    %455 = vector.load %arg14[%c0_107, %c1_108, %c0_109, %c0_110] : memref<1x2x1x64xf32, #tpu.memory_space<vmem>>, vector<1x1x1x64xf32>
    %456 = vector.shape_cast %455 : vector<1x1x1x64xf32> to vector<1x64xf32>
    %457 = vector.extract_strided_slice %196 {offsets = [14, 0], sizes = [2, 32], strides = [1, 1]} : vector<16x32xf32> to vector<2x32xf32>
    %cst_111 = arith.constant dense<0.000000e+00> : vector<2x192xf32>
    %458 = tpu.matmul %457, %450, %cst_111 {dimension_numbers = #tpu.dot_dimension_numbers<[1], [0], [0], [1], [0, 0, 1, 1], [], []>} : vector<2x32xf32>, vector<32x192xf32>, vector<2x192xf32> -> vector<2x192xf32>
    %459 = vector.broadcast %454 : vector<1x192xf32> to vector<2x192xf32>
    %460 = arith.addf %458, %459 : vector<2x192xf32>
    %cst_112 = arith.constant 0.000000e+00 : f32
    %461 = vector.broadcast %cst_112 : f32 to vector<2x64xf32>
    %cst_113 = arith.constant dense<0.000000e+00> : vector<2x192xf32>
    %462 = tpu.matmul %461, %452, %cst_113 {dimension_numbers = #tpu.dot_dimension_numbers<[1], [0], [0], [1], [0, 0, 1, 1], [], []>} : vector<2x64xf32>, vector<64x192xf32>, vector<2x192xf32> -> vector<2x192xf32>
    %463 = vector.extract_strided_slice %460 {offsets = [0, 0], sizes = [2, 64], strides = [1, 1]} : vector<2x192xf32> to vector<2x64xf32>
    %464 = vector.extract_strided_slice %462 {offsets = [0, 0], sizes = [2, 64], strides = [1, 1]} : vector<2x192xf32> to vector<2x64xf32>
    %465 = arith.addf %463, %464 : vector<2x64xf32>
    %466 = arith.negf %465 : vector<2x64xf32>
    %467 = math.exp %466 : vector<2x64xf32>
    %cst_114 = arith.constant 1.000000e+00 : f32
    %468 = vector.broadcast %cst_114 : f32 to vector<2x64xf32>
    %469 = arith.addf %468, %467 : vector<2x64xf32>
    %470 = arith.divf %468, %469 : vector<2x64xf32>
    %471 = vector.extract_strided_slice %460 {offsets = [0, 64], sizes = [2, 64], strides = [1, 1]} : vector<2x192xf32> to vector<2x64xf32>
    %472 = vector.extract_strided_slice %462 {offsets = [0, 64], sizes = [2, 64], strides = [1, 1]} : vector<2x192xf32> to vector<2x64xf32>
    %473 = arith.addf %471, %472 : vector<2x64xf32>
    %474 = arith.negf %473 : vector<2x64xf32>
    %475 = math.exp %474 : vector<2x64xf32>
    %cst_115 = arith.constant 1.000000e+00 : f32
    %476 = vector.broadcast %cst_115 : f32 to vector<2x64xf32>
    %477 = arith.addf %476, %475 : vector<2x64xf32>
    %478 = arith.divf %476, %477 : vector<2x64xf32>
    %479 = vector.extract_strided_slice %460 {offsets = [0, 128], sizes = [2, 64], strides = [1, 1]} : vector<2x192xf32> to vector<2x64xf32>
    %480 = vector.extract_strided_slice %462 {offsets = [0, 128], sizes = [2, 64], strides = [1, 1]} : vector<2x192xf32> to vector<2x64xf32>
    %481 = vector.broadcast %456 : vector<1x64xf32> to vector<2x64xf32>
    %482 = arith.addf %480, %481 : vector<2x64xf32>
    %483 = arith.mulf %470, %482 : vector<2x64xf32>
    %484 = arith.addf %479, %483 : vector<2x64xf32>
    %485 = math.tanh %484 : vector<2x64xf32>
    %cst_116 = arith.constant 1.000000e+00 : f32
    %486 = vector.broadcast %cst_116 : f32 to vector<2x64xf32>
    %487 = arith.subf %486, %478 : vector<2x64xf32>
    %488 = arith.mulf %487, %485 : vector<2x64xf32>
    %489 = arith.mulf %478, %461 : vector<2x64xf32>
    %490 = arith.addf %488, %489 : vector<2x64xf32>
    %491 = tpu.concatenate %448, %490 in 1 : vector<2x64xf32>, vector<2x64xf32> -> vector<2x128xf32>
    %c0_117 = arith.constant 0 : index
    %c0_118 = arith.constant 0 : index
    %c0_119 = arith.constant 0 : index
    %492 = vector.load %arg15[%c0_117, %c0_118, %c0_119] : memref<1x128x128xf32, #tpu.memory_space<vmem>>, vector<1x128x128xf32>
    %493 = vector.shape_cast %492 : vector<1x128x128xf32> to vector<128x128xf32>
    %cst_120 = arith.constant dense<0.000000e+00> : vector<2x128xf32>
    %494 = tpu.matmul %491, %493, %cst_120 {dimension_numbers = #tpu.dot_dimension_numbers<[1], [0], [0], [1], [0, 0, 1, 1], [], []>} : vector<2x128xf32>, vector<128x128xf32>, vector<2x128xf32> -> vector<2x128xf32>
    %c0_121 = arith.constant 0 : index
    %c0_122 = arith.constant 0 : index
    %c0_123 = arith.constant 0 : index
    %495 = vector.load %arg16[%c0_121, %c0_122, %c0_123] : memref<1x2x128xf32, #tpu.memory_space<vmem>>, vector<1x2x128xf32>
    %496 = vector.shape_cast %495 : vector<1x2x128xf32> to vector<2x128xf32>
    %497 = vector.shape_cast %494 : vector<2x128xf32> to vector<1x2x128xf32>
    tpu.vector_store %arg16[%c0_121, %c0_122, %c0_123], %497 {strides = array<i32>} : memref<1x2x128xf32, #tpu.memory_space<vmem>>, vector<1x2x128xf32>,
    return
  }
  func.func @transform_0(%arg0: i32) -> (i32, i32, i32) {
    %c0_i32 = arith.constant 0 : i32
    %c0_i32_0 = arith.constant 0 : i32
    %c0_i32_1 = arith.constant 0 : i32
    return %arg0, %c0_i32, %c0_i32_0 : i32, i32, i32
  }
  func.func @transform_1(%arg0: i32) -> (i32, i32, i32) {
    %c0_i32 = arith.constant 0 : i32
    %c0_i32_0 = arith.constant 0 : i32
    %c0_i32_1 = arith.constant 0 : i32
    return %arg0, %c0_i32, %c0_i32_0 : i32, i32, i32
  }
  func.func @transform_2(%arg0: i32) -> (i32, i32, i32) {
    %c0_i32 = arith.constant 0 : i32
    %c0_i32_0 = arith.constant 0 : i32
    %c0_i32_1 = arith.constant 0 : i32
    return %arg0, %c0_i32, %c0_i32_0 : i32, i32, i32
  }
  func.func @transform_3(%arg0: i32) -> (i32, i32, i32) {
    %c0_i32 = arith.constant 0 : i32
    %c0_i32_0 = arith.constant 0 : i32
    %c0_i32_1 = arith.constant 0 : i32
    return %arg0, %c0_i32, %c0_i32_0 : i32, i32, i32
  }
  func.func @transform_4(%arg0: i32) -> (i32, i32, i32) {
    %c0_i32 = arith.constant 0 : i32
    %c0_i32_0 = arith.constant 0 : i32
    %c0_i32_1 = arith.constant 0 : i32
    return %arg0, %c0_i32, %c0_i32_0 : i32, i32, i32
  }
  func.func @transform_5(%arg0: i32) -> (i32, i32, i32) {
    %c0_i32 = arith.constant 0 : i32
    %c0_i32_0 = arith.constant 0 : i32
    %c0_i32_1 = arith.constant 0 : i32
    return %arg0, %c0_i32, %c0_i32_0 : i32, i32, i32
  }
  func.func @transform_6(%arg0: i32) -> (i32, i32, i32) {
    %c0_i32 = arith.constant 0 : i32
    %c0_i32_0 = arith.constant 0 : i32
    %c0_i32_1 = arith.constant 0 : i32
    return %arg0, %c0_i32, %c0_i32_0 : i32, i32, i32
  }
  func.func @transform_7(%arg0: i32) -> (i32, i32) {
    %c0_i32 = arith.constant 0 : i32
    %c0_i32_0 = arith.constant 0 : i32
    %c0_i32_1 = arith.constant 0 : i32
    return %c0_i32, %c0_i32_0 : i32, i32
  }
  func.func @transform_8(%arg0: i32) -> (i32, i32) {
    %c0_i32 = arith.constant 0 : i32
    %c0_i32_0 = arith.constant 0 : i32
    %c0_i32_1 = arith.constant 0 : i32
    return %c0_i32, %c0_i32_0 : i32, i32
  }
  func.func @transform_9(%arg0: i32) -> (i32, i32) {
    %c0_i32 = arith.constant 0 : i32
    %c0_i32_0 = arith.constant 0 : i32
    %c0_i32_1 = arith.constant 0 : i32
    return %c0_i32, %c0_i32_0 : i32, i32
  }
  func.func @transform_10(%arg0: i32) -> (i32, i32, i32, i32) {
    %c0_i32 = arith.constant 0 : i32
    %c0_i32_0 = arith.constant 0 : i32
    %c0_i32_1 = arith.constant 0 : i32
    %c0_i32_2 = arith.constant 0 : i32
    return %arg0, %c0_i32, %c0_i32_0, %c0_i32_1 : i32, i32, i32, i32
  }
  func.func @transform_11(%arg0: i32) -> (i32, i32, i32, i32) {
    %c0_i32 = arith.constant 0 : i32
    %c0_i32_0 = arith.constant 0 : i32
    %c0_i32_1 = arith.constant 0 : i32
    %c0_i32_2 = arith.constant 0 : i32
    return %arg0, %c0_i32, %c0_i32_0, %c0_i32_1 : i32, i32, i32, i32
  }
  func.func @transform_12(%arg0: i32) -> (i32, i32, i32, i32) {
    %c0_i32 = arith.constant 0 : i32
    %c0_i32_0 = arith.constant 0 : i32
    %c0_i32_1 = arith.constant 0 : i32
    %c0_i32_2 = arith.constant 0 : i32
    return %arg0, %c0_i32, %c0_i32_0, %c0_i32_1 : i32, i32, i32, i32
  }
  func.func @transform_13(%arg0: i32) -> (i32, i32, i32, i32) {
    %c0_i32 = arith.constant 0 : i32
    %c0_i32_0 = arith.constant 0 : i32
    %c0_i32_1 = arith.constant 0 : i32
    %c0_i32_2 = arith.constant 0 : i32
    return %arg0, %c0_i32, %c0_i32_0, %c0_i32_1 : i32, i32, i32, i32
  }
  func.func @transform_14(%arg0: i32) -> (i32, i32, i32) {
    %c0_i32 = arith.constant 0 : i32
    %c0_i32_0 = arith.constant 0 : i32
    %c0_i32_1 = arith.constant 0 : i32
    return %arg0, %c0_i32, %c0_i32_0 : i32, i32, i32
  }
  func.func @transform_15(%arg0: i32) -> (i32, i32, i32) {
    %c0_i32 = arith.constant 0 : i32
    %c0_i32_0 = arith.constant 0 : i32
    %c0_i32_1 = arith.constant 0 : i32
    return %arg0, %c0_i32, %c0_i32_0 : i32, i32, i32
  }
}

</mosaic_0001>

<llo_original>
// kernel: hepps_forward.1
$region0: #{hepps_forward.1}
  #allocation0 [shape = 'u32[]', space=smem, size = 0x4, offset = 0x4, fixed_abs, tag = 'smem constant byte address 0x4 - core index']
  #allocation1 [shape = 'u32[144,128]{1,0:T(1,128)}', space=vmem, size = 0x12000, scoped, tag = 'internal scratch']
  %s0 = inlined_call_operand.vmem [shape: f32[2,2,512], index: 0, kind: input, shape index: {}]
  %s1 = inlined_call_operand.vmem [shape: f32[2,16,16], index: 1, kind: input, shape index: {}]
  %s2 = inlined_call_operand.vmem [shape: f32[2,16,1], index: 2, kind: input, shape index: {}]
  %s3 = inlined_call_operand.vmem [shape: f32[2,32,256], index: 3, kind: input, shape index: {}]
  %s4 = inlined_call_operand.vmem [shape: f32[2,32,1], index: 4, kind: input, shape index: {}]
  %s5 = inlined_call_operand.vmem [shape: f32[2,32,512], index: 5, kind: input, shape index: {}]
  %s6 = inlined_call_operand.vmem [shape: f32[2,32,1], index: 6, kind: input, shape index: {}]
  %s7 = inlined_call_operand.hbm [shape: f32[1021,256], index: 7, kind: input, shape index: {}]
  %s8 = inlined_call_operand.hbm [shape: f32[253,256], index: 8, kind: input, shape index: {}]
  %s9 = inlined_call_operand.vmem [shape: f32[255,16], index: 9, kind: input, shape index: {}]
  %s10 = inlined_call_operand.hbm [shape: f32[2,2,32,192], index: 10, kind: input, shape index: {}]
  %s11 = inlined_call_operand.hbm [shape: f32[2,2,64,192], index: 11, kind: input, shape index: {}]
  %s12 = inlined_call_operand.vmem [shape: f32[2,2,1,192], index: 12, kind: input, shape index: {}]
  %s13 = inlined_call_operand.vmem [shape: f32[2,2,1,64], index: 13, kind: input, shape index: {}]
  %s14 = inlined_call_operand.hbm [shape: f32[2,128,128], index: 14, kind: input, shape index: {}]
  %s15 = inlined_call_operand.vmem [shape: f32[2,2,128], index: 15, kind: output, shape index: {}]
  %s16 = sld [smem:[#allocation0]]
  $region113: #{hepps_forward.1} parent=0
    _
  %s18 = ssub.s32 1, %s16
  %s19 = scalar_select 0, %s18, %s16
  $region1: #{hepps_forward.1} parent=0
    #allocation2 [shape = 'u8[1048576]{0}', space=vmem, size = 0x100000, scoped, tag = 'input window, operand 7, single buffered']
    #allocation3 [shape = 's32[2]{0}', space=sflag, size = 0x8, scoped, tag = 'scoped memory for hepps_forward.1']
    #allocation4 [shape = 'u8[262144]{0}', space=vmem, size = 0x40000, scoped, tag = 'input window, operand 8, single buffered']
    #allocation5 [shape = 's32[1]{0}', space=sflag, size = 0x4, scoped, tag = 'scoped memory for hepps_forward.1']
    #allocation6 [shape = 'u8[131072]{0}', space=vmem, size = 0x20000, scoped, tag = 'input window, operand 10']
    #allocation7 [shape = 'u8[262144]{0}', space=vmem, size = 0x40000, scoped, tag = 'input window, operand 11']
    #allocation8 [shape = 'u8[131072]{0}', space=vmem, size = 0x20000, scoped, tag = 'input window, operand 14']
    %20 = vsyncpa [#allocation3], 0
    %21 = vsyncpa [#allocation5], 0
    loop: start=0, step=1, limit=4
    $region2: #{hepps_forward.1} parent=1 // loop_pre_header
      _
    $region3: #{hepps_forward.1} parent=1 // loop_header
      %s23 = sphi 0, %s27
      %p24 = scmp.ge.s32.totalorder %s23, 4
      %s33 = sphi 0, %s35
      %s36 = sphi 0, %s33
      %s37 = sphi 0, %s36
      %s53 = sphi 0, %s37
      %s59 = sphi 0, %s61
      %s62 = sphi 0, %s59
      %s63 = sphi 0, %s62
      %s79 = sphi 0, %s63
      %s85 = sphi 0, %s87
      %s88 = sphi 0, %s85
      %s89 = sphi 0, %s88
      %s105 = sphi 0, %s89
      %s111 = sphi 0, %s113
      %s114 = sphi 0, %s111
      %s115 = sphi 0, %s114
      %s131 = sphi 0, %s115
      %s137 = sphi 0, %s139
      %s140 = sphi 0, %s137
      %s141 = sphi 0, %s140
      %s157 = sphi 0, %s141
      %s163 = sphi 0, %s165
      %s166 = sphi 0, %s163
      %s167 = sphi 0, %s166
      %s183 = sphi 0, %s167
      %s189 = sphi 0, %s191
      %s192 = sphi 0, %s189
      %s193 = sphi 0, %s192
      %s209 = sphi 0, %s193
      %s213 = sphi 0, %s213
      %s215 = sphi 0, %s213
      %s216 = sphi 0, %s215
      %s230 = sphi 0, %s216
      %s234 = sphi 0, %s234
      %s236 = sphi 0, %s234
      %s237 = sphi 0, %s236
      %s251 = sphi 0, %s237
      %s255 = sphi 0, %s255
      %s257 = sphi 0, %s255
      %s258 = sphi 0, %s257
      %s272 = sphi 0, %s258
      %s278 = sphi 0, %s280
      %s281 = sphi 0, %s278
      %s282 = sphi 0, %s281
      %s298 = sphi 0, %s282
      %s304 = sphi 0, %s306
      %s307 = sphi 0, %s304
      %s308 = sphi 0, %s307
      %s324 = sphi 0, %s308
      %s330 = sphi 0, %s332
      %s333 = sphi 0, %s330
      %s334 = sphi 0, %s333
      %s350 = sphi 0, %s334
      %s356 = sphi 0, %s358
      %s359 = sphi 0, %s356
      %s360 = sphi 0, %s359
      %s376 = sphi 0, %s360
      %s382 = sphi 0, %s384
      %s385 = sphi 0, %s382
      %s386 = sphi 0, %s385
      %s402 = sphi 0, %s386
      %s408 = sphi 0, %s410
      %s411 = sphi 0, %s408
      %s412 = sphi 0, %s411
      %s428 = sphi 0, %s412
    $region4: #{hepps_forward.1} parent=1 // loop_header_branch
      %26 = sbr.rel (%p24) target = $region8
    $region5: #{hepps_forward.1} parent=1 // loop_body
      %s28 = ssub.s32 %s23, 1
      %s29 = ssub.s32 %s23, 2
      %s30 = sadd.s32 %s23, 1
      %s31 = ssub.s32 %s23, %s30
      %p32 = scmp.eq.s32.totalorder %s31, 0
      %s34 = sadd.s32 %s33, 1
      %s35 = scalar_select %p32, %s33, %s34
      %p38 = pneg %p32
      %p39 = scmp.eq.s32.totalorder %s23, 1
      %p40 = por %p38, %p39
      %p41 = scmp.ne.s32.totalorder %s33, %s36
      %p42 = scmp.eq.s32.totalorder %s23, 0
      %p43 = por %p41, %p42
      %p44 = scmp.ne.s32.totalorder %s33, %s36
      %p45 = scmp.eq.s32.totalorder %s28, 1
      %p46 = por %p44, %p45
      %p47 = scmp.ne.s32.totalorder %s36, %s37
      %p48 = scmp.eq.s32.totalorder %s28, 0
      %p49 = por %p47, %p48
      %p50 = scmp.ne.s32.totalorder %s36, %s37
      %p51 = scmp.eq.s32.totalorder %s29, 1
      %p52 = por %p50, %p51
      %p54 = scmp.ne.s32.totalorder %s37, %s53
      %p55 = scmp.eq.s32.totalorder %s29, 0
      %p56 = por %p54, %p55
      %s57 = ssub.s32 %s23, %s30
      %p58 = scmp.eq.s32.totalorder %s57, 0
      %s60 = sadd.s32 %s59, 1
      %s61 = scalar_select %p58, %s59, %s60
      %p64 = pneg %p58
      %p65 = scmp.eq.s32.totalorder %s23, 1
      %p66 = por %p64, %p65
      %p67 = scmp.ne.s32.totalorder %s59, %s62
      %p68 = scmp.eq.s32.totalorder %s23, 0
      %p69 = por %p67, %p68
      %p70 = scmp.ne.s32.totalorder %s59, %s62
      %p71 = scmp.eq.s32.totalorder %s28, 1
      %p72 = por %p70, %p71
      %p73 = scmp.ne.s32.totalorder %s62, %s63
      %p74 = scmp.eq.s32.totalorder %s28, 0
      %p75 = por %p73, %p74
      %p76 = scmp.ne.s32.totalorder %s62, %s63
      %p77 = scmp.eq.s32.totalorder %s29, 1
      %p78 = por %p76, %p77
      %p80 = scmp.ne.s32.totalorder %s63, %s79
      %p81 = scmp.eq.s32.totalorder %s29, 0
      %p82 = por %p80, %p81
      %s83 = ssub.s32 %s23, %s30
      %p84 = scmp.eq.s32.totalorder %s83, 0
      %s86 = sadd.s32 %s85, 1
      %s87 = scalar_select %p84, %s85, %s86
      %p90 = pneg %p84
      %p91 = scmp.eq.s32.totalorder %s23, 1
      %p92 = por %p90, %p91
      %p93 = scmp.ne.s32.totalorder %s85, %s88
      %p94 = scmp.eq.s32.totalorder %s23, 0
      %p95 = por %p93, %p94
      %p96 = scmp.ne.s32.totalorder %s85, %s88
      %p97 = scmp.eq.s32.totalorder %s28, 1
      %p98 = por %p96, %p97
      %p99 = scmp.ne.s32.totalorder %s88, %s89
      %p100 = scmp.eq.s32.totalorder %s28, 0
      %p101 = por %p99, %p100
      %p102 = scmp.ne.s32.totalorder %s88, %s89
      %p103 = scmp.eq.s32.totalorder %s29, 1
      %p104 = por %p102, %p103
      %p106 = scmp.ne.s32.totalorder %s89, %s105
      %p107 = scmp.eq.s32.totalorder %s29, 0
      %p108 = por %p106, %p107
      %s109 = ssub.s32 %s23, %s30
      %p110 = scmp.eq.s32.totalorder %s109, 0
      %s112 = sadd.s32 %s111, 1
      %s113 = scalar_select %p110, %s111, %s112
      %p116 = pneg %p110
      %p117 = scmp.eq.s32.totalorder %s23, 1
      %p118 = por %p116, %p117
      %p119 = scmp.ne.s32.totalorder %s111, %s114
      %p120 = scmp.eq.s32.totalorder %s23, 0
      %p121 = por %p119, %p120
      %p122 = scmp.ne.s32.totalorder %s111, %s114
      %p123 = scmp.eq.s32.totalorder %s28, 1
      %p124 = por %p122, %p123
      %p125 = scmp.ne.s32.totalorder %s114, %s115
      %p126 = scmp.eq.s32.totalorder %s28, 0
      %p127 = por %p125, %p126
      %p128 = scmp.ne.s32.totalorder %s114, %s115
      %p129 = scmp.eq.s32.totalorder %s29, 1
      %p130 = por %p128, %p129
      %p132 = scmp.ne.s32.totalorder %s115, %s131
      %p133 = scmp.eq.s32.totalorder %s29, 0
      %p134 = por %p132, %p133
      %s135 = ssub.s32 %s23, %s30
      %p136 = scmp.eq.s32.totalorder %s135, 0
      %s138 = sadd.s32 %s137, 1
      %s139 = scalar_select %p136, %s137, %s138
      %p142 = pneg %p136
      %p143 = scmp.eq.s32.totalorder %s23, 1
      %p144 = por %p142, %p143
      %p145 = scmp.ne.s32.totalorder %s137, %s140
      %p146 = scmp.eq.s32.totalorder %s23, 0
      %p147 = por %p145, %p146
      %p148 = scmp.ne.s32.totalorder %s137, %s140
      %p149 = scmp.eq.s32.totalorder %s28, 1
      %p150 = por %p148, %p149
      %p151 = scmp.ne.s32.totalorder %s140, %s141
      %p152 = scmp.eq.s32.totalorder %s28, 0
      %p153 = por %p151, %p152
      %p154 = scmp.ne.s32.totalorder %s140, %s141
      %p155 = scmp.eq.s32.totalorder %s29, 1
      %p156 = por %p154, %p155
      %p158 = scmp.ne.s32.totalorder %s141, %s157
      %p159 = scmp.eq.s32.totalorder %s29, 0
      %p160 = por %p158, %p159
      %s161 = ssub.s32 %s23, %s30
      %p162 = scmp.eq.s32.totalorder %s161, 0
      %s164 = sadd.s32 %s163, 1
      %s165 = scalar_select %p162, %s163, %s164
      %p168 = pneg %p162
      %p169 = scmp.eq.s32.totalorder %s23, 1
      %p170 = por %p168, %p169
      %p171 = scmp.ne.s32.totalorder %s163, %s166
      %p172 = scmp.eq.s32.totalorder %s23, 0
      %p173 = por %p171, %p172
      %p174 = scmp.ne.s32.totalorder %s163, %s166
      %p175 = scmp.eq.s32.totalorder %s28, 1
      %p176 = por %p174, %p175
      %p177 = scmp.ne.s32.totalorder %s166, %s167
      %p178 = scmp.eq.s32.totalorder %s28, 0
      %p179 = por %p177, %p178
      %p180 = scmp.ne.s32.totalorder %s166, %s167
      %p181 = scmp.eq.s32.totalorder %s29, 1
      %p182 = por %p180, %p181
      %p184 = scmp.ne.s32.totalorder %s167, %s183
      %p185 = scmp.eq.s32.totalorder %s29, 0
      %p186 = por %p184, %p185
      %s187 = ssub.s32 %s23, %s30
      %p188 = scmp.eq.s32.totalorder %s187, 0
      %s190 = sadd.s32 %s189, 1
      %s191 = scalar_select %p188, %s189, %s190
      %p194 = pneg %p188
      %p195 = scmp.eq.s32.totalorder %s23, 1
      %p196 = por %p194, %p195
      %p197 = scmp.ne.s32.totalorder %s189, %s192
      %p198 = scmp.eq.s32.totalorder %s23, 0
      %p199 = por %p197, %p198
      %p200 = scmp.ne.s32.totalorder %s189, %s192
      %p201 = scmp.eq.s32.totalorder %s28, 1
      %p202 = por %p200, %p201
      %p203 = scmp.ne.s32.totalorder %s192, %s193
      %p204 = scmp.eq.s32.totalorder %s28, 0
      %p205 = por %p203, %p204
      %p206 = scmp.ne.s32.totalorder %s192, %s193
      %p207 = scmp.eq.s32.totalorder %s29, 1
      %p208 = por %p206, %p207
      %p210 = scmp.ne.s32.totalorder %s193, %s209
      %p211 = scmp.eq.s32.totalorder %s29, 0
      %p212 = por %p210, %p211
      %s214 = sadd.s32 %s213, 1
      %p217 = scmp.eq.s32.totalorder %s23, 1
      %p218 = scmp.ne.s32.totalorder %s213, %s215
      %p219 = scmp.eq.s32.totalorder %s23, 0
      %p220 = por %p218, %p219
      %p221 = scmp.ne.s32.totalorder %s213, %s215
      %p222 = scmp.eq.s32.totalorder %s28, 1
      %p223 = por %p221, %p222
      %p224 = scmp.ne.s32.totalorder %s215, %s216
      %p225 = scmp.eq.s32.totalorder %s28, 0
      %p226 = por %p224, %p225
      %p227 = scmp.ne.s32.totalorder %s215, %s216
      %p228 = scmp.eq.s32.totalorder %s29, 1
      %p229 = por %p227, %p228
      %p231 = scmp.ne.s32.totalorder %s216, %s230
      %p232 = scmp.eq.s32.totalorder %s29, 0
      %p233 = por %p231, %p232
      %s235 = sadd.s32 %s234, 1
      %p238 = scmp.eq.s32.totalorder %s23, 1
      %p239 = scmp.ne.s32.totalorder %s234, %s236
      %p240 = scmp.eq.s32.totalorder %s23, 0
      %p241 = por %p239, %p240
      %p242 = scmp.ne.s32.totalorder %s234, %s236
      %p243 = scmp.eq.s32.totalorder %s28, 1
      %p244 = por %p242, %p243
      %p245 = scmp.ne.s32.totalorder %s236, %s237
      %p246 = scmp.eq.s32.totalorder %s28, 0
      %p247 = por %p245, %p246
      %p248 = scmp.ne.s32.totalorder %s236, %s237
      %p249 = scmp.eq.s32.totalorder %s29, 1
      %p250 = por %p248, %p249
      %p252 = scmp.ne.s32.totalorder %s237, %s251
      %p253 = scmp.eq.s32.totalorder %s29, 0
      %p254 = por %p252, %p253
      %s256 = sadd.s32 %s255, 1
      %p259 = scmp.eq.s32.totalorder %s23, 1
      %p260 = scmp.ne.s32.totalorder %s255, %s257
      %p261 = scmp.eq.s32.totalorder %s23, 0
      %p262 = por %p260, %p261
      %p263 = scmp.ne.s32.totalorder %s255, %s257
      %p264 = scmp.eq.s32.totalorder %s28, 1
      %p265 = por %p263, %p264
      %p266 = scmp.ne.s32.totalorder %s257, %s258
      %p267 = scmp.eq.s32.totalorder %s28, 0
      %p268 = por %p266, %p267
      %p269 = scmp.ne.s32.totalorder %s257, %s258
      %p270 = scmp.eq.s32.totalorder %s29, 1
      %p271 = por %p269, %p270
      %p273 = scmp.ne.s32.totalorder %s258, %s272
      %p274 = scmp.eq.s32.totalorder %s29, 0
      %p275 = por %p273, %p274
      %s276 = ssub.s32 %s23, %s30
      %p277 = scmp.eq.s32.totalorder %s276, 0
      %s279 = sadd.s32 %s278, 1
      %s280 = scalar_select %p277, %s278, %s279
      %p283 = pneg %p277
      %p284 = scmp.eq.s32.totalorder %s23, 1
      %p285 = por %p283, %p284
      %p286 = scmp.ne.s32.totalorder %s278, %s281
      %p287 = scmp.eq.s32.totalorder %s23, 0
      %p288 = por %p286, %p287
      %p289 = scmp.ne.s32.totalorder %s278, %s281
      %p290 = scmp.eq.s32.totalorder %s28, 1
      %p291 = por %p289, %p290
      %p292 = scmp.ne.s32.totalorder %s281, %s282
      %p293 = scmp.eq.s32.totalorder %s28, 0
      %p294 = por %p292, %p293
      %p295 = scmp.ne.s32.totalorder %s281, %s282
      %p296 = scmp.eq.s32.totalorder %s29, 1
      %p297 = por %p295, %p296
      %p299 = scmp.ne.s32.totalorder %s282, %s298
      %p300 = scmp.eq.s32.totalorder %s29, 0
      %p301 = por %p299, %p300
      %s302 = ssub.s32 %s23, %s30
      %p303 = scmp.eq.s32.totalorder %s302, 0
      %s305 = sadd.s32 %s304, 1
      %s306 = scalar_select %p303, %s304, %s305
      %p309 = pneg %p303
      %p310 = scmp.eq.s32.totalorder %s23, 1
      %p311 = por %p309, %p310
      %p312 = scmp.ne.s32.totalorder %s304, %s307
      %p313 = scmp.eq.s32.totalorder %s23, 0
      %p314 = por %p312, %p313
      %p315 = scmp.ne.s32.totalorder %s304, %s307
      %p316 = scmp.eq.s32.totalorder %s28, 1
      %p317 = por %p315, %p316
      %p318 = scmp.ne.s32.totalorder %s307, %s308
      %p319 = scmp.eq.s32.totalorder %s28, 0
      %p320 = por %p318, %p319
      %p321 = scmp.ne.s32.totalorder %s307, %s308
      %p322 = scmp.eq.s32.totalorder %s29, 1
      %p323 = por %p321, %p322
      %p325 = scmp.ne.s32.totalorder %s308, %s324
      %p326 = scmp.eq.s32.totalorder %s29, 0
      %p327 = por %p325, %p326
      %s328 = ssub.s32 %s23, %s30
      %p329 = scmp.eq.s32.totalorder %s328, 0
      %s331 = sadd.s32 %s330, 1
      %s332 = scalar_select %p329, %s330, %s331
      %p335 = pneg %p329
      %p336 = scmp.eq.s32.totalorder %s23, 1
      %p337 = por %p335, %p336
      %p338 = scmp.ne.s32.totalorder %s330, %s333
      %p339 = scmp.eq.s32.totalorder %s23, 0
      %p340 = por %p338, %p339
      %p341 = scmp.ne.s32.totalorder %s330, %s333
      %p342 = scmp.eq.s32.totalorder %s28, 1
      %p343 = por %p341, %p342
      %p344 = scmp.ne.s32.totalorder %s333, %s334
      %p345 = scmp.eq.s32.totalorder %s28, 0
      %p346 = por %p344, %p345
      %p347 = scmp.ne.s32.totalorder %s333, %s334
      %p348 = scmp.eq.s32.totalorder %s29, 1
      %p349 = por %p347, %p348
      %p351 = scmp.ne.s32.totalorder %s334, %s350
      %p352 = scmp.eq.s32.totalorder %s29, 0
      %p353 = por %p351, %p352
      %s354 = ssub.s32 %s23, %s30
      %p355 = scmp.eq.s32.totalorder %s354, 0
      %s357 = sadd.s32 %s356, 1
      %s358 = scalar_select %p355, %s356, %s357
      %p361 = pneg %p355
      %p362 = scmp.eq.s32.totalorder %s23, 1
      %p363 = por %p361, %p362
      %p364 = scmp.ne.s32.totalorder %s356, %s359
      %p365 = scmp.eq.s32.totalorder %s23, 0
      %p366 = por %p364, %p365
      %p367 = scmp.ne.s32.totalorder %s356, %s359
      %p368 = scmp.eq.s32.totalorder %s28, 1
      %p369 = por %p367, %p368
      %p370 = scmp.ne.s32.totalorder %s359, %s360
      %p371 = scmp.eq.s32.totalorder %s28, 0
      %p372 = por %p370, %p371
      %p373 = scmp.ne.s32.totalorder %s359, %s360
      %p374 = scmp.eq.s32.totalorder %s29, 1
      %p375 = por %p373, %p374
      %p377 = scmp.ne.s32.totalorder %s360, %s376
      %p378 = scmp.eq.s32.totalorder %s29, 0
      %p379 = por %p377, %p378
      %s380 = ssub.s32 %s23, %s30
      %p381 = scmp.eq.s32.totalorder %s380, 0
      %s383 = sadd.s32 %s382, 1
      %s384 = scalar_select %p381, %s382, %s383
      %p387 = pneg %p381
      %p388 = scmp.eq.s32.totalorder %s23, 1
      %p389 = por %p387, %p388
      %p390 = scmp.ne.s32.totalorder %s382, %s385
      %p391 = scmp.eq.s32.totalorder %s23, 0
      %p392 = por %p390, %p391
      %p393 = scmp.ne.s32.totalorder %s382, %s385
      %p394 = scmp.eq.s32.totalorder %s28, 1
      %p395 = por %p393, %p394
      %p396 = scmp.ne.s32.totalorder %s385, %s386
      %p397 = scmp.eq.s32.totalorder %s28, 0
      %p398 = por %p396, %p397
      %p399 = scmp.ne.s32.totalorder %s385, %s386
      %p400 = scmp.eq.s32.totalorder %s29, 1
      %p401 = por %p399, %p400
      %p403 = scmp.ne.s32.totalorder %s386, %s402
      %p404 = scmp.eq.s32.totalorder %s29, 0
      %p405 = por %p403, %p404
      %s406 = ssub.s32 %s23, %s30
      %p407 = scmp.eq.s32.totalorder %s406, 0
      %s409 = sadd.s32 %s408, 1
      %s410 = scalar_select %p407, %s408, %s409
      %p413 = pneg %p407
      %p414 = scmp.eq.s32.totalorder %s23, 1
      %p415 = por %p413, %p414
      %p416 = scmp.ne.s32.totalorder %s408, %s411
      %p417 = scmp.eq.s32.totalorder %s23, 0
      %p418 = por %p416, %p417
      %p419 = scmp.ne.s32.totalorder %s408, %s411
      %p420 = scmp.eq.s32.totalorder %s28, 1
      %p421 = por %p419, %p420
      %p422 = scmp.ne.s32.totalorder %s411, %s412
      %p423 = scmp.eq.s32.totalorder %s28, 0
      %p424 = por %p422, %p423
      %p425 = scmp.ne.s32.totalorder %s411, %s412
      %p426 = scmp.eq.s32.totalorder %s29, 1
      %p427 = por %p425, %p426
      %p429 = scmp.ne.s32.totalorder %s412, %s428
      %p430 = scmp.eq.s32.totalorder %s29, 0
      %p431 = por %p429, %p430
      %p432 = scmp.le.s32.totalorder 1, %s23
      %p433 = scmp.lt.s32.totalorder %s23, 3
      %p434 = pnand %p432, %p433
      %p435 = pneg %p434
      // Predicated region
      $region9: #{hepps_forward.1} parent=5 // pred_check
        _
      $region10: #{hepps_forward.1} parent=5 // pred_check_branch
        %437 = sbr.rel (%p434) target = $region12
      $region11: #{hepps_forward.1} parent=5 // pred_region
        %s438 = ssub.s32 %s23, 1
        // Predicated region
        $region13: #{hepps_forward.1} parent=11 // pred_check
          %p439 = pneg %p226
        $region14: #{hepps_forward.1} parent=11 // pred_check_branch
          %441 = sbr.rel (%p439) target = $region16
        $region15: #{hepps_forward.1} parent=11 // pred_region
          %s443 = ssub.s32 32768, 32768
          %444 = vsyncadd [#allocation3], %s443
          %s445 = sshll.u32 [#allocation2], 4
          %s446 = int_to_ptr.vmem [resolvable:$true] %s445
          %451 = dma.hbm_to_vmem [thread:$0]  %s7, 32768, %s446, [#allocation3], 256, 256, 16
        $region16: #{hepps_forward.1} parent=11 // pred_fallthru
          _
        // Predicated region
        $region17: #{hepps_forward.1} parent=11 // pred_check
          %p452 = pneg %p247
        $region18: #{hepps_forward.1} parent=11 // pred_check_branch
          %454 = sbr.rel (%p452) target = $region20
        $region19: #{hepps_forward.1} parent=11 // pred_region
          %s456 = ssub.s32 8192, 8192
          %457 = vsyncadd [#allocation5], %s456
          %s458 = sshll.u32 [#allocation4], 4
          %s459 = int_to_ptr.vmem [resolvable:$true] %s458
          %464 = dma.hbm_to_vmem [thread:$0]  %s8, 8192, %s459, [#allocation5], 256, 256, 16
        $region20: #{hepps_forward.1} parent=11 // pred_fallthru
          _
        // Predicated region
        $region21: #{hepps_forward.1} parent=11 // pred_check
          %p465 = pneg %p268
        $region22: #{hepps_forward.1} parent=11 // pred_check_branch
          %467 = sbr.rel (%p465) target = $region24
        $region23: #{hepps_forward.1} parent=11 // pred_region
          _
        $region24: #{hepps_forward.1} parent=11 // pred_fallthru
          _
      $region12: #{hepps_forward.1} parent=5 // pred_fallthru
        _
      %p468 = scmp.lt.s32.totalorder %s23, 2
      // Predicated region
      $region25: #{hepps_forward.1} parent=5 // pred_check
        %p469 = pneg %p468
      $region26: #{hepps_forward.1} parent=5 // pred_check_branch
        %471 = sbr.rel (%p469) target = $region28
      $region27: #{hepps_forward.1} parent=5 // pred_region
        // Predicated region
        $region29: #{hepps_forward.1} parent=27 // pred_check
          %p472 = pneg %p43
        $region30: #{hepps_forward.1} parent=27 // pred_check_branch
          %474 = sbr.rel (%p472) target = $region32
        $region31: #{hepps_forward.1} parent=27 // pred_region
          %p475 = scmp.lt.s32.totalorder %s23, 1
          %s476 = scalar_select %p475, %s23, 1
          %s477 = smul.addr %s476, 4
          %s478 = smul.addr %s477, 2
          %s479 = scalar_lea.vmem %s0, %s478
        $region32: #{hepps_forward.1} parent=27 // pred_fallthru
          _
        // Predicated region
        $region33: #{hepps_forward.1} parent=27 // pred_check
          %p480 = pneg %p69
        $region34: #{hepps_forward.1} parent=27 // pred_check_branch
          %482 = sbr.rel (%p480) target = $region36
        $region35: #{hepps_forward.1} parent=27 // pred_region
          %p483 = scmp.lt.s32.totalorder %s23, 1
          %s484 = scalar_select %p483, %s23, 1
          %s485 = smul.addr %s484, 2
          %s486 = smul.addr %s485, 8
          %s487 = scalar_lea.vmem %s1, %s486
        $region36: #{hepps_forward.1} parent=27 // pred_fallthru
          _
        // Predicated region
        $region37: #{hepps_forward.1} parent=27 // pred_check
          %p488 = pneg %p95
        $region38: #{hepps_forward.1} parent=27 // pred_check_branch
          %490 = sbr.rel (%p488) target = $region40
        $region39: #{hepps_forward.1} parent=27 // pred_region
          %p491 = scmp.lt.s32.totalorder %s23, 1
          %s492 = scalar_select %p491, %s23, 1
          %s493 = smul.addr %s492, 2
          %s494 = smul.addr %s493, 8
          %s495 = scalar_lea.vmem %s2, %s494
        $region40: #{hepps_forward.1} parent=27 // pred_fallthru
          _
        // Predicated region
        $region41: #{hepps_forward.1} parent=27 // pred_check
          %p496 = pneg %p121
        $region42: #{hepps_forward.1} parent=27 // pred_check_branch
          %498 = sbr.rel (%p496) target = $region44
        $region43: #{hepps_forward.1} parent=27 // pred_region
          %p499 = scmp.lt.s32.totalorder %s23, 1
          %s500 = scalar_select %p499, %s23, 1
          %s501 = smul.addr %s500, 8
          %s502 = smul.addr %s501, 8
          %s503 = scalar_lea.vmem %s3, %s502
        $region44: #{hepps_forward.1} parent=27 // pred_fallthru
          _
        // Predicated region
        $region45: #{hepps_forward.1} parent=27 // pred_check
          %p504 = pneg %p147
        $region46: #{hepps_forward.1} parent=27 // pred_check_branch
          %506 = sbr.rel (%p504) target = $region48
        $region47: #{hepps_forward.1} parent=27 // pred_region
          %p507 = scmp.lt.s32.totalorder %s23, 1
          %s508 = scalar_select %p507, %s23, 1
          %s509 = smul.addr %s508, 4
          %s510 = smul.addr %s509, 8
          %s511 = scalar_lea.vmem %s4, %s510
        $region48: #{hepps_forward.1} parent=27 // pred_fallthru
          _
        // Predicated region
        $region49: #{hepps_forward.1} parent=27 // pred_check
          %p512 = pneg %p173
        $region50: #{hepps_forward.1} parent=27 // pred_check_branch
          %514 = sbr.rel (%p512) target = $region52
        $region51: #{hepps_forward.1} parent=27 // pred_region
          %p515 = scmp.lt.s32.totalorder %s23, 1
          %s516 = scalar_select %p515, %s23, 1
          %s517 = smul.addr %s516, 16
          %s518 = smul.addr %s517, 8
          %s519 = scalar_lea.vmem %s5, %s518
        $region52: #{hepps_forward.1} parent=27 // pred_fallthru
          _
        // Predicated region
        $region53: #{hepps_forward.1} parent=27 // pred_check
          %p520 = pneg %p199
        $region54: #{hepps_forward.1} parent=27 // pred_check_branch
          %522 = sbr.rel (%p520) target = $region56
        $region55: #{hepps_forward.1} parent=27 // pred_region
          %p523 = scmp.lt.s32.totalorder %s23, 1
          %s524 = scalar_select %p523, %s23, 1
          %s525 = smul.addr %s524, 4
          %s526 = smul.addr %s525, 8
          %s527 = scalar_lea.vmem %s6, %s526
        $region56: #{hepps_forward.1} parent=27 // pred_fallthru
          _
        // Predicated region
        $region57: #{hepps_forward.1} parent=27 // pred_check
          %p528 = pneg %p288
        $region58: #{hepps_forward.1} parent=27 // pred_check_branch
          %530 = sbr.rel (%p528) target = $region60
        $region59: #{hepps_forward.1} parent=27 // pred_region
          %s531 = sand.u32 %s23, 1
          %s532 = scalar_lea.sflag [#allocation3], %s531
          %s533 = sand.u32 %s278, 1
          %s534 = smul.addr %s533, 128
          %s535 = scalar_lea.vmem [#allocation6], %s534
          %s537 = ssub.s32 2048, 2048
          %538 = vsyncadd %s532, %s537
          %s539 = smul.addr %s23, 16
          %s540 = smul.addr %s539, 128
          %s541 = scalar_lea.hbm %s10, %s540
          %s542 = sshll.u32 %s535, 4
          %s543 = int_to_ptr.vmem [resolvable:$true] %s542
          %548 = dma.hbm_to_vmem [thread:$0]  %s541, 2048, %s543, %s532, 256, 256, 16
        $region60: #{hepps_forward.1} parent=27 // pred_fallthru
          _
        // Predicated region
        $region61: #{hepps_forward.1} parent=27 // pred_check
          %p549 = pneg %p314
        $region62: #{hepps_forward.1} parent=27 // pred_check_branch
          %551 = sbr.rel (%p549) target = $region64
        $region63: #{hepps_forward.1} parent=27 // pred_region
          %s552 = sand.u32 %s23, 1
          %s553 = scalar_lea.sflag [#allocation3], %s552
          %s554 = sand.u32 %s304, 1
          %s555 = smul.addr %s554, 256
          %s556 = scalar_lea.vmem [#allocation7], %s555
          %s558 = ssub.s32 4096, 4096
          %559 = vsyncadd %s553, %s558
          %s560 = smul.addr %s23, 32
          %s561 = smul.addr %s560, 128
          %s562 = scalar_lea.hbm %s11, %s561
          %s563 = sshll.u32 %s556, 4
          %s564 = int_to_ptr.vmem [resolvable:$true] %s563
          %569 = dma.hbm_to_vmem [thread:$0]  %s562, 4096, %s564, %s553, 256, 256, 16
        $region64: #{hepps_forward.1} parent=27 // pred_fallthru
          _
        // Predicated region
        $region65: #{hepps_forward.1} parent=27 // pred_check
          %p570 = pneg %p340
        $region66: #{hepps_forward.1} parent=27 // pred_check_branch
          %572 = sbr.rel (%p570) target = $region68
        $region67: #{hepps_forward.1} parent=27 // pred_region
          %p573 = scmp.lt.s32.totalorder %s23, 1
          %s574 = scalar_select %p573, %s23, 1
          %s575 = smul.addr %s574, 4
          %s576 = scalar_lea.vmem %s12, %s575
        $region68: #{hepps_forward.1} parent=27 // pred_fallthru
          _
        // Predicated region
        $region69: #{hepps_forward.1} parent=27 // pred_check
          %p577 = pneg %p366
        $region70: #{hepps_forward.1} parent=27 // pred_check_branch
          %579 = sbr.rel (%p577) target = $region72
        $region71: #{hepps_forward.1} parent=27 // pred_region
          %p580 = scmp.lt.s32.totalorder %s23, 1
          %s581 = scalar_select %p580, %s23, 1
          %s582 = smul.addr %s581, 2
          %s583 = scalar_lea.vmem %s13, %s582
        $region72: #{hepps_forward.1} parent=27 // pred_fallthru
          _
        // Predicated region
        $region73: #{hepps_forward.1} parent=27 // pred_check
          %p584 = pneg %p392
        $region74: #{hepps_forward.1} parent=27 // pred_check_branch
          %586 = sbr.rel (%p584) target = $region76
        $region75: #{hepps_forward.1} parent=27 // pred_region
          %s587 = sand.u32 %s23, 1
          %s588 = scalar_lea.sflag [#allocation3], %s587
          %s589 = sand.u32 %s382, 1
          %s590 = smul.addr %s589, 128
          %s591 = scalar_lea.vmem [#allocation8], %s590
          %s593 = ssub.s32 2048, 2048
          %594 = vsyncadd %s588, %s593
          %s595 = smul.addr %s23, 16
          %s596 = smul.addr %s595, 128
          %s597 = scalar_lea.hbm %s14, %s596
          %s598 = sshll.u32 %s591, 4
          %s599 = int_to_ptr.vmem [resolvable:$true] %s598
          %604 = dma.hbm_to_vmem [thread:$0]  %s597, 2048, %s599, %s588, 128, 128, 8
        $region76: #{hepps_forward.1} parent=27 // pred_fallthru
          _
      $region28: #{hepps_forward.1} parent=5 // pred_fallthru
        _
      %p605 = scmp.le.s32.totalorder 1, %s23
      %p606 = scmp.lt.s32.totalorder %s23, 3
      %p607 = pnand %p605, %p606
      %p608 = pneg %p607
      // Predicated region
      $region77: #{hepps_forward.1} parent=5 // pred_check
        _
      $region78: #{hepps_forward.1} parent=5 // pred_check_branch
        %610 = sbr.rel (%p607) target = $region80
      $region79: #{hepps_forward.1} parent=5 // pred_region
        %s611 = ssub.s32 %s23, 1
        // Predicated region
        $region81: #{hepps_forward.1} parent=79 // pred_check
          %p612 = pneg %p226
        $region82: #{hepps_forward.1} parent=79 // pred_check_branch
          %614 = sbr.rel (%p612) target = $region84
        $region83: #{hepps_forward.1} parent=79 // pred_region
          %615 = dma.done [#allocation3], 32768
        $region84: #{hepps_forward.1} parent=79 // pred_fallthru
          _
        // Predicated region
        $region85: #{hepps_forward.1} parent=79 // pred_check
          %p616 = pneg %p247
        $region86: #{hepps_forward.1} parent=79 // pred_check_branch
          %618 = sbr.rel (%p616) target = $region88
        $region87: #{hepps_forward.1} parent=79 // pred_region
          %619 = dma.done [#allocation5], 8192
        $region88: #{hepps_forward.1} parent=79 // pred_fallthru
          _
        %s620 = sand.u32 %s28, 1
        %s621 = scalar_lea.sflag [#allocation3], %s620
        %s622 = sand.u32 %s281, 1
        %s623 = smul.addr %s622, 128
        %s624 = scalar_lea.vmem [#allocation6], %s623
        // Predicated region
        $region89: #{hepps_forward.1} parent=79 // pred_check
          %p625 = pneg %p294
        $region90: #{hepps_forward.1} parent=79 // pred_check_branch
          %627 = sbr.rel (%p625) target = $region92
        $region91: #{hepps_forward.1} parent=79 // pred_region
          %628 = dma.done %s621, 2048
        $region92: #{hepps_forward.1} parent=79 // pred_fallthru
          _
        %s629 = sand.u32 %s28, 1
        %s630 = scalar_lea.sflag [#allocation3], %s629
        %s631 = sand.u32 %s307, 1
        %s632 = smul.addr %s631, 256
        %s633 = scalar_lea.vmem [#allocation7], %s632
        // Predicated region
        $region93: #{hepps_forward.1} parent=79 // pred_check
          %p634 = pneg %p320
        $region94: #{hepps_forward.1} parent=79 // pred_check_branch
          %636 = sbr.rel (%p634) target = $region96
        $region95: #{hepps_forward.1} parent=79 // pred_region
          %637 = dma.done %s630, 4096
        $region96: #{hepps_forward.1} parent=79 // pred_fallthru
          _
        %s638 = sand.u32 %s28, 1
        %s639 = scalar_lea.sflag [#allocation3], %s638
        %s640 = sand.u32 %s385, 1
        %s641 = smul.addr %s640, 128
        %s642 = scalar_lea.vmem [#allocation8], %s641
        // Predicated region
        $region97: #{hepps_forward.1} parent=79 // pred_check
          %p643 = pneg %p398
        $region98: #{hepps_forward.1} parent=79 // pred_check_branch
          %645 = sbr.rel (%p643) target = $region100
        $region99: #{hepps_forward.1} parent=79 // pred_region
          %646 = dma.done %s639, 2048
        $region100: #{hepps_forward.1} parent=79 // pred_fallthru
          _
        %p647 = scmp.lt.s32.totalorder %s28, 1
        %s648 = scalar_select %p647, %s28, 1
        %s649 = smul.addr %s648, 4
        %s650 = smul.addr %s649, 2
        %s651 = scalar_lea.vmem %s0, %s650
        %p652 = pneg %p49
        %p653 = pneg %p46
        %p654 = scmp.lt.s32.totalorder %s28, 1
        %s655 = scalar_select %p654, %s28, 1
        %s656 = smul.addr %s655, 2
        %s657 = smul.addr %s656, 8
        %s658 = scalar_lea.vmem %s1, %s657
        %p659 = pneg %p75
        %p660 = pneg %p72
        %p661 = scmp.lt.s32.totalorder %s28, 1
        %s662 = scalar_select %p661, %s28, 1
        %s663 = smul.addr %s662, 2
        %s664 = smul.addr %s663, 8
        %s665 = scalar_lea.vmem %s2, %s664
        %p666 = pneg %p101
        %p667 = pneg %p98
        %p668 = scmp.lt.s32.totalorder %s28, 1
        %s669 = scalar_select %p668, %s28, 1
        %s670 = smul.addr %s669, 8
        %s671 = smul.addr %s670, 8
        %s672 = scalar_lea.vmem %s3, %s671
        %p673 = pneg %p127
        %p674 = pneg %p124
        %p675 = scmp.lt.s32.totalorder %s28, 1
        %s676 = scalar_select %p675, %s28, 1
        %s677 = smul.addr %s676, 4
        %s678 = smul.addr %s677, 8
        %s679 = scalar_lea.vmem %s4, %s678
        %p680 = pneg %p153
        %p681 = pneg %p150
        %p682 = scmp.lt.s32.totalorder %s28, 1
        %s683 = scalar_select %p682, %s28, 1
        %s684 = smul.addr %s683, 16
        %s685 = smul.addr %s684, 8
        %s686 = scalar_lea.vmem %s5, %s685
        %p687 = pneg %p179
        %p688 = pneg %p176
        %p689 = scmp.lt.s32.totalorder %s28, 1
        %s690 = scalar_select %p689, %s28, 1
        %s691 = smul.addr %s690, 4
        %s692 = smul.addr %s691, 8
        %s693 = scalar_lea.vmem %s6, %s692
        %p694 = pneg %p205
        %p695 = pneg %p202
        %p696 = pneg %p226
        %p697 = pneg %p223
        %p698 = pneg %p247
        %p699 = pneg %p244
        %p700 = pneg %p268
        %p701 = pneg %p265
        %s702 = sand.u32 %s28, 1
        %s703 = scalar_lea.sflag [#allocation3], %s702
        %s704 = sand.u32 %s281, 1
        %s705 = smul.addr %s704, 128
        %s706 = scalar_lea.vmem [#allocation6], %s705
        %p707 = pneg %p294
        %p708 = pneg %p291
        %s709 = sand.u32 %s28, 1
        %s710 = scalar_lea.sflag [#allocation3], %s709
        %s711 = sand.u32 %s307, 1
        %s712 = smul.addr %s711, 256
        %s713 = scalar_lea.vmem [#allocation7], %s712
        %p714 = pneg %p320
        %p715 = pneg %p317
        %p716 = scmp.lt.s32.totalorder %s28, 1
        %s717 = scalar_select %p716, %s28, 1
        %s718 = smul.addr %s717, 4
        %s719 = scalar_lea.vmem %s12, %s718
        %p720 = pneg %p346
        %p721 = pneg %p343
        %p722 = scmp.lt.s32.totalorder %s28, 1
        %s723 = scalar_select %p722, %s28, 1
        %s724 = smul.addr %s723, 2
        %s725 = scalar_lea.vmem %s13, %s724
        %p726 = pneg %p372
        %p727 = pneg %p369
        %s728 = sand.u32 %s28, 1
        %s729 = scalar_lea.sflag [#allocation3], %s728
        %s730 = sand.u32 %s385, 1
        %s731 = smul.addr %s730, 128
        %s732 = scalar_lea.vmem [#allocation8], %s731
        %p733 = pneg %p398
        %p734 = pneg %p395
        %p735 = pneg %p424
        %p736 = pneg %p421
        %p737 = scmp.lt.s32.totalorder %s28, 1
        %s738 = scalar_select %p737, %s28, 1
        %s739 = smul.addr %s738, 2
        %s740 = scalar_lea.vmem %s15, %s739
        %p741 = scmp.lt.s32.totalorder %s28, 1
        %s742 = scalar_select %p741, %s28, 1
        %s743 = smul.addr %s742, 4
        %s744 = smul.addr %s743, 2
        %s745 = scalar_lea.vmem %s0, %s744
        %p746 = scmp.lt.s32.totalorder %s28, 1
        %s747 = scalar_select %p746, %s28, 1
        %s748 = smul.addr %s747, 2
        %s749 = smul.addr %s748, 8
        %s750 = scalar_lea.vmem %s1, %s749
        %p751 = scmp.lt.s32.totalorder %s28, 1
        %s752 = scalar_select %p751, %s28, 1
        %s753 = smul.addr %s752, 2
        %s754 = smul.addr %s753, 8
        %s755 = scalar_lea.vmem %s2, %s754
        %p756 = scmp.lt.s32.totalorder %s28, 1
        %s757 = scalar_select %p756, %s28, 1
        %s758 = smul.addr %s757, 8
        %s759 = smul.addr %s758, 8
        %s760 = scalar_lea.vmem %s3, %s759
        %p761 = scmp.lt.s32.totalorder %s28, 1
        %s762 = scalar_select %p761, %s28, 1
        %s763 = smul.addr %s762, 4
        %s764 = smul.addr %s763, 8
        %s765 = scalar_lea.vmem %s4, %s764
        %p766 = scmp.lt.s32.totalorder %s28, 1
        %s767 = scalar_select %p766, %s28, 1
        %s768 = smul.addr %s767, 16
        %s769 = smul.addr %s768, 8
        %s770 = scalar_lea.vmem %s5, %s769
        %p771 = scmp.lt.s32.totalorder %s28, 1
        %s772 = scalar_select %p771, %s28, 1
        %s773 = smul.addr %s772, 4
        %s774 = smul.addr %s773, 8
        %s775 = scalar_lea.vmem %s6, %s774
        %p776 = scmp.lt.s32.totalorder %s28, 1
        %s777 = scalar_select %p776, %s28, 1
        %s778 = smul.addr %s777, 4
        %s779 = scalar_lea.vmem %s12, %s778
        %p780 = scmp.lt.s32.totalorder %s28, 1
        %s781 = scalar_select %p780, %s28, 1
        %s782 = smul.addr %s781, 2
        %s783 = scalar_lea.vmem %s13, %s782
        %p784 = scmp.lt.s32.totalorder %s28, 1
        %s785 = scalar_select %p784, %s28, 1
        %s786 = smul.addr %s785, 2
        %s787 = scalar_lea.vmem %s15, %s786
        %v788 = vld [vmem:[%s745] sm:$0xff]
        %v789 = vld [vmem:[%s750] sm:$0xff]
        %v790 = vld [vmem:[%s750 + $0x8] sm:$0xff]
        %v791 = vld [vmem:[%s760] sm:$0xff]
        %v792 = vld [vmem:[%s760 + $0x8] sm:$0xff]
        %v793 = vld [vmem:[%s760 + $0x10] sm:$0xff]
        %v794 = vld [vmem:[%s760 + $0x18] sm:$0xff]
        %v795 = vld [vmem:[%s760 + $0x20] sm:$0xff]
        %v796 = vld [vmem:[%s760 + $0x28] sm:$0xff]
        %v797 = vld [vmem:[%s760 + $0x30] sm:$0xff]
        %v798 = vld [vmem:[%s760 + $0x38] sm:$0xff]
        %v799 = vld [vmem:[%s770] sm:$0xff]
        %v800 = vld [vmem:[%s770 + $0x8] sm:$0xff]
        %v801 = vld [vmem:[%s770 + $0x10] sm:$0xff]
        %v802 = vld [vmem:[%s770 + $0x18] sm:$0xff]
        %v803 = vld [vmem:[%s770 + $0x20] sm:$0xff]
        %v804 = vld [vmem:[%s770 + $0x28] sm:$0xff]
        %v805 = vld [vmem:[%s770 + $0x30] sm:$0xff]
        %v806 = vld [vmem:[%s770 + $0x38] sm:$0xff]
        %v807 = vld [vmem:[%s770 + $0x40] sm:$0xff]
        %v808 = vld [vmem:[%s770 + $0x48] sm:$0xff]
        %v809 = vld [vmem:[%s770 + $0x50] sm:$0xff]
        %v810 = vld [vmem:[%s770 + $0x58] sm:$0xff]
        %v811 = vld [vmem:[%s770 + $0x60] sm:$0xff]
        %v812 = vld [vmem:[%s770 + $0x68] sm:$0xff]
        %v813 = vld [vmem:[%s770 + $0x70] sm:$0xff]
        %v814 = vld [vmem:[%s770 + $0x78] sm:$0xff]
        %v815 = vld [vmem:[%s755] sm:$0xff]
        %v816 = vld [vmem:[%s755 + $0x8] sm:$0xff]
        %v817 = vld [vmem:[%s765] sm:$0xff]
        %v818 = vld [vmem:[%s765 + $0x8] sm:$0xff]
        %v819 = vld [vmem:[%s765 + $0x10] sm:$0xff]
        %v820 = vld [vmem:[%s765 + $0x18] sm:$0xff]
        %v821 = vld [vmem:[%s775] sm:$0xff]
        %v822 = vld [vmem:[%s775 + $0x8] sm:$0xff]
        %v823 = vld [vmem:[%s775 + $0x10] sm:$0xff]
        %v824 = vld [vmem:[%s775 + $0x18] sm:$0xff]
        %v825 = vld [vmem:[#allocation2] sm:$0xff]
        %v826 = vld [vmem:[#allocation2 + $0x8] sm:$0xff]
        %v827 = vld [vmem:[#allocation2 + $0x10] sm:$0xff]
        %v828 = vld [vmem:[#allocation2 + $0x18] sm:$0xff]
        %v829 = vld [vmem:[#allocation2 + $0x20] sm:$0xff]
        %v830 = vld [vmem:[#allocation2 + $0x28] sm:$0xff]
        %v831 = vld [vmem:[#allocation2 + $0x30] sm:$0xff]
        %v832 = vld [vmem:[#allocation2 + $0x38] sm:$0xff]
        %v833 = vld [vmem:[#allocation2 + $0x40] sm:$0xff]
        %v834 = vld [vmem:[#allocation2 + $0x48] sm:$0xff]
        %v835 = vld [vmem:[#allocation2 + $0x50] sm:$0xff]
        %v836 = vld [vmem:[#allocation2 + $0x58] sm:$0xff]
        %v837 = vld [vmem:[#allocation2 + $0x60] sm:$0xff]
        %v838 = vld [vmem:[#allocation2 + $0x68] sm:$0xff]
        %v839 = vld [vmem:[#allocation2 + $0x70] sm:$0xff]
        %v840 = vld [vmem:[#allocation2 + $0x78] sm:$0xff]
        %v841 = vld [vmem:[#allocation2 + $0x80] sm:$0xff]
        %v842 = vld [vmem:[#allocation2 + $0x88] sm:$0xff]
        %v843 = vld [vmem:[#allocation2 + $0x90] sm:$0xff]
        %v844 = vld [vmem:[#allocation2 + $0x98] sm:$0xff]
        %v845 = vld [vmem:[#allocation2 + $0xa0] sm:$0xff]
        %v846 = vld [vmem:[#allocation2 + $0xa8] sm:$0xff]
        %v847 = vld [vmem:[#allocation2 + $0xb0] sm:$0xff]
        %v848 = vld [vmem:[#allocation2 + $0xb8] sm:$0xff]
        %v849 = vld [vmem:[#allocation2 + $0xc0] sm:$0xff]
        %v850 = vld [vmem:[#allocation2 + $0xc8] sm:$0xff]
        %v851 = vld [vmem:[#allocation2 + $0xd0] sm:$0xff]
        %v852 = vld [vmem:[#allocation2 + $0xd8] sm:$0xff]
        %v853 = vld [vmem:[#allocation2 + $0xe0] sm:$0xff]
        %v854 = vld [vmem:[#allocation2 + $0xe8] sm:$0xff]
        %v855 = vld [vmem:[#allocation2 + $0xf0] sm:$0xff]
        %v856 = vld [vmem:[#allocation2 + $0xf8] sm:$0xff]
        %v857 = vld [vmem:[#allocation2 + $0x100] sm:$0xff]
        %v858 = vld [vmem:[#allocation2 + $0x108] sm:$0xff]
        %v859 = vld [vmem:[#allocation2 + $0x110] sm:$0xff]
        %v860 = vld [vmem:[#allocation2 + $0x118] sm:$0xff]
        %v861 = vld [vmem:[#allocation2 + $0x120] sm:$0xff]
        %v862 = vld [vmem:[#allocation2 + $0x128] sm:$0xff]
        %v863 = vld [vmem:[#allocation2 + $0x130] sm:$0xff]
        %v864 = vld [vmem:[#allocation2 + $0x138] sm:$0xff]
        %v865 = vld [vmem:[#allocation2 + $0x140] sm:$0xff]
        %v866 = vld [vmem:[#allocation2 + $0x148] sm:$0xff]
        %v867 = vld [vmem:[#allocation2 + $0x150] sm:$0xff]
        %v868 = vld [vmem:[#allocation2 + $0x158] sm:$0xff]
        %v869 = vld [vmem:[#allocation2 + $0x160] sm:$0xff]
        %v870 = vld [vmem:[#allocation2 + $0x168] sm:$0xff]
        %v871 = vld [vmem:[#allocation2 + $0x170] sm:$0xff]
        %v872 = vld [vmem:[#allocation2 + $0x178] sm:$0xff]
        %v873 = vld [vmem:[#allocation2 + $0x180] sm:$0xff]
        %v874 = vld [vmem:[#allocation2 + $0x188] sm:$0xff]
        %v875 = vld [vmem:[#allocation2 + $0x190] sm:$0xff]
        %v876 = vld [vmem:[#allocation2 + $0x198] sm:$0xff]
        %v877 = vld [vmem:[#allocation2 + $0x1a0] sm:$0xff]
        %v878 = vld [vmem:[#allocation2 + $0x1a8] sm:$0xff]
        %v879 = vld [vmem:[#allocation2 + $0x1b0] sm:$0xff]
        %v880 = vld [vmem:[#allocation2 + $0x1b8] sm:$0xff]
        %v881 = vld [vmem:[#allocation2 + $0x1c0] sm:$0xff]
        %v882 = vld [vmem:[#allocation2 + $0x1c8] sm:$0xff]
        %v883 = vld [vmem:[#allocation2 + $0x1d0] sm:$0xff]
        %v884 = vld [vmem:[#allocation2 + $0x1d8] sm:$0xff]
        %v885 = vld [vmem:[#allocation2 + $0x1e0] sm:$0xff]
        %v886 = vld [vmem:[#allocation2 + $0x1e8] sm:$0xff]
        %v887 = vld [vmem:[#allocation2 + $0x1f0] sm:$0xff]
        %v888 = vld [vmem:[#allocation2 + $0x1f8] sm:$0xff]
        %v889 = vld [vmem:[#allocation2 + $0x200] sm:$0xff]
        %v890 = vld [vmem:[#allocation2 + $0x208] sm:$0xff]
        %v891 = vld [vmem:[#allocation2 + $0x210] sm:$0xff]
        %v892 = vld [vmem:[#allocation2 + $0x218] sm:$0xff]
        %v893 = vld [vmem:[#allocation2 + $0x220] sm:$0xff]
        %v894 = vld [vmem:[#allocation2 + $0x228] sm:$0xff]
        %v895 = vld [vmem:[#allocation2 + $0x230] sm:$0xff]
        %v896 = vld [vmem:[#allocation2 + $0x238] sm:$0xff]
        %v897 = vld [vmem:[#allocation2 + $0x240] sm:$0xff]
        %v898 = vld [vmem:[#allocation2 + $0x248] sm:$0xff]
        %v899 = vld [vmem:[#allocation2 + $0x250] sm:$0xff]
        %v900 = vld [vmem:[#allocation2 + $0x258] sm:$0xff]
        %v901 = vld [vmem:[#allocation2 + $0x260] sm:$0xff]
        %v902 = vld [vmem:[#allocation2 + $0x268] sm:$0xff]
        %v903 = vld [vmem:[#allocation2 + $0x270] sm:$0xff]
        %v904 = vld [vmem:[#allocation2 + $0x278] sm:$0xff]
        %v905 = vld [vmem:[#allocation2 + $0x280] sm:$0xff]
        %v906 = vld [vmem:[#allocation2 + $0x288] sm:$0xff]
        %v907 = vld [vmem:[#allocation2 + $0x290] sm:$0xff]
        %v908 = vld [vmem:[#allocation2 + $0x298] sm:$0xff]
        %v909 = vld [vmem:[#allocation2 + $0x2a0] sm:$0xff]
        %v910 = vld [vmem:[#allocation2 + $0x2a8] sm:$0xff]
        %v911 = vld [vmem:[#allocation2 + $0x2b0] sm:$0xff]
        %v912 = vld [vmem:[#allocation2 + $0x2b8] sm:$0xff]
        %v913 = vld [vmem:[#allocation2 + $0x2c0] sm:$0xff]
        %v914 = vld [vmem:[#allocation2 + $0x2c8] sm:$0xff]
        %v915 = vld [vmem:[#allocation2 + $0x2d0] sm:$0xff]
        %v916 = vld [vmem:[#allocation2 + $0x2d8] sm:$0xff]
        %v917 = vld [vmem:[#allocation2 + $0x2e0] sm:$0xff]
        %v918 = vld [vmem:[#allocation2 + $0x2e8] sm:$0xff]
        %v919 = vld [vmem:[#allocation2 + $0x2f0] sm:$0xff]
        %v920 = vld [vmem:[#allocation2 + $0x2f8] sm:$0xff]
        %v921 = vld [vmem:[#allocation2 + $0x300] sm:$0xff]
        %v922 = vld [vmem:[#allocation2 + $0x308] sm:$0xff]
        %v923 = vld [vmem:[#allocation2 + $0x310] sm:$0xff]
        %v924 = vld [vmem:[#allocation2 + $0x318] sm:$0xff]
        %v925 = vld [vmem:[#allocation2 + $0x320] sm:$0xff]
        %v926 = vld [vmem:[#allocation2 + $0x328] sm:$0xff]
        %v927 = vld [vmem:[#allocation2 + $0x330] sm:$0xff]
        %v928 = vld [vmem:[#allocation2 + $0x338] sm:$0xff]
        %v929 = vld [vmem:[#allocation2 + $0x340] sm:$0xff]
        %v930 = vld [vmem:[#allocation2 + $0x348] sm:$0xff]
        %v931 = vld [vmem:[#allocation2 + $0x350] sm:$0xff]
        %v932 = vld [vmem:[#allocation2 + $0x358] sm:$0xff]
        %v933 = vld [vmem:[#allocation2 + $0x360] sm:$0xff]
        %v934 = vld [vmem:[#allocation2 + $0x368] sm:$0xff]
        %v935 = vld [vmem:[#allocation2 + $0x370] sm:$0xff]
        %v936 = vld [vmem:[#allocation2 + $0x378] sm:$0xff]
        %v937 = vld [vmem:[#allocation2 + $0x380] sm:$0xff]
        %v938 = vld [vmem:[#allocation2 + $0x388] sm:$0xff]
        %v939 = vld [vmem:[#allocation2 + $0x390] sm:$0xff]
        %v940 = vld [vmem:[#allocation2 + $0x398] sm:$0xff]
        %v941 = vld [vmem:[#allocation2 + $0x3a0] sm:$0xff]
        %v942 = vld [vmem:[#allocation2 + $0x3a8] sm:$0xff]
        %v943 = vld [vmem:[#allocation2 + $0x3b0] sm:$0xff]
        %v944 = vld [vmem:[#allocation2 + $0x3b8] sm:$0xff]
        %v945 = vld [vmem:[#allocation2 + $0x3c0] sm:$0xff]
        %v946 = vld [vmem:[#allocation2 + $0x3c8] sm:$0xff]
        %v947 = vld [vmem:[#allocation2 + $0x3d0] sm:$0xff]
        %v948 = vld [vmem:[#allocation2 + $0x3d8] sm:$0xff]
        %v949 = vld [vmem:[#allocation2 + $0x3e0] sm:$0xff]
        %v950 = vld [vmem:[#allocation2 + $0x3e8] sm:$0xff]
        %v951 = vld [vmem:[#allocation2 + $0x3f0] sm:$0xff]
        %v952 = vld [vmem:[#allocation2 + $0x3f8] sm:$0xff]
        %v953 = vld [vmem:[#allocation2 + $0x400] sm:$0xff]
        %v954 = vld [vmem:[#allocation2 + $0x408] sm:$0xff]
        %v955 = vld [vmem:[#allocation2 + $0x410] sm:$0xff]
        %v956 = vld [vmem:[#allocation2 + $0x418] sm:$0xff]
        %v957 = vld [vmem:[#allocation2 + $0x420] sm:$0xff]
        %v958 = vld [vmem:[#allocation2 + $0x428] sm:$0xff]
        %v959 = vld [vmem:[#allocation2 + $0x430] sm:$0xff]
        %v960 = vld [vmem:[#allocation2 + $0x438] sm:$0xff]
        %v961 = vld [vmem:[#allocation2 + $0x440] sm:$0xff]
        %v962 = vld [vmem:[#allocation2 + $0x448] sm:$0xff]
        %v963 = vld [vmem:[#allocation2 + $0x450] sm:$0xff]
        %v964 = vld [vmem:[#allocation2 + $0x458] sm:$0xff]
        %v965 = vld [vmem:[#allocation2 + $0x460] sm:$0xff]
        %v966 = vld [vmem:[#allocation2 + $0x468] sm:$0xff]
        %v967 = vld [vmem:[#allocation2 + $0x470] sm:$0xff]
        %v968 = vld [vmem:[#allocation2 + $0x478] sm:$0xff]
        %v969 = vld [vmem:[#allocation2 + $0x480] sm:$0xff]
        %v970 = vld [vmem:[#allocation2 + $0x488] sm:$0xff]
        %v971 = vld [vmem:[#allocation2 + $0x490] sm:$0xff]
        %v972 = vld [vmem:[#allocation2 + $0x498] sm:$0xff]
        %v973 = vld [vmem:[#allocation2 + $0x4a0] sm:$0xff]
        %v974 = vld [vmem:[#allocation2 + $0x4a8] sm:$0xff]
        %v975 = vld [vmem:[#allocation2 + $0x4b0] sm:$0xff]
        %v976 = vld [vmem:[#allocation2 + $0x4b8] sm:$0xff]
        %v977 = vld [vmem:[#allocation2 + $0x4c0] sm:$0xff]
        %v978 = vld [vmem:[#allocation2 + $0x4c8] sm:$0xff]
        %v979 = vld [vmem:[#allocation2 + $0x4d0] sm:$0xff]
        %v980 = vld [vmem:[#allocation2 + $0x4d8] sm:$0xff]
        %v981 = vld [vmem:[#allocation2 + $0x4e0] sm:$0xff]
        %v982 = vld [vmem:[#allocation2 + $0x4e8] sm:$0xff]
        %v983 = vld [vmem:[#allocation2 + $0x4f0] sm:$0xff]
        %v984 = vld [vmem:[#allocation2 + $0x4f8] sm:$0xff]
        %v985 = vld [vmem:[#allocation2 + $0x500] sm:$0xff]
        %v986 = vld [vmem:[#allocation2 + $0x508] sm:$0xff]
        %v987 = vld [vmem:[#allocation2 + $0x510] sm:$0xff]
        %v988 = vld [vmem:[#allocation2 + $0x518] sm:$0xff]
        %v989 = vld [vmem:[#allocation2 + $0x520] sm:$0xff]
        %v990 = vld [vmem:[#allocation2 + $0x528] sm:$0xff]
        %v991 = vld [vmem:[#allocation2 + $0x530] sm:$0xff]
        %v992 = vld [vmem:[#allocation2 + $0x538] sm:$0xff]
        %v993 = vld [vmem:[#allocation2 + $0x540] sm:$0xff]
        %v994 = vld [vmem:[#allocation2 + $0x548] sm:$0xff]
        %v995 = vld [vmem:[#allocation2 + $0x550] sm:$0xff]
        %v996 = vld [vmem:[#allocation2 + $0x558] sm:$0xff]
        %v997 = vld [vmem:[#allocation2 + $0x560] sm:$0xff]
        %v998 = vld [vmem:[#allocation2 + $0x568] sm:$0xff]
        %v999 = vld [vmem:[#allocation2 + $0x570] sm:$0xff]
        %v1000 = vld [vmem:[#allocation2 + $0x578] sm:$0xff]
        %v1001 = vld [vmem:[#allocation2 + $0x580] sm:$0xff]
        %v1002 = vld [vmem:[#allocation2 + $0x588] sm:$0xff]
        %v1003 = vld [vmem:[#allocation2 + $0x590] sm:$0xff]
        %v1004 = vld [vmem:[#allocation2 + $0x598] sm:$0xff]
        %v1005 = vld [vmem:[#allocation2 + $0x5a0] sm:$0xff]
        %v1006 = vld [vmem:[#allocation2 + $0x5a8] sm:$0xff]
        %v1007 = vld [vmem:[#allocation2 + $0x5b0] sm:$0xff]
        %v1008 = vld [vmem:[#allocation2 + $0x5b8] sm:$0xff]
        %v1009 = vld [vmem:[#allocation2 + $0x5c0] sm:$0xff]
        %v1010 = vld [vmem:[#allocation2 + $0x5c8] sm:$0xff]
        %v1011 = vld [vmem:[#allocation2 + $0x5d0] sm:$0xff]
        %v1012 = vld [vmem:[#allocation2 + $0x5d8] sm:$0xff]
        %v1013 = vld [vmem:[#allocation2 + $0x5e0] sm:$0xff]
        %v1014 = vld [vmem:[#allocation2 + $0x5e8] sm:$0xff]
        %v1015 = vld [vmem:[#allocation2 + $0x5f0] sm:$0xff]
        %v1016 = vld [vmem:[#allocation2 + $0x5f8] sm:$0xff]
        %v1017 = vld [vmem:[#allocation2 + $0x600] sm:$0xff]
        %v1018 = vld [vmem:[#allocation2 + $0x608] sm:$0xff]
        %v1019 = vld [vmem:[#allocation2 + $0x610] sm:$0xff]
        %v1020 = vld [vmem:[#allocation2 + $0x618] sm:$0xff]
        %v1021 = vld [vmem:[#allocation2 + $0x620] sm:$0xff]
        %v1022 = vld [vmem:[#allocation2 + $0x628] sm:$0xff]
        %v1023 = vld [vmem:[#allocation2 + $0x630] sm:$0xff]
        %v1024 = vld [vmem:[#allocation2 + $0x638] sm:$0xff]
        %v1025 = vld [vmem:[#allocation2 + $0x640] sm:$0xff]
        %v1026 = vld [vmem:[#allocation2 + $0x648] sm:$0xff]
        %v1027 = vld [vmem:[#allocation2 + $0x650] sm:$0xff]
        %v1028 = vld [vmem:[#allocation2 + $0x658] sm:$0xff]
        %v1029 = vld [vmem:[#allocation2 + $0x660] sm:$0xff]
        %v1030 = vld [vmem:[#allocation2 + $0x668] sm:$0xff]
        %v1031 = vld [vmem:[#allocation2 + $0x670] sm:$0xff]
        %v1032 = vld [vmem:[#allocation2 + $0x678] sm:$0xff]
        %v1033 = vld [vmem:[#allocation2 + $0x680] sm:$0xff]
        %v1034 = vld [vmem:[#allocation2 + $0x688] sm:$0xff]
        %v1035 = vld [vmem:[#allocation2 + $0x690] sm:$0xff]
        %v1036 = vld [vmem:[#allocation2 + $0x698] sm:$0xff]
        %v1037 = vld [vmem:[#allocation2 + $0x6a0] sm:$0xff]
        %v1038 = vld [vmem:[#allocation2 + $0x6a8] sm:$0xff]
        %v1039 = vld [vmem:[#allocation2 + $0x6b0] sm:$0xff]
        %v1040 = vld [vmem:[#allocation2 + $0x6b8] sm:$0xff]
        %v1041 = vld [vmem:[#allocation2 + $0x6c0] sm:$0xff]
        %v1042 = vld [vmem:[#allocation2 + $0x6c8] sm:$0xff]
        %v1043 = vld [vmem:[#allocation2 + $0x6d0] sm:$0xff]
        %v1044 = vld [vmem:[#allocation2 + $0x6d8] sm:$0xff]
        %v1045 = vld [vmem:[#allocation2 + $0x6e0] sm:$0xff]
        %v1046 = vld [vmem:[#allocation2 + $0x6e8] sm:$0xff]
        %v1047 = vld [vmem:[#allocation2 + $0x6f0] sm:$0xff]
        %v1048 = vld [vmem:[#allocation2 + $0x6f8] sm:$0xff]
        %v1049 = vld [vmem:[#allocation2 + $0x700] sm:$0xff]
        %v1050 = vld [vmem:[#allocation2 + $0x708] sm:$0xff]
        %v1051 = vld [vmem:[#allocation2 + $0x710] sm:$0xff]
        %v1052 = vld [vmem:[#allocation2 + $0x718] sm:$0xff]
        %v1053 = vld [vmem:[#allocation2 + $0x720] sm:$0xff]
        %v1054 = vld [vmem:[#allocation2 + $0x728] sm:$0xff]
        %v1055 = vld [vmem:[#allocation2 + $0x730] sm:$0xff]
        %v1056 = vld [vmem:[#allocation2 + $0x738] sm:$0xff]
        %v1057 = vld [vmem:[#allocation2 + $0x740] sm:$0xff]
        %v1058 = vld [vmem:[#allocation2 + $0x748] sm:$0xff]
        %v1059 = vld [vmem:[#allocation2 + $0x750] sm:$0xff]
        %v1060 = vld [vmem:[#allocation2 + $0x758] sm:$0xff]
        %v1061 = vld [vmem:[#allocation2 + $0x760] sm:$0xff]
        %v1062 = vld [vmem:[#allocation2 + $0x768] sm:$0xff]
        %v1063 = vld [vmem:[#allocation2 + $0x770] sm:$0xff]
        %v1064 = vld [vmem:[#allocation2 + $0x778] sm:$0xff]
        %v1065 = vld [vmem:[#allocation2 + $0x780] sm:$0xff]
        %v1066 = vld [vmem:[#allocation2 + $0x788] sm:$0xff]
        %v1067 = vld [vmem:[#allocation2 + $0x790] sm:$0xff]
        %v1068 = vld [vmem:[#allocation2 + $0x798] sm:$0xff]
        %v1069 = vld [vmem:[#allocation2 + $0x7a0] sm:$0xff]
        %v1070 = vld [vmem:[#allocation2 + $0x7a8] sm:$0xff]
        %v1071 = vld [vmem:[#allocation2 + $0x7b0] sm:$0xff]
        %v1072 = vld [vmem:[#allocation2 + $0x7b8] sm:$0xff]
        %v1073 = vld [vmem:[#allocation2 + $0x7c0] sm:$0xff]
        %v1074 = vld [vmem:[#allocation2 + $0x7c8] sm:$0xff]
        %v1075 = vld [vmem:[#allocation2 + $0x7d0] sm:$0xff]
        %v1076 = vld [vmem:[#allocation2 + $0x7d8] sm:$0xff]
        %v1077 = vld [vmem:[#allocation2 + $0x7e0] sm:$0xff]
        %v1078 = vld [vmem:[#allocation2 + $0x7e8] sm:$0xff]
        %v1079 = vld [vmem:[#allocation2 + $0x7f0] sm:$0x1f]
        %v1080 = vld [vmem:[#allocation2 + $0x7f8] sm:$0x1f]
        %v1081 = vld [vmem:[#allocation4] sm:$0xff]
        %v1082 = vld [vmem:[#allocation4 + $0x8] sm:$0xff]
        %v1083 = vld [vmem:[#allocation4 + $0x10] sm:$0xff]
        %v1084 = vld [vmem:[#allocation4 + $0x18] sm:$0xff]
        %v1085 = vld [vmem:[#allocation4 + $0x20] sm:$0xff]
        %v1086 = vld [vmem:[#allocation4 + $0x28] sm:$0xff]
        %v1087 = vld [vmem:[#allocation4 + $0x30] sm:$0xff]
        %v1088 = vld [vmem:[#allocation4 + $0x38] sm:$0xff]
        %v1089 = vld [vmem:[#allocation4 + $0x40] sm:$0xff]
        %v1090 = vld [vmem:[#allocation4 + $0x48] sm:$0xff]
        %v1091 = vld [vmem:[#allocation4 + $0x50] sm:$0xff]
        %v1092 = vld [vmem:[#allocation4 + $0x58] sm:$0xff]
        %v1093 = vld [vmem:[#allocation4 + $0x60] sm:$0xff]
        %v1094 = vld [vmem:[#allocation4 + $0x68] sm:$0xff]
        %v1095 = vld [vmem:[#allocation4 + $0x70] sm:$0xff]
        %v1096 = vld [vmem:[#allocation4 + $0x78] sm:$0xff]
        %v1097 = vld [vmem:[#allocation4 + $0x80] sm:$0xff]
        %v1098 = vld [vmem:[#allocation4 + $0x88] sm:$0xff]
        %v1099 = vld [vmem:[#allocation4 + $0x90] sm:$0xff]
        %v1100 = vld [vmem:[#allocation4 + $0x98] sm:$0xff]
        %v1101 = vld [vmem:[#allocation4 + $0xa0] sm:$0xff]
        %v1102 = vld [vmem:[#allocation4 + $0xa8] sm:$0xff]
        %v1103 = vld [vmem:[#allocation4 + $0xb0] sm:$0xff]
        %v1104 = vld [vmem:[#allocation4 + $0xb8] sm:$0xff]
        %v1105 = vld [vmem:[#allocation4 + $0xc0] sm:$0xff]
        %v1106 = vld [vmem:[#allocation4 + $0xc8] sm:$0xff]
        %v1107 = vld [vmem:[#allocation4 + $0xd0] sm:$0xff]
        %v1108 = vld [vmem:[#allocation4 + $0xd8] sm:$0xff]
        %v1109 = vld [vmem:[#allocation4 + $0xe0] sm:$0xff]
        %v1110 = vld [vmem:[#allocation4 + $0xe8] sm:$0xff]
        %v1111 = vld [vmem:[#allocation4 + $0xf0] sm:$0xff]
        %v1112 = vld [vmem:[#allocation4 + $0xf8] sm:$0xff]
        %v1113 = vld [vmem:[#allocation4 + $0x100] sm:$0xff]
        %v1114 = vld [vmem:[#allocation4 + $0x108] sm:$0xff]
        %v1115 = vld [vmem:[#allocation4 + $0x110] sm:$0xff]
        %v1116 = vld [vmem:[#allocation4 + $0x118] sm:$0xff]
        %v1117 = vld [vmem:[#allocation4 + $0x120] sm:$0xff]
        %v1118 = vld [vmem:[#allocation4 + $0x128] sm:$0xff]
        %v1119 = vld [vmem:[#allocation4 + $0x130] sm:$0xff]
        %v1120 = vld [vmem:[#allocation4 + $0x138] sm:$0xff]
        %v1121 = vld [vmem:[#allocation4 + $0x140] sm:$0xff]
        %v1122 = vld [vmem:[#allocation4 + $0x148] sm:$0xff]
        %v1123 = vld [vmem:[#allocation4 + $0x150] sm:$0xff]
        %v1124 = vld [vmem:[#allocation4 + $0x158] sm:$0xff]
        %v1125 = vld [vmem:[#allocation4 + $0x160] sm:$0xff]
        %v1126 = vld [vmem:[#allocation4 + $0x168] sm:$0xff]
        %v1127 = vld [vmem:[#allocation4 + $0x170] sm:$0xff]
        %v1128 = vld [vmem:[#allocation4 + $0x178] sm:$0xff]
        %v1129 = vld [vmem:[#allocation4 + $0x180] sm:$0xff]
        %v1130 = vld [vmem:[#allocation4 + $0x188] sm:$0xff]
        %v1131 = vld [vmem:[#allocation4 + $0x190] sm:$0xff]
        %v1132 = vld [vmem:[#allocation4 + $0x198] sm:$0xff]
        %v1133 = vld [vmem:[#allocation4 + $0x1a0] sm:$0xff]
        %v1134 = vld [vmem:[#allocation4 + $0x1a8] sm:$0xff]
        %v1135 = vld [vmem:[#allocation4 + $0x1b0] sm:$0xff]
        %v1136 = vld [vmem:[#allocation4 + $0x1b8] sm:$0xff]
        %v1137 = vld [vmem:[#allocation4 + $0x1c0] sm:$0xff]
        %v1138 = vld [vmem:[#allocation4 + $0x1c8] sm:$0xff]
        %v1139 = vld [vmem:[#allocation4 + $0x1d0] sm:$0xff]
        %v1140 = vld [vmem:[#allocation4 + $0x1d8] sm:$0xff]
        %v1141 = vld [vmem:[#allocation4 + $0x1e0] sm:$0xff]
        %v1142 = vld [vmem:[#allocation4 + $0x1e8] sm:$0xff]
        %v1143 = vld [vmem:[#allocation4 + $0x1f0] sm:$0x1f]
        %v1144 = vld [vmem:[#allocation4 + $0x1f8] sm:$0x1f]
        %v1145 = vld [vmem:[%s9] sm:$0xff]
        %v1146 = vld [vmem:[%s9 + $0x8] sm:$0xff]
        %v1147 = vld [vmem:[%s9 + $0x10] sm:$0xff]
        %v1148 = vld [vmem:[%s9 + $0x18] sm:$0xff]
        %v1149 = vld [vmem:[%s9 + $0x20] sm:$0xff]
        %v1150 = vld [vmem:[%s9 + $0x28] sm:$0xff]
        %v1151 = vld [vmem:[%s9 + $0x30] sm:$0xff]
        %v1152 = vld [vmem:[%s9 + $0x38] sm:$0xff]
        %v1153 = vld [vmem:[%s9 + $0x40] sm:$0xff]
        %v1154 = vld [vmem:[%s9 + $0x48] sm:$0xff]
        %v1155 = vld [vmem:[%s9 + $0x50] sm:$0xff]
        %v1156 = vld [vmem:[%s9 + $0x58] sm:$0xff]
        %v1157 = vld [vmem:[%s9 + $0x60] sm:$0xff]
        %v1158 = vld [vmem:[%s9 + $0x68] sm:$0xff]
        %v1159 = vld [vmem:[%s9 + $0x70] sm:$0xff]
        %v1160 = vld [vmem:[%s9 + $0x78] sm:$0xff]
        %v1161 = vld [vmem:[%s9 + $0x80] sm:$0xff]
        %v1162 = vld [vmem:[%s9 + $0x88] sm:$0xff]
        %v1163 = vld [vmem:[%s9 + $0x90] sm:$0xff]
        %v1164 = vld [vmem:[%s9 + $0x98] sm:$0xff]
        %v1165 = vld [vmem:[%s9 + $0xa0] sm:$0xff]
        %v1166 = vld [vmem:[%s9 + $0xa8] sm:$0xff]
        %v1167 = vld [vmem:[%s9 + $0xb0] sm:$0xff]
        %v1168 = vld [vmem:[%s9 + $0xb8] sm:$0xff]
        %v1169 = vld [vmem:[%s9 + $0xc0] sm:$0xff]
        %v1170 = vld [vmem:[%s9 + $0xc8] sm:$0xff]
        %v1171 = vld [vmem:[%s9 + $0xd0] sm:$0xff]
        %v1172 = vld [vmem:[%s9 + $0xd8] sm:$0xff]
        %v1173 = vld [vmem:[%s9 + $0xe0] sm:$0xff]
        %v1174 = vld [vmem:[%s9 + $0xe8] sm:$0xff]
        %v1175 = vld [vmem:[%s9 + $0xf0] sm:$0xff]
        %v1176 = vld [vmem:[%s9 + $0xf8] sm:$0x7f]
        %v1178 = vlaneseq
        %v1179 = vshrl.u32 %v1178, 7
        %v1180 = vsub.s32 0, %v1179
        %v1181 = vrot.slane %v788, %v1180
        %v1182 = vlaneseq
        %v1183 = vshrl.u32 %v1182, 7
        %v1184 = vsub.s32 2, %v1183
        %v1185 = vrot.slane %v788, %v1184
        %v1186 = vlaneseq
        %v1187 = vshrl.u32 %v1186, 7
        %v1188 = vsub.s32 4, %v1187
        %v1189 = vrot.slane %v788, %v1188
        %v1190 = vlaneseq
        %v1191 = vshrl.u32 %v1190, 7
        %v1192 = vsub.s32 6, %v1191
        %v1193 = vrot.slane %v788, %v1192
        %1194 = vrot.lane.b32.xlu0 %v1181, 2
        %v1195 = vpop.permute.xlu0 %1194
        %1196 = vrot.lane.b32.xlu0 %v1185, 2
        %v1197 = vpop.permute.xlu0 %1196
        %1198 = vrot.lane.b32.xlu0 %v1189, 2
        %v1199 = vpop.permute.xlu0 %1198
        %1200 = vrot.lane.b32.xlu0 %v1193, 2
        %v1201 = vpop.permute.xlu0 %1200
        %vm1202 = vcmask 15360
        %v1203 = vsel %vm1202, %v1195, %v1197
        %v1204 = vsel %vm1202, %v1197, %v1199
        %v1205 = vsel %vm1202, %v1199, %v1201
        %v1211 = vsel %vm1202, 0.0, %v1195
        %v1212 = vsel %vm1202, %v1201, 0.0
        %v1214 = vrot.slane %v1211, 7
        %v1215 = vrot.slane %v1203, 7
        %v1216 = vrot.slane %v1204, 7
        %v1217 = vrot.slane %v1205, 7
        %1218 = vrot.lane.b32.xlu0 %v1214, 127
        %v1219 = vpop.permute.xlu0 %1218
        %1220 = vrot.lane.b32.xlu0 %v1215, 127
        %v1221 = vpop.permute.xlu0 %1220
        %1222 = vrot.lane.b32.xlu0 %v1216, 127
        %v1223 = vpop.permute.xlu0 %1222
        %1224 = vrot.lane.b32.xlu0 %v1217, 127
        %v1225 = vpop.permute.xlu0 %1224
        %vm1226 = vcmask 1039360
        %v1227 = vsel %vm1226, %v1219, %v1221
        %v1228 = vsel %vm1226, %v1221, %v1223
        %v1229 = vsel %vm1226, %v1223, %v1225
        %v1234 = vrot.slane %v1211, 6
        %v1235 = vrot.slane %v1203, 6
        %v1236 = vrot.slane %v1204, 6
        %v1237 = vrot.slane %v1205, 6
        %1238 = vrot.lane.b32.xlu0 %v1234, 126
        %v1239 = vpop.permute.xlu0 %1238
        %1240 = vrot.lane.b32.xlu0 %v1235, 126
        %v1241 = vpop.permute.xlu0 %1240
        %1242 = vrot.lane.b32.xlu0 %v1236, 126
        %v1243 = vpop.permute.xlu0 %1242
        %1244 = vrot.lane.b32.xlu0 %v1237, 126
        %v1245 = vpop.permute.xlu0 %1244
        %vm1246 = vcmask 1031168
        %v1247 = vsel %vm1246, %v1239, %v1241
        %v1248 = vsel %vm1246, %v1241, %v1243
        %v1249 = vsel %vm1246, %v1243, %v1245
        %v1254 = vrot.slane %v1211, 5
        %v1255 = vrot.slane %v1203, 5
        %v1256 = vrot.slane %v1204, 5
        %v1257 = vrot.slane %v1205, 5
        %1258 = vrot.lane.b32.xlu0 %v1254, 125
        %v1259 = vpop.permute.xlu0 %1258
        %1260 = vrot.lane.b32.xlu0 %v1255, 125
        %v1261 = vpop.permute.xlu0 %1260
        %1262 = vrot.lane.b32.xlu0 %v1256, 125
        %v1263 = vpop.permute.xlu0 %1262
        %1264 = vrot.lane.b32.xlu0 %v1257, 125
        %v1265 = vpop.permute.xlu0 %1264
        %vm1266 = vcmask 1022976
        %v1267 = vsel %vm1266, %v1259, %v1261
        %v1268 = vsel %vm1266, %v1261, %v1263
        %v1269 = vsel %vm1266, %v1263, %v1265
        %v1274 = vrot.slane %v1211, 4
        %v1275 = vrot.slane %v1203, 4
        %v1276 = vrot.slane %v1204, 4
        %v1277 = vrot.slane %v1205, 4
        %1278 = vrot.lane.b32.xlu0 %v1274, 124
        %v1279 = vpop.permute.xlu0 %1278
        %1280 = vrot.lane.b32.xlu0 %v1275, 124
        %v1281 = vpop.permute.xlu0 %1280
        %1282 = vrot.lane.b32.xlu0 %v1276, 124
        %v1283 = vpop.permute.xlu0 %1282
        %1284 = vrot.lane.b32.xlu0 %v1277, 124
        %v1285 = vpop.permute.xlu0 %1284
        %vm1286 = vcmask 1014784
        %v1287 = vsel %vm1286, %v1279, %v1281
        %v1288 = vsel %vm1286, %v1281, %v1283
        %v1289 = vsel %vm1286, %v1283, %v1285
        %v1294 = vrot.slane %v1211, 3
        %v1295 = vrot.slane %v1203, 3
        %v1296 = vrot.slane %v1204, 3
        %v1297 = vrot.slane %v1205, 3
        %1298 = vrot.lane.b32.xlu0 %v1294, 123
        %v1299 = vpop.permute.xlu0 %1298
        %1300 = vrot.lane.b32.xlu0 %v1295, 123
        %v1301 = vpop.permute.xlu0 %1300
        %1302 = vrot.lane.b32.xlu0 %v1296, 123
        %v1303 = vpop.permute.xlu0 %1302
        %1304 = vrot.lane.b32.xlu0 %v1297, 123
        %v1305 = vpop.permute.xlu0 %1304
        %vm1306 = vcmask 1006592
        %v1307 = vsel %vm1306, %v1299, %v1301
        %v1308 = vsel %vm1306, %v1301, %v1303
        %v1309 = vsel %vm1306, %v1303, %v1305
        %v1314 = vrot.slane %v1211, 2
        %v1315 = vrot.slane %v1203, 2
        %v1316 = vrot.slane %v1204, 2
        %v1317 = vrot.slane %v1205, 2
        %1318 = vrot.lane.b32.xlu0 %v1314, 122
        %v1319 = vpop.permute.xlu0 %1318
        %1320 = vrot.lane.b32.xlu0 %v1315, 122
        %v1321 = vpop.permute.xlu0 %1320
        %1322 = vrot.lane.b32.xlu0 %v1316, 122
        %v1323 = vpop.permute.xlu0 %1322
        %1324 = vrot.lane.b32.xlu0 %v1317, 122
        %v1325 = vpop.permute.xlu0 %1324
        %vm1326 = vcmask 998400
        %v1327 = vsel %vm1326, %v1319, %v1321
        %v1328 = vsel %vm1326, %v1321, %v1323
        %v1329 = vsel %vm1326, %v1323, %v1325
        %v1334 = vrot.slane %v1211, 1
        %v1335 = vrot.slane %v1203, 1
        %v1336 = vrot.slane %v1204, 1
        %v1337 = vrot.slane %v1205, 1
        %1338 = vrot.lane.b32.xlu0 %v1334, 121
        %v1339 = vpop.permute.xlu0 %1338
        %1340 = vrot.lane.b32.xlu0 %v1335, 121
        %v1341 = vpop.permute.xlu0 %1340
        %1342 = vrot.lane.b32.xlu0 %v1336, 121
        %v1343 = vpop.permute.xlu0 %1342
        %1344 = vrot.lane.b32.xlu0 %v1337, 121
        %v1345 = vpop.permute.xlu0 %1344
        %vm1346 = vcmask 990208
        %v1347 = vsel %vm1346, %v1339, %v1341
        %v1348 = vsel %vm1346, %v1341, %v1343
        %v1349 = vsel %vm1346, %v1343, %v1345
        %1354 = vrot.lane.b32.xlu0 %v1211, 120
        %v1355 = vpop.permute.xlu0 %1354
        %1356 = vrot.lane.b32.xlu0 %v1203, 120
        %v1357 = vpop.permute.xlu0 %1356
        %1358 = vrot.lane.b32.xlu0 %v1204, 120
        %v1359 = vpop.permute.xlu0 %1358
        %1360 = vrot.lane.b32.xlu0 %v1205, 120
        %v1361 = vpop.permute.xlu0 %1360
        %vm1362 = vcmask 982016
        %v1363 = vsel %vm1362, %v1355, %v1357
        %v1364 = vsel %vm1362, %v1357, %v1359
        %v1365 = vsel %vm1362, %v1359, %v1361
        %1370 = vrot.lane.b32.xlu0 %v1214, 119
        %v1371 = vpop.permute.xlu0 %1370
        %1372 = vrot.lane.b32.xlu0 %v1215, 119
        %v1373 = vpop.permute.xlu0 %1372
        %1374 = vrot.lane.b32.xlu0 %v1216, 119
        %v1375 = vpop.permute.xlu0 %1374
        %1376 = vrot.lane.b32.xlu0 %v1217, 119
        %v1377 = vpop.permute.xlu0 %1376
        %vm1378 = vcmask 973824
        %v1379 = vsel %vm1378, %v1371, %v1373
        %v1380 = vsel %vm1378, %v1373, %v1375
        %v1381 = vsel %vm1378, %v1375, %v1377
        %1386 = vrot.lane.b32.xlu0 %v1234, 118
        %v1387 = vpop.permute.xlu0 %1386
        %1388 = vrot.lane.b32.xlu0 %v1235, 118
        %v1389 = vpop.permute.xlu0 %1388
        %1390 = vrot.lane.b32.xlu0 %v1236, 118
        %v1391 = vpop.permute.xlu0 %1390
        %1392 = vrot.lane.b32.xlu0 %v1237, 118
        %v1393 = vpop.permute.xlu0 %1392
        %vm1394 = vcmask 965632
        %v1395 = vsel %vm1394, %v1387, %v1389
        %v1396 = vsel %vm1394, %v1389, %v1391
        %v1397 = vsel %vm1394, %v1391, %v1393
        %1402 = vrot.lane.b32.xlu0 %v1254, 117
        %v1403 = vpop.permute.xlu0 %1402
        %1404 = vrot.lane.b32.xlu0 %v1255, 117
        %v1405 = vpop.permute.xlu0 %1404
        %1406 = vrot.lane.b32.xlu0 %v1256, 117
        %v1407 = vpop.permute.xlu0 %1406
        %1408 = vrot.lane.b32.xlu0 %v1257, 117
        %v1409 = vpop.permute.xlu0 %1408
        %vm1410 = vcmask 957440
        %v1411 = vsel %vm1410, %v1403, %v1405
        %v1412 = vsel %vm1410, %v1405, %v1407
        %v1413 = vsel %vm1410, %v1407, %v1409
        %v1419 = vrot.slane %v1212, 4
        %1420 = vrot.lane.b32.xlu0 %v1274, 116
        %v1421 = vpop.permute.xlu0 %1420
        %1422 = vrot.lane.b32.xlu0 %v1275, 116
        %v1423 = vpop.permute.xlu0 %1422
        %1424 = vrot.lane.b32.xlu0 %v1276, 116
        %v1425 = vpop.permute.xlu0 %1424
        %1426 = vrot.lane.b32.xlu0 %v1277, 116
        %v1427 = vpop.permute.xlu0 %1426
        %1428 = vrot.lane.b32.xlu0 %v1419, 116
        %v1429 = vpop.permute.xlu0 %1428
        %vm1430 = vcmask 949248
        %v1431 = vsel %vm1430, %v1421, %v1423
        %v1432 = vsel %vm1430, %v1423, %v1425
        %v1433 = vsel %vm1430, %v1425, %v1427
        %v1434 = vsel %vm1430, %v1427, %v1429
        %v1439 = vrot.slane %v1212, 3
        %1440 = vrot.lane.b32.xlu0 %v1294, 115
        %v1441 = vpop.permute.xlu0 %1440
        %1442 = vrot.lane.b32.xlu0 %v1295, 115
        %v1443 = vpop.permute.xlu0 %1442
        %1444 = vrot.lane.b32.xlu0 %v1296, 115
        %v1445 = vpop.permute.xlu0 %1444
        %1446 = vrot.lane.b32.xlu0 %v1297, 115
        %v1447 = vpop.permute.xlu0 %1446
        %1448 = vrot.lane.b32.xlu0 %v1439, 115
        %v1449 = vpop.permute.xlu0 %1448
        %vm1450 = vcmask 941056
        %v1451 = vsel %vm1450, %v1441, %v1443
        %v1452 = vsel %vm1450, %v1443, %v1445
        %v1453 = vsel %vm1450, %v1445, %v1447
        %v1454 = vsel %vm1450, %v1447, %v1449
        %v1459 = vrot.slane %v1212, 2
        %1460 = vrot.lane.b32.xlu0 %v1314, 114
        %v1461 = vpop.permute.xlu0 %1460
        %1462 = vrot.lane.b32.xlu0 %v1315, 114
        %v1463 = vpop.permute.xlu0 %1462
        %1464 = vrot.lane.b32.xlu0 %v1316, 114
        %v1465 = vpop.permute.xlu0 %1464
        %1466 = vrot.lane.b32.xlu0 %v1317, 114
        %v1467 = vpop.permute.xlu0 %1466
        %1468 = vrot.lane.b32.xlu0 %v1459, 114
        %v1469 = vpop.permute.xlu0 %1468
        %vm1470 = vcmask 932864
        %v1471 = vsel %vm1470, %v1461, %v1463
        %v1472 = vsel %vm1470, %v1463, %v1465
        %v1473 = vsel %vm1470, %v1465, %v1467
        %v1474 = vsel %vm1470, %v1467, %v1469
        %v1479 = vrot.slane %v1212, 1
        %1480 = vrot.lane.b32.xlu0 %v1334, 113
        %v1481 = vpop.permute.xlu0 %1480
        %1482 = vrot.lane.b32.xlu0 %v1335, 113
        %v1483 = vpop.permute.xlu0 %1482
        %1484 = vrot.lane.b32.xlu0 %v1336, 113
        %v1485 = vpop.permute.xlu0 %1484
        %1486 = vrot.lane.b32.xlu0 %v1337, 113
        %v1487 = vpop.permute.xlu0 %1486
        %1488 = vrot.lane.b32.xlu0 %v1479, 113
        %v1489 = vpop.permute.xlu0 %1488
        %vm1490 = vcmask 924672
        %v1491 = vsel %vm1490, %v1481, %v1483
        %v1492 = vsel %vm1490, %v1483, %v1485
        %v1493 = vsel %vm1490, %v1485, %v1487
        %v1494 = vsel %vm1490, %v1487, %v1489
        %vm1499 = vcmask 1040384
        %v1500 = vsel %vm1499, %v1211, %v1227
        %v1501 = vsel %vm1499, %v1203, %v1228
        %v1502 = vsel %vm1499, %v1204, %v1229
        %v1503 = vsel %vm1499, %v1205, %v1225
        %vm1504 = vcmask 1041408
        %v1505 = vsel %vm1504, %v1500, %v1247
        %v1506 = vsel %vm1504, %v1501, %v1248
        %v1507 = vsel %vm1504, %v1502, %v1249
        %v1508 = vsel %vm1504, %v1503, %v1245
        %vm1509 = vcmask 1042432
        %v1510 = vsel %vm1509, %v1505, %v1267
        %v1511 = vsel %vm1509, %v1506, %v1268
        %v1512 = vsel %vm1509, %v1507, %v1269
        %v1513 = vsel %vm1509, %v1508, %v1265
        %vm1514 = vcmask 1043456
        %v1515 = vsel %vm1514, %v1510, %v1287
        %v1516 = vsel %vm1514, %v1511, %v1288
        %v1517 = vsel %vm1514, %v1512, %v1289
        %v1518 = vsel %vm1514, %v1513, %v1285
        %vm1519 = vcmask 1044480
        %v1520 = vsel %vm1519, %v1515, %v1307
        %v1521 = vsel %vm1519, %v1516, %v1308
        %v1522 = vsel %vm1519, %v1517, %v1309
        %v1523 = vsel %vm1519, %v1518, %v1305
        %vm1524 = vcmask 1045504
        %v1525 = vsel %vm1524, %v1520, %v1327
        %v1526 = vsel %vm1524, %v1521, %v1328
        %v1527 = vsel %vm1524, %v1522, %v1329
        %v1528 = vsel %vm1524, %v1523, %v1325
        %vm1529 = vcmask 1046528
        %v1530 = vsel %vm1529, %v1525, %v1347
        %v1531 = vsel %vm1529, %v1526, %v1348
        %v1532 = vsel %vm1529, %v1527, %v1349
        %v1533 = vsel %vm1529, %v1528, %v1345
        %v1534 = vsel %vm1499, %v1363, %v1379
        %v1535 = vsel %vm1499, %v1364, %v1380
        %v1536 = vsel %vm1499, %v1365, %v1381
        %v1537 = vsel %vm1499, %v1361, %v1377
        %v1538 = vsel %vm1504, %v1534, %v1395
        %v1539 = vsel %vm1504, %v1535, %v1396
        %v1540 = vsel %vm1504, %v1536, %v1397
        %v1541 = vsel %vm1504, %v1537, %v1393
        %v1542 = vsel %vm1509, %v1538, %v1411
        %v1543 = vsel %vm1509, %v1539, %v1412
        %v1544 = vsel %vm1509, %v1540, %v1413
        %v1545 = vsel %vm1509, %v1541, %v1409
        %v1546 = vsel %vm1514, %v1542, %v1431
        %v1547 = vsel %vm1514, %v1543, %v1432
        %v1548 = vsel %vm1514, %v1544, %v1433
        %v1549 = vsel %vm1514, %v1545, %v1434
        %v1550 = vsel %vm1519, %v1546, %v1451
        %v1551 = vsel %vm1519, %v1547, %v1452
        %v1552 = vsel %vm1519, %v1548, %v1453
        %v1553 = vsel %vm1519, %v1549, %v1454
        %v1554 = vsel %vm1524, %v1550, %v1471
        %v1555 = vsel %vm1524, %v1551, %v1472
        %v1556 = vsel %vm1524, %v1552, %v1473
        %v1557 = vsel %vm1524, %v1553, %v1474
        %v1558 = vsel %vm1529, %v1554, %v1491
        %v1559 = vsel %vm1529, %v1555, %v1492
        %v1560 = vsel %vm1529, %v1556, %v1493
        %v1561 = vsel %vm1529, %v1557, %v1494
        %v1562 = vsel %vm1410, %v1533, 0.0
        %v1563 = vsel %vm1410, %v1561, 0.0
        %v1564 = vlaneseq
        %v1565 = vshrl.u32 %v1564, 7
        %v1566 = vsub.s32 1, %v1565
        %v1567 = vrot.slane %v788, %v1566
        %v1568 = vlaneseq
        %v1569 = vshrl.u32 %v1568, 7
        %v1570 = vsub.s32 3, %v1569
        %v1571 = vrot.slane %v788, %v1570
        %v1572 = vlaneseq
        %v1573 = vshrl.u32 %v1572, 7
        %v1574 = vsub.s32 5, %v1573
        %v1575 = vrot.slane %v788, %v1574
        %v1576 = vlaneseq
        %v1577 = vshrl.u32 %v1576, 7
        %v1578 = vsub.s32 7, %v1577
        %v1579 = vrot.slane %v788, %v1578
        %1580 = vrot.lane.b32.xlu0 %v1567, 2
        %v1581 = vpop.permute.xlu0 %1580
        %1582 = vrot.lane.b32.xlu0 %v1571, 2
        %v1583 = vpop.permute.xlu0 %1582
        %1584 = vrot.lane.b32.xlu0 %v1575, 2
        %v1585 = vpop.permute.xlu0 %1584
        %1586 = vrot.lane.b32.xlu0 %v1579, 2
        %v1587 = vpop.permute.xlu0 %1586
        %v1588 = vsel %vm1202, %v1581, %v1583
        %v1589 = vsel %vm1202, %v1583, %v1585
        %v1590 = vsel %vm1202, %v1585, %v1587
        %v1596 = vsel %vm1202, 0.0, %v1581
        %v1597 = vsel %vm1202, %v1587, 0.0
        %v1599 = vrot.slane %v1596, 7
        %v1600 = vrot.slane %v1588, 7
        %v1601 = vrot.slane %v1589, 7
        %v1602 = vrot.slane %v1590, 7
        %1603 = vrot.lane.b32.xlu0 %v1599, 127
        %v1604 = vpop.permute.xlu0 %1603
        %1605 = vrot.lane.b32.xlu0 %v1600, 127
        %v1606 = vpop.permute.xlu0 %1605
        %1607 = vrot.lane.b32.xlu0 %v1601, 127
        %v1608 = vpop.permute.xlu0 %1607
        %1609 = vrot.lane.b32.xlu0 %v1602, 127
        %v1610 = vpop.permute.xlu0 %1609
        %v1611 = vsel %vm1226, %v1604, %v1606
        %v1612 = vsel %vm1226, %v1606, %v1608
        %v1613 = vsel %vm1226, %v1608, %v1610
        %v1618 = vrot.slane %v1596, 6
        %v1619 = vrot.slane %v1588, 6
        %v1620 = vrot.slane %v1589, 6
        %v1621 = vrot.slane %v1590, 6
        %1622 = vrot.lane.b32.xlu0 %v1618, 126
        %v1623 = vpop.permute.xlu0 %1622
        %1624 = vrot.lane.b32.xlu0 %v1619, 126
        %v1625 = vpop.permute.xlu0 %1624
        %1626 = vrot.lane.b32.xlu0 %v1620, 126
        %v1627 = vpop.permute.xlu0 %1626
        %1628 = vrot.lane.b32.xlu0 %v1621, 126
        %v1629 = vpop.permute.xlu0 %1628
        %v1630 = vsel %vm1246, %v1623, %v1625
        %v1631 = vsel %vm1246, %v1625, %v1627
        %v1632 = vsel %vm1246, %v1627, %v1629
        %v1637 = vrot.slane %v1596, 5
        %v1638 = vrot.slane %v1588, 5
        %v1639 = vrot.slane %v1589, 5
        %v1640 = vrot.slane %v1590, 5
        %1641 = vrot.lane.b32.xlu0 %v1637, 125
        %v1642 = vpop.permute.xlu0 %1641
        %1643 = vrot.lane.b32.xlu0 %v1638, 125
        %v1644 = vpop.permute.xlu0 %1643
        %1645 = vrot.lane.b32.xlu0 %v1639, 125
        %v1646 = vpop.permute.xlu0 %1645
        %1647 = vrot.lane.b32.xlu0 %v1640, 125
        %v1648 = vpop.permute.xlu0 %1647
        %v1649 = vsel %vm1266, %v1642, %v1644
        %v1650 = vsel %vm1266, %v1644, %v1646
        %v1651 = vsel %vm1266, %v1646, %v1648
        %v1656 = vrot.slane %v1596, 4
        %v1657 = vrot.slane %v1588, 4
        %v1658 = vrot.slane %v1589, 4
        %v1659 = vrot.slane %v1590, 4
        %1660 = vrot.lane.b32.xlu0 %v1656, 124
        %v1661 = vpop.permute.xlu0 %1660
        %1662 = vrot.lane.b32.xlu0 %v1657, 124
        %v1663 = vpop.permute.xlu0 %1662
        %1664 = vrot.lane.b32.xlu0 %v1658, 124
        %v1665 = vpop.permute.xlu0 %1664
        %1666 = vrot.lane.b32.xlu0 %v1659, 124
        %v1667 = vpop.permute.xlu0 %1666
        %v1668 = vsel %vm1286, %v1661, %v1663
        %v1669 = vsel %vm1286, %v1663, %v1665
        %v1670 = vsel %vm1286, %v1665, %v1667
        %v1675 = vrot.slane %v1596, 3
        %v1676 = vrot.slane %v1588, 3
        %v1677 = vrot.slane %v1589, 3
        %v1678 = vrot.slane %v1590, 3
        %1679 = vrot.lane.b32.xlu0 %v1675, 123
        %v1680 = vpop.permute.xlu0 %1679
        %1681 = vrot.lane.b32.xlu0 %v1676, 123
        %v1682 = vpop.permute.xlu0 %1681
        %1683 = vrot.lane.b32.xlu0 %v1677, 123
        %v1684 = vpop.permute.xlu0 %1683
        %1685 = vrot.lane.b32.xlu0 %v1678, 123
        %v1686 = vpop.permute.xlu0 %1685
        %v1687 = vsel %vm1306, %v1680, %v1682
        %v1688 = vsel %vm1306, %v1682, %v1684
        %v1689 = vsel %vm1306, %v1684, %v1686
        %v1694 = vrot.slane %v1596, 2
        %v1695 = vrot.slane %v1588, 2
        %v1696 = vrot.slane %v1589, 2
        %v1697 = vrot.slane %v1590, 2
        %1698 = vrot.lane.b32.xlu0 %v1694, 122
        %v1699 = vpop.permute.xlu0 %1698
        %1700 = vrot.lane.b32.xlu0 %v1695, 122
        %v1701 = vpop.permute.xlu0 %1700
        %1702 = vrot.lane.b32.xlu0 %v1696, 122
        %v1703 = vpop.permute.xlu0 %1702
        %1704 = vrot.lane.b32.xlu0 %v1697, 122
        %v1705 = vpop.permute.xlu0 %1704
        %v1706 = vsel %vm1326, %v1699, %v1701
        %v1707 = vsel %vm1326, %v1701, %v1703
        %v1708 = vsel %vm1326, %v1703, %v1705
        %v1713 = vrot.slane %v1596, 1
        %v1714 = vrot.slane %v1588, 1
        %v1715 = vrot.slane %v1589, 1
        %v1716 = vrot.slane %v1590, 1
        %1717 = vrot.lane.b32.xlu0 %v1713, 121
        %v1718 = vpop.permute.xlu0 %1717
        %1719 = vrot.lane.b32.xlu0 %v1714, 121
        %v1720 = vpop.permute.xlu0 %1719
        %1721 = vrot.lane.b32.xlu0 %v1715, 121
        %v1722 = vpop.permute.xlu0 %1721
        %1723 = vrot.lane.b32.xlu0 %v1716, 121
        %v1724 = vpop.permute.xlu0 %1723
        %v1725 = vsel %vm1346, %v1718, %v1720
        %v1726 = vsel %vm1346, %v1720, %v1722
        %v1727 = vsel %vm1346, %v1722, %v1724
        %1732 = vrot.lane.b32.xlu0 %v1596, 120
        %v1733 = vpop.permute.xlu0 %1732
        %1734 = vrot.lane.b32.xlu0 %v1588, 120
        %v1735 = vpop.permute.xlu0 %1734
        %1736 = vrot.lane.b32.xlu0 %v1589, 120
        %v1737 = vpop.permute.xlu0 %1736
        %1738 = vrot.lane.b32.xlu0 %v1590, 120
        %v1739 = vpop.permute.xlu0 %1738
        %v1740 = vsel %vm1362, %v1733, %v1735
        %v1741 = vsel %vm1362, %v1735, %v1737
        %v1742 = vsel %vm1362, %v1737, %v1739
        %1747 = vrot.lane.b32.xlu0 %v1599, 119
        %v1748 = vpop.permute.xlu0 %1747
        %1749 = vrot.lane.b32.xlu0 %v1600, 119
        %v1750 = vpop.permute.xlu0 %1749
        %1751 = vrot.lane.b32.xlu0 %v1601, 119
        %v1752 = vpop.permute.xlu0 %1751
        %1753 = vrot.lane.b32.xlu0 %v1602, 119
        %v1754 = vpop.permute.xlu0 %1753
        %v1755 = vsel %vm1378, %v1748, %v1750
        %v1756 = vsel %vm1378, %v1750, %v1752
        %v1757 = vsel %vm1378, %v1752, %v1754
        %1762 = vrot.lane.b32.xlu0 %v1618, 118
        %v1763 = vpop.permute.xlu0 %1762
        %1764 = vrot.lane.b32.xlu0 %v1619, 118
        %v1765 = vpop.permute.xlu0 %1764
        %1766 = vrot.lane.b32.xlu0 %v1620, 118
        %v1767 = vpop.permute.xlu0 %1766
        %1768 = vrot.lane.b32.xlu0 %v1621, 118
        %v1769 = vpop.permute.xlu0 %1768
        %v1770 = vsel %vm1394, %v1763, %v1765
        %v1771 = vsel %vm1394, %v1765, %v1767
        %v1772 = vsel %vm1394, %v1767, %v1769
        %1777 = vrot.lane.b32.xlu0 %v1637, 117
        %v1778 = vpop.permute.xlu0 %1777
        %1779 = vrot.lane.b32.xlu0 %v1638, 117
        %v1780 = vpop.permute.xlu0 %1779
        %1781 = vrot.lane.b32.xlu0 %v1639, 117
        %v1782 = vpop.permute.xlu0 %1781
        %1783 = vrot.lane.b32.xlu0 %v1640, 117
        %v1784 = vpop.permute.xlu0 %1783
        %v1785 = vsel %vm1410, %v1778, %v1780
        %v1786 = vsel %vm1410, %v1780, %v1782
        %v1787 = vsel %vm1410, %v1782, %v1784
        %v1793 = vrot.slane %v1597, 4
        %1794 = vrot.lane.b32.xlu0 %v1656, 116
        %v1795 = vpop.permute.xlu0 %1794
        %1796 = vrot.lane.b32.xlu0 %v1657, 116
        %v1797 = vpop.permute.xlu0 %1796
        %1798 = vrot.lane.b32.xlu0 %v1658, 116
        %v1799 = vpop.permute.xlu0 %1798
        %1800 = vrot.lane.b32.xlu0 %v1659, 116
        %v1801 = vpop.permute.xlu0 %1800
        %1802 = vrot.lane.b32.xlu0 %v1793, 116
        %v1803 = vpop.permute.xlu0 %1802
        %v1804 = vsel %vm1430, %v1795, %v1797
        %v1805 = vsel %vm1430, %v1797, %v1799
        %v1806 = vsel %vm1430, %v1799, %v1801
        %v1807 = vsel %vm1430, %v1801, %v1803
        %v1812 = vrot.slane %v1597, 3
        %1813 = vrot.lane.b32.xlu0 %v1675, 115
        %v1814 = vpop.permute.xlu0 %1813
        %1815 = vrot.lane.b32.xlu0 %v1676, 115
        %v1816 = vpop.permute.xlu0 %1815
        %1817 = vrot.lane.b32.xlu0 %v1677, 115
        %v1818 = vpop.permute.xlu0 %1817
        %1819 = vrot.lane.b32.xlu0 %v1678, 115
        %v1820 = vpop.permute.xlu0 %1819
        %1821 = vrot.lane.b32.xlu0 %v1812, 115
        %v1822 = vpop.permute.xlu0 %1821
        %v1823 = vsel %vm1450, %v1814, %v1816
        %v1824 = vsel %vm1450, %v1816, %v1818
        %v1825 = vsel %vm1450, %v1818, %v1820
        %v1826 = vsel %vm1450, %v1820, %v1822
        %v1831 = vrot.slane %v1597, 2
        %1832 = vrot.lane.b32.xlu0 %v1694, 114
        %v1833 = vpop.permute.xlu0 %1832
        %1834 = vrot.lane.b32.xlu0 %v1695, 114
        %v1835 = vpop.permute.xlu0 %1834
        %1836 = vrot.lane.b32.xlu0 %v1696, 114
        %v1837 = vpop.permute.xlu0 %1836
        %1838 = vrot.lane.b32.xlu0 %v1697, 114
        %v1839 = vpop.permute.xlu0 %1838
        %1840 = vrot.lane.b32.xlu0 %v1831, 114
        %v1841 = vpop.permute.xlu0 %1840
        %v1842 = vsel %vm1470, %v1833, %v1835
        %v1843 = vsel %vm1470, %v1835, %v1837
        %v1844 = vsel %vm1470, %v1837, %v1839
        %v1845 = vsel %vm1470, %v1839, %v1841
        %v1850 = vrot.slane %v1597, 1
        %1851 = vrot.lane.b32.xlu0 %v1713, 113
        %v1852 = vpop.permute.xlu0 %1851
        %1853 = vrot.lane.b32.xlu0 %v1714, 113
        %v1854 = vpop.permute.xlu0 %1853
        %1855 = vrot.lane.b32.xlu0 %v1715, 113
        %v1856 = vpop.permute.xlu0 %1855
        %1857 = vrot.lane.b32.xlu0 %v1716, 113
        %v1858 = vpop.permute.xlu0 %1857
        %1859 = vrot.lane.b32.xlu0 %v1850, 113
        %v1860 = vpop.permute.xlu0 %1859
        %v1861 = vsel %vm1490, %v1852, %v1854
        %v1862 = vsel %vm1490, %v1854, %v1856
        %v1863 = vsel %vm1490, %v1856, %v1858
        %v1864 = vsel %vm1490, %v1858, %v1860
        %v1869 = vsel %vm1499, %v1596, %v1611
        %v1870 = vsel %vm1499, %v1588, %v1612
        %v1871 = vsel %vm1499, %v1589, %v1613
        %v1872 = vsel %vm1499, %v1590, %v1610
        %v1873 = vsel %vm1504, %v1869, %v1630
        %v1874 = vsel %vm1504, %v1870, %v1631
        %v1875 = vsel %vm1504, %v1871, %v1632
        %v1876 = vsel %vm1504, %v1872, %v1629
        %v1877 = vsel %vm1509, %v1873, %v1649
        %v1878 = vsel %vm1509, %v1874, %v1650
        %v1879 = vsel %vm1509, %v1875, %v1651
        %v1880 = vsel %vm1509, %v1876, %v1648
        %v1881 = vsel %vm1514, %v1877, %v1668
        %v1882 = vsel %vm1514, %v1878, %v1669
        %v1883 = vsel %vm1514, %v1879, %v1670
        %v1884 = vsel %vm1514, %v1880, %v1667
        %v1885 = vsel %vm1519, %v1881, %v1687
        %v1886 = vsel %vm1519, %v1882, %v1688
        %v1887 = vsel %vm1519, %v1883, %v1689
        %v1888 = vsel %vm1519, %v1884, %v1686
        %v1889 = vsel %vm1524, %v1885, %v1706
        %v1890 = vsel %vm1524, %v1886, %v1707
        %v1891 = vsel %vm1524, %v1887, %v1708
        %v1892 = vsel %vm1524, %v1888, %v1705
        %v1893 = vsel %vm1529, %v1889, %v1725
        %v1894 = vsel %vm1529, %v1890, %v1726
        %v1895 = vsel %vm1529, %v1891, %v1727
        %v1896 = vsel %vm1529, %v1892, %v1724
        %v1897 = vsel %vm1499, %v1740, %v1755
        %v1898 = vsel %vm1499, %v1741, %v1756
        %v1899 = vsel %vm1499, %v1742, %v1757
        %v1900 = vsel %vm1499, %v1739, %v1754
        %v1901 = vsel %vm1504, %v1897, %v1770
        %v1902 = vsel %vm1504, %v1898, %v1771
        %v1903 = vsel %vm1504, %v1899, %v1772
        %v1904 = vsel %vm1504, %v1900, %v1769
        %v1905 = vsel %vm1509, %v1901, %v1785
        %v1906 = vsel %vm1509, %v1902, %v1786
        %v1907 = vsel %vm1509, %v1903, %v1787
        %v1908 = vsel %vm1509, %v1904, %v1784
        %v1909 = vsel %vm1514, %v1905, %v1804
        %v1910 = vsel %vm1514, %v1906, %v1805
        %v1911 = vsel %vm1514, %v1907, %v1806
        %v1912 = vsel %vm1514, %v1908, %v1807
        %v1913 = vsel %vm1519, %v1909, %v1823
        %v1914 = vsel %vm1519, %v1910, %v1824
        %v1915 = vsel %vm1519, %v1911, %v1825
        %v1916 = vsel %vm1519, %v1912, %v1826
        %v1917 = vsel %vm1524, %v1913, %v1842
        %v1918 = vsel %vm1524, %v1914, %v1843
        %v1919 = vsel %vm1524, %v1915, %v1844
        %v1920 = vsel %vm1524, %v1916, %v1845
        %v1921 = vsel %vm1529, %v1917, %v1861
        %v1922 = vsel %vm1529, %v1918, %v1862
        %v1923 = vsel %vm1529, %v1919, %v1863
        %v1924 = vsel %vm1529, %v1920, %v1864
        %v1925 = vsel %vm1410, %v1896, 0.0
        %v1926 = vsel %vm1410, %v1924, 0.0
        %1928 = vset.pattern.permute.xlu0 0
        %1929 = vperm.xlu0 %1928, %v815
        %v1930 = vpop.permute.xlu0 %1929
        %1933 = vset.pattern.permute.xlu0 0
        %1934 = vperm.xlu0 %1933, %v816
        %v1935 = vpop.permute.xlu0 %1934
        %vm1937 = vcmask 130048
        %v1939 = vsel %vm1937, %v789, 0
        %v1942 = vsel %vm1937, %v790, 0
        %1944 = vmatprep.subr.mxu0 0.0
        %1945 = vmatpush1.msra.mxu0 0.0
        %1946 = vmatprep.subr.mxu0 0.0
        %1947 = vmatpush1.msra.mxu0 0.0
        %1948 = vmatprep.subr.mxu0 0.0
        %1949 = vmatpush1.msra.mxu0 0.0
        %1950 = vmatprep.subr.mxu0 0.0
        %1951 = vmatpush1.msra.mxu0 0.0
        %1952 = vmatprep.subr.mxu0 0.0
        %1953 = vmatpush1.msra.mxu0 0.0
        %1954 = vmatprep.subr.mxu0 0.0
        %1955 = vmatpush1.msra.mxu0 0.0
        %1956 = vmatprep.subr.mxu0 0.0
        %1957 = vmatpush1.msra.mxu0 0.0
        %1958 = vmatprep.subr.mxu0 0.0
        %1959 = vmatpush1.msra.mxu0 0.0
        %1960 = vmatprep.subr.mxu0 0.0
        %1961 = vmatpush1.msra.mxu0 0.0
        %1962 = vmatprep.subr.mxu0 0.0
        %1963 = vmatpush1.msra.mxu0 0.0
        %1964 = vmatprep.subr.mxu0 0.0
        %1965 = vmatpush1.msra.mxu0 0.0
        %1966 = vmatprep.subr.mxu0 0.0
        %1967 = vmatpush1.msra.mxu0 0.0
        %1968 = vmatprep.subr.mxu0 0.0
        %1969 = vmatpush1.msra.mxu0 0.0
        %1970 = vmatprep.subr.mxu0 0.0
        %1971 = vmatpush1.msra.mxu0 0.0
        %1972 = vmatprep.subr.mxu0 %v1559
        %1973 = vmatpush1.msra.mxu0 %v1558
        %1974 = vmatprep.subr.mxu0 %v1531
        %1975 = vmatpush1.msra.mxu0 %v1530
        %1976 = vmatprep.subr.mxu0 0.0
        %1977 = vmatpush2.msra.mxu0 0.0
        %1978 = vmatprep.subr.mxu0 0.0
        %1979 = vmatpush2.msra.mxu0 0.0
        %1980 = vmatprep.subr.mxu0 0.0
        %1981 = vmatpush2.msra.mxu0 0.0
        %1982 = vmatprep.subr.mxu0 0.0
        %1983 = vmatpush2.msra.mxu0 0.0
        %1984 = vmatprep.subr.mxu0 0.0
        %1985 = vmatpush2.msra.mxu0 0.0
        %1986 = vmatprep.subr.mxu0 0.0
        %1987 = vmatpush2.msra.mxu0 0.0
        %1988 = vmatprep.subr.mxu0 0.0
        %1989 = vmatpush2.msra.mxu0 0.0
        %1990 = vmatprep.subr.mxu0 0.0
        %1991 = vmatpush2.msra.mxu0 0.0
        %1992 = vmatprep.subr.mxu0 0.0
        %1993 = vmatpush2.msra.mxu0 0.0
        %1994 = vmatprep.subr.mxu0 0.0
        %1995 = vmatpush2.msra.mxu0 0.0
        %1996 = vmatprep.subr.mxu0 0.0
        %1997 = vmatpush2.msra.mxu0 0.0
        %1998 = vmatprep.subr.mxu0 0.0
        %1999 = vmatpush2.msra.mxu0 0.0
        %2000 = vmatprep.subr.mxu0 0.0
        %2001 = vmatpush2.msra.mxu0 0.0
        %2002 = vmatprep.subr.mxu0 0.0
        %2003 = vmatpush2.msra.mxu0 0.0
        %2004 = vmatprep.subr.mxu0 0.0
        %2005 = vmatpush2.msra.mxu0 0.0
        %2006 = vmatprep.subr.mxu0 0.0
        %2007 = vmatpush2.msra.mxu0 0.0
        %2008 = vmatprep.mubr.f32.mxu0 0.0
        %2009 = vmatmul.mubr.f32.gmra.mxu0 %v1939
        %v2010 = vpop.f32.mrf.mxu0
        %v2011 = vadd.f32 %v1930, %v2010
        %v2012 = vpop.f32.mrf.mxu0
        %v2013 = vadd.f32 %v1930, %v2012
        %2014 = vmatprep.mubr.f32.mxu0 0.0
        %2015 = vmatmul.mubr.f32.gmra.mxu0 %v1942
        %v2016 = vpop.f32.mrf.mxu0
        %v2017 = vadd.f32 %v1935, %v2016
        %v2018 = vpop.f32.mrf.mxu0
        %v2019 = vadd.f32 %v1935, %v2018
        %2020 = vdwg.mxu0
        %2021 = vmatprep.subr.mxu0 0.0
        %2022 = vmatpush1.msra.mxu0 0.0
        %2023 = vmatprep.subr.mxu0 0.0
        %2024 = vmatpush1.msra.mxu0 0.0
        %2025 = vmatprep.subr.mxu0 0.0
        %2026 = vmatpush1.msra.mxu0 0.0
        %2027 = vmatprep.subr.mxu0 0.0
        %2028 = vmatpush1.msra.mxu0 0.0
        %2029 = vmatprep.subr.mxu0 0.0
        %2030 = vmatpush1.msra.mxu0 0.0
        %2031 = vmatprep.subr.mxu0 0.0
        %2032 = vmatpush1.msra.mxu0 0.0
        %2033 = vmatprep.subr.mxu0 0.0
        %2034 = vmatpush1.msra.mxu0 0.0
        %2035 = vmatprep.subr.mxu0 0.0
        %2036 = vmatpush1.msra.mxu0 0.0
        %2037 = vmatprep.subr.mxu0 0.0
        %2038 = vmatpush1.msra.mxu0 0.0
        %2039 = vmatprep.subr.mxu0 0.0
        %2040 = vmatpush1.msra.mxu0 0.0
        %2041 = vmatprep.subr.mxu0 0.0
        %2042 = vmatpush1.msra.mxu0 0.0
        %2043 = vmatprep.subr.mxu0 0.0
        %2044 = vmatpush1.msra.mxu0 0.0
        %2045 = vmatprep.subr.mxu0 0.0
        %2046 = vmatpush1.msra.mxu0 0.0
        %2047 = vmatprep.subr.mxu0 0.0
        %2048 = vmatpush1.msra.mxu0 0.0
        %2049 = vmatprep.subr.mxu0 %v1563
        %2050 = vmatpush1.msra.mxu0 %v1560
        %2051 = vmatprep.subr.mxu0 %v1562
        %2052 = vmatpush1.msra.mxu0 %v1532
        %2053 = vmatprep.subr.mxu0 0.0
        %2054 = vmatpush2.msra.mxu0 0.0
        %2055 = vmatprep.subr.mxu0 0.0
        %2056 = vmatpush2.msra.mxu0 0.0
        %2057 = vmatprep.subr.mxu0 0.0
        %2058 = vmatpush2.msra.mxu0 0.0
        %2059 = vmatprep.subr.mxu0 0.0
        %2060 = vmatpush2.msra.mxu0 0.0
        %2061 = vmatprep.subr.mxu0 0.0
        %2062 = vmatpush2.msra.mxu0 0.0
        %2063 = vmatprep.subr.mxu0 0.0
        %2064 = vmatpush2.msra.mxu0 0.0
        %2065 = vmatprep.subr.mxu0 0.0
        %2066 = vmatpush2.msra.mxu0 0.0
        %2067 = vmatprep.subr.mxu0 0.0
        %2068 = vmatpush2.msra.mxu0 0.0
        %2069 = vmatprep.subr.mxu0 0.0
        %2070 = vmatpush2.msra.mxu0 0.0
        %2071 = vmatprep.subr.mxu0 0.0
        %2072 = vmatpush2.msra.mxu0 0.0
        %2073 = vmatprep.subr.mxu0 0.0
        %2074 = vmatpush2.msra.mxu0 0.0
        %2075 = vmatprep.subr.mxu0 0.0
        %2076 = vmatpush2.msra.mxu0 0.0
        %2077 = vmatprep.subr.mxu0 0.0
        %2078 = vmatpush2.msra.mxu0 0.0
        %2079 = vmatprep.subr.mxu0 0.0
        %2080 = vmatpush2.msra.mxu0 0.0
        %2081 = vmatprep.subr.mxu0 0.0
        %2082 = vmatpush2.msra.mxu0 0.0
        %2083 = vmatprep.subr.mxu0 0.0
        %2084 = vmatpush2.msra.mxu0 0.0
        %2085 = vmatprep.mubr.f32.mxu0 0.0
        %2086 = vmatmul.mubr.f32.gmra.mxu0 %v1939
        %v2087 = vpop.f32.mrf.mxu0
        %v2088 = vadd.f32 %v1930, %v2087
        %v2089 = vpop.f32.mrf.mxu0
        %v2090 = vadd.f32 %v1930, %v2089
        %2091 = vmatprep.mubr.f32.mxu0 0.0
        %2092 = vmatmul.mubr.f32.gmra.mxu0 %v1942
        %v2093 = vpop.f32.mrf.mxu0
        %v2094 = vadd.f32 %v1935, %v2093
        %v2095 = vpop.f32.mrf.mxu0
        %v2096 = vadd.f32 %v1935, %v2095
        %2097 = vdwg.mxu0
        %2098 = vmatprep.subr.mxu0 0.0
        %2099 = vmatpush1.msra.mxu0 0.0
        %2100 = vmatprep.subr.mxu0 0.0
        %2101 = vmatpush1.msra.mxu0 0.0
        %2102 = vmatprep.subr.mxu0 0.0
        %2103 = vmatpush1.msra.mxu0 0.0
        %2104 = vmatprep.subr.mxu0 0.0
        %2105 = vmatpush1.msra.mxu0 0.0
        %2106 = vmatprep.subr.mxu0 0.0
        %2107 = vmatpush1.msra.mxu0 0.0
        %2108 = vmatprep.subr.mxu0 0.0
        %2109 = vmatpush1.msra.mxu0 0.0
        %2110 = vmatprep.subr.mxu0 0.0
        %2111 = vmatpush1.msra.mxu0 0.0
        %2112 = vmatprep.subr.mxu0 0.0
        %2113 = vmatpush1.msra.mxu0 0.0
        %2114 = vmatprep.subr.mxu0 0.0
        %2115 = vmatpush1.msra.mxu0 0.0
        %2116 = vmatprep.subr.mxu0 0.0
        %2117 = vmatpush1.msra.mxu0 0.0
        %2118 = vmatprep.subr.mxu0 0.0
        %2119 = vmatpush1.msra.mxu0 0.0
        %2120 = vmatprep.subr.mxu0 0.0
        %2121 = vmatpush1.msra.mxu0 0.0
        %2122 = vmatprep.subr.mxu0 0.0
        %2123 = vmatpush1.msra.mxu0 0.0
        %2124 = vmatprep.subr.mxu0 0.0
        %2125 = vmatpush1.msra.mxu0 0.0
        %2126 = vmatprep.subr.mxu0 %v1922
        %2127 = vmatpush1.msra.mxu0 %v1921
        %2128 = vmatprep.subr.mxu0 %v1894
        %2129 = vmatpush1.msra.mxu0 %v1893
        %2130 = vmatprep.subr.mxu0 0.0
        %2131 = vmatpush2.msra.mxu0 0.0
        %2132 = vmatprep.subr.mxu0 0.0
        %2133 = vmatpush2.msra.mxu0 0.0
        %2134 = vmatprep.subr.mxu0 0.0
        %2135 = vmatpush2.msra.mxu0 0.0
        %2136 = vmatprep.subr.mxu0 0.0
        %2137 = vmatpush2.msra.mxu0 0.0
        %2138 = vmatprep.subr.mxu0 0.0
        %2139 = vmatpush2.msra.mxu0 0.0
        %2140 = vmatprep.subr.mxu0 0.0
        %2141 = vmatpush2.msra.mxu0 0.0
        %2142 = vmatprep.subr.mxu0 0.0
        %2143 = vmatpush2.msra.mxu0 0.0
        %2144 = vmatprep.subr.mxu0 0.0
        %2145 = vmatpush2.msra.mxu0 0.0
        %2146 = vmatprep.subr.mxu0 0.0
        %2147 = vmatpush2.msra.mxu0 0.0
        %2148 = vmatprep.subr.mxu0 0.0
        %2149 = vmatpush2.msra.mxu0 0.0
        %2150 = vmatprep.subr.mxu0 0.0
        %2151 = vmatpush2.msra.mxu0 0.0
        %2152 = vmatprep.subr.mxu0 0.0
        %2153 = vmatpush2.msra.mxu0 0.0
        %2154 = vmatprep.subr.mxu0 0.0
        %2155 = vmatpush2.msra.mxu0 0.0
        %2156 = vmatprep.subr.mxu0 0.0
        %2157 = vmatpush2.msra.mxu0 0.0
        %2158 = vmatprep.subr.mxu0 0.0
        %2159 = vmatpush2.msra.mxu0 0.0
        %2160 = vmatprep.subr.mxu0 0.0
        %2161 = vmatpush2.msra.mxu0 0.0
        %2162 = vmatprep.mubr.f32.mxu0 0.0
        %2163 = vmatmul.mubr.f32.gmra.mxu0 %v1939
        %v2164 = vpop.f32.mrf.mxu0
        %v2165 = vadd.f32 %v1930, %v2164
        %v2166 = vpop.f32.mrf.mxu0
        %v2167 = vadd.f32 %v1930, %v2166
        %2168 = vmatprep.mubr.f32.mxu0 0.0
        %2169 = vmatmul.mubr.f32.gmra.mxu0 %v1942
        %v2170 = vpop.f32.mrf.mxu0
        %v2171 = vadd.f32 %v1935, %v2170
        %v2172 = vpop.f32.mrf.mxu0
        %v2173 = vadd.f32 %v1935, %v2172
        %2174 = vdwg.mxu0
        %2175 = vmatprep.subr.mxu0 0.0
        %2176 = vmatpush1.msra.mxu0 0.0
        %2177 = vmatprep.subr.mxu0 0.0
        %2178 = vmatpush1.msra.mxu0 0.0
        %2179 = vmatprep.subr.mxu0 0.0
        %2180 = vmatpush1.msra.mxu0 0.0
        %2181 = vmatprep.subr.mxu0 0.0
        %2182 = vmatpush1.msra.mxu0 0.0
        %2183 = vmatprep.subr.mxu0 0.0
        %2184 = vmatpush1.msra.mxu0 0.0
        %2185 = vmatprep.subr.mxu0 0.0
        %2186 = vmatpush1.msra.mxu0 0.0
        %2187 = vmatprep.subr.mxu0 0.0
        %2188 = vmatpush1.msra.mxu0 0.0
        %2189 = vmatprep.subr.mxu0 0.0
        %2190 = vmatpush1.msra.mxu0 0.0
        %2191 = vmatprep.subr.mxu0 0.0
        %2192 = vmatpush1.msra.mxu0 0.0
        %2193 = vmatprep.subr.mxu0 0.0
        %2194 = vmatpush1.msra.mxu0 0.0
        %2195 = vmatprep.subr.mxu0 0.0
        %2196 = vmatpush1.msra.mxu0 0.0
        %2197 = vmatprep.subr.mxu0 0.0
        %2198 = vmatpush1.msra.mxu0 0.0
        %2199 = vmatprep.subr.mxu0 0.0
        %2200 = vmatpush1.msra.mxu0 0.0
        %2201 = vmatprep.subr.mxu0 0.0
        %2202 = vmatpush1.msra.mxu0 0.0
        %2203 = vmatprep.subr.mxu0 %v1926
        %2204 = vmatpush1.msra.mxu0 %v1923
        %2205 = vmatprep.subr.mxu0 %v1925
        %2206 = vmatpush1.msra.mxu0 %v1895
        %2207 = vmatprep.subr.mxu0 0.0
        %2208 = vmatpush2.msra.mxu0 0.0
        %2209 = vmatprep.subr.mxu0 0.0
        %2210 = vmatpush2.msra.mxu0 0.0
        %2211 = vmatprep.subr.mxu0 0.0
        %2212 = vmatpush2.msra.mxu0 0.0
        %2213 = vmatprep.subr.mxu0 0.0
        %2214 = vmatpush2.msra.mxu0 0.0
        %2215 = vmatprep.subr.mxu0 0.0
        %2216 = vmatpush2.msra.mxu0 0.0
        %2217 = vmatprep.subr.mxu0 0.0
        %2218 = vmatpush2.msra.mxu0 0.0
        %2219 = vmatprep.subr.mxu0 0.0
        %2220 = vmatpush2.msra.mxu0 0.0
        %2221 = vmatprep.subr.mxu0 0.0
        %2222 = vmatpush2.msra.mxu0 0.0
        %2223 = vmatprep.subr.mxu0 0.0
        %2224 = vmatpush2.msra.mxu0 0.0
        %2225 = vmatprep.subr.mxu0 0.0
        %2226 = vmatpush2.msra.mxu0 0.0
        %2227 = vmatprep.subr.mxu0 0.0
        %2228 = vmatpush2.msra.mxu0 0.0
        %2229 = vmatprep.subr.mxu0 0.0
        %2230 = vmatpush2.msra.mxu0 0.0
        %2231 = vmatprep.subr.mxu0 0.0
        %2232 = vmatpush2.msra.mxu0 0.0
        %2233 = vmatprep.subr.mxu0 0.0
        %2234 = vmatpush2.msra.mxu0 0.0
        %2235 = vmatprep.subr.mxu0 0.0
        %2236 = vmatpush2.msra.mxu0 0.0
        %2237 = vmatprep.subr.mxu0 0.0
        %2238 = vmatpush2.msra.mxu0 0.0
        %2239 = vmatprep.mubr.f32.mxu0 0.0
        %2240 = vmatmul.mubr.f32.gmra.mxu0 %v1939
        %v2241 = vpop.f32.mrf.mxu0
        %v2242 = vadd.f32 %v1930, %v2241
        %v2243 = vpop.f32.mrf.mxu0
        %v2244 = vadd.f32 %v1930, %v2243
        %2245 = vmatprep.mubr.f32.mxu0 0.0
        %2246 = vmatmul.mubr.f32.gmra.mxu0 %v1942
        %v2247 = vpop.f32.mrf.mxu0
        %v2248 = vadd.f32 %v1935, %v2247
        %v2249 = vpop.f32.mrf.mxu0
        %v2250 = vadd.f32 %v1935, %v2249
        %2251 = vdwg.mxu0
        %2268 = vrot.lane.b32.xlu0 %v2011, 127
        %v2269 = vpop.permute.xlu0 %2268
        %2270 = vrot.lane.b32.xlu0 %v2013, 127
        %v2271 = vpop.permute.xlu0 %2270
        %2272 = vrot.lane.b32.xlu0 %v2088, 127
        %v2273 = vpop.permute.xlu0 %2272
        %2274 = vrot.lane.b32.xlu0 %v2090, 127
        %v2275 = vpop.permute.xlu0 %2274
        %2276 = vrot.lane.b32.xlu0 %v2165, 127
        %v2277 = vpop.permute.xlu0 %2276
        %2278 = vrot.lane.b32.xlu0 %v2167, 127
        %v2279 = vpop.permute.xlu0 %2278
        %2280 = vrot.lane.b32.xlu0 %v2242, 127
        %v2281 = vpop.permute.xlu0 %2280
        %2282 = vrot.lane.b32.xlu0 %v2244, 127
        %v2283 = vpop.permute.xlu0 %2282
        %2284 = vrot.lane.b32.xlu0 %v2017, 127
        %v2285 = vpop.permute.xlu0 %2284
        %2286 = vrot.lane.b32.xlu0 %v2019, 127
        %v2287 = vpop.permute.xlu0 %2286
        %2288 = vrot.lane.b32.xlu0 %v2094, 127
        %v2289 = vpop.permute.xlu0 %2288
        %2290 = vrot.lane.b32.xlu0 %v2096, 127
        %v2291 = vpop.permute.xlu0 %2290
        %2292 = vrot.lane.b32.xlu0 %v2171, 127
        %v2293 = vpop.permute.xlu0 %2292
        %2294 = vrot.lane.b32.xlu0 %v2173, 127
        %v2295 = vpop.permute.xlu0 %2294
        %2296 = vrot.lane.b32.xlu0 %v2248, 127
        %v2297 = vpop.permute.xlu0 %2296
        %2298 = vrot.lane.b32.xlu0 %v2250, 127
        %v2299 = vpop.permute.xlu0 %2298
        %v2300 = vsel %vm1226, %v2269, %v2271
        %v2301 = vsel %vm1226, %v2271, %v2273
        %v2302 = vsel %vm1226, %v2273, %v2275
        %v2303 = vsel %vm1226, %v2275, %v2277
        %v2304 = vsel %vm1226, %v2277, %v2279
        %v2305 = vsel %vm1226, %v2279, %v2281
        %v2306 = vsel %vm1226, %v2281, %v2283
        %v2307 = vsel %vm1226, %v2285, %v2287
        %v2308 = vsel %vm1226, %v2287, %v2289
        %v2309 = vsel %vm1226, %v2289, %v2291
        %v2310 = vsel %vm1226, %v2291, %v2293
        %v2311 = vsel %vm1226, %v2293, %v2295
        %v2312 = vsel %vm1226, %v2295, %v2297
        %v2313 = vsel %vm1226, %v2297, %v2299
        %v2330 = vmax.f32 %v2011, %v2300
        %v2331 = vmax.f32 %v2013, %v2301
        %v2332 = vmax.f32 %v2088, %v2302
        %v2333 = vmax.f32 %v2090, %v2303
        %v2334 = vmax.f32 %v2165, %v2304
        %v2335 = vmax.f32 %v2167, %v2305
        %v2336 = vmax.f32 %v2242, %v2306
        %v2337 = vmax.f32 %v2244, %v2283
        %v2338 = vmax.f32 %v2017, %v2307
        %v2339 = vmax.f32 %v2019, %v2308
        %v2340 = vmax.f32 %v2094, %v2309
        %v2341 = vmax.f32 %v2096, %v2310
        %v2342 = vmax.f32 %v2171, %v2311
        %v2343 = vmax.f32 %v2173, %v2312
        %v2344 = vmax.f32 %v2248, %v2313
        %v2345 = vmax.f32 %v2250, %v2299
        %2346 = vrot.lane.b32.xlu0 %v2011, 126
        %v2347 = vpop.permute.xlu0 %2346
        %2348 = vrot.lane.b32.xlu0 %v2013, 126
        %v2349 = vpop.permute.xlu0 %2348
        %2350 = vrot.lane.b32.xlu0 %v2088, 126
        %v2351 = vpop.permute.xlu0 %2350
        %2352 = vrot.lane.b32.xlu0 %v2090, 126
        %v2353 = vpop.permute.xlu0 %2352
        %2354 = vrot.lane.b32.xlu0 %v2165, 126
        %v2355 = vpop.permute.xlu0 %2354
        %2356 = vrot.lane.b32.xlu0 %v2167, 126
        %v2357 = vpop.permute.xlu0 %2356
        %2358 = vrot.lane.b32.xlu0 %v2242, 126
        %v2359 = vpop.permute.xlu0 %2358
        %2360 = vrot.lane.b32.xlu0 %v2244, 126
        %v2361 = vpop.permute.xlu0 %2360
        %2362 = vrot.lane.b32.xlu0 %v2017, 126
        %v2363 = vpop.permute.xlu0 %2362
        %2364 = vrot.lane.b32.xlu0 %v2019, 126
        %v2365 = vpop.permute.xlu0 %2364
        %2366 = vrot.lane.b32.xlu0 %v2094, 126
        %v2367 = vpop.permute.xlu0 %2366
        %2368 = vrot.lane.b32.xlu0 %v2096, 126
        %v2369 = vpop.permute.xlu0 %2368
        %2370 = vrot.lane.b32.xlu0 %v2171, 126
        %v2371 = vpop.permute.xlu0 %2370
        %2372 = vrot.lane.b32.xlu0 %v2173, 126
        %v2373 = vpop.permute.xlu0 %2372
        %2374 = vrot.lane.b32.xlu0 %v2248, 126
        %v2375 = vpop.permute.xlu0 %2374
        %2376 = vrot.lane.b32.xlu0 %v2250, 126
        %v2377 = vpop.permute.xlu0 %2376
        %v2378 = vsel %vm1246, %v2347, %v2349
        %v2379 = vsel %vm1246, %v2349, %v2351
        %v2380 = vsel %vm1246, %v2351, %v2353
        %v2381 = vsel %vm1246, %v2353, %v2355
        %v2382 = vsel %vm1246, %v2355, %v2357
        %v2383 = vsel %vm1246, %v2357, %v2359
        %v2384 = vsel %vm1246, %v2359, %v2361
        %v2385 = vsel %vm1246, %v2363, %v2365
        %v2386 = vsel %vm1246, %v2365, %v2367
        %v2387 = vsel %vm1246, %v2367, %v2369
        %v2388 = vsel %vm1246, %v2369, %v2371
        %v2389 = vsel %vm1246, %v2371, %v2373
        %v2390 = vsel %vm1246, %v2373, %v2375
        %v2391 = vsel %vm1246, %v2375, %v2377
        %v2408 = vmax.f32 %v2330, %v2378
        %v2409 = vmax.f32 %v2331, %v2379
        %v2410 = vmax.f32 %v2332, %v2380
        %v2411 = vmax.f32 %v2333, %v2381
        %v2412 = vmax.f32 %v2334, %v2382
        %v2413 = vmax.f32 %v2335, %v2383
        %v2414 = vmax.f32 %v2336, %v2384
        %v2415 = vmax.f32 %v2337, %v2361
        %v2416 = vmax.f32 %v2338, %v2385
        %v2417 = vmax.f32 %v2339, %v2386
        %v2418 = vmax.f32 %v2340, %v2387
        %v2419 = vmax.f32 %v2341, %v2388
        %v2420 = vmax.f32 %v2342, %v2389
        %v2421 = vmax.f32 %v2343, %v2390
        %v2422 = vmax.f32 %v2344, %v2391
        %v2423 = vmax.f32 %v2345, %v2377
        %2424 = vrot.lane.b32.xlu0 %v2011, 125
        %v2425 = vpop.permute.xlu0 %2424
        %2426 = vrot.lane.b32.xlu0 %v2013, 125
        %v2427 = vpop.permute.xlu0 %2426
        %2428 = vrot.lane.b32.xlu0 %v2088, 125
        %v2429 = vpop.permute.xlu0 %2428
        %2430 = vrot.lane.b32.xlu0 %v2090, 125
        %v2431 = vpop.permute.xlu0 %2430
        %2432 = vrot.lane.b32.xlu0 %v2165, 125
        %v2433 = vpop.permute.xlu0 %2432
        %2434 = vrot.lane.b32.xlu0 %v2167, 125
        %v2435 = vpop.permute.xlu0 %2434
        %2436 = vrot.lane.b32.xlu0 %v2242, 125
        %v2437 = vpop.permute.xlu0 %2436
        %2438 = vrot.lane.b32.xlu0 %v2244, 125
        %v2439 = vpop.permute.xlu0 %2438
        %2440 = vrot.lane.b32.xlu0 %v2017, 125
        %v2441 = vpop.permute.xlu0 %2440
        %2442 = vrot.lane.b32.xlu0 %v2019, 125
        %v2443 = vpop.permute.xlu0 %2442
        %2444 = vrot.lane.b32.xlu0 %v2094, 125
        %v2445 = vpop.permute.xlu0 %2444
        %2446 = vrot.lane.b32.xlu0 %v2096, 125
        %v2447 = vpop.permute.xlu0 %2446
        %2448 = vrot.lane.b32.xlu0 %v2171, 125
        %v2449 = vpop.permute.xlu0 %2448
        %2450 = vrot.lane.b32.xlu0 %v2173, 125
        %v2451 = vpop.permute.xlu0 %2450
        %2452 = vrot.lane.b32.xlu0 %v2248, 125
        %v2453 = vpop.permute.xlu0 %2452
        %2454 = vrot.lane.b32.xlu0 %v2250, 125
        %v2455 = vpop.permute.xlu0 %2454
        %v2456 = vsel %vm1266, %v2425, %v2427
        %v2457 = vsel %vm1266, %v2427, %v2429
        %v2458 = vsel %vm1266, %v2429, %v2431
        %v2459 = vsel %vm1266, %v2431, %v2433
        %v2460 = vsel %vm1266, %v2433, %v2435
        %v2461 = vsel %vm1266, %v2435, %v2437
        %v2462 = vsel %vm1266, %v2437, %v2439
        %v2463 = vsel %vm1266, %v2441, %v2443
        %v2464 = vsel %vm1266, %v2443, %v2445
        %v2465 = vsel %vm1266, %v2445, %v2447
        %v2466 = vsel %vm1266, %v2447, %v2449
        %v2467 = vsel %vm1266, %v2449, %v2451
        %v2468 = vsel %vm1266, %v2451, %v2453
        %v2469 = vsel %vm1266, %v2453, %v2455
        %v2486 = vmax.f32 %v2408, %v2456
        %v2487 = vmax.f32 %v2409, %v2457
        %v2488 = vmax.f32 %v2410, %v2458
        %v2489 = vmax.f32 %v2411, %v2459
        %v2490 = vmax.f32 %v2412, %v2460
        %v2491 = vmax.f32 %v2413, %v2461
        %v2492 = vmax.f32 %v2414, %v2462
        %v2493 = vmax.f32 %v2415, %v2439
        %v2494 = vmax.f32 %v2416, %v2463
        %v2495 = vmax.f32 %v2417, %v2464
        %v2496 = vmax.f32 %v2418, %v2465
        %v2497 = vmax.f32 %v2419, %v2466
        %v2498 = vmax.f32 %v2420, %v2467
        %v2499 = vmax.f32 %v2421, %v2468
        %v2500 = vmax.f32 %v2422, %v2469
        %v2501 = vmax.f32 %v2423, %v2455
        %v2503 = vsel %vm1266, %v2493, 0
        %v2506 = vsel %vm1266, %v2501, 0
        %v2509 = vsel %vm1519, %v1079, 0
        %v2512 = vsel %vm1519, %v1080, 0
        %2514 = vmatprep.subr.mxu0 %v856
        %2515 = vmatpush1.msra.mxu0 %v855
        %2516 = vmatprep.subr.mxu0 %v854
        %2517 = vmatpush1.msra.mxu0 %v853
        %2518 = vmatprep.subr.mxu0 %v852
        %2519 = vmatpush1.msra.mxu0 %v851
        %2520 = vmatprep.subr.mxu0 %v850
        %2521 = vmatpush1.msra.mxu0 %v849
        %2522 = vmatprep.subr.mxu0 %v848
        %2523 = vmatpush1.msra.mxu0 %v847
        %2524 = vmatprep.subr.mxu0 %v846
        %2525 = vmatpush1.msra.mxu0 %v845
        %2526 = vmatprep.subr.mxu0 %v844
        %2527 = vmatpush1.msra.mxu0 %v843
        %2528 = vmatprep.subr.mxu0 %v842
        %2529 = vmatpush1.msra.mxu0 %v841
        %2530 = vmatprep.subr.mxu0 %v840
        %2531 = vmatpush1.msra.mxu0 %v839
        %2532 = vmatprep.subr.mxu0 %v838
        %2533 = vmatpush1.msra.mxu0 %v837
        %2534 = vmatprep.subr.mxu0 %v836
        %2535 = vmatpush1.msra.mxu0 %v835
        %2536 = vmatprep.subr.mxu0 %v834
        %2537 = vmatpush1.msra.mxu0 %v833
        %2538 = vmatprep.subr.mxu0 %v832
        %2539 = vmatpush1.msra.mxu0 %v831
        %2540 = vmatprep.subr.mxu0 %v830
        %2541 = vmatpush1.msra.mxu0 %v829
        %2542 = vmatprep.subr.mxu0 %v828
        %2543 = vmatpush1.msra.mxu0 %v827
        %2544 = vmatprep.subr.mxu0 %v826
        %2545 = vmatpush1.msra.mxu0 %v825
        %2546 = vmatprep.subr.mxu0 %v888
        %2547 = vmatpush2.msra.mxu0 %v887
        %2548 = vmatprep.subr.mxu0 %v886
        %2549 = vmatpush2.msra.mxu0 %v885
        %2550 = vmatprep.subr.mxu0 %v884
        %2551 = vmatpush2.msra.mxu0 %v883
        %2552 = vmatprep.subr.mxu0 %v882
        %2553 = vmatpush2.msra.mxu0 %v881
        %2554 = vmatprep.subr.mxu0 %v880
        %2555 = vmatpush2.msra.mxu0 %v879
        %2556 = vmatprep.subr.mxu0 %v878
        %2557 = vmatpush2.msra.mxu0 %v877
        %2558 = vmatprep.subr.mxu0 %v876
        %2559 = vmatpush2.msra.mxu0 %v875
        %2560 = vmatprep.subr.mxu0 %v874
        %2561 = vmatpush2.msra.mxu0 %v873
        %2562 = vmatprep.subr.mxu0 %v872
        %2563 = vmatpush2.msra.mxu0 %v871
        %2564 = vmatprep.subr.mxu0 %v870
        %2565 = vmatpush2.msra.mxu0 %v869
        %2566 = vmatprep.subr.mxu0 %v868
        %2567 = vmatpush2.msra.mxu0 %v867
        %2568 = vmatprep.subr.mxu0 %v866
        %2569 = vmatpush2.msra.mxu0 %v865
        %2570 = vmatprep.subr.mxu0 %v864
        %2571 = vmatpush2.msra.mxu0 %v863
        %2572 = vmatprep.subr.mxu0 %v862
        %2573 = vmatpush2.msra.mxu0 %v861
        %2574 = vmatprep.subr.mxu0 %v860
        %2575 = vmatpush2.msra.mxu0 %v859
        %2576 = vmatprep.subr.mxu0 %v858
        %2577 = vmatpush2.msra.mxu0 %v857
        %2578 = vmatprep.mubr.f32.mxu0 %v2487
        %2579 = vmatmul.mubr.f32.gmra.mxu0 %v2486
        %v2580 = vpop.f32.mrf.mxu0
        %v2581 = vadd.f32 0.0, %v2580
        %v2582 = vpop.f32.mrf.mxu0
        %v2583 = vadd.f32 0.0, %v2582
        %2584 = vmatprep.mubr.f32.mxu0 %v2495
        %2585 = vmatmul.mubr.f32.gmra.mxu0 %v2494
        %v2586 = vpop.f32.mrf.mxu0
        %v2587 = vadd.f32 0.0, %v2586
        %v2588 = vpop.f32.mrf.mxu0
        %v2589 = vadd.f32 0.0, %v2588
        %2590 = vdwg.mxu0
        %2591 = vmatprep.subr.mxu0 %v920
        %2592 = vmatpush1.msra.mxu0 %v919
        %2593 = vmatprep.subr.mxu0 %v918
        %2594 = vmatpush1.msra.mxu0 %v917
        %2595 = vmatprep.subr.mxu0 %v916
        %2596 = vmatpush1.msra.mxu0 %v915
        %2597 = vmatprep.subr.mxu0 %v914
        %2598 = vmatpush1.msra.mxu0 %v913
        %2599 = vmatprep.subr.mxu0 %v912
        %2600 = vmatpush1.msra.mxu0 %v911
        %2601 = vmatprep.subr.mxu0 %v910
        %2602 = vmatpush1.msra.mxu0 %v909
        %2603 = vmatprep.subr.mxu0 %v908
        %2604 = vmatpush1.msra.mxu0 %v907
        %2605 = vmatprep.subr.mxu0 %v906
        %2606 = vmatpush1.msra.mxu0 %v905
        %2607 = vmatprep.subr.mxu0 %v904
        %2608 = vmatpush1.msra.mxu0 %v903
        %2609 = vmatprep.subr.mxu0 %v902
        %2610 = vmatpush1.msra.mxu0 %v901
        %2611 = vmatprep.subr.mxu0 %v900
        %2612 = vmatpush1.msra.mxu0 %v899
        %2613 = vmatprep.subr.mxu0 %v898
        %2614 = vmatpush1.msra.mxu0 %v897
        %2615 = vmatprep.subr.mxu0 %v896
        %2616 = vmatpush1.msra.mxu0 %v895
        %2617 = vmatprep.subr.mxu0 %v894
        %2618 = vmatpush1.msra.mxu0 %v893
        %2619 = vmatprep.subr.mxu0 %v892
        %2620 = vmatpush1.msra.mxu0 %v891
        %2621 = vmatprep.subr.mxu0 %v890
        %2622 = vmatpush1.msra.mxu0 %v889
        %2623 = vmatprep.subr.mxu0 %v952
        %2624 = vmatpush2.msra.mxu0 %v951
        %2625 = vmatprep.subr.mxu0 %v950
        %2626 = vmatpush2.msra.mxu0 %v949
        %2627 = vmatprep.subr.mxu0 %v948
        %2628 = vmatpush2.msra.mxu0 %v947
        %2629 = vmatprep.subr.mxu0 %v946
        %2630 = vmatpush2.msra.mxu0 %v945
        %2631 = vmatprep.subr.mxu0 %v944
        %2632 = vmatpush2.msra.mxu0 %v943
        %2633 = vmatprep.subr.mxu0 %v942
        %2634 = vmatpush2.msra.mxu0 %v941
        %2635 = vmatprep.subr.mxu0 %v940
        %2636 = vmatpush2.msra.mxu0 %v939
        %2637 = vmatprep.subr.mxu0 %v938
        %2638 = vmatpush2.msra.mxu0 %v937
        %2639 = vmatprep.subr.mxu0 %v936
        %2640 = vmatpush2.msra.mxu0 %v935
        %2641 = vmatprep.subr.mxu0 %v934
        %2642 = vmatpush2.msra.mxu0 %v933
        %2643 = vmatprep.subr.mxu0 %v932
        %2644 = vmatpush2.msra.mxu0 %v931
        %2645 = vmatprep.subr.mxu0 %v930
        %2646 = vmatpush2.msra.mxu0 %v929
        %2647 = vmatprep.subr.mxu0 %v928
        %2648 = vmatpush2.msra.mxu0 %v927
        %2649 = vmatprep.subr.mxu0 %v926
        %2650 = vmatpush2.msra.mxu0 %v925
        %2651 = vmatprep.subr.mxu0 %v924
        %2652 = vmatpush2.msra.mxu0 %v923
        %2653 = vmatprep.subr.mxu0 %v922
        %2654 = vmatpush2.msra.mxu0 %v921
        %2655 = vmatprep.mubr.f32.mxu0 %v2489
        %2656 = vmatmul.mubr.f32.gmra.mxu0 %v2488
        %v2657 = vpop.f32.mrf.mxu0
        %v2658 = vadd.f32 %v2581, %v2657
        %v2659 = vpop.f32.mrf.mxu0
        %v2660 = vadd.f32 %v2583, %v2659
        %2661 = vmatprep.mubr.f32.mxu0 %v2497
        %2662 = vmatmul.mubr.f32.gmra.mxu0 %v2496
        %v2663 = vpop.f32.mrf.mxu0
        %v2664 = vadd.f32 %v2587, %v2663
        %v2665 = vpop.f32.mrf.mxu0
        %v2666 = vadd.f32 %v2589, %v2665
        %2667 = vdwg.mxu0
        %2668 = vmatprep.subr.mxu0 %v984
        %2669 = vmatpush1.msra.mxu0 %v983
        %2670 = vmatprep.subr.mxu0 %v982
        %2671 = vmatpush1.msra.mxu0 %v981
        %2672 = vmatprep.subr.mxu0 %v980
        %2673 = vmatpush1.msra.mxu0 %v979
        %2674 = vmatprep.subr.mxu0 %v978
        %2675 = vmatpush1.msra.mxu0 %v977
        %2676 = vmatprep.subr.mxu0 %v976
        %2677 = vmatpush1.msra.mxu0 %v975
        %2678 = vmatprep.subr.mxu0 %v974
        %2679 = vmatpush1.msra.mxu0 %v973
        %2680 = vmatprep.subr.mxu0 %v972
        %2681 = vmatpush1.msra.mxu0 %v971
        %2682 = vmatprep.subr.mxu0 %v970
        %2683 = vmatpush1.msra.mxu0 %v969
        %2684 = vmatprep.subr.mxu0 %v968
        %2685 = vmatpush1.msra.mxu0 %v967
        %2686 = vmatprep.subr.mxu0 %v966
        %2687 = vmatpush1.msra.mxu0 %v965
        %2688 = vmatprep.subr.mxu0 %v964
        %2689 = vmatpush1.msra.mxu0 %v963
        %2690 = vmatprep.subr.mxu0 %v962
        %2691 = vmatpush1.msra.mxu0 %v961
        %2692 = vmatprep.subr.mxu0 %v960
        %2693 = vmatpush1.msra.mxu0 %v959
        %2694 = vmatprep.subr.mxu0 %v958
        %2695 = vmatpush1.msra.mxu0 %v957
        %2696 = vmatprep.subr.mxu0 %v956
        %2697 = vmatpush1.msra.mxu0 %v955
        %2698 = vmatprep.subr.mxu0 %v954
        %2699 = vmatpush1.msra.mxu0 %v953
        %2700 = vmatprep.subr.mxu0 %v1016
        %2701 = vmatpush2.msra.mxu0 %v1015
        %2702 = vmatprep.subr.mxu0 %v1014
        %2703 = vmatpush2.msra.mxu0 %v1013
        %2704 = vmatprep.subr.mxu0 %v1012
        %2705 = vmatpush2.msra.mxu0 %v1011
        %2706 = vmatprep.subr.mxu0 %v1010
        %2707 = vmatpush2.msra.mxu0 %v1009
        %2708 = vmatprep.subr.mxu0 %v1008
        %2709 = vmatpush2.msra.mxu0 %v1007
        %2710 = vmatprep.subr.mxu0 %v1006
        %2711 = vmatpush2.msra.mxu0 %v1005
        %2712 = vmatprep.subr.mxu0 %v1004
        %2713 = vmatpush2.msra.mxu0 %v1003
        %2714 = vmatprep.subr.mxu0 %v1002
        %2715 = vmatpush2.msra.mxu0 %v1001
        %2716 = vmatprep.subr.mxu0 %v1000
        %2717 = vmatpush2.msra.mxu0 %v999
        %2718 = vmatprep.subr.mxu0 %v998
        %2719 = vmatpush2.msra.mxu0 %v997
        %2720 = vmatprep.subr.mxu0 %v996
        %2721 = vmatpush2.msra.mxu0 %v995
        %2722 = vmatprep.subr.mxu0 %v994
        %2723 = vmatpush2.msra.mxu0 %v993
        %2724 = vmatprep.subr.mxu0 %v992
        %2725 = vmatpush2.msra.mxu0 %v991
        %2726 = vmatprep.subr.mxu0 %v990
        %2727 = vmatpush2.msra.mxu0 %v989
        %2728 = vmatprep.subr.mxu0 %v988
        %2729 = vmatpush2.msra.mxu0 %v987
        %2730 = vmatprep.subr.mxu0 %v986
        %2731 = vmatpush2.msra.mxu0 %v985
        %2732 = vmatprep.mubr.f32.mxu0 %v2491
        %2733 = vmatmul.mubr.f32.gmra.mxu0 %v2490
        %v2734 = vpop.f32.mrf.mxu0
        %v2735 = vadd.f32 %v2658, %v2734
        %v2736 = vpop.f32.mrf.mxu0
        %v2737 = vadd.f32 %v2660, %v2736
        %2738 = vmatprep.mubr.f32.mxu0 %v2499
        %2739 = vmatmul.mubr.f32.gmra.mxu0 %v2498
        %v2740 = vpop.f32.mrf.mxu0
        %v2741 = vadd.f32 %v2664, %v2740
        %v2742 = vpop.f32.mrf.mxu0
        %v2743 = vadd.f32 %v2666, %v2742
        %2744 = vdwg.mxu0
        %2745 = vmatprep.subr.mxu0 %v1048
        %2746 = vmatpush1.msra.mxu0 %v1047
        %2747 = vmatprep.subr.mxu0 %v1046
        %2748 = vmatpush1.msra.mxu0 %v1045
        %2749 = vmatprep.subr.mxu0 %v1044
        %2750 = vmatpush1.msra.mxu0 %v1043
        %2751 = vmatprep.subr.mxu0 %v1042
        %2752 = vmatpush1.msra.mxu0 %v1041
        %2753 = vmatprep.subr.mxu0 %v1040
        %2754 = vmatpush1.msra.mxu0 %v1039
        %2755 = vmatprep.subr.mxu0 %v1038
        %2756 = vmatpush1.msra.mxu0 %v1037
        %2757 = vmatprep.subr.mxu0 %v1036
        %2758 = vmatpush1.msra.mxu0 %v1035
        %2759 = vmatprep.subr.mxu0 %v1034
        %2760 = vmatpush1.msra.mxu0 %v1033
        %2761 = vmatprep.subr.mxu0 %v1032
        %2762 = vmatpush1.msra.mxu0 %v1031
        %2763 = vmatprep.subr.mxu0 %v1030
        %2764 = vmatpush1.msra.mxu0 %v1029
        %2765 = vmatprep.subr.mxu0 %v1028
        %2766 = vmatpush1.msra.mxu0 %v1027
        %2767 = vmatprep.subr.mxu0 %v1026
        %2768 = vmatpush1.msra.mxu0 %v1025
        %2769 = vmatprep.subr.mxu0 %v1024
        %2770 = vmatpush1.msra.mxu0 %v1023
        %2771 = vmatprep.subr.mxu0 %v1022
        %2772 = vmatpush1.msra.mxu0 %v1021
        %2773 = vmatprep.subr.mxu0 %v1020
        %2774 = vmatpush1.msra.mxu0 %v1019
        %2775 = vmatprep.subr.mxu0 %v1018
        %2776 = vmatpush1.msra.mxu0 %v1017
        %2777 = vmatprep.subr.mxu0 %v2512
        %2778 = vmatpush2.msra.mxu0 %v2509
        %2779 = vmatprep.subr.mxu0 %v1078
        %2780 = vmatpush2.msra.mxu0 %v1077
        %2781 = vmatprep.subr.mxu0 %v1076
        %2782 = vmatpush2.msra.mxu0 %v1075
        %2783 = vmatprep.subr.mxu0 %v1074
        %2784 = vmatpush2.msra.mxu0 %v1073
        %2785 = vmatprep.subr.mxu0 %v1072
        %2786 = vmatpush2.msra.mxu0 %v1071
        %2787 = vmatprep.subr.mxu0 %v1070
        %2788 = vmatpush2.msra.mxu0 %v1069
        %2789 = vmatprep.subr.mxu0 %v1068
        %2790 = vmatpush2.msra.mxu0 %v1067
        %2791 = vmatprep.subr.mxu0 %v1066
        %2792 = vmatpush2.msra.mxu0 %v1065
        %2793 = vmatprep.subr.mxu0 %v1064
        %2794 = vmatpush2.msra.mxu0 %v1063
        %2795 = vmatprep.subr.mxu0 %v1062
        %2796 = vmatpush2.msra.mxu0 %v1061
        %2797 = vmatprep.subr.mxu0 %v1060
        %2798 = vmatpush2.msra.mxu0 %v1059
        %2799 = vmatprep.subr.mxu0 %v1058
        %2800 = vmatpush2.msra.mxu0 %v1057
        %2801 = vmatprep.subr.mxu0 %v1056
        %2802 = vmatpush2.msra.mxu0 %v1055
        %2803 = vmatprep.subr.mxu0 %v1054
        %2804 = vmatpush2.msra.mxu0 %v1053
        %2805 = vmatprep.subr.mxu0 %v1052
        %2806 = vmatpush2.msra.mxu0 %v1051
        %2807 = vmatprep.subr.mxu0 %v1050
        %2808 = vmatpush2.msra.mxu0 %v1049
        %2809 = vmatprep.mubr.f32.mxu0 %v2503
        %2810 = vmatmul.mubr.f32.gmra.mxu0 %v2492
        %v2811 = vpop.f32.mrf.mxu0
        %v2812 = vadd.f32 %v2735, %v2811
        %v2813 = vpop.f32.mrf.mxu0
        %v2814 = vadd.f32 %v2737, %v2813
        %2815 = vmatprep.mubr.f32.mxu0 %v2506
        %2816 = vmatmul.mubr.f32.gmra.mxu0 %v2500
        %v2817 = vpop.f32.mrf.mxu0
        %v2818 = vadd.f32 %v2741, %v2817
        %v2819 = vpop.f32.mrf.mxu0
        %v2820 = vadd.f32 %v2743, %v2819
        %2821 = vdwg.mxu0
        %v2822 = vxor.u32 %v2812, 2147483648
        %v2823 = vxor.u32 %v2814, 2147483648
        %v2824 = vxor.u32 %v2818, 2147483648
        %v2825 = vxor.u32 %v2820, 2147483648
        %v2826 = vmul.f32 %v2822, 1.442695
        %v2827 = vpow.pop %v2826
        %v2828 = vmul.f32 %v2823, 1.442695
        %v2829 = vpow.pop %v2828
        %v2830 = vmul.f32 %v2824, 1.442695
        %v2831 = vpow.pop %v2830
        %v2832 = vmul.f32 %v2825, 1.442695
        %v2833 = vpow.pop %v2832
        %v2834 = vadd.f32 %v2827, 1.0
        %v2835 = vadd.f32 %v2829, 1.0
        %v2836 = vadd.f32 %v2831, 1.0
        %v2837 = vadd.f32 %v2833, 1.0
        %v2838 = vrcp.pop %v2834
        %v2839 = vmul.f32 1.0, %v2838
        %v2840 = vrcp.pop %v2835
        %v2841 = vmul.f32 1.0, %v2840
        %v2842 = vrcp.pop %v2836
        %v2843 = vmul.f32 1.0, %v2842
        %v2844 = vrcp.pop %v2837
        %v2845 = vmul.f32 1.0, %v2844
        %2848 = vrot.lane.b32.xlu0 %v2839, 2
        %v2849 = vpop.permute.xlu0 %2848
        %2850 = vrot.lane.b32.xlu0 %v2843, 2
        %v2851 = vpop.permute.xlu0 %2850
        %v2854 = vsel %vm1202, 0.0, %v2849
        %v2855 = vsel %vm1202, 0.0, %v2851
        %v2856 = vsel %vm1226, %v2854, 0.0
        %v2857 = vsel %vm1226, %v2855, 0.0
        %2860 = vrot.lane.b32.xlu0 %v2856, 127
        %v2861 = vpop.permute.xlu0 %2860
        %2862 = vrot.lane.b32.xlu0 %v2857, 127
        %v2863 = vpop.permute.xlu0 %2862
        %2866 = vrot.lane.b32.xlu0 %v2856, 126
        %v2867 = vpop.permute.xlu0 %2866
        %2868 = vrot.lane.b32.xlu0 %v2857, 126
        %v2869 = vpop.permute.xlu0 %2868
        %2872 = vrot.lane.b32.xlu0 %v2856, 125
        %v2873 = vpop.permute.xlu0 %2872
        %2874 = vrot.lane.b32.xlu0 %v2857, 125
        %v2875 = vpop.permute.xlu0 %2874
        %2878 = vrot.lane.b32.xlu0 %v2856, 124
        %v2879 = vpop.permute.xlu0 %2878
        %2880 = vrot.lane.b32.xlu0 %v2857, 124
        %v2881 = vpop.permute.xlu0 %2880
        %2884 = vrot.lane.b32.xlu0 %v2856, 123
        %v2885 = vpop.permute.xlu0 %2884
        %2886 = vrot.lane.b32.xlu0 %v2857, 123
        %v2887 = vpop.permute.xlu0 %2886
        %2890 = vrot.lane.b32.xlu0 %v2856, 122
        %v2891 = vpop.permute.xlu0 %2890
        %2892 = vrot.lane.b32.xlu0 %v2857, 122
        %v2893 = vpop.permute.xlu0 %2892
        %2896 = vrot.lane.b32.xlu0 %v2856, 121
        %v2897 = vpop.permute.xlu0 %2896
        %2898 = vrot.lane.b32.xlu0 %v2857, 121
        %v2899 = vpop.permute.xlu0 %2898
        %2902 = vrot.lane.b32.xlu0 %v2856, 120
        %v2903 = vpop.permute.xlu0 %2902
        %2904 = vrot.lane.b32.xlu0 %v2857, 120
        %v2905 = vpop.permute.xlu0 %2904
        %2908 = vrot.lane.b32.xlu0 %v2856, 119
        %v2909 = vpop.permute.xlu0 %2908
        %2910 = vrot.lane.b32.xlu0 %v2857, 119
        %v2911 = vpop.permute.xlu0 %2910
        %2914 = vrot.lane.b32.xlu0 %v2856, 118
        %v2915 = vpop.permute.xlu0 %2914
        %2916 = vrot.lane.b32.xlu0 %v2857, 118
        %v2917 = vpop.permute.xlu0 %2916
        %2920 = vrot.lane.b32.xlu0 %v2856, 117
        %v2921 = vpop.permute.xlu0 %2920
        %2922 = vrot.lane.b32.xlu0 %v2857, 117
        %v2923 = vpop.permute.xlu0 %2922
        %2926 = vrot.lane.b32.xlu0 %v2856, 116
        %v2927 = vpop.permute.xlu0 %2926
        %2928 = vrot.lane.b32.xlu0 %v2857, 116
        %v2929 = vpop.permute.xlu0 %2928
        %2932 = vrot.lane.b32.xlu0 %v2856, 115
        %v2933 = vpop.permute.xlu0 %2932
        %2934 = vrot.lane.b32.xlu0 %v2857, 115
        %v2935 = vpop.permute.xlu0 %2934
        %2938 = vrot.lane.b32.xlu0 %v2856, 114
        %v2939 = vpop.permute.xlu0 %2938
        %2940 = vrot.lane.b32.xlu0 %v2857, 114
        %v2941 = vpop.permute.xlu0 %2940
        %2945 = vrot.lane.b32.xlu0 %v2856, 113
        %v2946 = vpop.permute.xlu0 %2945
        %2947 = vrot.lane.b32.xlu0 0.0, 113
        %v2948 = vpop.permute.xlu0 %2947
        %2949 = vrot.lane.b32.xlu0 %v2857, 113
        %v2950 = vpop.permute.xlu0 %2949
        %v2951 = vsel %vm1490, %v2946, %v2948
        %v2952 = vsel %vm1490, %v2950, %v2948
        %v2955 = vsel %vm1470, %v2856, 0.0
        %v2956 = vsel %vm1470, %v2857, 0.0
        %v2957 = vsel %vm1470, %v2861, 0.0
        %v2958 = vsel %vm1470, %v2863, 0.0
        %v2959 = vsel %vm1470, %v2867, 0.0
        %v2960 = vsel %vm1470, %v2869, 0.0
        %v2961 = vsel %vm1470, %v2873, 0.0
        %v2962 = vsel %vm1470, %v2875, 0.0
        %v2963 = vsel %vm1470, %v2879, 0.0
        %v2964 = vsel %vm1470, %v2881, 0.0
        %v2965 = vsel %vm1470, %v2885, 0.0
        %v2966 = vsel %vm1470, %v2887, 0.0
        %v2967 = vsel %vm1470, %v2891, 0.0
        %v2968 = vsel %vm1470, %v2893, 0.0
        %v2969 = vsel %vm1470, %v2897, 0.0
        %v2970 = vsel %vm1470, %v2899, 0.0
        %v2971 = vsel %vm1470, %v2903, 0.0
        %v2972 = vsel %vm1470, %v2905, 0.0
        %v2973 = vsel %vm1470, %v2909, 0.0
        %v2974 = vsel %vm1470, %v2911, 0.0
        %v2975 = vsel %vm1470, %v2915, 0.0
        %v2976 = vsel %vm1470, %v2917, 0.0
        %v2977 = vsel %vm1470, %v2921, 0.0
        %v2978 = vsel %vm1470, %v2923, 0.0
        %v2979 = vsel %vm1470, %v2927, 0.0
        %v2980 = vsel %vm1470, %v2929, 0.0
        %v2981 = vsel %vm1470, %v2933, 0.0
        %v2982 = vsel %vm1470, %v2935, 0.0
        %v2983 = vsel %vm1470, %v2939, 0.0
        %v2984 = vsel %vm1470, %v2941, 0.0
        %v2985 = vsel %vm1470, %v2951, 0.0
        %v2986 = vsel %vm1470, %v2952, 0.0
        %2989 = vrot.lane.b32.xlu0 %v2841, 2
        %v2990 = vpop.permute.xlu0 %2989
        %2991 = vrot.lane.b32.xlu0 %v2845, 2
        %v2992 = vpop.permute.xlu0 %2991
        %v2995 = vsel %vm1202, 0.0, %v2990
        %v2996 = vsel %vm1202, 0.0, %v2992
        %v2997 = vsel %vm1226, %v2995, 0.0
        %v2998 = vsel %vm1226, %v2996, 0.0
        %3001 = vrot.lane.b32.xlu0 %v2997, 127
        %v3002 = vpop.permute.xlu0 %3001
        %3003 = vrot.lane.b32.xlu0 %v2998, 127
        %v3004 = vpop.permute.xlu0 %3003
        %3007 = vrot.lane.b32.xlu0 %v2997, 126
        %v3008 = vpop.permute.xlu0 %3007
        %3009 = vrot.lane.b32.xlu0 %v2998, 126
        %v3010 = vpop.permute.xlu0 %3009
        %3013 = vrot.lane.b32.xlu0 %v2997, 125
        %v3014 = vpop.permute.xlu0 %3013
        %3015 = vrot.lane.b32.xlu0 %v2998, 125
        %v3016 = vpop.permute.xlu0 %3015
        %3019 = vrot.lane.b32.xlu0 %v2997, 124
        %v3020 = vpop.permute.xlu0 %3019
        %3021 = vrot.lane.b32.xlu0 %v2998, 124
        %v3022 = vpop.permute.xlu0 %3021
        %3025 = vrot.lane.b32.xlu0 %v2997, 123
        %v3026 = vpop.permute.xlu0 %3025
        %3027 = vrot.lane.b32.xlu0 %v2998, 123
        %v3028 = vpop.permute.xlu0 %3027
        %3031 = vrot.lane.b32.xlu0 %v2997, 122
        %v3032 = vpop.permute.xlu0 %3031
        %3033 = vrot.lane.b32.xlu0 %v2998, 122
        %v3034 = vpop.permute.xlu0 %3033
        %3037 = vrot.lane.b32.xlu0 %v2997, 121
        %v3038 = vpop.permute.xlu0 %3037
        %3039 = vrot.lane.b32.xlu0 %v2998, 121
        %v3040 = vpop.permute.xlu0 %3039
        %3043 = vrot.lane.b32.xlu0 %v2997, 120
        %v3044 = vpop.permute.xlu0 %3043
        %3045 = vrot.lane.b32.xlu0 %v2998, 120
        %v3046 = vpop.permute.xlu0 %3045
        %3049 = vrot.lane.b32.xlu0 %v2997, 119
        %v3050 = vpop.permute.xlu0 %3049
        %3051 = vrot.lane.b32.xlu0 %v2998, 119
        %v3052 = vpop.permute.xlu0 %3051
        %3055 = vrot.lane.b32.xlu0 %v2997, 118
        %v3056 = vpop.permute.xlu0 %3055
        %3057 = vrot.lane.b32.xlu0 %v2998, 118
        %v3058 = vpop.permute.xlu0 %3057
        %3061 = vrot.lane.b32.xlu0 %v2997, 117
        %v3062 = vpop.permute.xlu0 %3061
        %3063 = vrot.lane.b32.xlu0 %v2998, 117
        %v3064 = vpop.permute.xlu0 %3063
        %3067 = vrot.lane.b32.xlu0 %v2997, 116
        %v3068 = vpop.permute.xlu0 %3067
        %3069 = vrot.lane.b32.xlu0 %v2998, 116
        %v3070 = vpop.permute.xlu0 %3069
        %3073 = vrot.lane.b32.xlu0 %v2997, 115
        %v3074 = vpop.permute.xlu0 %3073
        %3075 = vrot.lane.b32.xlu0 %v2998, 115
        %v3076 = vpop.permute.xlu0 %3075
        %3079 = vrot.lane.b32.xlu0 %v2997, 114
        %v3080 = vpop.permute.xlu0 %3079
        %3081 = vrot.lane.b32.xlu0 %v2998, 114
        %v3082 = vpop.permute.xlu0 %3081
        %3085 = vrot.lane.b32.xlu0 %v2997, 113
        %v3086 = vpop.permute.xlu0 %3085
        %3087 = vrot.lane.b32.xlu0 %v2998, 113
        %v3088 = vpop.permute.xlu0 %3087
        %v3089 = vsel %vm1490, %v3086, %v2948
        %v3090 = vsel %vm1490, %v3088, %v2948
        %v3093 = vsel %vm1470, %v2997, 0.0
        %v3094 = vsel %vm1470, %v2998, 0.0
        %v3095 = vsel %vm1470, %v3002, 0.0
        %v3096 = vsel %vm1470, %v3004, 0.0
        %v3097 = vsel %vm1470, %v3008, 0.0
        %v3098 = vsel %vm1470, %v3010, 0.0
        %v3099 = vsel %vm1470, %v3014, 0.0
        %v3100 = vsel %vm1470, %v3016, 0.0
        %v3101 = vsel %vm1470, %v3020, 0.0
        %v3102 = vsel %vm1470, %v3022, 0.0
        %v3103 = vsel %vm1470, %v3026, 0.0
        %v3104 = vsel %vm1470, %v3028, 0.0
        %v3105 = vsel %vm1470, %v3032, 0.0
        %v3106 = vsel %vm1470, %v3034, 0.0
        %v3107 = vsel %vm1470, %v3038, 0.0
        %v3108 = vsel %vm1470, %v3040, 0.0
        %v3109 = vsel %vm1470, %v3044, 0.0
        %v3110 = vsel %vm1470, %v3046, 0.0
        %v3111 = vsel %vm1470, %v3050, 0.0
        %v3112 = vsel %vm1470, %v3052, 0.0
        %v3113 = vsel %vm1470, %v3056, 0.0
        %v3114 = vsel %vm1470, %v3058, 0.0
        %v3115 = vsel %vm1470, %v3062, 0.0
        %v3116 = vsel %vm1470, %v3064, 0.0
        %v3117 = vsel %vm1470, %v3068, 0.0
        %v3118 = vsel %vm1470, %v3070, 0.0
        %v3119 = vsel %vm1470, %v3074, 0.0
        %v3120 = vsel %vm1470, %v3076, 0.0
        %v3121 = vsel %vm1470, %v3080, 0.0
        %v3122 = vsel %vm1470, %v3082, 0.0
        %v3123 = vsel %vm1470, %v3089, 0.0
        %v3124 = vsel %vm1470, %v3090, 0.0
        %3126 = vset.pattern.permute.xlu0 0
        %3127 = vperm.xlu0 %3126, %v817
        %v3128 = vpop.permute.xlu0 %3127
        %3131 = vset.pattern.permute.xlu0 0
        %3132 = vperm.xlu0 %3131, %v818
        %v3133 = vpop.permute.xlu0 %3132
        %3136 = vset.pattern.permute.xlu0 0
        %3137 = vperm.xlu0 %3136, %v819
        %v3138 = vpop.permute.xlu0 %3137
        %3141 = vset.pattern.permute.xlu0 0
        %3142 = vperm.xlu0 %3141, %v820
        %v3143 = vpop.permute.xlu0 %3142
        %3145 = vmatprep.subr.mxu0 %v3108
        %3146 = vmatpush1.msra.mxu0 %v2970
        %3147 = vmatprep.subr.mxu0 %v3107
        %3148 = vmatpush1.msra.mxu0 %v2969
        %3149 = vmatprep.subr.mxu0 %v3106
        %3150 = vmatpush1.msra.mxu0 %v2968
        %3151 = vmatprep.subr.mxu0 %v3105
        %3152 = vmatpush1.msra.mxu0 %v2967
        %3153 = vmatprep.subr.mxu0 %v3104
        %3154 = vmatpush1.msra.mxu0 %v2966
        %3155 = vmatprep.subr.mxu0 %v3103
        %3156 = vmatpush1.msra.mxu0 %v2965
        %3157 = vmatprep.subr.mxu0 %v3102
        %3158 = vmatpush1.msra.mxu0 %v2964
        %3159 = vmatprep.subr.mxu0 %v3101
        %3160 = vmatpush1.msra.mxu0 %v2963
        %3161 = vmatprep.subr.mxu0 %v3100
        %3162 = vmatpush1.msra.mxu0 %v2962
        %3163 = vmatprep.subr.mxu0 %v3099
        %3164 = vmatpush1.msra.mxu0 %v2961
        %3165 = vmatprep.subr.mxu0 %v3098
        %3166 = vmatpush1.msra.mxu0 %v2960
        %3167 = vmatprep.subr.mxu0 %v3097
        %3168 = vmatpush1.msra.mxu0 %v2959
        %3169 = vmatprep.subr.mxu0 %v3096
        %3170 = vmatpush1.msra.mxu0 %v2958
        %3171 = vmatprep.subr.mxu0 %v3095
        %3172 = vmatpush1.msra.mxu0 %v2957
        %3173 = vmatprep.subr.mxu0 %v3094
        %3174 = vmatpush1.msra.mxu0 %v2956
        %3175 = vmatprep.subr.mxu0 %v3093
        %3176 = vmatpush1.msra.mxu0 %v2955
        %3177 = vmatprep.subr.mxu0 %v3124
        %3178 = vmatpush2.msra.mxu0 %v2986
        %3179 = vmatprep.subr.mxu0 %v3123
        %3180 = vmatpush2.msra.mxu0 %v2985
        %3181 = vmatprep.subr.mxu0 %v3122
        %3182 = vmatpush2.msra.mxu0 %v2984
        %3183 = vmatprep.subr.mxu0 %v3121
        %3184 = vmatpush2.msra.mxu0 %v2983
        %3185 = vmatprep.subr.mxu0 %v3120
        %3186 = vmatpush2.msra.mxu0 %v2982
        %3187 = vmatprep.subr.mxu0 %v3119
        %3188 = vmatpush2.msra.mxu0 %v2981
        %3189 = vmatprep.subr.mxu0 %v3118
        %3190 = vmatpush2.msra.mxu0 %v2980
        %3191 = vmatprep.subr.mxu0 %v3117
        %3192 = vmatpush2.msra.mxu0 %v2979
        %3193 = vmatprep.subr.mxu0 %v3116
        %3194 = vmatpush2.msra.mxu0 %v2978
        %3195 = vmatprep.subr.mxu0 %v3115
        %3196 = vmatpush2.msra.mxu0 %v2977
        %3197 = vmatprep.subr.mxu0 %v3114
        %3198 = vmatpush2.msra.mxu0 %v2976
        %3199 = vmatprep.subr.mxu0 %v3113
        %3200 = vmatpush2.msra.mxu0 %v2975
        %3201 = vmatprep.subr.mxu0 %v3112
        %3202 = vmatpush2.msra.mxu0 %v2974
        %3203 = vmatprep.subr.mxu0 %v3111
        %3204 = vmatpush2.msra.mxu0 %v2973
        %3205 = vmatprep.subr.mxu0 %v3110
        %3206 = vmatpush2.msra.mxu0 %v2972
        %3207 = vmatprep.subr.mxu0 %v3109
        %3208 = vmatpush2.msra.mxu0 %v2971
        %3209 = vmatprep.mubr.f32.mxu0 %v792
        %3210 = vmatmul.mubr.f32.gmra.mxu0 %v791
        %v3211 = vpop.f32.mrf.mxu0
        %v3212 = vadd.f32 %v3128, %v3211
        %v3213 = vpop.f32.mrf.mxu0
        %v3214 = vadd.f32 %v3128, %v3213
        %3215 = vmatprep.mubr.f32.mxu0 %v794
        %3216 = vmatmul.mubr.f32.gmra.mxu0 %v793
        %v3217 = vpop.f32.mrf.mxu0
        %v3218 = vadd.f32 %v3133, %v3217
        %v3219 = vpop.f32.mrf.mxu0
        %v3220 = vadd.f32 %v3133, %v3219
        %3221 = vmatprep.mubr.f32.mxu0 %v796
        %3222 = vmatmul.mubr.f32.gmra.mxu0 %v795
        %v3223 = vpop.f32.mrf.mxu0
        %v3224 = vadd.f32 %v3138, %v3223
        %v3225 = vpop.f32.mrf.mxu0
        %v3226 = vadd.f32 %v3138, %v3225
        %3227 = vmatprep.mubr.f32.mxu0 %v798
        %3228 = vmatmul.mubr.f32.gmra.mxu0 %v797
        %v3229 = vpop.f32.mrf.mxu0
        %v3230 = vadd.f32 %v3143, %v3229
        %v3231 = vpop.f32.mrf.mxu0
        %v3232 = vadd.f32 %v3143, %v3231
        %3233 = vdwg.mxu0
        %3242 = vrot.lane.b32.xlu0 %v3212, 127
        %v3243 = vpop.permute.xlu0 %3242
        %3244 = vrot.lane.b32.xlu0 %v3214, 127
        %v3245 = vpop.permute.xlu0 %3244
        %3246 = vrot.lane.b32.xlu0 %v3218, 127
        %v3247 = vpop.permute.xlu0 %3246
        %3248 = vrot.lane.b32.xlu0 %v3220, 127
        %v3249 = vpop.permute.xlu0 %3248
        %3250 = vrot.lane.b32.xlu0 %v3224, 127
        %v3251 = vpop.permute.xlu0 %3250
        %3252 = vrot.lane.b32.xlu0 %v3226, 127
        %v3253 = vpop.permute.xlu0 %3252
        %3254 = vrot.lane.b32.xlu0 %v3230, 127
        %v3255 = vpop.permute.xlu0 %3254
        %3256 = vrot.lane.b32.xlu0 %v3232, 127
        %v3257 = vpop.permute.xlu0 %3256
        %v3258 = vsel %vm1226, %v3243, %v3245
        %v3259 = vsel %vm1226, %v3247, %v3249
        %v3260 = vsel %vm1226, %v3251, %v3253
        %v3261 = vsel %vm1226, %v3255, %v3257
        %v3270 = vmax.f32 %v3212, %v3258
        %v3271 = vmax.f32 %v3214, %v3245
        %v3272 = vmax.f32 %v3218, %v3259
        %v3273 = vmax.f32 %v3220, %v3249
        %v3274 = vmax.f32 %v3224, %v3260
        %v3275 = vmax.f32 %v3226, %v3253
        %v3276 = vmax.f32 %v3230, %v3261
        %v3277 = vmax.f32 %v3232, %v3257
        %3278 = vrot.lane.b32.xlu0 %v3212, 126
        %v3279 = vpop.permute.xlu0 %3278
        %3280 = vrot.lane.b32.xlu0 %v3214, 126
        %v3281 = vpop.permute.xlu0 %3280
        %3282 = vrot.lane.b32.xlu0 %v3218, 126
        %v3283 = vpop.permute.xlu0 %3282
        %3284 = vrot.lane.b32.xlu0 %v3220, 126
        %v3285 = vpop.permute.xlu0 %3284
        %3286 = vrot.lane.b32.xlu0 %v3224, 126
        %v3287 = vpop.permute.xlu0 %3286
        %3288 = vrot.lane.b32.xlu0 %v3226, 126
        %v3289 = vpop.permute.xlu0 %3288
        %3290 = vrot.lane.b32.xlu0 %v3230, 126
        %v3291 = vpop.permute.xlu0 %3290
        %3292 = vrot.lane.b32.xlu0 %v3232, 126
        %v3293 = vpop.permute.xlu0 %3292
        %v3294 = vsel %vm1246, %v3279, %v3281
        %v3295 = vsel %vm1246, %v3283, %v3285
        %v3296 = vsel %vm1246, %v3287, %v3289
        %v3297 = vsel %vm1246, %v3291, %v3293
        %v3306 = vmax.f32 %v3270, %v3294
        %v3307 = vmax.f32 %v3271, %v3281
        %v3308 = vmax.f32 %v3272, %v3295
        %v3309 = vmax.f32 %v3273, %v3285
        %v3310 = vmax.f32 %v3274, %v3296
        %v3311 = vmax.f32 %v3275, %v3289
        %v3312 = vmax.f32 %v3276, %v3297
        %v3313 = vmax.f32 %v3277, %v3293
        %3314 = vrot.lane.b32.xlu0 %v3212, 125
        %v3315 = vpop.permute.xlu0 %3314
        %3316 = vrot.lane.b32.xlu0 %v3214, 125
        %v3317 = vpop.permute.xlu0 %3316
        %3318 = vrot.lane.b32.xlu0 %v3218, 125
        %v3319 = vpop.permute.xlu0 %3318
        %3320 = vrot.lane.b32.xlu0 %v3220, 125
        %v3321 = vpop.permute.xlu0 %3320
        %3322 = vrot.lane.b32.xlu0 %v3224, 125
        %v3323 = vpop.permute.xlu0 %3322
        %3324 = vrot.lane.b32.xlu0 %v3226, 125
        %v3325 = vpop.permute.xlu0 %3324
        %3326 = vrot.lane.b32.xlu0 %v3230, 125
        %v3327 = vpop.permute.xlu0 %3326
        %3328 = vrot.lane.b32.xlu0 %v3232, 125
        %v3329 = vpop.permute.xlu0 %3328
        %v3330 = vsel %vm1266, %v3315, %v3317
        %v3331 = vsel %vm1266, %v3319, %v3321
        %v3332 = vsel %vm1266, %v3323, %v3325
        %v3333 = vsel %vm1266, %v3327, %v3329
        %v3342 = vmax.f32 %v3306, %v3330
        %v3343 = vmax.f32 %v3307, %v3317
        %v3344 = vmax.f32 %v3308, %v3331
        %v3345 = vmax.f32 %v3309, %v3321
        %v3346 = vmax.f32 %v3310, %v3332
        %v3347 = vmax.f32 %v3311, %v3325
        %v3348 = vmax.f32 %v3312, %v3333
        %v3349 = vmax.f32 %v3313, %v3329
        %v3351 = vsel %vm1266, %v3343, 0
        %v3354 = vsel %vm1266, %v3345, 0
        %v3357 = vsel %vm1266, %v3347, 0
        %v3360 = vsel %vm1266, %v3349, 0
        %v3363 = vsel %vm1519, %v1143, 0
        %v3366 = vsel %vm1519, %v1144, 0
        %3368 = vmatprep.subr.mxu0 %v1112
        %3369 = vmatpush1.msra.mxu0 %v1111
        %3370 = vmatprep.subr.mxu0 %v1110
        %3371 = vmatpush1.msra.mxu0 %v1109
        %3372 = vmatprep.subr.mxu0 %v1108
        %3373 = vmatpush1.msra.mxu0 %v1107
        %3374 = vmatprep.subr.mxu0 %v1106
        %3375 = vmatpush1.msra.mxu0 %v1105
        %3376 = vmatprep.subr.mxu0 %v1104
        %3377 = vmatpush1.msra.mxu0 %v1103
        %3378 = vmatprep.subr.mxu0 %v1102
        %3379 = vmatpush1.msra.mxu0 %v1101
        %3380 = vmatprep.subr.mxu0 %v1100
        %3381 = vmatpush1.msra.mxu0 %v1099
        %3382 = vmatprep.subr.mxu0 %v1098
        %3383 = vmatpush1.msra.mxu0 %v1097
        %3384 = vmatprep.subr.mxu0 %v1096
        %3385 = vmatpush1.msra.mxu0 %v1095
        %3386 = vmatprep.subr.mxu0 %v1094
        %3387 = vmatpush1.msra.mxu0 %v1093
        %3388 = vmatprep.subr.mxu0 %v1092
        %3389 = vmatpush1.msra.mxu0 %v1091
        %3390 = vmatprep.subr.mxu0 %v1090
        %3391 = vmatpush1.msra.mxu0 %v1089
        %3392 = vmatprep.subr.mxu0 %v1088
        %3393 = vmatpush1.msra.mxu0 %v1087
        %3394 = vmatprep.subr.mxu0 %v1086
        %3395 = vmatpush1.msra.mxu0 %v1085
        %3396 = vmatprep.subr.mxu0 %v1084
        %3397 = vmatpush1.msra.mxu0 %v1083
        %3398 = vmatprep.subr.mxu0 %v1082
        %3399 = vmatpush1.msra.mxu0 %v1081
        %3400 = vmatprep.subr.mxu0 %v3366
        %3401 = vmatpush2.msra.mxu0 %v3363
        %3402 = vmatprep.subr.mxu0 %v1142
        %3403 = vmatpush2.msra.mxu0 %v1141
        %3404 = vmatprep.subr.mxu0 %v1140
        %3405 = vmatpush2.msra.mxu0 %v1139
        %3406 = vmatprep.subr.mxu0 %v1138
        %3407 = vmatpush2.msra.mxu0 %v1137
        %3408 = vmatprep.subr.mxu0 %v1136
        %3409 = vmatpush2.msra.mxu0 %v1135
        %3410 = vmatprep.subr.mxu0 %v1134
        %3411 = vmatpush2.msra.mxu0 %v1133
        %3412 = vmatprep.subr.mxu0 %v1132
        %3413 = vmatpush2.msra.mxu0 %v1131
        %3414 = vmatprep.subr.mxu0 %v1130
        %3415 = vmatpush2.msra.mxu0 %v1129
        %3416 = vmatprep.subr.mxu0 %v1128
        %3417 = vmatpush2.msra.mxu0 %v1127
        %3418 = vmatprep.subr.mxu0 %v1126
        %3419 = vmatpush2.msra.mxu0 %v1125
        %3420 = vmatprep.subr.mxu0 %v1124
        %3421 = vmatpush2.msra.mxu0 %v1123
        %3422 = vmatprep.subr.mxu0 %v1122
        %3423 = vmatpush2.msra.mxu0 %v1121
        %3424 = vmatprep.subr.mxu0 %v1120
        %3425 = vmatpush2.msra.mxu0 %v1119
        %3426 = vmatprep.subr.mxu0 %v1118
        %3427 = vmatpush2.msra.mxu0 %v1117
        %3428 = vmatprep.subr.mxu0 %v1116
        %3429 = vmatpush2.msra.mxu0 %v1115
        %3430 = vmatprep.subr.mxu0 %v1114
        %3431 = vmatpush2.msra.mxu0 %v1113
        %3432 = vmatprep.mubr.f32.mxu0 %v3351
        %3433 = vmatmul.mubr.f32.gmra.mxu0 %v3342
        %v3434 = vpop.f32.mrf.mxu0
        %v3435 = vadd.f32 0.0, %v3434
        %v3436 = vpop.f32.mrf.mxu0
        %v3437 = vadd.f32 0.0, %v3436
        %3438 = vmatprep.mubr.f32.mxu0 %v3354
        %3439 = vmatmul.mubr.f32.gmra.mxu0 %v3344
        %v3440 = vpop.f32.mrf.mxu0
        %v3441 = vadd.f32 0.0, %v3440
        %v3442 = vpop.f32.mrf.mxu0
        %v3443 = vadd.f32 0.0, %v3442
        %3444 = vmatprep.mubr.f32.mxu0 %v3357
        %3445 = vmatmul.mubr.f32.gmra.mxu0 %v3346
        %v3446 = vpop.f32.mrf.mxu0
        %v3447 = vadd.f32 0.0, %v3446
        %v3448 = vpop.f32.mrf.mxu0
        %v3449 = vadd.f32 0.0, %v3448
        %3450 = vmatprep.mubr.f32.mxu0 %v3360
        %3451 = vmatmul.mubr.f32.gmra.mxu0 %v3348
        %v3452 = vpop.f32.mrf.mxu0
        %v3453 = vadd.f32 0.0, %v3452
        %v3454 = vpop.f32.mrf.mxu0
        %v3455 = vadd.f32 0.0, %v3454
        %3456 = vdwg.mxu0
        %v3457 = vxor.u32 %v3435, 2147483648
        %v3458 = vxor.u32 %v3437, 2147483648
        %v3459 = vxor.u32 %v3441, 2147483648
        %v3460 = vxor.u32 %v3443, 2147483648
        %v3461 = vxor.u32 %v3447, 2147483648
        %v3462 = vxor.u32 %v3449, 2147483648
        %v3463 = vxor.u32 %v3453, 2147483648
        %v3464 = vxor.u32 %v3455, 2147483648
        %v3465 = vmul.f32 %v3457, 1.442695
        %v3466 = vpow.pop %v3465
        %v3467 = vmul.f32 %v3458, 1.442695
        %v3468 = vpow.pop %v3467
        %v3469 = vmul.f32 %v3459, 1.442695
        %v3470 = vpow.pop %v3469
        %v3471 = vmul.f32 %v3460, 1.442695
        %v3472 = vpow.pop %v3471
        %v3473 = vmul.f32 %v3461, 1.442695
        %v3474 = vpow.pop %v3473
        %v3475 = vmul.f32 %v3462, 1.442695
        %v3476 = vpow.pop %v3475
        %v3477 = vmul.f32 %v3463, 1.442695
        %v3478 = vpow.pop %v3477
        %v3479 = vmul.f32 %v3464, 1.442695
        %v3480 = vpow.pop %v3479
        %v3481 = vadd.f32 %v3466, 1.0
        %v3482 = vadd.f32 %v3468, 1.0
        %v3483 = vadd.f32 %v3470, 1.0
        %v3484 = vadd.f32 %v3472, 1.0
        %v3485 = vadd.f32 %v3474, 1.0
        %v3486 = vadd.f32 %v3476, 1.0
        %v3487 = vadd.f32 %v3478, 1.0
        %v3488 = vadd.f32 %v3480, 1.0
        %v3489 = vrcp.pop %v3481
        %v3490 = vmul.f32 1.0, %v3489
        %v3491 = vrcp.pop %v3482
        %v3492 = vmul.f32 1.0, %v3491
        %v3493 = vrcp.pop %v3483
        %v3494 = vmul.f32 1.0, %v3493
        %v3495 = vrcp.pop %v3484
        %v3496 = vmul.f32 1.0, %v3495
        %v3497 = vrcp.pop %v3485
        %v3498 = vmul.f32 1.0, %v3497
        %v3499 = vrcp.pop %v3486
        %v3500 = vmul.f32 1.0, %v3499
        %v3501 = vrcp.pop %v3487
        %v3502 = vmul.f32 1.0, %v3501
        %v3503 = vrcp.pop %v3488
        %v3504 = vmul.f32 1.0, %v3503
        %3509 = vrot.lane.b32.xlu0 %v3490, 2
        %v3510 = vpop.permute.xlu0 %3509
        %3511 = vrot.lane.b32.xlu0 %v3494, 2
        %v3512 = vpop.permute.xlu0 %3511
        %3513 = vrot.lane.b32.xlu0 %v3498, 2
        %v3514 = vpop.permute.xlu0 %3513
        %3515 = vrot.lane.b32.xlu0 %v3502, 2
        %v3516 = vpop.permute.xlu0 %3515
        %v3521 = vsel %vm1202, 0.0, %v3510
        %v3522 = vsel %vm1202, 0.0, %v3512
        %v3523 = vsel %vm1202, 0.0, %v3514
        %v3524 = vsel %vm1202, 0.0, %v3516
        %vm3525 = vcmask 244736
        %v3526 = vsel %vm3525, %v3521, 0.0
        %v3527 = vsel %vm3525, %v3522, 0.0
        %v3528 = vsel %vm3525, %v3523, 0.0
        %v3529 = vsel %vm3525, %v3524, 0.0
        %3534 = vrot.lane.b32.xlu0 %v3526, 127
        %v3535 = vpop.permute.xlu0 %3534
        %3536 = vrot.lane.b32.xlu0 %v3527, 127
        %v3537 = vpop.permute.xlu0 %3536
        %3538 = vrot.lane.b32.xlu0 %v3528, 127
        %v3539 = vpop.permute.xlu0 %3538
        %3540 = vrot.lane.b32.xlu0 %v3529, 127
        %v3541 = vpop.permute.xlu0 %3540
        %3546 = vrot.lane.b32.xlu0 %v3526, 126
        %v3547 = vpop.permute.xlu0 %3546
        %3548 = vrot.lane.b32.xlu0 %v3527, 126
        %v3549 = vpop.permute.xlu0 %3548
        %3550 = vrot.lane.b32.xlu0 %v3528, 126
        %v3551 = vpop.permute.xlu0 %3550
        %3552 = vrot.lane.b32.xlu0 %v3529, 126
        %v3553 = vpop.permute.xlu0 %3552
        %3558 = vrot.lane.b32.xlu0 %v3526, 125
        %v3559 = vpop.permute.xlu0 %3558
        %3560 = vrot.lane.b32.xlu0 %v3527, 125
        %v3561 = vpop.permute.xlu0 %3560
        %3562 = vrot.lane.b32.xlu0 %v3528, 125
        %v3563 = vpop.permute.xlu0 %3562
        %3564 = vrot.lane.b32.xlu0 %v3529, 125
        %v3565 = vpop.permute.xlu0 %3564
        %3570 = vrot.lane.b32.xlu0 %v3526, 124
        %v3571 = vpop.permute.xlu0 %3570
        %3572 = vrot.lane.b32.xlu0 %v3527, 124
        %v3573 = vpop.permute.xlu0 %3572
        %3574 = vrot.lane.b32.xlu0 %v3528, 124
        %v3575 = vpop.permute.xlu0 %3574
        %3576 = vrot.lane.b32.xlu0 %v3529, 124
        %v3577 = vpop.permute.xlu0 %3576
        %3582 = vrot.lane.b32.xlu0 %v3526, 123
        %v3583 = vpop.permute.xlu0 %3582
        %3584 = vrot.lane.b32.xlu0 %v3527, 123
        %v3585 = vpop.permute.xlu0 %3584
        %3586 = vrot.lane.b32.xlu0 %v3528, 123
        %v3587 = vpop.permute.xlu0 %3586
        %3588 = vrot.lane.b32.xlu0 %v3529, 123
        %v3589 = vpop.permute.xlu0 %3588
        %3594 = vrot.lane.b32.xlu0 %v3526, 122
        %v3595 = vpop.permute.xlu0 %3594
        %3596 = vrot.lane.b32.xlu0 %v3527, 122
        %v3597 = vpop.permute.xlu0 %3596
        %3598 = vrot.lane.b32.xlu0 %v3528, 122
        %v3599 = vpop.permute.xlu0 %3598
        %3600 = vrot.lane.b32.xlu0 %v3529, 122
        %v3601 = vpop.permute.xlu0 %3600
        %3606 = vrot.lane.b32.xlu0 %v3526, 121
        %v3607 = vpop.permute.xlu0 %3606
        %3608 = vrot.lane.b32.xlu0 %v3527, 121
        %v3609 = vpop.permute.xlu0 %3608
        %3610 = vrot.lane.b32.xlu0 %v3528, 121
        %v3611 = vpop.permute.xlu0 %3610
        %3612 = vrot.lane.b32.xlu0 %v3529, 121
        %v3613 = vpop.permute.xlu0 %3612
        %3618 = vrot.lane.b32.xlu0 %v3526, 120
        %v3619 = vpop.permute.xlu0 %3618
        %3620 = vrot.lane.b32.xlu0 %v3527, 120
        %v3621 = vpop.permute.xlu0 %3620
        %3622 = vrot.lane.b32.xlu0 %v3528, 120
        %v3623 = vpop.permute.xlu0 %3622
        %3624 = vrot.lane.b32.xlu0 %v3529, 120
        %v3625 = vpop.permute.xlu0 %3624
        %3630 = vrot.lane.b32.xlu0 %v3526, 119
        %v3631 = vpop.permute.xlu0 %3630
        %3632 = vrot.lane.b32.xlu0 %v3527, 119
        %v3633 = vpop.permute.xlu0 %3632
        %3634 = vrot.lane.b32.xlu0 %v3528, 119
        %v3635 = vpop.permute.xlu0 %3634
        %3636 = vrot.lane.b32.xlu0 %v3529, 119
        %v3637 = vpop.permute.xlu0 %3636
        %3642 = vrot.lane.b32.xlu0 %v3526, 118
        %v3643 = vpop.permute.xlu0 %3642
        %3644 = vrot.lane.b32.xlu0 %v3527, 118
        %v3645 = vpop.permute.xlu0 %3644
        %3646 = vrot.lane.b32.xlu0 %v3528, 118
        %v3647 = vpop.permute.xlu0 %3646
        %3648 = vrot.lane.b32.xlu0 %v3529, 118
        %v3649 = vpop.permute.xlu0 %3648
        %3654 = vrot.lane.b32.xlu0 %v3526, 117
        %v3655 = vpop.permute.xlu0 %3654
        %3656 = vrot.lane.b32.xlu0 %v3527, 117
        %v3657 = vpop.permute.xlu0 %3656
        %3658 = vrot.lane.b32.xlu0 %v3528, 117
        %v3659 = vpop.permute.xlu0 %3658
        %3660 = vrot.lane.b32.xlu0 %v3529, 117
        %v3661 = vpop.permute.xlu0 %3660
        %3666 = vrot.lane.b32.xlu0 %v3526, 116
        %v3667 = vpop.permute.xlu0 %3666
        %3668 = vrot.lane.b32.xlu0 %v3527, 116
        %v3669 = vpop.permute.xlu0 %3668
        %3670 = vrot.lane.b32.xlu0 %v3528, 116
        %v3671 = vpop.permute.xlu0 %3670
        %3672 = vrot.lane.b32.xlu0 %v3529, 116
        %v3673 = vpop.permute.xlu0 %3672
        %3678 = vrot.lane.b32.xlu0 %v3526, 115
        %v3679 = vpop.permute.xlu0 %3678
        %3680 = vrot.lane.b32.xlu0 %v3527, 115
        %v3681 = vpop.permute.xlu0 %3680
        %3682 = vrot.lane.b32.xlu0 %v3528, 115
        %v3683 = vpop.permute.xlu0 %3682
        %3684 = vrot.lane.b32.xlu0 %v3529, 115
        %v3685 = vpop.permute.xlu0 %3684
        %3690 = vrot.lane.b32.xlu0 %v3526, 114
        %v3691 = vpop.permute.xlu0 %3690
        %3692 = vrot.lane.b32.xlu0 %v3527, 114
        %v3693 = vpop.permute.xlu0 %3692
        %3694 = vrot.lane.b32.xlu0 %v3528, 114
        %v3695 = vpop.permute.xlu0 %3694
        %3696 = vrot.lane.b32.xlu0 %v3529, 114
        %v3697 = vpop.permute.xlu0 %3696
        %3702 = vrot.lane.b32.xlu0 %v3526, 113
        %v3703 = vpop.permute.xlu0 %3702
        %3704 = vrot.lane.b32.xlu0 %v3527, 113
        %v3705 = vpop.permute.xlu0 %3704
        %3706 = vrot.lane.b32.xlu0 %v3528, 113
        %v3707 = vpop.permute.xlu0 %3706
        %3708 = vrot.lane.b32.xlu0 %v3529, 113
        %v3709 = vpop.permute.xlu0 %3708
        %vm3714 = vcmask 138240
        %v3715 = vsel %vm3714, %v3526, 0.0
        %v3716 = vsel %vm3714, %v3527, 0.0
        %v3717 = vsel %vm3714, %v3528, 0.0
        %v3718 = vsel %vm3714, %v3529, 0.0
        %v3719 = vsel %vm3714, %v3535, 0.0
        %v3720 = vsel %vm3714, %v3537, 0.0
        %v3721 = vsel %vm3714, %v3539, 0.0
        %v3722 = vsel %vm3714, %v3541, 0.0
        %v3723 = vsel %vm3714, %v3547, 0.0
        %v3724 = vsel %vm3714, %v3549, 0.0
        %v3725 = vsel %vm3714, %v3551, 0.0
        %v3726 = vsel %vm3714, %v3553, 0.0
        %v3727 = vsel %vm3714, %v3559, 0.0
        %v3728 = vsel %vm3714, %v3561, 0.0
        %v3729 = vsel %vm3714, %v3563, 0.0
        %v3730 = vsel %vm3714, %v3565, 0.0
        %v3731 = vsel %vm3714, %v3571, 0.0
        %v3732 = vsel %vm3714, %v3573, 0.0
        %v3733 = vsel %vm3714, %v3575, 0.0
        %v3734 = vsel %vm3714, %v3577, 0.0
        %v3735 = vsel %vm3714, %v3583, 0.0
        %v3736 = vsel %vm3714, %v3585, 0.0
        %v3737 = vsel %vm3714, %v3587, 0.0
        %v3738 = vsel %vm3714, %v3589, 0.0
        %v3739 = vsel %vm3714, %v3595, 0.0
        %v3740 = vsel %vm3714, %v3597, 0.0
        %v3741 = vsel %vm3714, %v3599, 0.0
        %v3742 = vsel %vm3714, %v3601, 0.0
        %v3743 = vsel %vm3714, %v3607, 0.0
        %v3744 = vsel %vm3714, %v3609, 0.0
        %v3745 = vsel %vm3714, %v3611, 0.0
        %v3746 = vsel %vm3714, %v3613, 0.0
        %v3747 = vsel %vm3714, %v3619, 0.0
        %v3748 = vsel %vm3714, %v3621, 0.0
        %v3749 = vsel %vm3714, %v3623, 0.0
        %v3750 = vsel %vm3714, %v3625, 0.0
        %v3751 = vsel %vm3714, %v3631, 0.0
        %v3752 = vsel %vm3714, %v3633, 0.0
        %v3753 = vsel %vm3714, %v3635, 0.0
        %v3754 = vsel %vm3714, %v3637, 0.0
        %v3755 = vsel %vm3714, %v3643, 0.0
        %v3756 = vsel %vm3714, %v3645, 0.0
        %v3757 = vsel %vm3714, %v3647, 0.0
        %v3758 = vsel %vm3714, %v3649, 0.0
        %v3759 = vsel %vm3714, %v3655, 0.0
        %v3760 = vsel %vm3714, %v3657, 0.0
        %v3761 = vsel %vm3714, %v3659, 0.0
        %v3762 = vsel %vm3714, %v3661, 0.0
        %v3763 = vsel %vm3714, %v3667, 0.0
        %v3764 = vsel %vm3714, %v3669, 0.0
        %v3765 = vsel %vm3714, %v3671, 0.0
        %v3766 = vsel %vm3714, %v3673, 0.0
        %v3767 = vsel %vm3714, %v3679, 0.0
        %v3768 = vsel %vm3714, %v3681, 0.0
        %v3769 = vsel %vm3714, %v3683, 0.0
        %v3770 = vsel %vm3714, %v3685, 0.0
        %v3771 = vsel %vm3714, %v3691, 0.0
        %v3772 = vsel %vm3714, %v3693, 0.0
        %v3773 = vsel %vm3714, %v3695, 0.0
        %v3774 = vsel %vm3714, %v3697, 0.0
        %v3775 = vsel %vm3714, %v3703, 0.0
        %v3776 = vsel %vm3714, %v3705, 0.0
        %v3777 = vsel %vm3714, %v3707, 0.0
        %v3778 = vsel %vm3714, %v3709, 0.0
        %3783 = vrot.lane.b32.xlu0 %v3492, 2
        %v3784 = vpop.permute.xlu0 %3783
        %3785 = vrot.lane.b32.xlu0 %v3496, 2
        %v3786 = vpop.permute.xlu0 %3785
        %3787 = vrot.lane.b32.xlu0 %v3500, 2
        %v3788 = vpop.permute.xlu0 %3787
        %3789 = vrot.lane.b32.xlu0 %v3504, 2
        %v3790 = vpop.permute.xlu0 %3789
        %v3795 = vsel %vm1202, 0.0, %v3784
        %v3796 = vsel %vm1202, 0.0, %v3786
        %v3797 = vsel %vm1202, 0.0, %v3788
        %v3798 = vsel %vm1202, 0.0, %v3790
        %v3799 = vsel %vm3525, %v3795, 0.0
        %v3800 = vsel %vm3525, %v3796, 0.0
        %v3801 = vsel %vm3525, %v3797, 0.0
        %v3802 = vsel %vm3525, %v3798, 0.0
        %3807 = vrot.lane.b32.xlu0 %v3799, 127
        %v3808 = vpop.permute.xlu0 %3807
        %3809 = vrot.lane.b32.xlu0 %v3800, 127
        %v3810 = vpop.permute.xlu0 %3809
        %3811 = vrot.lane.b32.xlu0 %v3801, 127
        %v3812 = vpop.permute.xlu0 %3811
        %3813 = vrot.lane.b32.xlu0 %v3802, 127
        %v3814 = vpop.permute.xlu0 %3813
        %3819 = vrot.lane.b32.xlu0 %v3799, 126
        %v3820 = vpop.permute.xlu0 %3819
        %3821 = vrot.lane.b32.xlu0 %v3800, 126
        %v3822 = vpop.permute.xlu0 %3821
        %3823 = vrot.lane.b32.xlu0 %v3801, 126
        %v3824 = vpop.permute.xlu0 %3823
        %3825 = vrot.lane.b32.xlu0 %v3802, 126
        %v3826 = vpop.permute.xlu0 %3825
        %3831 = vrot.lane.b32.xlu0 %v3799, 125
        %v3832 = vpop.permute.xlu0 %3831
        %3833 = vrot.lane.b32.xlu0 %v3800, 125
        %v3834 = vpop.permute.xlu0 %3833
        %3835 = vrot.lane.b32.xlu0 %v3801, 125
        %v3836 = vpop.permute.xlu0 %3835
        %3837 = vrot.lane.b32.xlu0 %v3802, 125
        %v3838 = vpop.permute.xlu0 %3837
        %3843 = vrot.lane.b32.xlu0 %v3799, 124
        %v3844 = vpop.permute.xlu0 %3843
        %3845 = vrot.lane.b32.xlu0 %v3800, 124
        %v3846 = vpop.permute.xlu0 %3845
        %3847 = vrot.lane.b32.xlu0 %v3801, 124
        %v3848 = vpop.permute.xlu0 %3847
        %3849 = vrot.lane.b32.xlu0 %v3802, 124
        %v3850 = vpop.permute.xlu0 %3849
        %3855 = vrot.lane.b32.xlu0 %v3799, 123
        %v3856 = vpop.permute.xlu0 %3855
        %3857 = vrot.lane.b32.xlu0 %v3800, 123
        %v3858 = vpop.permute.xlu0 %3857
        %3859 = vrot.lane.b32.xlu0 %v3801, 123
        %v3860 = vpop.permute.xlu0 %3859
        %3861 = vrot.lane.b32.xlu0 %v3802, 123
        %v3862 = vpop.permute.xlu0 %3861
        %3867 = vrot.lane.b32.xlu0 %v3799, 122
        %v3868 = vpop.permute.xlu0 %3867
        %3869 = vrot.lane.b32.xlu0 %v3800, 122
        %v3870 = vpop.permute.xlu0 %3869
        %3871 = vrot.lane.b32.xlu0 %v3801, 122
        %v3872 = vpop.permute.xlu0 %3871
        %3873 = vrot.lane.b32.xlu0 %v3802, 122
        %v3874 = vpop.permute.xlu0 %3873
        %3879 = vrot.lane.b32.xlu0 %v3799, 121
        %v3880 = vpop.permute.xlu0 %3879
        %3881 = vrot.lane.b32.xlu0 %v3800, 121
        %v3882 = vpop.permute.xlu0 %3881
        %3883 = vrot.lane.b32.xlu0 %v3801, 121
        %v3884 = vpop.permute.xlu0 %3883
        %3885 = vrot.lane.b32.xlu0 %v3802, 121
        %v3886 = vpop.permute.xlu0 %3885
        %3891 = vrot.lane.b32.xlu0 %v3799, 120
        %v3892 = vpop.permute.xlu0 %3891
        %3893 = vrot.lane.b32.xlu0 %v3800, 120
        %v3894 = vpop.permute.xlu0 %3893
        %3895 = vrot.lane.b32.xlu0 %v3801, 120
        %v3896 = vpop.permute.xlu0 %3895
        %3897 = vrot.lane.b32.xlu0 %v3802, 120
        %v3898 = vpop.permute.xlu0 %3897
        %3903 = vrot.lane.b32.xlu0 %v3799, 119
        %v3904 = vpop.permute.xlu0 %3903
        %3905 = vrot.lane.b32.xlu0 %v3800, 119
        %v3906 = vpop.permute.xlu0 %3905
        %3907 = vrot.lane.b32.xlu0 %v3801, 119
        %v3908 = vpop.permute.xlu0 %3907
        %3909 = vrot.lane.b32.xlu0 %v3802, 119
        %v3910 = vpop.permute.xlu0 %3909
        %3915 = vrot.lane.b32.xlu0 %v3799, 118
        %v3916 = vpop.permute.xlu0 %3915
        %3917 = vrot.lane.b32.xlu0 %v3800, 118
        %v3918 = vpop.permute.xlu0 %3917
        %3919 = vrot.lane.b32.xlu0 %v3801, 118
        %v3920 = vpop.permute.xlu0 %3919
        %3921 = vrot.lane.b32.xlu0 %v3802, 118
        %v3922 = vpop.permute.xlu0 %3921
        %3927 = vrot.lane.b32.xlu0 %v3799, 117
        %v3928 = vpop.permute.xlu0 %3927
        %3929 = vrot.lane.b32.xlu0 %v3800, 117
        %v3930 = vpop.permute.xlu0 %3929
        %3931 = vrot.lane.b32.xlu0 %v3801, 117
        %v3932 = vpop.permute.xlu0 %3931
        %3933 = vrot.lane.b32.xlu0 %v3802, 117
        %v3934 = vpop.permute.xlu0 %3933
        %3939 = vrot.lane.b32.xlu0 %v3799, 116
        %v3940 = vpop.permute.xlu0 %3939
        %3941 = vrot.lane.b32.xlu0 %v3800, 116
        %v3942 = vpop.permute.xlu0 %3941
        %3943 = vrot.lane.b32.xlu0 %v3801, 116
        %v3944 = vpop.permute.xlu0 %3943
        %3945 = vrot.lane.b32.xlu0 %v3802, 116
        %v3946 = vpop.permute.xlu0 %3945
        %3951 = vrot.lane.b32.xlu0 %v3799, 115
        %v3952 = vpop.permute.xlu0 %3951
        %3953 = vrot.lane.b32.xlu0 %v3800, 115
        %v3954 = vpop.permute.xlu0 %3953
        %3955 = vrot.lane.b32.xlu0 %v3801, 115
        %v3956 = vpop.permute.xlu0 %3955
        %3957 = vrot.lane.b32.xlu0 %v3802, 115
        %v3958 = vpop.permute.xlu0 %3957
        %3963 = vrot.lane.b32.xlu0 %v3799, 114
        %v3964 = vpop.permute.xlu0 %3963
        %3965 = vrot.lane.b32.xlu0 %v3800, 114
        %v3966 = vpop.permute.xlu0 %3965
        %3967 = vrot.lane.b32.xlu0 %v3801, 114
        %v3968 = vpop.permute.xlu0 %3967
        %3969 = vrot.lane.b32.xlu0 %v3802, 114
        %v3970 = vpop.permute.xlu0 %3969
        %3975 = vrot.lane.b32.xlu0 %v3799, 113
        %v3976 = vpop.permute.xlu0 %3975
        %3977 = vrot.lane.b32.xlu0 %v3800, 113
        %v3978 = vpop.permute.xlu0 %3977
        %3979 = vrot.lane.b32.xlu0 %v3801, 113
        %v3980 = vpop.permute.xlu0 %3979
        %3981 = vrot.lane.b32.xlu0 %v3802, 113
        %v3982 = vpop.permute.xlu0 %3981
        %v3987 = vsel %vm3714, %v3799, 0.0
        %v3988 = vsel %vm3714, %v3800, 0.0
        %v3989 = vsel %vm3714, %v3801, 0.0
        %v3990 = vsel %vm3714, %v3802, 0.0
        %v3991 = vsel %vm3714, %v3808, 0.0
        %v3992 = vsel %vm3714, %v3810, 0.0
        %v3993 = vsel %vm3714, %v3812, 0.0
        %v3994 = vsel %vm3714, %v3814, 0.0
        %v3995 = vsel %vm3714, %v3820, 0.0
        %v3996 = vsel %vm3714, %v3822, 0.0
        %v3997 = vsel %vm3714, %v3824, 0.0
        %v3998 = vsel %vm3714, %v3826, 0.0
        %v3999 = vsel %vm3714, %v3832, 0.0
        %v4000 = vsel %vm3714, %v3834, 0.0
        %v4001 = vsel %vm3714, %v3836, 0.0
        %v4002 = vsel %vm3714, %v3838, 0.0
        %v4003 = vsel %vm3714, %v3844, 0.0
        %v4004 = vsel %vm3714, %v3846, 0.0
        %v4005 = vsel %vm3714, %v3848, 0.0
        %v4006 = vsel %vm3714, %v3850, 0.0
        %v4007 = vsel %vm3714, %v3856, 0.0
        %v4008 = vsel %vm3714, %v3858, 0.0
        %v4009 = vsel %vm3714, %v3860, 0.0
        %v4010 = vsel %vm3714, %v3862, 0.0
        %v4011 = vsel %vm3714, %v3868, 0.0
        %v4012 = vsel %vm3714, %v3870, 0.0
        %v4013 = vsel %vm3714, %v3872, 0.0
        %v4014 = vsel %vm3714, %v3874, 0.0
        %v4015 = vsel %vm3714, %v3880, 0.0
        %v4016 = vsel %vm3714, %v3882, 0.0
        %v4017 = vsel %vm3714, %v3884, 0.0
        %v4018 = vsel %vm3714, %v3886, 0.0
        %v4019 = vsel %vm3714, %v3892, 0.0
        %v4020 = vsel %vm3714, %v3894, 0.0
        %v4021 = vsel %vm3714, %v3896, 0.0
        %v4022 = vsel %vm3714, %v3898, 0.0
        %v4023 = vsel %vm3714, %v3904, 0.0
        %v4024 = vsel %vm3714, %v3906, 0.0
        %v4025 = vsel %vm3714, %v3908, 0.0
        %v4026 = vsel %vm3714, %v3910, 0.0
        %v4027 = vsel %vm3714, %v3916, 0.0
        %v4028 = vsel %vm3714, %v3918, 0.0
        %v4029 = vsel %vm3714, %v3920, 0.0
        %v4030 = vsel %vm3714, %v3922, 0.0
        %v4031 = vsel %vm3714, %v3928, 0.0
        %v4032 = vsel %vm3714, %v3930, 0.0
        %v4033 = vsel %vm3714, %v3932, 0.0
        %v4034 = vsel %vm3714, %v3934, 0.0
        %v4035 = vsel %vm3714, %v3940, 0.0
        %v4036 = vsel %vm3714, %v3942, 0.0
        %v4037 = vsel %vm3714, %v3944, 0.0
        %v4038 = vsel %vm3714, %v3946, 0.0
        %v4039 = vsel %vm3714, %v3952, 0.0
        %v4040 = vsel %vm3714, %v3954, 0.0
        %v4041 = vsel %vm3714, %v3956, 0.0
        %v4042 = vsel %vm3714, %v3958, 0.0
        %v4043 = vsel %vm3714, %v3964, 0.0
        %v4044 = vsel %vm3714, %v3966, 0.0
        %v4045 = vsel %vm3714, %v3968, 0.0
        %v4046 = vsel %vm3714, %v3970, 0.0
        %v4047 = vsel %vm3714, %v3976, 0.0
        %v4048 = vsel %vm3714, %v3978, 0.0
        %v4049 = vsel %vm3714, %v3980, 0.0
        %v4050 = vsel %vm3714, %v3982, 0.0
        %4052 = vset.pattern.permute.xlu0 0
        %4053 = vperm.xlu0 %4052, %v821
        %v4054 = vpop.permute.xlu0 %4053
        %4057 = vset.pattern.permute.xlu0 0
        %4058 = vperm.xlu0 %4057, %v822
        %v4059 = vpop.permute.xlu0 %4058
        %4062 = vset.pattern.permute.xlu0 0
        %4063 = vperm.xlu0 %4062, %v823
        %v4064 = vpop.permute.xlu0 %4063
        %4067 = vset.pattern.permute.xlu0 0
        %4068 = vperm.xlu0 %4067, %v824
        %v4069 = vpop.permute.xlu0 %4068
        %4071 = vmatprep.subr.mxu0 %v4002
        %4072 = vmatpush1.msra.mxu0 %v3730
        %4073 = vmatprep.subr.mxu0 %v4001
        %4074 = vmatpush1.msra.mxu0 %v3729
        %4075 = vmatprep.subr.mxu0 %v4000
        %4076 = vmatpush1.msra.mxu0 %v3728
        %4077 = vmatprep.subr.mxu0 %v3999
        %4078 = vmatpush1.msra.mxu0 %v3727
        %4079 = vmatprep.subr.mxu0 %v3998
        %4080 = vmatpush1.msra.mxu0 %v3726
        %4081 = vmatprep.subr.mxu0 %v3997
        %4082 = vmatpush1.msra.mxu0 %v3725
        %4083 = vmatprep.subr.mxu0 %v3996
        %4084 = vmatpush1.msra.mxu0 %v3724
        %4085 = vmatprep.subr.mxu0 %v3995
        %4086 = vmatpush1.msra.mxu0 %v3723
        %4087 = vmatprep.subr.mxu0 %v3994
        %4088 = vmatpush1.msra.mxu0 %v3722
        %4089 = vmatprep.subr.mxu0 %v3993
        %4090 = vmatpush1.msra.mxu0 %v3721
        %4091 = vmatprep.subr.mxu0 %v3992
        %4092 = vmatpush1.msra.mxu0 %v3720
        %4093 = vmatprep.subr.mxu0 %v3991
        %4094 = vmatpush1.msra.mxu0 %v3719
        %4095 = vmatprep.subr.mxu0 %v3990
        %4096 = vmatpush1.msra.mxu0 %v3718
        %4097 = vmatprep.subr.mxu0 %v3989
        %4098 = vmatpush1.msra.mxu0 %v3717
        %4099 = vmatprep.subr.mxu0 %v3988
        %4100 = vmatpush1.msra.mxu0 %v3716
        %4101 = vmatprep.subr.mxu0 %v3987
        %4102 = vmatpush1.msra.mxu0 %v3715
        %4103 = vmatprep.subr.mxu0 %v4018
        %4104 = vmatpush2.msra.mxu0 %v3746
        %4105 = vmatprep.subr.mxu0 %v4017
        %4106 = vmatpush2.msra.mxu0 %v3745
        %4107 = vmatprep.subr.mxu0 %v4016
        %4108 = vmatpush2.msra.mxu0 %v3744
        %4109 = vmatprep.subr.mxu0 %v4015
        %4110 = vmatpush2.msra.mxu0 %v3743
        %4111 = vmatprep.subr.mxu0 %v4014
        %4112 = vmatpush2.msra.mxu0 %v3742
        %4113 = vmatprep.subr.mxu0 %v4013
        %4114 = vmatpush2.msra.mxu0 %v3741
        %4115 = vmatprep.subr.mxu0 %v4012
        %4116 = vmatpush2.msra.mxu0 %v3740
        %4117 = vmatprep.subr.mxu0 %v4011
        %4118 = vmatpush2.msra.mxu0 %v3739
        %4119 = vmatprep.subr.mxu0 %v4010
        %4120 = vmatpush2.msra.mxu0 %v3738
        %4121 = vmatprep.subr.mxu0 %v4009
        %4122 = vmatpush2.msra.mxu0 %v3737
        %4123 = vmatprep.subr.mxu0 %v4008
        %4124 = vmatpush2.msra.mxu0 %v3736
        %4125 = vmatprep.subr.mxu0 %v4007
        %4126 = vmatpush2.msra.mxu0 %v3735
        %4127 = vmatprep.subr.mxu0 %v4006
        %4128 = vmatpush2.msra.mxu0 %v3734
        %4129 = vmatprep.subr.mxu0 %v4005
        %4130 = vmatpush2.msra.mxu0 %v3733
        %4131 = vmatprep.subr.mxu0 %v4004
        %4132 = vmatpush2.msra.mxu0 %v3732
        %4133 = vmatprep.subr.mxu0 %v4003
        %4134 = vmatpush2.msra.mxu0 %v3731
        %4135 = vmatprep.mubr.f32.mxu0 %v800
        %4136 = vmatmul.mubr.f32.gmra.mxu0 %v799
        %v4137 = vpop.f32.mrf.mxu0
        %v4138 = vadd.f32 %v4054, %v4137
        %v4139 = vpop.f32.mrf.mxu0
        %v4140 = vadd.f32 %v4054, %v4139
        %4141 = vmatprep.mubr.f32.mxu0 %v804
        %4142 = vmatmul.mubr.f32.gmra.mxu0 %v803
        %v4143 = vpop.f32.mrf.mxu0
        %v4144 = vadd.f32 %v4059, %v4143
        %v4145 = vpop.f32.mrf.mxu0
        %v4146 = vadd.f32 %v4059, %v4145
        %4147 = vmatprep.mubr.f32.mxu0 %v808
        %4148 = vmatmul.mubr.f32.gmra.mxu0 %v807
        %v4149 = vpop.f32.mrf.mxu0
        %v4150 = vadd.f32 %v4064, %v4149
        %v4151 = vpop.f32.mrf.mxu0
        %v4152 = vadd.f32 %v4064, %v4151
        %4153 = vmatprep.mubr.f32.mxu0 %v812
        %4154 = vmatmul.mubr.f32.gmra.mxu0 %v811
        %v4155 = vpop.f32.mrf.mxu0
        %v4156 = vadd.f32 %v4069, %v4155
        %v4157 = vpop.f32.mrf.mxu0
        %v4158 = vadd.f32 %v4069, %v4157
        %4159 = vdwg.mxu0
        %4160 = vmatprep.subr.mxu0 %v4034
        %4161 = vmatpush1.msra.mxu0 %v3762
        %4162 = vmatprep.subr.mxu0 %v4033
        %4163 = vmatpush1.msra.mxu0 %v3761
        %4164 = vmatprep.subr.mxu0 %v4032
        %4165 = vmatpush1.msra.mxu0 %v3760
        %4166 = vmatprep.subr.mxu0 %v4031
        %4167 = vmatpush1.msra.mxu0 %v3759
        %4168 = vmatprep.subr.mxu0 %v4030
        %4169 = vmatpush1.msra.mxu0 %v3758
        %4170 = vmatprep.subr.mxu0 %v4029
        %4171 = vmatpush1.msra.mxu0 %v3757
        %4172 = vmatprep.subr.mxu0 %v4028
        %4173 = vmatpush1.msra.mxu0 %v3756
        %4174 = vmatprep.subr.mxu0 %v4027
        %4175 = vmatpush1.msra.mxu0 %v3755
        %4176 = vmatprep.subr.mxu0 %v4026
        %4177 = vmatpush1.msra.mxu0 %v3754
        %4178 = vmatprep.subr.mxu0 %v4025
        %4179 = vmatpush1.msra.mxu0 %v3753
        %4180 = vmatprep.subr.mxu0 %v4024
        %4181 = vmatpush1.msra.mxu0 %v3752
        %4182 = vmatprep.subr.mxu0 %v4023
        %4183 = vmatpush1.msra.mxu0 %v3751
        %4184 = vmatprep.subr.mxu0 %v4022
        %4185 = vmatpush1.msra.mxu0 %v3750
        %4186 = vmatprep.subr.mxu0 %v4021
        %4187 = vmatpush1.msra.mxu0 %v3749
        %4188 = vmatprep.subr.mxu0 %v4020
        %4189 = vmatpush1.msra.mxu0 %v3748
        %4190 = vmatprep.subr.mxu0 %v4019
        %4191 = vmatpush1.msra.mxu0 %v3747
        %4192 = vmatprep.subr.mxu0 %v4050
        %4193 = vmatpush2.msra.mxu0 %v3778
        %4194 = vmatprep.subr.mxu0 %v4049
        %4195 = vmatpush2.msra.mxu0 %v3777
        %4196 = vmatprep.subr.mxu0 %v4048
        %4197 = vmatpush2.msra.mxu0 %v3776
        %4198 = vmatprep.subr.mxu0 %v4047
        %4199 = vmatpush2.msra.mxu0 %v3775
        %4200 = vmatprep.subr.mxu0 %v4046
        %4201 = vmatpush2.msra.mxu0 %v3774
        %4202 = vmatprep.subr.mxu0 %v4045
        %4203 = vmatpush2.msra.mxu0 %v3773
        %4204 = vmatprep.subr.mxu0 %v4044
        %4205 = vmatpush2.msra.mxu0 %v3772
        %4206 = vmatprep.subr.mxu0 %v4043
        %4207 = vmatpush2.msra.mxu0 %v3771
        %4208 = vmatprep.subr.mxu0 %v4042
        %4209 = vmatpush2.msra.mxu0 %v3770
        %4210 = vmatprep.subr.mxu0 %v4041
        %4211 = vmatpush2.msra.mxu0 %v3769
        %4212 = vmatprep.subr.mxu0 %v4040
        %4213 = vmatpush2.msra.mxu0 %v3768
        %4214 = vmatprep.subr.mxu0 %v4039
        %4215 = vmatpush2.msra.mxu0 %v3767
        %4216 = vmatprep.subr.mxu0 %v4038
        %4217 = vmatpush2.msra.mxu0 %v3766
        %4218 = vmatprep.subr.mxu0 %v4037
        %4219 = vmatpush2.msra.mxu0 %v3765
        %4220 = vmatprep.subr.mxu0 %v4036
        %4221 = vmatpush2.msra.mxu0 %v3764
        %4222 = vmatprep.subr.mxu0 %v4035
        %4223 = vmatpush2.msra.mxu0 %v3763
        %4224 = vmatprep.mubr.f32.mxu0 %v802
        %4225 = vmatmul.mubr.f32.gmra.mxu0 %v801
        %v4226 = vpop.f32.mrf.mxu0
        %v4227 = vadd.f32 %v4138, %v4226
        %v4228 = vpop.f32.mrf.mxu0
        %v4229 = vadd.f32 %v4140, %v4228
        %4230 = vmatprep.mubr.f32.mxu0 %v806
        %4231 = vmatmul.mubr.f32.gmra.mxu0 %v805
        %v4232 = vpop.f32.mrf.mxu0
        %v4233 = vadd.f32 %v4144, %v4232
        %v4234 = vpop.f32.mrf.mxu0
        %v4235 = vadd.f32 %v4146, %v4234
        %4236 = vmatprep.mubr.f32.mxu0 %v810
        %4237 = vmatmul.mubr.f32.gmra.mxu0 %v809
        %v4238 = vpop.f32.mrf.mxu0
        %v4239 = vadd.f32 %v4150, %v4238
        %v4240 = vpop.f32.mrf.mxu0
        %v4241 = vadd.f32 %v4152, %v4240
        %4242 = vmatprep.mubr.f32.mxu0 %v814
        %4243 = vmatmul.mubr.f32.gmra.mxu0 %v813
        %v4244 = vpop.f32.mrf.mxu0
        %v4245 = vadd.f32 %v4156, %v4244
        %v4246 = vpop.f32.mrf.mxu0
        %v4247 = vadd.f32 %v4158, %v4246
        %4248 = vdwg.mxu0
        %4257 = vrot.lane.b32.xlu0 %v4227, 127
        %v4258 = vpop.permute.xlu0 %4257
        %4259 = vrot.lane.b32.xlu0 %v4229, 127
        %v4260 = vpop.permute.xlu0 %4259
        %4261 = vrot.lane.b32.xlu0 %v4233, 127
        %v4262 = vpop.permute.xlu0 %4261
        %4263 = vrot.lane.b32.xlu0 %v4235, 127
        %v4264 = vpop.permute.xlu0 %4263
        %4265 = vrot.lane.b32.xlu0 %v4239, 127
        %v4266 = vpop.permute.xlu0 %4265
        %4267 = vrot.lane.b32.xlu0 %v4241, 127
        %v4268 = vpop.permute.xlu0 %4267
        %4269 = vrot.lane.b32.xlu0 %v4245, 127
        %v4270 = vpop.permute.xlu0 %4269
        %4271 = vrot.lane.b32.xlu0 %v4247, 127
        %v4272 = vpop.permute.xlu0 %4271
        %v4273 = vsel %vm1226, %v4258, %v4260
        %v4274 = vsel %vm1226, %v4262, %v4264
        %v4275 = vsel %vm1226, %v4266, %v4268
        %v4276 = vsel %vm1226, %v4270, %v4272
        %v4285 = vmax.f32 %v4227, %v4273
        %v4286 = vmax.f32 %v4229, %v4260
        %v4287 = vmax.f32 %v4233, %v4274
        %v4288 = vmax.f32 %v4235, %v4264
        %v4289 = vmax.f32 %v4239, %v4275
        %v4290 = vmax.f32 %v4241, %v4268
        %v4291 = vmax.f32 %v4245, %v4276
        %v4292 = vmax.f32 %v4247, %v4272
        %v4294 = vsel %vm1226, %v4286, 0
        %v4297 = vsel %vm1226, %v4288, 0
        %v4300 = vsel %vm1226, %v4290, 0
        %v4303 = vsel %vm1226, %v4292, 0
        %v4306 = vsel %vm1529, %v1176, 0
        %4308 = vmatprep.subr.mxu0 0.0
        %4309 = vmatpush1.msra.mxu0 %v1160
        %4310 = vmatprep.subr.mxu0 0.0
        %4311 = vmatpush1.msra.mxu0 %v1159
        %4312 = vmatprep.subr.mxu0 0.0
        %4313 = vmatpush1.msra.mxu0 %v1158
        %4314 = vmatprep.subr.mxu0 0.0
        %4315 = vmatpush1.msra.mxu0 %v1157
        %4316 = vmatprep.subr.mxu0 0.0
        %4317 = vmatpush1.msra.mxu0 %v1156
        %4318 = vmatprep.subr.mxu0 0.0
        %4319 = vmatpush1.msra.mxu0 %v1155
        %4320 = vmatprep.subr.mxu0 0.0
        %4321 = vmatpush1.msra.mxu0 %v1154
        %4322 = vmatprep.subr.mxu0 0.0
        %4323 = vmatpush1.msra.mxu0 %v1153
        %4324 = vmatprep.subr.mxu0 0.0
        %4325 = vmatpush1.msra.mxu0 %v1152
        %4326 = vmatprep.subr.mxu0 0.0
        %4327 = vmatpush1.msra.mxu0 %v1151
        %4328 = vmatprep.subr.mxu0 0.0
        %4329 = vmatpush1.msra.mxu0 %v1150
        %4330 = vmatprep.subr.mxu0 0.0
        %4331 = vmatpush1.msra.mxu0 %v1149
        %4332 = vmatprep.subr.mxu0 0.0
        %4333 = vmatpush1.msra.mxu0 %v1148
        %4334 = vmatprep.subr.mxu0 0.0
        %4335 = vmatpush1.msra.mxu0 %v1147
        %4336 = vmatprep.subr.mxu0 0.0
        %4337 = vmatpush1.msra.mxu0 %v1146
        %4338 = vmatprep.subr.mxu0 0.0
        %4339 = vmatpush1.msra.mxu0 %v1145
        %4340 = vmatprep.subr.mxu0 0.0
        %4341 = vmatpush2.msra.mxu0 %v4306
        %4342 = vmatprep.subr.mxu0 0.0
        %4343 = vmatpush2.msra.mxu0 %v1175
        %4344 = vmatprep.subr.mxu0 0.0
        %4345 = vmatpush2.msra.mxu0 %v1174
        %4346 = vmatprep.subr.mxu0 0.0
        %4347 = vmatpush2.msra.mxu0 %v1173
        %4348 = vmatprep.subr.mxu0 0.0
        %4349 = vmatpush2.msra.mxu0 %v1172
        %4350 = vmatprep.subr.mxu0 0.0
        %4351 = vmatpush2.msra.mxu0 %v1171
        %4352 = vmatprep.subr.mxu0 0.0
        %4353 = vmatpush2.msra.mxu0 %v1170
        %4354 = vmatprep.subr.mxu0 0.0
        %4355 = vmatpush2.msra.mxu0 %v1169
        %4356 = vmatprep.subr.mxu0 0.0
        %4357 = vmatpush2.msra.mxu0 %v1168
        %4358 = vmatprep.subr.mxu0 0.0
        %4359 = vmatpush2.msra.mxu0 %v1167
        %4360 = vmatprep.subr.mxu0 0.0
        %4361 = vmatpush2.msra.mxu0 %v1166
        %4362 = vmatprep.subr.mxu0 0.0
        %4363 = vmatpush2.msra.mxu0 %v1165
        %4364 = vmatprep.subr.mxu0 0.0
        %4365 = vmatpush2.msra.mxu0 %v1164
        %4366 = vmatprep.subr.mxu0 0.0
        %4367 = vmatpush2.msra.mxu0 %v1163
        %4368 = vmatprep.subr.mxu0 0.0
        %4369 = vmatpush2.msra.mxu0 %v1162
        %4370 = vmatprep.subr.mxu0 0.0
        %4371 = vmatpush2.msra.mxu0 %v1161
        %4372 = vmatprep.mubr.f32.mxu0 %v4294
        %4373 = vmatmul.mubr.f32.gmra.mxu0 %v4285
        %v4374 = vpop.f32.mrf.mxu0
        %v4375 = vadd.f32 0.0, %v4374
        %v4376 = vpop.f32.mrf.mxu0
        %4377 = vmatprep.mubr.f32.mxu0 %v4297
        %4378 = vmatmul.mubr.f32.gmra.mxu0 %v4287
        %v4379 = vpop.f32.mrf.mxu0
        %v4380 = vadd.f32 0.0, %v4379
        %v4381 = vpop.f32.mrf.mxu0
        %4382 = vmatprep.mubr.f32.mxu0 %v4300
        %4383 = vmatmul.mubr.f32.gmra.mxu0 %v4289
        %v4384 = vpop.f32.mrf.mxu0
        %v4385 = vadd.f32 0.0, %v4384
        %v4386 = vpop.f32.mrf.mxu0
        %4387 = vmatprep.mubr.f32.mxu0 %v4303
        %4388 = vmatmul.mubr.f32.gmra.mxu0 %v4291
        %v4389 = vpop.f32.mrf.mxu0
        %v4390 = vadd.f32 0.0, %v4389
        %v4391 = vpop.f32.mrf.mxu0
        %4392 = vdwg.mxu0
        %v4393 = vxor.u32 %v4375, 2147483648
        %v4394 = vxor.u32 %v4380, 2147483648
        %v4395 = vxor.u32 %v4385, 2147483648
        %v4396 = vxor.u32 %v4390, 2147483648
        %v4397 = vmul.f32 %v4393, 1.442695
        %v4398 = vpow.pop %v4397
        %v4399 = vmul.f32 %v4394, 1.442695
        %v4400 = vpow.pop %v4399
        %v4401 = vmul.f32 %v4395, 1.442695
        %v4402 = vpow.pop %v4401
        %v4403 = vmul.f32 %v4396, 1.442695
        %v4404 = vpow.pop %v4403
        %v4405 = vadd.f32 %v4398, 1.0
        %v4406 = vadd.f32 %v4400, 1.0
        %v4407 = vadd.f32 %v4402, 1.0
        %v4408 = vadd.f32 %v4404, 1.0
        %v4409 = vrcp.pop %v4405
        %v4410 = vmul.f32 1.0, %v4409
        %v4411 = vrcp.pop %v4406
        %v4412 = vmul.f32 1.0, %v4411
        %v4413 = vrcp.pop %v4407
        %v4414 = vmul.f32 1.0, %v4413
        %v4415 = vrcp.pop %v4408
        %v4416 = vmul.f32 1.0, %v4415
        %4417 = vxpose.xlu0.b32.start [1/16] %v4410, 128
        %4418 = vxpose.xlu0.b32.cont [2/16] %v4412, 128
        %4419 = vxpose.xlu0.b32.cont [3/16] %v4414, 128
        %4420 = vxpose.xlu0.b32.cont [4/16] %v4416, 128
        %4421 = vxpose.xlu0.b32.cont [5/16] 0.0, 128
        %4422 = vxpose.xlu0.b32.cont [6/16] 0.0, 128
        %4423 = vxpose.xlu0.b32.cont [7/16] 0.0, 128
        %4424 = vxpose.xlu0.b32.cont [8/16] 0.0, 128
        %4425 = vxpose.xlu0.b32.cont [9/16] 0.0, 128
        %4426 = vxpose.xlu0.b32.cont [10/16] 0.0, 128
        %4427 = vxpose.xlu0.b32.cont [11/16] 0.0, 128
        %4428 = vxpose.xlu0.b32.cont [12/16] 0.0, 128
        %4429 = vxpose.xlu0.b32.cont [13/16] 0.0, 128
        %4430 = vxpose.xlu0.b32.cont [14/16] 0.0, 128
        %4431 = vxpose.xlu0.b32.cont [15/16] 0.0, 128
        %4432 = vxpose.xlu0.b32.end [16/16] 0.0, 128
        %v4433 = vpop.trf.xlu0
        %v4434 = vpop.trf.xlu0
        %v4435 = vpop.trf.xlu0
        %v4436 = vpop.trf.xlu0
        %v4437 = vpop.trf.xlu0
        %v4438 = vpop.trf.xlu0
        %v4439 = vpop.trf.xlu0
        %v4440 = vpop.trf.xlu0
        %v4441 = vpop.trf.xlu0
        %v4442 = vpop.trf.xlu0
        %v4443 = vpop.trf.xlu0
        %v4444 = vpop.trf.xlu0
        %v4445 = vpop.trf.xlu0
        %v4446 = vpop.trf.xlu0
        %v4447 = vpop.trf.xlu0
        %v4448 = vpop.trf.xlu0
        %v4449 = vld [vmem:[%s624] sm:$0xff]
        %v4450 = vld [vmem:[%s624 + $0x8] sm:$0xff]
        %v4451 = vld [vmem:[%s624 + $0x10] sm:$0xff]
        %v4452 = vld [vmem:[%s624 + $0x18] sm:$0xff]
        %v4453 = vld [vmem:[%s624 + $0x20] sm:$0xff]
        %v4454 = vld [vmem:[%s624 + $0x28] sm:$0xff]
        %v4455 = vld [vmem:[%s624 + $0x30] sm:$0xff]
        %v4456 = vld [vmem:[%s624 + $0x38] sm:$0xff]
        %v4457 = vld [vmem:[%s633] sm:$0xff]
        %v4458 = vld [vmem:[%s633 + $0x8] sm:$0xff]
        %v4459 = vld [vmem:[%s633 + $0x10] sm:$0xff]
        %v4460 = vld [vmem:[%s633 + $0x18] sm:$0xff]
        %v4461 = vld [vmem:[%s633 + $0x20] sm:$0xff]
        %v4462 = vld [vmem:[%s633 + $0x28] sm:$0xff]
        %v4463 = vld [vmem:[%s633 + $0x30] sm:$0xff]
        %v4464 = vld [vmem:[%s633 + $0x38] sm:$0xff]
        %v4465 = vld [vmem:[%s633 + $0x40] sm:$0xff]
        %v4466 = vld [vmem:[%s633 + $0x48] sm:$0xff]
        %v4467 = vld [vmem:[%s633 + $0x50] sm:$0xff]
        %v4468 = vld [vmem:[%s633 + $0x58] sm:$0xff]
        %v4469 = vld [vmem:[%s633 + $0x60] sm:$0xff]
        %v4470 = vld [vmem:[%s633 + $0x68] sm:$0xff]
        %v4471 = vld [vmem:[%s633 + $0x70] sm:$0xff]
        %v4472 = vld [vmem:[%s633 + $0x78] sm:$0xff]
        %v4473 = vld [vmem:[%s779] sm:$0x3]
        %v4474 = vld [vmem:[%s783] sm:$0x1]
        %v4476 = vlaneseq
        %v4477 = vshrl.u32 %v4476, 7
        %v4478 = vsub.s32 0, %v4477
        %v4479 = vrot.slane %v4473, %v4478
        %v4480 = vlaneseq
        %v4481 = vshrl.u32 %v4480, 7
        %v4482 = vsub.s32 1, %v4481
        %v4483 = vrot.slane %v4473, %v4482
        %vm4486 = vcmask 261120
        %v4488 = vsel %vm4486, %v4433, 0
        %v4491 = vsel %vm4486, %v4434, 0
        %4493 = vmatprep.subr.mxu0 0.0
        %4494 = vmatpush1.msra.mxu0 0.0
        %4495 = vmatprep.subr.mxu0 0.0
        %4496 = vmatpush1.msra.mxu0 0.0
        %4497 = vmatprep.subr.mxu0 0.0
        %4498 = vmatpush1.msra.mxu0 0.0
        %4499 = vmatprep.subr.mxu0 0.0
        %4500 = vmatpush1.msra.mxu0 0.0
        %4501 = vmatprep.subr.mxu0 0.0
        %4502 = vmatpush1.msra.mxu0 0.0
        %4503 = vmatprep.subr.mxu0 0.0
        %4504 = vmatpush1.msra.mxu0 0.0
        %4505 = vmatprep.subr.mxu0 0.0
        %4506 = vmatpush1.msra.mxu0 0.0
        %4507 = vmatprep.subr.mxu0 0.0
        %4508 = vmatpush1.msra.mxu0 0.0
        %4509 = vmatprep.subr.mxu0 0.0
        %4510 = vmatpush1.msra.mxu0 0.0
        %4511 = vmatprep.subr.mxu0 0.0
        %4512 = vmatpush1.msra.mxu0 0.0
        %4513 = vmatprep.subr.mxu0 0.0
        %4514 = vmatpush1.msra.mxu0 0.0
        %4515 = vmatprep.subr.mxu0 0.0
        %4516 = vmatpush1.msra.mxu0 0.0
        %4517 = vmatprep.subr.mxu0 %v4456
        %4518 = vmatpush1.msra.mxu0 %v4455
        %4519 = vmatprep.subr.mxu0 %v4454
        %4520 = vmatpush1.msra.mxu0 %v4453
        %4521 = vmatprep.subr.mxu0 %v4452
        %4522 = vmatpush1.msra.mxu0 %v4451
        %4523 = vmatprep.subr.mxu0 %v4450
        %4524 = vmatpush1.msra.mxu0 %v4449
        %4525 = vmatprep.subr.mxu0 0.0
        %4526 = vmatpush2.msra.mxu0 0.0
        %4527 = vmatprep.subr.mxu0 0.0
        %4528 = vmatpush2.msra.mxu0 0.0
        %4529 = vmatprep.subr.mxu0 0.0
        %4530 = vmatpush2.msra.mxu0 0.0
        %4531 = vmatprep.subr.mxu0 0.0
        %4532 = vmatpush2.msra.mxu0 0.0
        %4533 = vmatprep.subr.mxu0 0.0
        %4534 = vmatpush2.msra.mxu0 0.0
        %4535 = vmatprep.subr.mxu0 0.0
        %4536 = vmatpush2.msra.mxu0 0.0
        %4537 = vmatprep.subr.mxu0 0.0
        %4538 = vmatpush2.msra.mxu0 0.0
        %4539 = vmatprep.subr.mxu0 0.0
        %4540 = vmatpush2.msra.mxu0 0.0
        %4541 = vmatprep.subr.mxu0 0.0
        %4542 = vmatpush2.msra.mxu0 0.0
        %4543 = vmatprep.subr.mxu0 0.0
        %4544 = vmatpush2.msra.mxu0 0.0
        %4545 = vmatprep.subr.mxu0 0.0
        %4546 = vmatpush2.msra.mxu0 0.0
        %4547 = vmatprep.subr.mxu0 0.0
        %4548 = vmatpush2.msra.mxu0 0.0
        %4549 = vmatprep.subr.mxu0 0.0
        %4550 = vmatpush2.msra.mxu0 0.0
        %4551 = vmatprep.subr.mxu0 0.0
        %4552 = vmatpush2.msra.mxu0 0.0
        %4553 = vmatprep.subr.mxu0 0.0
        %4554 = vmatpush2.msra.mxu0 0.0
        %4555 = vmatprep.subr.mxu0 0.0
        %4556 = vmatpush2.msra.mxu0 0.0
        %4557 = vmatprep.mubr.f32.mxu0 0.0
        %4558 = vmatmul.mubr.f32.gmra.mxu0 %v4488
        %v4559 = vpop.f32.mrf.mxu0
        %v4560 = vadd.f32 %v4479, %v4559
        %v4561 = vpop.f32.mrf.mxu0
        %v4562 = vadd.f32 %v4483, %v4561
        %4563 = vmatprep.mubr.f32.mxu0 0.0
        %4564 = vmatmul.mubr.f32.gmra.mxu0 %v4491
        %v4565 = vpop.f32.mrf.mxu0
        %v4566 = vadd.f32 %v4479, %v4565
        %v4567 = vpop.f32.mrf.mxu0
        %v4568 = vadd.f32 %v4483, %v4567
        %4569 = vdwg.mxu0
        %vm4570 = vcmask 523264
        %v4571 = vsel %vm4570, 0.0, 0
        %4573 = vmatprep.subr.mxu0 0.0
        %4574 = vmatpush1.msra.mxu0 0.0
        %4575 = vmatprep.subr.mxu0 0.0
        %4576 = vmatpush1.msra.mxu0 0.0
        %4577 = vmatprep.subr.mxu0 0.0
        %4578 = vmatpush1.msra.mxu0 0.0
        %4579 = vmatprep.subr.mxu0 0.0
        %4580 = vmatpush1.msra.mxu0 0.0
        %4581 = vmatprep.subr.mxu0 0.0
        %4582 = vmatpush1.msra.mxu0 0.0
        %4583 = vmatprep.subr.mxu0 0.0
        %4584 = vmatpush1.msra.mxu0 0.0
        %4585 = vmatprep.subr.mxu0 0.0
        %4586 = vmatpush1.msra.mxu0 0.0
        %4587 = vmatprep.subr.mxu0 0.0
        %4588 = vmatpush1.msra.mxu0 0.0
        %4589 = vmatprep.subr.mxu0 %v4472
        %4590 = vmatpush1.msra.mxu0 %v4471
        %4591 = vmatprep.subr.mxu0 %v4470
        %4592 = vmatpush1.msra.mxu0 %v4469
        %4593 = vmatprep.subr.mxu0 %v4468
        %4594 = vmatpush1.msra.mxu0 %v4467
        %4595 = vmatprep.subr.mxu0 %v4466
        %4596 = vmatpush1.msra.mxu0 %v4465
        %4597 = vmatprep.subr.mxu0 %v4464
        %4598 = vmatpush1.msra.mxu0 %v4463
        %4599 = vmatprep.subr.mxu0 %v4462
        %4600 = vmatpush1.msra.mxu0 %v4461
        %4601 = vmatprep.subr.mxu0 %v4460
        %4602 = vmatpush1.msra.mxu0 %v4459
        %4603 = vmatprep.subr.mxu0 %v4458
        %4604 = vmatpush1.msra.mxu0 %v4457
        %4605 = vmatprep.subr.mxu0 0.0
        %4606 = vmatpush2.msra.mxu0 0.0
        %4607 = vmatprep.subr.mxu0 0.0
        %4608 = vmatpush2.msra.mxu0 0.0
        %4609 = vmatprep.subr.mxu0 0.0
        %4610 = vmatpush2.msra.mxu0 0.0
        %4611 = vmatprep.subr.mxu0 0.0
        %4612 = vmatpush2.msra.mxu0 0.0
        %4613 = vmatprep.subr.mxu0 0.0
        %4614 = vmatpush2.msra.mxu0 0.0
        %4615 = vmatprep.subr.mxu0 0.0
        %4616 = vmatpush2.msra.mxu0 0.0
        %4617 = vmatprep.subr.mxu0 0.0
        %4618 = vmatpush2.msra.mxu0 0.0
        %4619 = vmatprep.subr.mxu0 0.0
        %4620 = vmatpush2.msra.mxu0 0.0
        %4621 = vmatprep.subr.mxu0 0.0
        %4622 = vmatpush2.msra.mxu0 0.0
        %4623 = vmatprep.subr.mxu0 0.0
        %4624 = vmatpush2.msra.mxu0 0.0
        %4625 = vmatprep.subr.mxu0 0.0
        %4626 = vmatpush2.msra.mxu0 0.0
        %4627 = vmatprep.subr.mxu0 0.0
        %4628 = vmatpush2.msra.mxu0 0.0
        %4629 = vmatprep.subr.mxu0 0.0
        %4630 = vmatpush2.msra.mxu0 0.0
        %4631 = vmatprep.subr.mxu0 0.0
        %4632 = vmatpush2.msra.mxu0 0.0
        %4633 = vmatprep.subr.mxu0 0.0
        %4634 = vmatpush2.msra.mxu0 0.0
        %4635 = vmatprep.subr.mxu0 0.0
        %4636 = vmatpush2.msra.mxu0 0.0
        %4637 = vmatprep.mubr.f32.mxu0 0.0
        %4638 = vmatmul.mubr.f32.gmra.mxu0 %v4571
        %v4639 = vpop.f32.mrf.mxu0
        %v4640 = vadd.f32 0.0, %v4639
        %v4641 = vpop.f32.mrf.mxu0
        %v4642 = vadd.f32 0.0, %v4641
        %4643 = vdwg.mxu0
        %v4644 = vadd.f32 %v4560, %v4640
        %v4645 = vxor.u32 %v4644, 2147483648
        %v4646 = vmul.f32 %v4645, 1.442695
        %v4647 = vpow.pop %v4646
        %v4648 = vadd.f32 %v4647, 1.0
        %v4649 = vrcp.pop %v4648
        %v4650 = vmul.f32 1.0, %v4649
        %v4652 = vlaneseq
        %v4653 = vshrl.u32 %v4652, 7
        %v4654 = vsub.s32 0, %v4653
        %v4655 = vrot.slane %v4474, %v4654
        %v4657 = vadd.f32 %v4642, %v4655
        %v4658 = vmul.f32 %v4650, %v4657
        %v4659 = vadd.f32 %v4562, %v4658
        %v4660 = vtanh.pop %v4659
        %v4661 = vsub.f32 1.0, %v4650
        %4663 = vrot.lane.b32.xlu0 %v4660, 64
        %v4664 = vpop.permute.xlu0 %4663
        %v4666 = vmul.f32 %v4661, %v4664
        %v4667 = vmul.f32 %v4650, 0.0
        %v4668 = vadd.f32 %v4666, %v4667
        %4670 = vrot.lane.b32.xlu0 %v4668, 64
        %v4671 = vpop.permute.xlu0 %4670
        %v4672 = vsel %vm4570, %v4671, 0
        %4674 = vmatprep.subr.mxu0 0.0
        %4675 = vmatpush1.msra.mxu0 0.0
        %4676 = vmatprep.subr.mxu0 0.0
        %4677 = vmatpush1.msra.mxu0 0.0
        %4678 = vmatprep.subr.mxu0 0.0
        %4679 = vmatpush1.msra.mxu0 0.0
        %4680 = vmatprep.subr.mxu0 0.0
        %4681 = vmatpush1.msra.mxu0 0.0
        %4682 = vmatprep.subr.mxu0 0.0
        %4683 = vmatpush1.msra.mxu0 0.0
        %4684 = vmatprep.subr.mxu0 0.0
        %4685 = vmatpush1.msra.mxu0 0.0
        %4686 = vmatprep.subr.mxu0 0.0
        %4687 = vmatpush1.msra.mxu0 0.0
        %4688 = vmatprep.subr.mxu0 0.0
        %4689 = vmatpush1.msra.mxu0 0.0
        %4690 = vmatprep.subr.mxu0 %v4472
        %4691 = vmatpush1.msra.mxu0 %v4471
        %4692 = vmatprep.subr.mxu0 %v4470
        %4693 = vmatpush1.msra.mxu0 %v4469
        %4694 = vmatprep.subr.mxu0 %v4468
        %4695 = vmatpush1.msra.mxu0 %v4467
        %4696 = vmatprep.subr.mxu0 %v4466
        %4697 = vmatpush1.msra.mxu0 %v4465
        %4698 = vmatprep.subr.mxu0 %v4464
        %4699 = vmatpush1.msra.mxu0 %v4463
        %4700 = vmatprep.subr.mxu0 %v4462
        %4701 = vmatpush1.msra.mxu0 %v4461
        %4702 = vmatprep.subr.mxu0 %v4460
        %4703 = vmatpush1.msra.mxu0 %v4459
        %4704 = vmatprep.subr.mxu0 %v4458
        %4705 = vmatpush1.msra.mxu0 %v4457
        %4706 = vmatprep.subr.mxu0 0.0
        %4707 = vmatpush2.msra.mxu0 0.0
        %4708 = vmatprep.subr.mxu0 0.0
        %4709 = vmatpush2.msra.mxu0 0.0
        %4710 = vmatprep.subr.mxu0 0.0
        %4711 = vmatpush2.msra.mxu0 0.0
        %4712 = vmatprep.subr.mxu0 0.0
        %4713 = vmatpush2.msra.mxu0 0.0
        %4714 = vmatprep.subr.mxu0 0.0
        %4715 = vmatpush2.msra.mxu0 0.0
        %4716 = vmatprep.subr.mxu0 0.0
        %4717 = vmatpush2.msra.mxu0 0.0
        %4718 = vmatprep.subr.mxu0 0.0
        %4719 = vmatpush2.msra.mxu0 0.0
        %4720 = vmatprep.subr.mxu0 0.0
        %4721 = vmatpush2.msra.mxu0 0.0
        %4722 = vmatprep.subr.mxu0 0.0
        %4723 = vmatpush2.msra.mxu0 0.0
        %4724 = vmatprep.subr.mxu0 0.0
        %4725 = vmatpush2.msra.mxu0 0.0
        %4726 = vmatprep.subr.mxu0 0.0
        %4727 = vmatpush2.msra.mxu0 0.0
        %4728 = vmatprep.subr.mxu0 0.0
        %4729 = vmatpush2.msra.mxu0 0.0
        %4730 = vmatprep.subr.mxu0 0.0
        %4731 = vmatpush2.msra.mxu0 0.0
        %4732 = vmatprep.subr.mxu0 0.0
        %4733 = vmatpush2.msra.mxu0 0.0
        %4734 = vmatprep.subr.mxu0 0.0
        %4735 = vmatpush2.msra.mxu0 0.0
        %4736 = vmatprep.subr.mxu0 0.0
        %4737 = vmatpush2.msra.mxu0 0.0
        %4738 = vmatprep.mubr.f32.mxu0 0.0
        %4739 = vmatmul.mubr.f32.gmra.mxu0 %v4672
        %v4740 = vpop.f32.mrf.mxu0
        %v4741 = vadd.f32 0.0, %v4740
        %v4742 = vpop.f32.mrf.mxu0
        %v4743 = vadd.f32 0.0, %v4742
        %4744 = vdwg.mxu0
        %v4746 = vrot.slane %v4741, 6
        %v4748 = vadd.f32 %v4560, %v4746
        %v4749 = vxor.u32 %v4748, 2147483648
        %v4750 = vmul.f32 %v4749, 1.442695
        %v4751 = vpow.pop %v4750
        %v4752 = vadd.f32 %v4751, 1.0
        %v4753 = vrcp.pop %v4752
        %v4754 = vmul.f32 1.0, %v4753
        %v4755 = vadd.f32 %v4743, %v4655
        %v4757 = vrot.slane %v4755, 6
        %v4759 = vmul.f32 %v4754, %v4757
        %v4760 = vadd.f32 %v4562, %v4759
        %v4761 = vtanh.pop %v4760
        %v4762 = vsub.f32 1.0, %v4754
        %4764 = vrot.lane.b32.xlu0 %v4761, 64
        %v4765 = vpop.permute.xlu0 %4764
        %v4767 = vmul.f32 %v4762, %v4765
        %v4768 = vrot.slane %v4668, 6
        %v4770 = vmul.f32 %v4754, %v4768
        %v4771 = vadd.f32 %v4767, %v4770
        %v4773 = vrot.slane %v4771, 2
        %4774 = vrot.lane.b32.xlu0 %v4773, 64
        %v4775 = vpop.permute.xlu0 %4774
        %v4776 = vsel %vm4570, %v4775, 0
        %4778 = vmatprep.subr.mxu0 0.0
        %4779 = vmatpush1.msra.mxu0 0.0
        %4780 = vmatprep.subr.mxu0 0.0
        %4781 = vmatpush1.msra.mxu0 0.0
        %4782 = vmatprep.subr.mxu0 0.0
        %4783 = vmatpush1.msra.mxu0 0.0
        %4784 = vmatprep.subr.mxu0 0.0
        %4785 = vmatpush1.msra.mxu0 0.0
        %4786 = vmatprep.subr.mxu0 0.0
        %4787 = vmatpush1.msra.mxu0 0.0
        %4788 = vmatprep.subr.mxu0 0.0
        %4789 = vmatpush1.msra.mxu0 0.0
        %4790 = vmatprep.subr.mxu0 0.0
        %4791 = vmatpush1.msra.mxu0 0.0
        %4792 = vmatprep.subr.mxu0 0.0
        %4793 = vmatpush1.msra.mxu0 0.0
        %4794 = vmatprep.subr.mxu0 %v4472
        %4795 = vmatpush1.msra.mxu0 %v4471
        %4796 = vmatprep.subr.mxu0 %v4470
        %4797 = vmatpush1.msra.mxu0 %v4469
        %4798 = vmatprep.subr.mxu0 %v4468
        %4799 = vmatpush1.msra.mxu0 %v4467
        %4800 = vmatprep.subr.mxu0 %v4466
        %4801 = vmatpush1.msra.mxu0 %v4465
        %4802 = vmatprep.subr.mxu0 %v4464
        %4803 = vmatpush1.msra.mxu0 %v4463
        %4804 = vmatprep.subr.mxu0 %v4462
        %4805 = vmatpush1.msra.mxu0 %v4461
        %4806 = vmatprep.subr.mxu0 %v4460
        %4807 = vmatpush1.msra.mxu0 %v4459
        %4808 = vmatprep.subr.mxu0 %v4458
        %4809 = vmatpush1.msra.mxu0 %v4457
        %4810 = vmatprep.subr.mxu0 0.0
        %4811 = vmatpush2.msra.mxu0 0.0
        %4812 = vmatprep.subr.mxu0 0.0
        %4813 = vmatpush2.msra.mxu0 0.0
        %4814 = vmatprep.subr.mxu0 0.0
        %4815 = vmatpush2.msra.mxu0 0.0
        %4816 = vmatprep.subr.mxu0 0.0
        %4817 = vmatpush2.msra.mxu0 0.0
        %4818 = vmatprep.subr.mxu0 0.0
        %4819 = vmatpush2.msra.mxu0 0.0
        %4820 = vmatprep.subr.mxu0 0.0
        %4821 = vmatpush2.msra.mxu0 0.0
        %4822 = vmatprep.subr.mxu0 0.0
        %4823 = vmatpush2.msra.mxu0 0.0
        %4824 = vmatprep.subr.mxu0 0.0
        %4825 = vmatpush2.msra.mxu0 0.0
        %4826 = vmatprep.subr.mxu0 0.0
        %4827 = vmatpush2.msra.mxu0 0.0
        %4828 = vmatprep.subr.mxu0 0.0
        %4829 = vmatpush2.msra.mxu0 0.0
        %4830 = vmatprep.subr.mxu0 0.0
        %4831 = vmatpush2.msra.mxu0 0.0
        %4832 = vmatprep.subr.mxu0 0.0
        %4833 = vmatpush2.msra.mxu0 0.0
        %4834 = vmatprep.subr.mxu0 0.0
        %4835 = vmatpush2.msra.mxu0 0.0
        %4836 = vmatprep.subr.mxu0 0.0
        %4837 = vmatpush2.msra.mxu0 0.0
        %4838 = vmatprep.subr.mxu0 0.0
        %4839 = vmatpush2.msra.mxu0 0.0
        %4840 = vmatprep.subr.mxu0 0.0
        %4841 = vmatpush2.msra.mxu0 0.0
        %4842 = vmatprep.mubr.f32.mxu0 0.0
        %4843 = vmatmul.mubr.f32.gmra.mxu0 %v4776
        %v4844 = vpop.f32.mrf.mxu0
        %v4845 = vadd.f32 0.0, %v4844
        %v4846 = vpop.f32.mrf.mxu0
        %v4847 = vadd.f32 0.0, %v4846
        %4848 = vdwg.mxu0
        %v4850 = vrot.slane %v4845, 4
        %v4852 = vadd.f32 %v4560, %v4850
        %v4853 = vxor.u32 %v4852, 2147483648
        %v4854 = vmul.f32 %v4853, 1.442695
        %v4855 = vpow.pop %v4854
        %v4856 = vadd.f32 %v4855, 1.0
        %v4857 = vrcp.pop %v4856
        %v4858 = vmul.f32 1.0, %v4857
        %v4859 = vadd.f32 %v4847, %v4655
        %v4861 = vrot.slane %v4859, 4
        %v4863 = vmul.f32 %v4858, %v4861
        %v4864 = vadd.f32 %v4562, %v4863
        %v4865 = vtanh.pop %v4864
        %v4866 = vsub.f32 1.0, %v4858
        %4868 = vrot.lane.b32.xlu0 %v4865, 64
        %v4869 = vpop.permute.xlu0 %4868
        %v4871 = vmul.f32 %v4866, %v4869
        %v4872 = vrot.slane %v4771, 6
        %v4874 = vmul.f32 %v4858, %v4872
        %v4875 = vadd.f32 %v4871, %v4874
        %v4877 = vrot.slane %v4875, 4
        %4878 = vrot.lane.b32.xlu0 %v4877, 64
        %v4879 = vpop.permute.xlu0 %4878
        %v4880 = vsel %vm4570, %v4879, 0
        %4882 = vmatprep.subr.mxu0 0.0
        %4883 = vmatpush1.msra.mxu0 0.0
        %4884 = vmatprep.subr.mxu0 0.0
        %4885 = vmatpush1.msra.mxu0 0.0
        %4886 = vmatprep.subr.mxu0 0.0
        %4887 = vmatpush1.msra.mxu0 0.0
        %4888 = vmatprep.subr.mxu0 0.0
        %4889 = vmatpush1.msra.mxu0 0.0
        %4890 = vmatprep.subr.mxu0 0.0
        %4891 = vmatpush1.msra.mxu0 0.0
        %4892 = vmatprep.subr.mxu0 0.0
        %4893 = vmatpush1.msra.mxu0 0.0
        %4894 = vmatprep.subr.mxu0 0.0
        %4895 = vmatpush1.msra.mxu0 0.0
        %4896 = vmatprep.subr.mxu0 0.0
        %4897 = vmatpush1.msra.mxu0 0.0
        %4898 = vmatprep.subr.mxu0 %v4472
        %4899 = vmatpush1.msra.mxu0 %v4471
        %4900 = vmatprep.subr.mxu0 %v4470
        %4901 = vmatpush1.msra.mxu0 %v4469
        %4902 = vmatprep.subr.mxu0 %v4468
        %4903 = vmatpush1.msra.mxu0 %v4467
        %4904 = vmatprep.subr.mxu0 %v4466
        %4905 = vmatpush1.msra.mxu0 %v4465
        %4906 = vmatprep.subr.mxu0 %v4464
        %4907 = vmatpush1.msra.mxu0 %v4463
        %4908 = vmatprep.subr.mxu0 %v4462
        %4909 = vmatpush1.msra.mxu0 %v4461
        %4910 = vmatprep.subr.mxu0 %v4460
        %4911 = vmatpush1.msra.mxu0 %v4459
        %4912 = vmatprep.subr.mxu0 %v4458
        %4913 = vmatpush1.msra.mxu0 %v4457
        %4914 = vmatprep.subr.mxu0 0.0
        %4915 = vmatpush2.msra.mxu0 0.0
        %4916 = vmatprep.subr.mxu0 0.0
        %4917 = vmatpush2.msra.mxu0 0.0
        %4918 = vmatprep.subr.mxu0 0.0
        %4919 = vmatpush2.msra.mxu0 0.0
        %4920 = vmatprep.subr.mxu0 0.0
        %4921 = vmatpush2.msra.mxu0 0.0
        %4922 = vmatprep.subr.mxu0 0.0
        %4923 = vmatpush2.msra.mxu0 0.0
        %4924 = vmatprep.subr.mxu0 0.0
        %4925 = vmatpush2.msra.mxu0 0.0
        %4926 = vmatprep.subr.mxu0 0.0
        %4927 = vmatpush2.msra.mxu0 0.0
        %4928 = vmatprep.subr.mxu0 0.0
        %4929 = vmatpush2.msra.mxu0 0.0
        %4930 = vmatprep.subr.mxu0 0.0
        %4931 = vmatpush2.msra.mxu0 0.0
        %4932 = vmatprep.subr.mxu0 0.0
        %4933 = vmatpush2.msra.mxu0 0.0
        %4934 = vmatprep.subr.mxu0 0.0
        %4935 = vmatpush2.msra.mxu0 0.0
        %4936 = vmatprep.subr.mxu0 0.0
        %4937 = vmatpush2.msra.mxu0 0.0
        %4938 = vmatprep.subr.mxu0 0.0
        %4939 = vmatpush2.msra.mxu0 0.0
        %4940 = vmatprep.subr.mxu0 0.0
        %4941 = vmatpush2.msra.mxu0 0.0
        %4942 = vmatprep.subr.mxu0 0.0
        %4943 = vmatpush2.msra.mxu0 0.0
        %4944 = vmatprep.subr.mxu0 0.0
        %4945 = vmatpush2.msra.mxu0 0.0
        %4946 = vmatprep.mubr.f32.mxu0 0.0
        %4947 = vmatmul.mubr.f32.gmra.mxu0 %v4880
        %v4948 = vpop.f32.mrf.mxu0
        %v4949 = vadd.f32 0.0, %v4948
        %v4950 = vpop.f32.mrf.mxu0
        %v4951 = vadd.f32 0.0, %v4950
        %4952 = vdwg.mxu0
        %v4954 = vrot.slane %v4949, 2
        %v4956 = vadd.f32 %v4560, %v4954
        %v4957 = vxor.u32 %v4956, 2147483648
        %v4958 = vmul.f32 %v4957, 1.442695
        %v4959 = vpow.pop %v4958
        %v4960 = vadd.f32 %v4959, 1.0
        %v4961 = vrcp.pop %v4960
        %v4962 = vmul.f32 1.0, %v4961
        %v4963 = vadd.f32 %v4951, %v4655
        %v4965 = vrot.slane %v4963, 2
        %v4967 = vmul.f32 %v4962, %v4965
        %v4968 = vadd.f32 %v4562, %v4967
        %v4969 = vtanh.pop %v4968
        %v4970 = vsub.f32 1.0, %v4962
        %4972 = vrot.lane.b32.xlu0 %v4969, 64
        %v4973 = vpop.permute.xlu0 %4972
        %v4975 = vmul.f32 %v4970, %v4973
        %v4976 = vrot.slane %v4875, 6
        %v4978 = vmul.f32 %v4962, %v4976
        %v4979 = vadd.f32 %v4975, %v4978
        %v4981 = vrot.slane %v4979, 6
        %4982 = vrot.lane.b32.xlu0 %v4981, 64
        %v4983 = vpop.permute.xlu0 %4982
        %v4984 = vsel %vm4570, %v4983, 0
        %4986 = vmatprep.subr.mxu0 0.0
        %4987 = vmatpush1.msra.mxu0 0.0
        %4988 = vmatprep.subr.mxu0 0.0
        %4989 = vmatpush1.msra.mxu0 0.0
        %4990 = vmatprep.subr.mxu0 0.0
        %4991 = vmatpush1.msra.mxu0 0.0
        %4992 = vmatprep.subr.mxu0 0.0
        %4993 = vmatpush1.msra.mxu0 0.0
        %4994 = vmatprep.subr.mxu0 0.0
        %4995 = vmatpush1.msra.mxu0 0.0
        %4996 = vmatprep.subr.mxu0 0.0
        %4997 = vmatpush1.msra.mxu0 0.0
        %4998 = vmatprep.subr.mxu0 0.0
        %4999 = vmatpush1.msra.mxu0 0.0
        %5000 = vmatprep.subr.mxu0 0.0
        %5001 = vmatpush1.msra.mxu0 0.0
        %5002 = vmatprep.subr.mxu0 %v4472
        %5003 = vmatpush1.msra.mxu0 %v4471
        %5004 = vmatprep.subr.mxu0 %v4470
        %5005 = vmatpush1.msra.mxu0 %v4469
        %5006 = vmatprep.subr.mxu0 %v4468
        %5007 = vmatpush1.msra.mxu0 %v4467
        %5008 = vmatprep.subr.mxu0 %v4466
        %5009 = vmatpush1.msra.mxu0 %v4465
        %5010 = vmatprep.subr.mxu0 %v4464
        %5011 = vmatpush1.msra.mxu0 %v4463
        %5012 = vmatprep.subr.mxu0 %v4462
        %5013 = vmatpush1.msra.mxu0 %v4461
        %5014 = vmatprep.subr.mxu0 %v4460
        %5015 = vmatpush1.msra.mxu0 %v4459
        %5016 = vmatprep.subr.mxu0 %v4458
        %5017 = vmatpush1.msra.mxu0 %v4457
        %5018 = vmatprep.subr.mxu0 0.0
        %5019 = vmatpush2.msra.mxu0 0.0
        %5020 = vmatprep.subr.mxu0 0.0
        %5021 = vmatpush2.msra.mxu0 0.0
        %5022 = vmatprep.subr.mxu0 0.0
        %5023 = vmatpush2.msra.mxu0 0.0
        %5024 = vmatprep.subr.mxu0 0.0
        %5025 = vmatpush2.msra.mxu0 0.0
        %5026 = vmatprep.subr.mxu0 0.0
        %5027 = vmatpush2.msra.mxu0 0.0
        %5028 = vmatprep.subr.mxu0 0.0
        %5029 = vmatpush2.msra.mxu0 0.0
        %5030 = vmatprep.subr.mxu0 0.0
        %5031 = vmatpush2.msra.mxu0 0.0
        %5032 = vmatprep.subr.mxu0 0.0
        %5033 = vmatpush2.msra.mxu0 0.0
        %5034 = vmatprep.subr.mxu0 0.0
        %5035 = vmatpush2.msra.mxu0 0.0
        %5036 = vmatprep.subr.mxu0 0.0
        %5037 = vmatpush2.msra.mxu0 0.0
        %5038 = vmatprep.subr.mxu0 0.0
        %5039 = vmatpush2.msra.mxu0 0.0
        %5040 = vmatprep.subr.mxu0 0.0
        %5041 = vmatpush2.msra.mxu0 0.0
        %5042 = vmatprep.subr.mxu0 0.0
        %5043 = vmatpush2.msra.mxu0 0.0
        %5044 = vmatprep.subr.mxu0 0.0
        %5045 = vmatpush2.msra.mxu0 0.0
        %5046 = vmatprep.subr.mxu0 0.0
        %5047 = vmatpush2.msra.mxu0 0.0
        %5048 = vmatprep.subr.mxu0 0.0
        %5049 = vmatpush2.msra.mxu0 0.0
        %5050 = vmatprep.mubr.f32.mxu0 0.0
        %5051 = vmatmul.mubr.f32.gmra.mxu0 %v4984
        %v5052 = vpop.f32.mrf.mxu0
        %v5053 = vadd.f32 0.0, %v5052
        %v5054 = vpop.f32.mrf.mxu0
        %v5055 = vadd.f32 0.0, %v5054
        %5056 = vdwg.mxu0
        %v5057 = vadd.f32 %v4566, %v5053
        %v5058 = vxor.u32 %v5057, 2147483648
        %v5059 = vmul.f32 %v5058, 1.442695
        %v5060 = vpow.pop %v5059
        %v5061 = vadd.f32 %v5060, 1.0
        %v5062 = vrcp.pop %v5061
        %v5063 = vmul.f32 1.0, %v5062
        %v5064 = vadd.f32 %v5055, %v4655
        %v5065 = vmul.f32 %v5063, %v5064
        %v5066 = vadd.f32 %v4568, %v5065
        %v5067 = vtanh.pop %v5066
        %v5068 = vsub.f32 1.0, %v5063
        %5070 = vrot.lane.b32.xlu0 %v5067, 64
        %v5071 = vpop.permute.xlu0 %5070
        %v5073 = vmul.f32 %v5068, %v5071
        %v5075 = vmul.f32 %v5063, %v4981
        %v5076 = vadd.f32 %v5073, %v5075
        %5078 = vrot.lane.b32.xlu0 %v5076, 64
        %v5079 = vpop.permute.xlu0 %5078
        %v5080 = vsel %vm4570, %v5079, 0
        %5082 = vmatprep.subr.mxu0 0.0
        %5083 = vmatpush1.msra.mxu0 0.0
        %5084 = vmatprep.subr.mxu0 0.0
        %5085 = vmatpush1.msra.mxu0 0.0
        %5086 = vmatprep.subr.mxu0 0.0
        %5087 = vmatpush1.msra.mxu0 0.0
        %5088 = vmatprep.subr.mxu0 0.0
        %5089 = vmatpush1.msra.mxu0 0.0
        %5090 = vmatprep.subr.mxu0 0.0
        %5091 = vmatpush1.msra.mxu0 0.0
        %5092 = vmatprep.subr.mxu0 0.0
        %5093 = vmatpush1.msra.mxu0 0.0
        %5094 = vmatprep.subr.mxu0 0.0
        %5095 = vmatpush1.msra.mxu0 0.0
        %5096 = vmatprep.subr.mxu0 0.0
        %5097 = vmatpush1.msra.mxu0 0.0
        %5098 = vmatprep.subr.mxu0 %v4472
        %5099 = vmatpush1.msra.mxu0 %v4471
        %5100 = vmatprep.subr.mxu0 %v4470
        %5101 = vmatpush1.msra.mxu0 %v4469
        %5102 = vmatprep.subr.mxu0 %v4468
        %5103 = vmatpush1.msra.mxu0 %v4467
        %5104 = vmatprep.subr.mxu0 %v4466
        %5105 = vmatpush1.msra.mxu0 %v4465
        %5106 = vmatprep.subr.mxu0 %v4464
        %5107 = vmatpush1.msra.mxu0 %v4463
        %5108 = vmatprep.subr.mxu0 %v4462
        %5109 = vmatpush1.msra.mxu0 %v4461
        %5110 = vmatprep.subr.mxu0 %v4460
        %5111 = vmatpush1.msra.mxu0 %v4459
        %5112 = vmatprep.subr.mxu0 %v4458
        %5113 = vmatpush1.msra.mxu0 %v4457
        %5114 = vmatprep.subr.mxu0 0.0
        %5115 = vmatpush2.msra.mxu0 0.0
        %5116 = vmatprep.subr.mxu0 0.0
        %5117 = vmatpush2.msra.mxu0 0.0
        %5118 = vmatprep.subr.mxu0 0.0
        %5119 = vmatpush2.msra.mxu0 0.0
        %5120 = vmatprep.subr.mxu0 0.0
        %5121 = vmatpush2.msra.mxu0 0.0
        %5122 = vmatprep.subr.mxu0 0.0
        %5123 = vmatpush2.msra.mxu0 0.0
        %5124 = vmatprep.subr.mxu0 0.0
        %5125 = vmatpush2.msra.mxu0 0.0
        %5126 = vmatprep.subr.mxu0 0.0
        %5127 = vmatpush2.msra.mxu0 0.0
        %5128 = vmatprep.subr.mxu0 0.0
        %5129 = vmatpush2.msra.mxu0 0.0
        %5130 = vmatprep.subr.mxu0 0.0
        %5131 = vmatpush2.msra.mxu0 0.0
        %5132 = vmatprep.subr.mxu0 0.0
        %5133 = vmatpush2.msra.mxu0 0.0
        %5134 = vmatprep.subr.mxu0 0.0
        %5135 = vmatpush2.msra.mxu0 0.0
        %5136 = vmatprep.subr.mxu0 0.0
        %5137 = vmatpush2.msra.mxu0 0.0
        %5138 = vmatprep.subr.mxu0 0.0
        %5139 = vmatpush2.msra.mxu0 0.0
        %5140 = vmatprep.subr.mxu0 0.0
        %5141 = vmatpush2.msra.mxu0 0.0
        %5142 = vmatprep.subr.mxu0 0.0
        %5143 = vmatpush2.msra.mxu0 0.0
        %5144 = vmatprep.subr.mxu0 0.0
        %5145 = vmatpush2.msra.mxu0 0.0
        %5146 = vmatprep.mubr.f32.mxu0 0.0
        %5147 = vmatmul.mubr.f32.gmra.mxu0 %v5080
        %v5148 = vpop.f32.mrf.mxu0
        %v5149 = vadd.f32 0.0, %v5148
        %v5150 = vpop.f32.mrf.mxu0
        %v5151 = vadd.f32 0.0, %v5150
        %5152 = vdwg.mxu0
        %v5154 = vrot.slane %v5149, 6
        %v5156 = vadd.f32 %v4566, %v5154
        %v5157 = vxor.u32 %v5156, 2147483648
        %v5158 = vmul.f32 %v5157, 1.442695
        %v5159 = vpow.pop %v5158
        %v5160 = vadd.f32 %v5159, 1.0
        %v5161 = vrcp.pop %v5160
        %v5162 = vmul.f32 1.0, %v5161
        %v5163 = vadd.f32 %v5151, %v4655
        %v5165 = vrot.slane %v5163, 6
        %v5167 = vmul.f32 %v5162, %v5165
        %v5168 = vadd.f32 %v4568, %v5167
        %v5169 = vtanh.pop %v5168
        %v5170 = vsub.f32 1.0, %v5162
        %5172 = vrot.lane.b32.xlu0 %v5169, 64
        %v5173 = vpop.permute.xlu0 %5172
        %v5175 = vmul.f32 %v5170, %v5173
        %v5176 = vrot.slane %v5076, 6
        %v5178 = vmul.f32 %v5162, %v5176
        %v5179 = vadd.f32 %v5175, %v5178
        %v5181 = vrot.slane %v5179, 2
        %5182 = vrot.lane.b32.xlu0 %v5181, 64
        %v5183 = vpop.permute.xlu0 %5182
        %v5184 = vsel %vm4570, %v5183, 0
        %5186 = vmatprep.subr.mxu0 0.0
        %5187 = vmatpush1.msra.mxu0 0.0
        %5188 = vmatprep.subr.mxu0 0.0
        %5189 = vmatpush1.msra.mxu0 0.0
        %5190 = vmatprep.subr.mxu0 0.0
        %5191 = vmatpush1.msra.mxu0 0.0
        %5192 = vmatprep.subr.mxu0 0.0
        %5193 = vmatpush1.msra.mxu0 0.0
        %5194 = vmatprep.subr.mxu0 0.0
        %5195 = vmatpush1.msra.mxu0 0.0
        %5196 = vmatprep.subr.mxu0 0.0
        %5197 = vmatpush1.msra.mxu0 0.0
        %5198 = vmatprep.subr.mxu0 0.0
        %5199 = vmatpush1.msra.mxu0 0.0
        %5200 = vmatprep.subr.mxu0 0.0
        %5201 = vmatpush1.msra.mxu0 0.0
        %5202 = vmatprep.subr.mxu0 %v4472
        %5203 = vmatpush1.msra.mxu0 %v4471
        %5204 = vmatprep.subr.mxu0 %v4470
        %5205 = vmatpush1.msra.mxu0 %v4469
        %5206 = vmatprep.subr.mxu0 %v4468
        %5207 = vmatpush1.msra.mxu0 %v4467
        %5208 = vmatprep.subr.mxu0 %v4466
        %5209 = vmatpush1.msra.mxu0 %v4465
        %5210 = vmatprep.subr.mxu0 %v4464
        %5211 = vmatpush1.msra.mxu0 %v4463
        %5212 = vmatprep.subr.mxu0 %v4462
        %5213 = vmatpush1.msra.mxu0 %v4461
        %5214 = vmatprep.subr.mxu0 %v4460
        %5215 = vmatpush1.msra.mxu0 %v4459
        %5216 = vmatprep.subr.mxu0 %v4458
        %5217 = vmatpush1.msra.mxu0 %v4457
        %5218 = vmatprep.subr.mxu0 0.0
        %5219 = vmatpush2.msra.mxu0 0.0
        %5220 = vmatprep.subr.mxu0 0.0
        %5221 = vmatpush2.msra.mxu0 0.0
        %5222 = vmatprep.subr.mxu0 0.0
        %5223 = vmatpush2.msra.mxu0 0.0
        %5224 = vmatprep.subr.mxu0 0.0
        %5225 = vmatpush2.msra.mxu0 0.0
        %5226 = vmatprep.subr.mxu0 0.0
        %5227 = vmatpush2.msra.mxu0 0.0
        %5228 = vmatprep.subr.mxu0 0.0
        %5229 = vmatpush2.msra.mxu0 0.0
        %5230 = vmatprep.subr.mxu0 0.0
        %5231 = vmatpush2.msra.mxu0 0.0
        %5232 = vmatprep.subr.mxu0 0.0
        %5233 = vmatpush2.msra.mxu0 0.0
        %5234 = vmatprep.subr.mxu0 0.0
        %5235 = vmatpush2.msra.mxu0 0.0
        %5236 = vmatprep.subr.mxu0 0.0
        %5237 = vmatpush2.msra.mxu0 0.0
        %5238 = vmatprep.subr.mxu0 0.0
        %5239 = vmatpush2.msra.mxu0 0.0
        %5240 = vmatprep.subr.mxu0 0.0
        %5241 = vmatpush2.msra.mxu0 0.0
        %5242 = vmatprep.subr.mxu0 0.0
        %5243 = vmatpush2.msra.mxu0 0.0
        %5244 = vmatprep.subr.mxu0 0.0
        %5245 = vmatpush2.msra.mxu0 0.0
        %5246 = vmatprep.subr.mxu0 0.0
        %5247 = vmatpush2.msra.mxu0 0.0
        %5248 = vmatprep.subr.mxu0 0.0
        %5249 = vmatpush2.msra.mxu0 0.0
        %5250 = vmatprep.mubr.f32.mxu0 0.0
        %5251 = vmatmul.mubr.f32.gmra.mxu0 %v5184
        %v5252 = vpop.f32.mrf.mxu0
        %v5253 = vadd.f32 0.0, %v5252
        %v5254 = vpop.f32.mrf.mxu0
        %v5255 = vadd.f32 0.0, %v5254
        %5256 = vdwg.mxu0
        %v5258 = vrot.slane %v5253, 4
        %v5260 = vadd.f32 %v4566, %v5258
        %v5261 = vxor.u32 %v5260, 2147483648
        %v5262 = vmul.f32 %v5261, 1.442695
        %v5263 = vpow.pop %v5262
        %v5264 = vadd.f32 %v5263, 1.0
        %v5265 = vrcp.pop %v5264
        %v5266 = vmul.f32 1.0, %v5265
        %v5267 = vadd.f32 %v5255, %v4655
        %v5269 = vrot.slane %v5267, 4
        %v5271 = vmul.f32 %v5266, %v5269
        %v5272 = vadd.f32 %v4568, %v5271
        %v5273 = vtanh.pop %v5272
        %v5274 = vsub.f32 1.0, %v5266
        %5276 = vrot.lane.b32.xlu0 %v5273, 64
        %v5277 = vpop.permute.xlu0 %5276
        %v5279 = vmul.f32 %v5274, %v5277
        %v5280 = vrot.slane %v5179, 6
        %v5282 = vmul.f32 %v5266, %v5280
        %v5283 = vadd.f32 %v5279, %v5282
        %v5285 = vrot.slane %v5283, 4
        %5286 = vrot.lane.b32.xlu0 %v5285, 64
        %v5287 = vpop.permute.xlu0 %5286
        %v5288 = vsel %vm4570, %v5287, 0
        %5290 = vmatprep.subr.mxu0 0.0
        %5291 = vmatpush1.msra.mxu0 0.0
        %5292 = vmatprep.subr.mxu0 0.0
        %5293 = vmatpush1.msra.mxu0 0.0
        %5294 = vmatprep.subr.mxu0 0.0
        %5295 = vmatpush1.msra.mxu0 0.0
        %5296 = vmatprep.subr.mxu0 0.0
        %5297 = vmatpush1.msra.mxu0 0.0
        %5298 = vmatprep.subr.mxu0 0.0
        %5299 = vmatpush1.msra.mxu0 0.0
        %5300 = vmatprep.subr.mxu0 0.0
        %5301 = vmatpush1.msra.mxu0 0.0
        %5302 = vmatprep.subr.mxu0 0.0
        %5303 = vmatpush1.msra.mxu0 0.0
        %5304 = vmatprep.subr.mxu0 0.0
        %5305 = vmatpush1.msra.mxu0 0.0
        %5306 = vmatprep.subr.mxu0 %v4472
        %5307 = vmatpush1.msra.mxu0 %v4471
        %5308 = vmatprep.subr.mxu0 %v4470
        %5309 = vmatpush1.msra.mxu0 %v4469
        %5310 = vmatprep.subr.mxu0 %v4468
        %5311 = vmatpush1.msra.mxu0 %v4467
        %5312 = vmatprep.subr.mxu0 %v4466
        %5313 = vmatpush1.msra.mxu0 %v4465
        %5314 = vmatprep.subr.mxu0 %v4464
        %5315 = vmatpush1.msra.mxu0 %v4463
        %5316 = vmatprep.subr.mxu0 %v4462
        %5317 = vmatpush1.msra.mxu0 %v4461
        %5318 = vmatprep.subr.mxu0 %v4460
        %5319 = vmatpush1.msra.mxu0 %v4459
        %5320 = vmatprep.subr.mxu0 %v4458
        %5321 = vmatpush1.msra.mxu0 %v4457
        %5322 = vmatprep.subr.mxu0 0.0
        %5323 = vmatpush2.msra.mxu0 0.0
        %5324 = vmatprep.subr.mxu0 0.0
        %5325 = vmatpush2.msra.mxu0 0.0
        %5326 = vmatprep.subr.mxu0 0.0
        %5327 = vmatpush2.msra.mxu0 0.0
        %5328 = vmatprep.subr.mxu0 0.0
        %5329 = vmatpush2.msra.mxu0 0.0
        %5330 = vmatprep.subr.mxu0 0.0
        %5331 = vmatpush2.msra.mxu0 0.0
        %5332 = vmatprep.subr.mxu0 0.0
        %5333 = vmatpush2.msra.mxu0 0.0
        %5334 = vmatprep.subr.mxu0 0.0
        %5335 = vmatpush2.msra.mxu0 0.0
        %5336 = vmatprep.subr.mxu0 0.0
        %5337 = vmatpush2.msra.mxu0 0.0
        %5338 = vmatprep.subr.mxu0 0.0
        %5339 = vmatpush2.msra.mxu0 0.0
        %5340 = vmatprep.subr.mxu0 0.0
        %5341 = vmatpush2.msra.mxu0 0.0
        %5342 = vmatprep.subr.mxu0 0.0
        %5343 = vmatpush2.msra.mxu0 0.0
        %5344 = vmatprep.subr.mxu0 0.0
        %5345 = vmatpush2.msra.mxu0 0.0
        %5346 = vmatprep.subr.mxu0 0.0
        %5347 = vmatpush2.msra.mxu0 0.0
        %5348 = vmatprep.subr.mxu0 0.0
        %5349 = vmatpush2.msra.mxu0 0.0
        %5350 = vmatprep.subr.mxu0 0.0
        %5351 = vmatpush2.msra.mxu0 0.0
        %5352 = vmatprep.subr.mxu0 0.0
        %5353 = vmatpush2.msra.mxu0 0.0
        %5354 = vmatprep.mubr.f32.mxu0 0.0
        %5355 = vmatmul.mubr.f32.gmra.mxu0 %v5288
        %v5356 = vpop.f32.mrf.mxu0
        %v5357 = vadd.f32 0.0, %v5356
        %v5358 = vpop.f32.mrf.mxu0
        %v5359 = vadd.f32 0.0, %v5358
        %5360 = vdwg.mxu0
        %v5362 = vrot.slane %v5357, 2
        %v5364 = vadd.f32 %v4566, %v5362
        %v5365 = vxor.u32 %v5364, 2147483648
        %v5366 = vmul.f32 %v5365, 1.442695
        %v5367 = vpow.pop %v5366
        %v5368 = vadd.f32 %v5367, 1.0
        %v5369 = vrcp.pop %v5368
        %v5370 = vmul.f32 1.0, %v5369
        %v5371 = vadd.f32 %v5359, %v4655
        %v5373 = vrot.slane %v5371, 2
        %v5375 = vmul.f32 %v5370, %v5373
        %v5376 = vadd.f32 %v4568, %v5375
        %v5377 = vtanh.pop %v5376
        %v5378 = vsub.f32 1.0, %v5370
        %5380 = vrot.lane.b32.xlu0 %v5377, 64
        %v5381 = vpop.permute.xlu0 %5380
        %v5383 = vmul.f32 %v5378, %v5381
        %v5384 = vrot.slane %v5283, 6
        %v5386 = vmul.f32 %v5370, %v5384
        %v5387 = vadd.f32 %v5383, %v5386
        %s5388 = scalar_lea.vmem %s624, 64 [#allocation6]
        %v5389 = vld [vmem:[%s5388] sm:$0xff]
        %v5390 = vld [vmem:[%s5388 + $0x8] sm:$0xff]
        %v5391 = vld [vmem:[%s5388 + $0x10] sm:$0xff]
        %v5392 = vld [vmem:[%s5388 + $0x18] sm:$0xff]
        %v5393 = vld [vmem:[%s5388 + $0x20] sm:$0xff]
        %v5394 = vld [vmem:[%s5388 + $0x28] sm:$0xff]
        %v5395 = vld [vmem:[%s5388 + $0x30] sm:$0xff]
        %v5396 = vld [vmem:[%s5388 + $0x38] sm:$0xff]
        %s5397 = scalar_lea.vmem %s633, 128 [#allocation7]
        %v5398 = vld [vmem:[%s5397] sm:$0xff]
        %v5399 = vld [vmem:[%s5397 + $0x8] sm:$0xff]
        %v5400 = vld [vmem:[%s5397 + $0x10] sm:$0xff]
        %v5401 = vld [vmem:[%s5397 + $0x18] sm:$0xff]
        %v5402 = vld [vmem:[%s5397 + $0x20] sm:$0xff]
        %v5403 = vld [vmem:[%s5397 + $0x28] sm:$0xff]
        %v5404 = vld [vmem:[%s5397 + $0x30] sm:$0xff]
        %v5405 = vld [vmem:[%s5397 + $0x38] sm:$0xff]
        %v5406 = vld [vmem:[%s5397 + $0x40] sm:$0xff]
        %v5407 = vld [vmem:[%s5397 + $0x48] sm:$0xff]
        %v5408 = vld [vmem:[%s5397 + $0x50] sm:$0xff]
        %v5409 = vld [vmem:[%s5397 + $0x58] sm:$0xff]
        %v5410 = vld [vmem:[%s5397 + $0x60] sm:$0xff]
        %v5411 = vld [vmem:[%s5397 + $0x68] sm:$0xff]
        %v5412 = vld [vmem:[%s5397 + $0x70] sm:$0xff]
        %v5413 = vld [vmem:[%s5397 + $0x78] sm:$0xff]
        %s5414 = scalar_lea.vmem %s779, 2
        %v5415 = vld [vmem:[%s5414] sm:$0x3]
        %s5416 = scalar_lea.vmem %s783, 1
        %v5417 = vld [vmem:[%s5416] sm:$0x1]
        %v5419 = vlaneseq
        %v5420 = vshrl.u32 %v5419, 7
        %v5421 = vsub.s32 0, %v5420
        %v5422 = vrot.slane %v5415, %v5421
        %v5423 = vlaneseq
        %v5424 = vshrl.u32 %v5423, 7
        %v5425 = vsub.s32 1, %v5424
        %v5426 = vrot.slane %v5415, %v5425
        %v5429 = vrot.slane %v4434, 6
        %v5430 = vsel %vm4486, %v5429, 0
        %5432 = vmatprep.subr.mxu0 0.0
        %5433 = vmatpush1.msra.mxu0 0.0
        %5434 = vmatprep.subr.mxu0 0.0
        %5435 = vmatpush1.msra.mxu0 0.0
        %5436 = vmatprep.subr.mxu0 0.0
        %5437 = vmatpush1.msra.mxu0 0.0
        %5438 = vmatprep.subr.mxu0 0.0
        %5439 = vmatpush1.msra.mxu0 0.0
        %5440 = vmatprep.subr.mxu0 0.0
        %5441 = vmatpush1.msra.mxu0 0.0
        %5442 = vmatprep.subr.mxu0 0.0
        %5443 = vmatpush1.msra.mxu0 0.0
        %5444 = vmatprep.subr.mxu0 0.0
        %5445 = vmatpush1.msra.mxu0 0.0
        %5446 = vmatprep.subr.mxu0 0.0
        %5447 = vmatpush1.msra.mxu0 0.0
        %5448 = vmatprep.subr.mxu0 0.0
        %5449 = vmatpush1.msra.mxu0 0.0
        %5450 = vmatprep.subr.mxu0 0.0
        %5451 = vmatpush1.msra.mxu0 0.0
        %5452 = vmatprep.subr.mxu0 0.0
        %5453 = vmatpush1.msra.mxu0 0.0
        %5454 = vmatprep.subr.mxu0 0.0
        %5455 = vmatpush1.msra.mxu0 0.0
        %5456 = vmatprep.subr.mxu0 %v5396
        %5457 = vmatpush1.msra.mxu0 %v5395
        %5458 = vmatprep.subr.mxu0 %v5394
        %5459 = vmatpush1.msra.mxu0 %v5393
        %5460 = vmatprep.subr.mxu0 %v5392
        %5461 = vmatpush1.msra.mxu0 %v5391
        %5462 = vmatprep.subr.mxu0 %v5390
        %5463 = vmatpush1.msra.mxu0 %v5389
        %5464 = vmatprep.subr.mxu0 0.0
        %5465 = vmatpush2.msra.mxu0 0.0
        %5466 = vmatprep.subr.mxu0 0.0
        %5467 = vmatpush2.msra.mxu0 0.0
        %5468 = vmatprep.subr.mxu0 0.0
        %5469 = vmatpush2.msra.mxu0 0.0
        %5470 = vmatprep.subr.mxu0 0.0
        %5471 = vmatpush2.msra.mxu0 0.0
        %5472 = vmatprep.subr.mxu0 0.0
        %5473 = vmatpush2.msra.mxu0 0.0
        %5474 = vmatprep.subr.mxu0 0.0
        %5475 = vmatpush2.msra.mxu0 0.0
        %5476 = vmatprep.subr.mxu0 0.0
        %5477 = vmatpush2.msra.mxu0 0.0
        %5478 = vmatprep.subr.mxu0 0.0
        %5479 = vmatpush2.msra.mxu0 0.0
        %5480 = vmatprep.subr.mxu0 0.0
        %5481 = vmatpush2.msra.mxu0 0.0
        %5482 = vmatprep.subr.mxu0 0.0
        %5483 = vmatpush2.msra.mxu0 0.0
        %5484 = vmatprep.subr.mxu0 0.0
        %5485 = vmatpush2.msra.mxu0 0.0
        %5486 = vmatprep.subr.mxu0 0.0
        %5487 = vmatpush2.msra.mxu0 0.0
        %5488 = vmatprep.subr.mxu0 0.0
        %5489 = vmatpush2.msra.mxu0 0.0
        %5490 = vmatprep.subr.mxu0 0.0
        %5491 = vmatpush2.msra.mxu0 0.0
        %5492 = vmatprep.subr.mxu0 0.0
        %5493 = vmatpush2.msra.mxu0 0.0
        %5494 = vmatprep.subr.mxu0 0.0
        %5495 = vmatpush2.msra.mxu0 0.0
        %5496 = vmatprep.mubr.f32.mxu0 0.0
        %5497 = vmatmul.mubr.f32.gmra.mxu0 %v5430
        %v5498 = vpop.f32.mrf.mxu0
        %v5499 = vadd.f32 %v5422, %v5498
        %v5500 = vpop.f32.mrf.mxu0
        %v5501 = vadd.f32 %v5426, %v5500
        %5502 = vdwg.mxu0
        %5503 = vmatprep.subr.mxu0 0.0
        %5504 = vmatpush1.msra.mxu0 0.0
        %5505 = vmatprep.subr.mxu0 0.0
        %5506 = vmatpush1.msra.mxu0 0.0
        %5507 = vmatprep.subr.mxu0 0.0
        %5508 = vmatpush1.msra.mxu0 0.0
        %5509 = vmatprep.subr.mxu0 0.0
        %5510 = vmatpush1.msra.mxu0 0.0
        %5511 = vmatprep.subr.mxu0 0.0
        %5512 = vmatpush1.msra.mxu0 0.0
        %5513 = vmatprep.subr.mxu0 0.0
        %5514 = vmatpush1.msra.mxu0 0.0
        %5515 = vmatprep.subr.mxu0 0.0
        %5516 = vmatpush1.msra.mxu0 0.0
        %5517 = vmatprep.subr.mxu0 0.0
        %5518 = vmatpush1.msra.mxu0 0.0
        %5519 = vmatprep.subr.mxu0 %v5413
        %5520 = vmatpush1.msra.mxu0 %v5412
        %5521 = vmatprep.subr.mxu0 %v5411
        %5522 = vmatpush1.msra.mxu0 %v5410
        %5523 = vmatprep.subr.mxu0 %v5409
        %5524 = vmatpush1.msra.mxu0 %v5408
        %5525 = vmatprep.subr.mxu0 %v5407
        %5526 = vmatpush1.msra.mxu0 %v5406
        %5527 = vmatprep.subr.mxu0 %v5405
        %5528 = vmatpush1.msra.mxu0 %v5404
        %5529 = vmatprep.subr.mxu0 %v5403
        %5530 = vmatpush1.msra.mxu0 %v5402
        %5531 = vmatprep.subr.mxu0 %v5401
        %5532 = vmatpush1.msra.mxu0 %v5400
        %5533 = vmatprep.subr.mxu0 %v5399
        %5534 = vmatpush1.msra.mxu0 %v5398
        %5535 = vmatprep.subr.mxu0 0.0
        %5536 = vmatpush2.msra.mxu0 0.0
        %5537 = vmatprep.subr.mxu0 0.0
        %5538 = vmatpush2.msra.mxu0 0.0
        %5539 = vmatprep.subr.mxu0 0.0
        %5540 = vmatpush2.msra.mxu0 0.0
        %5541 = vmatprep.subr.mxu0 0.0
        %5542 = vmatpush2.msra.mxu0 0.0
        %5543 = vmatprep.subr.mxu0 0.0
        %5544 = vmatpush2.msra.mxu0 0.0
        %5545 = vmatprep.subr.mxu0 0.0
        %5546 = vmatpush2.msra.mxu0 0.0
        %5547 = vmatprep.subr.mxu0 0.0
        %5548 = vmatpush2.msra.mxu0 0.0
        %5549 = vmatprep.subr.mxu0 0.0
        %5550 = vmatpush2.msra.mxu0 0.0
        %5551 = vmatprep.subr.mxu0 0.0
        %5552 = vmatpush2.msra.mxu0 0.0
        %5553 = vmatprep.subr.mxu0 0.0
        %5554 = vmatpush2.msra.mxu0 0.0
        %5555 = vmatprep.subr.mxu0 0.0
        %5556 = vmatpush2.msra.mxu0 0.0
        %5557 = vmatprep.subr.mxu0 0.0
        %5558 = vmatpush2.msra.mxu0 0.0
        %5559 = vmatprep.subr.mxu0 0.0
        %5560 = vmatpush2.msra.mxu0 0.0
        %5561 = vmatprep.subr.mxu0 0.0
        %5562 = vmatpush2.msra.mxu0 0.0
        %5563 = vmatprep.subr.mxu0 0.0
        %5564 = vmatpush2.msra.mxu0 0.0
        %5565 = vmatprep.subr.mxu0 0.0
        %5566 = vmatpush2.msra.mxu0 0.0
        %5567 = vmatprep.mubr.f32.mxu0 0.0
        %5568 = vmatmul.mubr.f32.gmra.mxu0 %v4571
        %v5569 = vpop.f32.mrf.mxu0
        %v5570 = vadd.f32 0.0, %v5569
        %v5571 = vpop.f32.mrf.mxu0
        %v5572 = vadd.f32 0.0, %v5571
        %5573 = vdwg.mxu0
        %v5574 = vadd.f32 %v5499, %v5570
        %v5575 = vxor.u32 %v5574, 2147483648
        %v5576 = vmul.f32 %v5575, 1.442695
        %v5577 = vpow.pop %v5576
        %v5578 = vadd.f32 %v5577, 1.0
        %v5579 = vrcp.pop %v5578
        %v5580 = vmul.f32 1.0, %v5579
        %v5582 = vlaneseq
        %v5583 = vshrl.u32 %v5582, 7
        %v5584 = vsub.s32 0, %v5583
        %v5585 = vrot.slane %v5417, %v5584
        %v5587 = vadd.f32 %v5572, %v5585
        %v5588 = vmul.f32 %v5580, %v5587
        %v5589 = vadd.f32 %v5501, %v5588
        %v5590 = vtanh.pop %v5589
        %v5591 = vsub.f32 1.0, %v5580
        %5593 = vrot.lane.b32.xlu0 %v5590, 64
        %v5594 = vpop.permute.xlu0 %5593
        %v5596 = vmul.f32 %v5591, %v5594
        %v5597 = vmul.f32 %v5580, 0.0
        %v5598 = vadd.f32 %v5596, %v5597
        %5600 = vrot.lane.b32.xlu0 %v5387, 64
        %v5601 = vpop.permute.xlu0 %5600
        %v5604 = vrot.slane %v5598, 2
        %v5606 = vsel %vm4570, %v5601, %v5604
        %v5607 = vld [vmem:[%s642] sm:$0xff]
        %v5608 = vld [vmem:[%s642 + $0x8] sm:$0xff]
        %v5609 = vld [vmem:[%s642 + $0x10] sm:$0xff]
        %v5610 = vld [vmem:[%s642 + $0x18] sm:$0xff]
        %v5611 = vld [vmem:[%s642 + $0x20] sm:$0xff]
        %v5612 = vld [vmem:[%s642 + $0x28] sm:$0xff]
        %v5613 = vld [vmem:[%s642 + $0x30] sm:$0xff]
        %v5614 = vld [vmem:[%s642 + $0x38] sm:$0xff]
        %v5615 = vld [vmem:[%s642 + $0x40] sm:$0xff]
        %v5616 = vld [vmem:[%s642 + $0x48] sm:$0xff]
        %v5617 = vld [vmem:[%s642 + $0x50] sm:$0xff]
        %v5618 = vld [vmem:[%s642 + $0x58] sm:$0xff]
        %v5619 = vld [vmem:[%s642 + $0x60] sm:$0xff]
        %v5620 = vld [vmem:[%s642 + $0x68] sm:$0xff]
        %v5621 = vld [vmem:[%s642 + $0x70] sm:$0xff]
        %v5622 = vld [vmem:[%s642 + $0x78] sm:$0xff]
        %v5624 = vrot.slane %v5606, 6
        %5626 = vmatprep.subr.mxu0 0.0
        %5627 = vmatpush1.msra.mxu0 %v5622
        %5628 = vmatprep.subr.mxu0 0.0
        %5629 = vmatpush1.msra.mxu0 %v5621
        %5630 = vmatprep.subr.mxu0 0.0
        %5631 = vmatpush1.msra.mxu0 %v5620
        %5632 = vmatprep.subr.mxu0 0.0
        %5633 = vmatpush1.msra.mxu0 %v5619
        %5634 = vmatprep.subr.mxu0 0.0
        %5635 = vmatpush1.msra.mxu0 %v5618
        %5636 = vmatprep.subr.mxu0 0.0
        %5637 = vmatpush1.msra.mxu0 %v5617
        %5638 = vmatprep.subr.mxu0 0.0
        %5639 = vmatpush1.msra.mxu0 %v5616
        %5640 = vmatprep.subr.mxu0 0.0
        %5641 = vmatpush1.msra.mxu0 %v5615
        %5642 = vmatprep.subr.mxu0 0.0
        %5643 = vmatpush1.msra.mxu0 %v5614
        %5644 = vmatprep.subr.mxu0 0.0
        %5645 = vmatpush1.msra.mxu0 %v5613
        %5646 = vmatprep.subr.mxu0 0.0
        %5647 = vmatpush1.msra.mxu0 %v5612
        %5648 = vmatprep.subr.mxu0 0.0
        %5649 = vmatpush1.msra.mxu0 %v5611
        %5650 = vmatprep.subr.mxu0 0.0
        %5651 = vmatpush1.msra.mxu0 %v5610
        %5652 = vmatprep.subr.mxu0 0.0
        %5653 = vmatpush1.msra.mxu0 %v5609
        %5654 = vmatprep.subr.mxu0 0.0
        %5655 = vmatpush1.msra.mxu0 %v5608
        %5656 = vmatprep.subr.mxu0 0.0
        %5657 = vmatpush1.msra.mxu0 %v5607
        %5658 = vmatprep.subr.mxu0 0.0
        %5659 = vmatpush2.msra.mxu0 0.0
        %5660 = vmatprep.subr.mxu0 0.0
        %5661 = vmatpush2.msra.mxu0 0.0
        %5662 = vmatprep.subr.mxu0 0.0
        %5663 = vmatpush2.msra.mxu0 0.0
        %5664 = vmatprep.subr.mxu0 0.0
        %5665 = vmatpush2.msra.mxu0 0.0
        %5666 = vmatprep.subr.mxu0 0.0
        %5667 = vmatpush2.msra.mxu0 0.0
        %5668 = vmatprep.subr.mxu0 0.0
        %5669 = vmatpush2.msra.mxu0 0.0
        %5670 = vmatprep.subr.mxu0 0.0
        %5671 = vmatpush2.msra.mxu0 0.0
        %5672 = vmatprep.subr.mxu0 0.0
        %5673 = vmatpush2.msra.mxu0 0.0
        %5674 = vmatprep.subr.mxu0 0.0
        %5675 = vmatpush2.msra.mxu0 0.0
        %5676 = vmatprep.subr.mxu0 0.0
        %5677 = vmatpush2.msra.mxu0 0.0
        %5678 = vmatprep.subr.mxu0 0.0
        %5679 = vmatpush2.msra.mxu0 0.0
        %5680 = vmatprep.subr.mxu0 0.0
        %5681 = vmatpush2.msra.mxu0 0.0
        %5682 = vmatprep.subr.mxu0 0.0
        %5683 = vmatpush2.msra.mxu0 0.0
        %5684 = vmatprep.subr.mxu0 0.0
        %5685 = vmatpush2.msra.mxu0 0.0
        %5686 = vmatprep.subr.mxu0 0.0
        %5687 = vmatpush2.msra.mxu0 0.0
        %5688 = vmatprep.subr.mxu0 0.0
        %5689 = vmatpush2.msra.mxu0 0.0
        %5690 = vmatprep.mubr.f32.mxu0 0.0
        %5691 = vmatmul.mubr.f32.gmra.mxu0 %v5624
        %v5692 = vpop.f32.mrf.mxu0
        %v5693 = vadd.f32 0.0, %v5692
        %v5694 = vpop.f32.mrf.mxu0
        %5695 = vdwg.mxu0
        %5696 = vst [vmem:[%s787] sm:$0x3] %v5693
        %p5697 = scmp.lt.s32.totalorder %s28, 1
        %s5698 = scalar_select %p5697, %s28, 1
        %s5699 = smul.addr %s5698, 2
        %s5700 = scalar_lea.vmem %s15, %s5699
        // Predicated region
        $region101: #{hepps_forward.1} parent=79 // pred_check
          %p5701 = pneg %p421
        $region102: #{hepps_forward.1} parent=79 // pred_check_branch
          %5703 = sbr.rel (%p5701) target = $region104
        $region103: #{hepps_forward.1} parent=79 // pred_region
          _
        $region104: #{hepps_forward.1} parent=79 // pred_fallthru
          _
      $region80: #{hepps_forward.1} parent=5 // pred_fallthru
        _
      %p5704 = scmp.le.s32.totalorder 2, %s23
      // Predicated region
      $region105: #{hepps_forward.1} parent=5 // pred_check
        %p5705 = pneg %p5704
      $region106: #{hepps_forward.1} parent=5 // pred_check_branch
        %5707 = sbr.rel (%p5705) target = $region108
      $region107: #{hepps_forward.1} parent=5 // pred_region
        %s5708 = ssub.s32 %s23, 2
        // Predicated region
        $region109: #{hepps_forward.1} parent=107 // pred_check
          %p5709 = pneg %p427
        $region110: #{hepps_forward.1} parent=107 // pred_check_branch
          %5711 = sbr.rel (%p5709) target = $region112
        $region111: #{hepps_forward.1} parent=107 // pred_region
          %p5712 = scmp.lt.s32.totalorder %s29, 1
          %s5713 = scalar_select %p5712, %s29, 1
          %s5714 = smul.addr %s5713, 2
          %s5715 = scalar_lea.vmem %s15, %s5714
        $region112: #{hepps_forward.1} parent=107 // pred_fallthru
          _
      $region108: #{hepps_forward.1} parent=5 // pred_fallthru
        _
    $region6: #{hepps_forward.1} parent=1 // loop_footer
      %s27 = sadd.s32 1, %s23
    $region7: #{hepps_forward.1} parent=1 // loop_footer_branch
      %22 = sbr.rel target = $region3
    $region8: #{hepps_forward.1} parent=1 // loop_exit
      _
    %5716 = vsyncpa [#allocation3], 1
    %s5717 = scalar_lea.sflag [#allocation3], 1
    %5718 = vsyncpa %s5717, 1
    %5719 = vsyncpa [#allocation5], 1

</llo_original>
